<compile_context>
chip_gen: v5e
topology: v5e:2x2
jax: 0.10.0
libtpu: 0.0.40
codegen_flags: <defaults>
</compile_context>

<pallas_src>
import jax
import jax.numpy as jnp
from jax.experimental import pallas as pl
from jax.experimental.pallas import tpu as pltpu

_LANE = 128
_TINY_ELEMS = 65536  # below this, plain jnp.sqrt (launch overhead would dominate)


def _sqrt_kernel(x_ref, o_ref):
    # Cast is a no-op for float inputs; for int inputs it fuses the promotion
    # into the kernel (free VPU work under the DMA). sqrt runs on the EUP.
    o_ref[...] = jnp.sqrt(x_ref[...].astype(o_ref.dtype))


def _max_block_rows():
    """Pick the largest safe block (rows of 128 lanes) for this TPU generation."""
    try:
        kind = jax.devices()[0].device_kind.lower()
    except Exception:
        kind = ""
    if "v6" in kind or "v7" in kind:
        # 8192 x 128 f32 = 4 MiB block; in+out double-buffered = 16 MiB < 32 MiB scoped default.
        return 8192
    # v5e (and unknown): 4096 x 128 f32 = 2 MiB block; 8 MiB total < 16 MiB scoped default.
    return 4096


def _sqrt_2d(x2d, out_dtype):
    """sqrt over a (rows, 128) lane-aligned array via a 1-D 'parallel' grid."""
    rows = x2d.shape[0]
    max_block = _max_block_rows()

    if rows <= max_block:
        # Mid-size: split into 2 blocks (rounded up to a multiple of 8 sublanes)
        # so a 2-TensorCore chip (v7x) can shard the grid; partial last block is masked.
        half = -(-rows // 2)
        block_rows = ((half + 7) // 8) * 8
        if block_rows >= rows:
            block_rows = rows
    else:
        block_rows = max_block

    grid = (pl.cdiv(rows, block_rows),)

    out_shape = jax.ShapeDtypeStruct((rows, _LANE), out_dtype)
    n = rows * _LANE
    cost = pl.CostEstimate(
        flops=0,
        transcendentals=n,
        bytes_accessed=n * (x2d.dtype.itemsize + out_shape.dtype.itemsize),
    )

    return pl.pallas_call(
        _sqrt_kernel,
        out_shape=out_shape,
        grid_spec=pltpu.PrefetchScalarGridSpec(
            num_scalar_prefetch=0,
            grid=grid,
            in_specs=[pl.BlockSpec((block_rows, _LANE), lambda i: (i, 0))],
            out_specs=pl.BlockSpec((block_rows, _LANE), lambda i: (i, 0)),
        ),
        compiler_params=pltpu.CompilerParams(
            dimension_semantics=("parallel",),
        ),
        cost_estimate=cost,
    )(x2d)


def mynet_forward(x):
    """Equivalent of MyNet.forward: returns sqrt(x), same shape as x."""
    orig_shape = x.shape

    # torch.sqrt on integer tensors returns float; the cast itself is fused
    # into the kernel (or into the tiny-input jnp path) — no standalone astype pass.
    if jnp.issubdtype(x.dtype, jnp.floating):
        out_dtype = x.dtype
    else:
        out_dtype = jnp.float32

    n = x.size
    if n < _TINY_ELEMS:
        # Tiny-input fallback: let XLA fuse it; pallas_call overhead would dominate.
        return jnp.sqrt(x.astype(out_dtype))

    flat = x.reshape(-1)
    rem = n % _LANE
    aligned = n - rem

    head = flat[:aligned] if rem else flat
    main = _sqrt_2d(head.reshape(aligned // _LANE, _LANE), out_dtype).reshape(-1)

    if rem:
        # <128-element tail handled with plain jnp (cheaper than whole-array pad + slice).
        tail = jnp.sqrt(flat[aligned:].astype(out_dtype))
        main = jnp.concatenate([main, tail])

    return main.reshape(orig_shape)


if __name__ == "__main__":
    key = jax.random.PRNGKey(0)
    k1, k2 = jax.random.split(key)

    # 1) Module-shaped demo input (batch=2, C=4, H=W=16): tiny-input fast path.
    x_small = jax.random.uniform(k1, (2, 4, 16, 16), dtype=jnp.float32)
    y_small = mynet_forward(x_small)

    # 2) Larger float input exercising the multi-block Pallas path.
    x_big = jax.random.uniform(k2, (4096, 512), dtype=jnp.float32)
    y_big = mynet_forward(x_big)

    # 3) Integer input exercising the fused int->float32 promotion inside the kernel.
    x_int = jnp.arange(512 * 256, dtype=jnp.int32).reshape(512, 256)
    y_int = mynet_forward(x_int)

    jax.block_until_ready((y_small, y_big, y_int))

    ref_small = jnp.sqrt(x_small)
    ref_big = jnp.sqrt(x_big)
    ref_int = jnp.sqrt(x_int.astype(jnp.float32))

    assert y_small.shape == x_small.shape and y_small.dtype == ref_small.dtype
    assert y_big.shape == x_big.shape and y_big.dtype == ref_big.dtype
    assert y_int.shape == x_int.shape and y_int.dtype == jnp.float32
    assert jnp.allclose(y_small, ref_small, atol=1e-6, rtol=1e-6)
    assert jnp.allclose(y_big, ref_big, atol=1e-6, rtol=1e-6)
    assert jnp.allclose(y_int, ref_int, atol=1e-5, rtol=1e-5)

    print("KERNEL_OK")
</pallas_src>

<mosaic_0001>
module attributes {stable_mosaic.version = 11 : i64} {
  func.func @_sqrt_kernel(%arg0: i32, %arg1: memref<4096x128xf32, #tpu.memory_space<vmem>>, %arg2: memref<4096x128xf32, #tpu.memory_space<vmem>>) attributes {dimension_semantics = [#tpu.dimension_semantics<parallel>], iteration_bounds = array<i64: 4>, scalar_prefetch = 0 : i64, scratch_operands = 0 : i64, tpu.core_type = #tpu.core_type<tc>, window_params = [{transform_indices = @transform_0, window_bounds = array<i64: 4096, 128>}, {transform_indices = @transform_1, window_bounds = array<i64: 4096, 128>}]} {
    %c0 = arith.constant 0 : index
    %c0_0 = arith.constant 0 : index
    %0 = vector.load %arg1[%c0, %c0_0] : memref<4096x128xf32, #tpu.memory_space<vmem>>, vector<4096x128xf32>
    %1 = math.sqrt %0 : vector<4096x128xf32>
    %c0_1 = arith.constant 0 : index
    %c0_2 = arith.constant 0 : index
    %2 = vector.load %arg2[%c0_1, %c0_2] : memref<4096x128xf32, #tpu.memory_space<vmem>>, vector<4096x128xf32>
    tpu.vector_store %arg2[%c0_1, %c0_2], %1 {strides = array<i32>} : memref<4096x128xf32, #tpu.memory_space<vmem>>, vector<4096x128xf32>,
    return
  }
  func.func @transform_0(%arg0: i32) -> (i32, i32) {
    %c0_i32 = arith.constant 0 : i32
    %c0_i32_0 = arith.constant 0 : i32
    return %arg0, %c0_i32 : i32, i32
  }
  func.func @transform_1(%arg0: i32) -> (i32, i32) {
    %c0_i32 = arith.constant 0 : i32
    %c0_i32_0 = arith.constant 0 : i32
    return %arg0, %c0_i32 : i32, i32
  }
}

</mosaic_0001>

<llo_original>
// kernel: tpu_custom_call.1
$region0: #{tpu_custom_call.1}
  #allocation0 [shape = 'u32[]', space=smem, size = 0x4, offset = 0x4, fixed_abs, tag = 'smem constant byte address 0x4 - core index']
  #allocation1 [shape = 'u32[72,128]{1,0:T(1,128)}', space=vmem, size = 0x9000, scoped, tag = 'internal scratch']
  %s0 = inlined_call_operand.hbm [shape: f32[16384,128], index: 0, kind: input, shape index: {}]
  %s1 = inlined_call_operand.hbm [shape: f32[16384,128], index: 1, kind: output, shape index: {}]
  %s2 = sld [smem:[#allocation0]]
  $region41: #{tpu_custom_call.1} parent=0
    _
  %s4 = ssub.s32 1, %s2
  %s5 = scalar_select 0, %s4, %s2
  $region1: #{tpu_custom_call.1} parent=0
    #allocation2 [shape = 'u8[4194304]{0}', space=vmem, size = 0x400000, scoped, tag = 'input window, operand 0']
    #allocation3 [shape = 's32[2]{0}', space=sflag, size = 0x8, scoped, tag = 'scoped memory for tpu_custom_call.1']
    #allocation4 [shape = 's32[2]{0}', space=sflag, size = 0x8, scoped, tag = 'scoped memory for tpu_custom_call.1']
    #allocation5 [shape = 'u8[4194304]{0}', space=vmem, size = 0x400000, scoped, tag = 'output window, operand 0']
    %6 = vsyncpa [#allocation3], 0
    %s7 = scalar_lea.sflag [#allocation3], 1
    %8 = vsyncpa %s7, 0
    %9 = vsyncpa [#allocation4], 0
    %s10 = scalar_lea.sflag [#allocation4], 1
    %11 = vsyncpa %s10, 0
    loop: start=0, step=1, limit=6
    $region2: #{tpu_custom_call.1} parent=1 // loop_pre_header
      _
    $region3: #{tpu_custom_call.1} parent=1 // loop_header
      %s13 = sphi 0, %s17
      %p14 = scmp.ge.s32.totalorder %s13, 6
      %s23 = sphi 0, %s25
      %s26 = sphi 0, %s23
      %s27 = sphi 0, %s26
      %s43 = sphi 0, %s27
      %s49 = sphi 0, %s51
      %s52 = sphi 0, %s49
      %s53 = sphi 0, %s52
      %s69 = sphi 0, %s53
    $region4: #{tpu_custom_call.1} parent=1 // loop_header_branch
      %16 = sbr.rel (%p14) target = $region8
    $region5: #{tpu_custom_call.1} parent=1 // loop_body
      %s18 = ssub.s32 %s13, 1
      %s19 = ssub.s32 %s13, 2
      %s20 = sadd.s32 %s13, 1
      %s21 = ssub.s32 %s13, %s20
      %p22 = scmp.eq.s32.totalorder %s21, 0
      %s24 = sadd.s32 %s23, 1
      %s25 = scalar_select %p22, %s23, %s24
      %p28 = pneg %p22
      %p29 = scmp.eq.s32.totalorder %s13, 3
      %p30 = por %p28, %p29
      %p31 = scmp.ne.s32.totalorder %s23, %s26
      %p32 = scmp.eq.s32.totalorder %s13, 0
      %p33 = por %p31, %p32
      %p34 = scmp.ne.s32.totalorder %s23, %s26
      %p35 = scmp.eq.s32.totalorder %s18, 3
      %p36 = por %p34, %p35
      %p37 = scmp.ne.s32.totalorder %s26, %s27
      %p38 = scmp.eq.s32.totalorder %s18, 0
      %p39 = por %p37, %p38
      %p40 = scmp.ne.s32.totalorder %s26, %s27
      %p41 = scmp.eq.s32.totalorder %s19, 3
      %p42 = por %p40, %p41
      %p44 = scmp.ne.s32.totalorder %s27, %s43
      %p45 = scmp.eq.s32.totalorder %s19, 0
      %p46 = por %p44, %p45
      %s47 = ssub.s32 %s13, %s20
      %p48 = scmp.eq.s32.totalorder %s47, 0
      %s50 = sadd.s32 %s49, 1
      %s51 = scalar_select %p48, %s49, %s50
      %p54 = pneg %p48
      %p55 = scmp.eq.s32.totalorder %s13, 3
      %p56 = por %p54, %p55
      %p57 = scmp.ne.s32.totalorder %s49, %s52
      %p58 = scmp.eq.s32.totalorder %s13, 0
      %p59 = por %p57, %p58
      %p60 = scmp.ne.s32.totalorder %s49, %s52
      %p61 = scmp.eq.s32.totalorder %s18, 3
      %p62 = por %p60, %p61
      %p63 = scmp.ne.s32.totalorder %s52, %s53
      %p64 = scmp.eq.s32.totalorder %s18, 0
      %p65 = por %p63, %p64
      %p66 = scmp.ne.s32.totalorder %s52, %s53
      %p67 = scmp.eq.s32.totalorder %s19, 3
      %p68 = por %p66, %p67
      %p70 = scmp.ne.s32.totalorder %s53, %s69
      %p71 = scmp.eq.s32.totalorder %s19, 0
      %p72 = por %p70, %p71
      %p73 = scmp.le.s32.totalorder 1, %s13
      %p74 = scmp.lt.s32.totalorder %s13, 5
      %p75 = pnand %p73, %p74
      %p76 = pneg %p75
      // Predicated region
      $region9: #{tpu_custom_call.1} parent=5 // pred_check
        _
      $region10: #{tpu_custom_call.1} parent=5 // pred_check_branch
        %78 = sbr.rel (%p75) target = $region12
      $region11: #{tpu_custom_call.1} parent=5 // pred_region
        %s79 = ssub.s32 %s13, 1
      $region12: #{tpu_custom_call.1} parent=5 // pred_fallthru
        _
      %p80 = scmp.lt.s32.totalorder %s13, 4
      // Predicated region
      $region13: #{tpu_custom_call.1} parent=5 // pred_check
        %p81 = pneg %p80
      $region14: #{tpu_custom_call.1} parent=5 // pred_check_branch
        %83 = sbr.rel (%p81) target = $region16
      $region15: #{tpu_custom_call.1} parent=5 // pred_region
        // Predicated region
        $region17: #{tpu_custom_call.1} parent=15 // pred_check
          %p84 = pneg %p33
        $region18: #{tpu_custom_call.1} parent=15 // pred_check_branch
          %86 = sbr.rel (%p84) target = $region20
        $region19: #{tpu_custom_call.1} parent=15 // pred_region
          %s87 = sand.u32 %s23, 1
          %s88 = scalar_lea.sflag [#allocation3], %s87
          %s89 = sand.u32 %s23, 1
          %s90 = smul.addr %s89, 4096
          %s91 = scalar_lea.vmem [#allocation2], %s90
          %s92 = smul.u32 512, %s13
          %94 = vsyncadd %s88, 0
          %s95 = smul.addr %s92, 8
          %s96 = scalar_lea.hbm %s0, %s95
          %s97 = sshll.u32 %s96, 4
          %s98 = int_to_ptr.hbm [resolvable:$true] %s97
          %s99 = sshll.u32 %s91, 4
          %s100 = int_to_ptr.vmem [resolvable:$true] %s99
          %105 = dma.hbm_to_vmem [thread:$0]  %s98, 65536, %s100, %s88, 128, 128, 8
        $region20: #{tpu_custom_call.1} parent=15 // pred_fallthru
          _
      $region16: #{tpu_custom_call.1} parent=5 // pred_fallthru
        _
      %p106 = scmp.le.s32.totalorder 1, %s13
      %p107 = scmp.lt.s32.totalorder %s13, 5
      %p108 = pnand %p106, %p107
      %p109 = pneg %p108
      // Predicated region
      $region21: #{tpu_custom_call.1} parent=5 // pred_check
        _
      $region22: #{tpu_custom_call.1} parent=5 // pred_check_branch
        %111 = sbr.rel (%p108) target = $region24
      $region23: #{tpu_custom_call.1} parent=5 // pred_region
        %s112 = ssub.s32 %s13, 1
        %s113 = sand.u32 %s26, 1
        %s114 = scalar_lea.sflag [#allocation3], %s113
        %s115 = sand.u32 %s26, 1
        %s116 = smul.addr %s115, 4096
        %s117 = scalar_lea.vmem [#allocation2], %s116
        // Predicated region
        $region25: #{tpu_custom_call.1} parent=23 // pred_check
          %p118 = pneg %p39
        $region26: #{tpu_custom_call.1} parent=23 // pred_check_branch
          %120 = sbr.rel (%p118) target = $region28
        $region27: #{tpu_custom_call.1} parent=23 // pred_region
          %122 = dma.done %s114, 65536
        $region28: #{tpu_custom_call.1} parent=23 // pred_fallthru
          _
        %s123 = sand.u32 %s26, 1
        %s124 = scalar_lea.sflag [#allocation3], %s123
        %s125 = sand.u32 %s26, 1
        %s126 = smul.addr %s125, 4096
        %s127 = scalar_lea.vmem [#allocation2], %s126
        %p128 = pneg %p39
        %p129 = pneg %p36
        %p130 = pneg %p65
        %p131 = pneg %p62
        %s132 = sand.u32 %s52, 1
        %s133 = scalar_lea.sflag [#allocation4], %s132
        %s134 = sand.u32 %s52, 1
        %s135 = smul.addr %s134, 4096
        %s136 = scalar_lea.vmem [#allocation5], %s135
        %s137 = smul.u32 512, %s18
        %s138 = smul.u32 512, %s18
        %v139 = vld [vmem:[%s117] sm:$0xff]
        %v140 = vld [vmem:[%s117 + $0x8] sm:$0xff]
        %v141 = vld [vmem:[%s117 + $0x10] sm:$0xff]
        %v142 = vld [vmem:[%s117 + $0x18] sm:$0xff]
        %v143 = vld [vmem:[%s117 + $0x20] sm:$0xff]
        %v144 = vld [vmem:[%s117 + $0x28] sm:$0xff]
        %v145 = vld [vmem:[%s117 + $0x30] sm:$0xff]
        %v146 = vld [vmem:[%s117 + $0x38] sm:$0xff]
        %v147 = vld [vmem:[%s117 + $0x40] sm:$0xff]
        %v148 = vld [vmem:[%s117 + $0x48] sm:$0xff]
        %v149 = vld [vmem:[%s117 + $0x50] sm:$0xff]
        %v150 = vld [vmem:[%s117 + $0x58] sm:$0xff]
        %v151 = vld [vmem:[%s117 + $0x60] sm:$0xff]
        %v152 = vld [vmem:[%s117 + $0x68] sm:$0xff]
        %v153 = vld [vmem:[%s117 + $0x70] sm:$0xff]
        %v154 = vld [vmem:[%s117 + $0x78] sm:$0xff]
        %v155 = vld [vmem:[%s117 + $0x80] sm:$0xff]
        %v156 = vld [vmem:[%s117 + $0x88] sm:$0xff]
        %v157 = vld [vmem:[%s117 + $0x90] sm:$0xff]
        %v158 = vld [vmem:[%s117 + $0x98] sm:$0xff]
        %v159 = vld [vmem:[%s117 + $0xa0] sm:$0xff]
        %v160 = vld [vmem:[%s117 + $0xa8] sm:$0xff]
        %v161 = vld [vmem:[%s117 + $0xb0] sm:$0xff]
        %v162 = vld [vmem:[%s117 + $0xb8] sm:$0xff]
        %v163 = vld [vmem:[%s117 + $0xc0] sm:$0xff]
        %v164 = vld [vmem:[%s117 + $0xc8] sm:$0xff]
        %v165 = vld [vmem:[%s117 + $0xd0] sm:$0xff]
        %v166 = vld [vmem:[%s117 + $0xd8] sm:$0xff]
        %v167 = vld [vmem:[%s117 + $0xe0] sm:$0xff]
        %v168 = vld [vmem:[%s117 + $0xe8] sm:$0xff]
        %v169 = vld [vmem:[%s117 + $0xf0] sm:$0xff]
        %v170 = vld [vmem:[%s117 + $0xf8] sm:$0xff]
        %v171 = vld [vmem:[%s117 + $0x100] sm:$0xff]
        %v172 = vld [vmem:[%s117 + $0x108] sm:$0xff]
        %v173 = vld [vmem:[%s117 + $0x110] sm:$0xff]
        %v174 = vld [vmem:[%s117 + $0x118] sm:$0xff]
        %v175 = vld [vmem:[%s117 + $0x120] sm:$0xff]
        %v176 = vld [vmem:[%s117 + $0x128] sm:$0xff]
        %v177 = vld [vmem:[%s117 + $0x130] sm:$0xff]
        %v178 = vld [vmem:[%s117 + $0x138] sm:$0xff]
        %v179 = vld [vmem:[%s117 + $0x140] sm:$0xff]
        %v180 = vld [vmem:[%s117 + $0x148] sm:$0xff]
        %v181 = vld [vmem:[%s117 + $0x150] sm:$0xff]
        %v182 = vld [vmem:[%s117 + $0x158] sm:$0xff]
        %v183 = vld [vmem:[%s117 + $0x160] sm:$0xff]
        %v184 = vld [vmem:[%s117 + $0x168] sm:$0xff]
        %v185 = vld [vmem:[%s117 + $0x170] sm:$0xff]
        %v186 = vld [vmem:[%s117 + $0x178] sm:$0xff]
        %v187 = vld [vmem:[%s117 + $0x180] sm:$0xff]
        %v188 = vld [vmem:[%s117 + $0x188] sm:$0xff]
        %v189 = vld [vmem:[%s117 + $0x190] sm:$0xff]
        %v190 = vld [vmem:[%s117 + $0x198] sm:$0xff]
        %v191 = vld [vmem:[%s117 + $0x1a0] sm:$0xff]
        %v192 = vld [vmem:[%s117 + $0x1a8] sm:$0xff]
        %v193 = vld [vmem:[%s117 + $0x1b0] sm:$0xff]
        %v194 = vld [vmem:[%s117 + $0x1b8] sm:$0xff]
        %v195 = vld [vmem:[%s117 + $0x1c0] sm:$0xff]
        %v196 = vld [vmem:[%s117 + $0x1c8] sm:$0xff]
        %v197 = vld [vmem:[%s117 + $0x1d0] sm:$0xff]
        %v198 = vld [vmem:[%s117 + $0x1d8] sm:$0xff]
        %v199 = vld [vmem:[%s117 + $0x1e0] sm:$0xff]
        %v200 = vld [vmem:[%s117 + $0x1e8] sm:$0xff]
        %v201 = vld [vmem:[%s117 + $0x1f0] sm:$0xff]
        %v202 = vld [vmem:[%s117 + $0x1f8] sm:$0xff]
        %v203 = vld [vmem:[%s117 + $0x200] sm:$0xff]
        %v204 = vld [vmem:[%s117 + $0x208] sm:$0xff]
        %v205 = vld [vmem:[%s117 + $0x210] sm:$0xff]
        %v206 = vld [vmem:[%s117 + $0x218] sm:$0xff]
        %v207 = vld [vmem:[%s117 + $0x220] sm:$0xff]
        %v208 = vld [vmem:[%s117 + $0x228] sm:$0xff]
        %v209 = vld [vmem:[%s117 + $0x230] sm:$0xff]
        %v210 = vld [vmem:[%s117 + $0x238] sm:$0xff]
        %v211 = vld [vmem:[%s117 + $0x240] sm:$0xff]
        %v212 = vld [vmem:[%s117 + $0x248] sm:$0xff]
        %v213 = vld [vmem:[%s117 + $0x250] sm:$0xff]
        %v214 = vld [vmem:[%s117 + $0x258] sm:$0xff]
        %v215 = vld [vmem:[%s117 + $0x260] sm:$0xff]
        %v216 = vld [vmem:[%s117 + $0x268] sm:$0xff]
        %v217 = vld [vmem:[%s117 + $0x270] sm:$0xff]
        %v218 = vld [vmem:[%s117 + $0x278] sm:$0xff]
        %v219 = vld [vmem:[%s117 + $0x280] sm:$0xff]
        %v220 = vld [vmem:[%s117 + $0x288] sm:$0xff]
        %v221 = vld [vmem:[%s117 + $0x290] sm:$0xff]
        %v222 = vld [vmem:[%s117 + $0x298] sm:$0xff]
        %v223 = vld [vmem:[%s117 + $0x2a0] sm:$0xff]
        %v224 = vld [vmem:[%s117 + $0x2a8] sm:$0xff]
        %v225 = vld [vmem:[%s117 + $0x2b0] sm:$0xff]
        %v226 = vld [vmem:[%s117 + $0x2b8] sm:$0xff]
        %v227 = vld [vmem:[%s117 + $0x2c0] sm:$0xff]
        %v228 = vld [vmem:[%s117 + $0x2c8] sm:$0xff]
        %v229 = vld [vmem:[%s117 + $0x2d0] sm:$0xff]
        %v230 = vld [vmem:[%s117 + $0x2d8] sm:$0xff]
        %v231 = vld [vmem:[%s117 + $0x2e0] sm:$0xff]
        %v232 = vld [vmem:[%s117 + $0x2e8] sm:$0xff]
        %v233 = vld [vmem:[%s117 + $0x2f0] sm:$0xff]
        %v234 = vld [vmem:[%s117 + $0x2f8] sm:$0xff]
        %v235 = vld [vmem:[%s117 + $0x300] sm:$0xff]
        %v236 = vld [vmem:[%s117 + $0x308] sm:$0xff]
        %v237 = vld [vmem:[%s117 + $0x310] sm:$0xff]
        %v238 = vld [vmem:[%s117 + $0x318] sm:$0xff]
        %v239 = vld [vmem:[%s117 + $0x320] sm:$0xff]
        %v240 = vld [vmem:[%s117 + $0x328] sm:$0xff]
        %v241 = vld [vmem:[%s117 + $0x330] sm:$0xff]
        %v242 = vld [vmem:[%s117 + $0x338] sm:$0xff]
        %v243 = vld [vmem:[%s117 + $0x340] sm:$0xff]
        %v244 = vld [vmem:[%s117 + $0x348] sm:$0xff]
        %v245 = vld [vmem:[%s117 + $0x350] sm:$0xff]
        %v246 = vld [vmem:[%s117 + $0x358] sm:$0xff]
        %v247 = vld [vmem:[%s117 + $0x360] sm:$0xff]
        %v248 = vld [vmem:[%s117 + $0x368] sm:$0xff]
        %v249 = vld [vmem:[%s117 + $0x370] sm:$0xff]
        %v250 = vld [vmem:[%s117 + $0x378] sm:$0xff]
        %v251 = vld [vmem:[%s117 + $0x380] sm:$0xff]
        %v252 = vld [vmem:[%s117 + $0x388] sm:$0xff]
        %v253 = vld [vmem:[%s117 + $0x390] sm:$0xff]
        %v254 = vld [vmem:[%s117 + $0x398] sm:$0xff]
        %v255 = vld [vmem:[%s117 + $0x3a0] sm:$0xff]
        %v256 = vld [vmem:[%s117 + $0x3a8] sm:$0xff]
        %v257 = vld [vmem:[%s117 + $0x3b0] sm:$0xff]
        %v258 = vld [vmem:[%s117 + $0x3b8] sm:$0xff]
        %v259 = vld [vmem:[%s117 + $0x3c0] sm:$0xff]
        %v260 = vld [vmem:[%s117 + $0x3c8] sm:$0xff]
        %v261 = vld [vmem:[%s117 + $0x3d0] sm:$0xff]
        %v262 = vld [vmem:[%s117 + $0x3d8] sm:$0xff]
        %v263 = vld [vmem:[%s117 + $0x3e0] sm:$0xff]
        %v264 = vld [vmem:[%s117 + $0x3e8] sm:$0xff]
        %v265 = vld [vmem:[%s117 + $0x3f0] sm:$0xff]
        %v266 = vld [vmem:[%s117 + $0x3f8] sm:$0xff]
        %v267 = vld [vmem:[%s117 + $0x400] sm:$0xff]
        %v268 = vld [vmem:[%s117 + $0x408] sm:$0xff]
        %v269 = vld [vmem:[%s117 + $0x410] sm:$0xff]
        %v270 = vld [vmem:[%s117 + $0x418] sm:$0xff]
        %v271 = vld [vmem:[%s117 + $0x420] sm:$0xff]
        %v272 = vld [vmem:[%s117 + $0x428] sm:$0xff]
        %v273 = vld [vmem:[%s117 + $0x430] sm:$0xff]
        %v274 = vld [vmem:[%s117 + $0x438] sm:$0xff]
        %v275 = vld [vmem:[%s117 + $0x440] sm:$0xff]
        %v276 = vld [vmem:[%s117 + $0x448] sm:$0xff]
        %v277 = vld [vmem:[%s117 + $0x450] sm:$0xff]
        %v278 = vld [vmem:[%s117 + $0x458] sm:$0xff]
        %v279 = vld [vmem:[%s117 + $0x460] sm:$0xff]
        %v280 = vld [vmem:[%s117 + $0x468] sm:$0xff]
        %v281 = vld [vmem:[%s117 + $0x470] sm:$0xff]
        %v282 = vld [vmem:[%s117 + $0x478] sm:$0xff]
        %v283 = vld [vmem:[%s117 + $0x480] sm:$0xff]
        %v284 = vld [vmem:[%s117 + $0x488] sm:$0xff]
        %v285 = vld [vmem:[%s117 + $0x490] sm:$0xff]
        %v286 = vld [vmem:[%s117 + $0x498] sm:$0xff]
        %v287 = vld [vmem:[%s117 + $0x4a0] sm:$0xff]
        %v288 = vld [vmem:[%s117 + $0x4a8] sm:$0xff]
        %v289 = vld [vmem:[%s117 + $0x4b0] sm:$0xff]
        %v290 = vld [vmem:[%s117 + $0x4b8] sm:$0xff]
        %v291 = vld [vmem:[%s117 + $0x4c0] sm:$0xff]
        %v292 = vld [vmem:[%s117 + $0x4c8] sm:$0xff]
        %v293 = vld [vmem:[%s117 + $0x4d0] sm:$0xff]
        %v294 = vld [vmem:[%s117 + $0x4d8] sm:$0xff]
        %v295 = vld [vmem:[%s117 + $0x4e0] sm:$0xff]
        %v296 = vld [vmem:[%s117 + $0x4e8] sm:$0xff]
        %v297 = vld [vmem:[%s117 + $0x4f0] sm:$0xff]
        %v298 = vld [vmem:[%s117 + $0x4f8] sm:$0xff]
        %v299 = vld [vmem:[%s117 + $0x500] sm:$0xff]
        %v300 = vld [vmem:[%s117 + $0x508] sm:$0xff]
        %v301 = vld [vmem:[%s117 + $0x510] sm:$0xff]
        %v302 = vld [vmem:[%s117 + $0x518] sm:$0xff]
        %v303 = vld [vmem:[%s117 + $0x520] sm:$0xff]
        %v304 = vld [vmem:[%s117 + $0x528] sm:$0xff]
        %v305 = vld [vmem:[%s117 + $0x530] sm:$0xff]
        %v306 = vld [vmem:[%s117 + $0x538] sm:$0xff]
        %v307 = vld [vmem:[%s117 + $0x540] sm:$0xff]
        %v308 = vld [vmem:[%s117 + $0x548] sm:$0xff]
        %v309 = vld [vmem:[%s117 + $0x550] sm:$0xff]
        %v310 = vld [vmem:[%s117 + $0x558] sm:$0xff]
        %v311 = vld [vmem:[%s117 + $0x560] sm:$0xff]
        %v312 = vld [vmem:[%s117 + $0x568] sm:$0xff]
        %v313 = vld [vmem:[%s117 + $0x570] sm:$0xff]
        %v314 = vld [vmem:[%s117 + $0x578] sm:$0xff]
        %v315 = vld [vmem:[%s117 + $0x580] sm:$0xff]
        %v316 = vld [vmem:[%s117 + $0x588] sm:$0xff]
        %v317 = vld [vmem:[%s117 + $0x590] sm:$0xff]
        %v318 = vld [vmem:[%s117 + $0x598] sm:$0xff]
        %v319 = vld [vmem:[%s117 + $0x5a0] sm:$0xff]
        %v320 = vld [vmem:[%s117 + $0x5a8] sm:$0xff]
        %v321 = vld [vmem:[%s117 + $0x5b0] sm:$0xff]
        %v322 = vld [vmem:[%s117 + $0x5b8] sm:$0xff]
        %v323 = vld [vmem:[%s117 + $0x5c0] sm:$0xff]
        %v324 = vld [vmem:[%s117 + $0x5c8] sm:$0xff]
        %v325 = vld [vmem:[%s117 + $0x5d0] sm:$0xff]
        %v326 = vld [vmem:[%s117 + $0x5d8] sm:$0xff]
        %v327 = vld [vmem:[%s117 + $0x5e0] sm:$0xff]
        %v328 = vld [vmem:[%s117 + $0x5e8] sm:$0xff]
        %v329 = vld [vmem:[%s117 + $0x5f0] sm:$0xff]
        %v330 = vld [vmem:[%s117 + $0x5f8] sm:$0xff]
        %v331 = vld [vmem:[%s117 + $0x600] sm:$0xff]
        %v332 = vld [vmem:[%s117 + $0x608] sm:$0xff]
        %v333 = vld [vmem:[%s117 + $0x610] sm:$0xff]
        %v334 = vld [vmem:[%s117 + $0x618] sm:$0xff]
        %v335 = vld [vmem:[%s117 + $0x620] sm:$0xff]
        %v336 = vld [vmem:[%s117 + $0x628] sm:$0xff]
        %v337 = vld [vmem:[%s117 + $0x630] sm:$0xff]
        %v338 = vld [vmem:[%s117 + $0x638] sm:$0xff]
        %v339 = vld [vmem:[%s117 + $0x640] sm:$0xff]
        %v340 = vld [vmem:[%s117 + $0x648] sm:$0xff]
        %v341 = vld [vmem:[%s117 + $0x650] sm:$0xff]
        %v342 = vld [vmem:[%s117 + $0x658] sm:$0xff]
        %v343 = vld [vmem:[%s117 + $0x660] sm:$0xff]
        %v344 = vld [vmem:[%s117 + $0x668] sm:$0xff]
        %v345 = vld [vmem:[%s117 + $0x670] sm:$0xff]
        %v346 = vld [vmem:[%s117 + $0x678] sm:$0xff]
        %v347 = vld [vmem:[%s117 + $0x680] sm:$0xff]
        %v348 = vld [vmem:[%s117 + $0x688] sm:$0xff]
        %v349 = vld [vmem:[%s117 + $0x690] sm:$0xff]
        %v350 = vld [vmem:[%s117 + $0x698] sm:$0xff]
        %v351 = vld [vmem:[%s117 + $0x6a0] sm:$0xff]
        %v352 = vld [vmem:[%s117 + $0x6a8] sm:$0xff]
        %v353 = vld [vmem:[%s117 + $0x6b0] sm:$0xff]
        %v354 = vld [vmem:[%s117 + $0x6b8] sm:$0xff]
        %v355 = vld [vmem:[%s117 + $0x6c0] sm:$0xff]
        %v356 = vld [vmem:[%s117 + $0x6c8] sm:$0xff]
        %v357 = vld [vmem:[%s117 + $0x6d0] sm:$0xff]
        %v358 = vld [vmem:[%s117 + $0x6d8] sm:$0xff]
        %v359 = vld [vmem:[%s117 + $0x6e0] sm:$0xff]
        %v360 = vld [vmem:[%s117 + $0x6e8] sm:$0xff]
        %v361 = vld [vmem:[%s117 + $0x6f0] sm:$0xff]
        %v362 = vld [vmem:[%s117 + $0x6f8] sm:$0xff]
        %v363 = vld [vmem:[%s117 + $0x700] sm:$0xff]
        %v364 = vld [vmem:[%s117 + $0x708] sm:$0xff]
        %v365 = vld [vmem:[%s117 + $0x710] sm:$0xff]
        %v366 = vld [vmem:[%s117 + $0x718] sm:$0xff]
        %v367 = vld [vmem:[%s117 + $0x720] sm:$0xff]
        %v368 = vld [vmem:[%s117 + $0x728] sm:$0xff]
        %v369 = vld [vmem:[%s117 + $0x730] sm:$0xff]
        %v370 = vld [vmem:[%s117 + $0x738] sm:$0xff]
        %v371 = vld [vmem:[%s117 + $0x740] sm:$0xff]
        %v372 = vld [vmem:[%s117 + $0x748] sm:$0xff]
        %v373 = vld [vmem:[%s117 + $0x750] sm:$0xff]
        %v374 = vld [vmem:[%s117 + $0x758] sm:$0xff]
        %v375 = vld [vmem:[%s117 + $0x760] sm:$0xff]
        %v376 = vld [vmem:[%s117 + $0x768] sm:$0xff]
        %v377 = vld [vmem:[%s117 + $0x770] sm:$0xff]
        %v378 = vld [vmem:[%s117 + $0x778] sm:$0xff]
        %v379 = vld [vmem:[%s117 + $0x780] sm:$0xff]
        %v380 = vld [vmem:[%s117 + $0x788] sm:$0xff]
        %v381 = vld [vmem:[%s117 + $0x790] sm:$0xff]
        %v382 = vld [vmem:[%s117 + $0x798] sm:$0xff]
        %v383 = vld [vmem:[%s117 + $0x7a0] sm:$0xff]
        %v384 = vld [vmem:[%s117 + $0x7a8] sm:$0xff]
        %v385 = vld [vmem:[%s117 + $0x7b0] sm:$0xff]
        %v386 = vld [vmem:[%s117 + $0x7b8] sm:$0xff]
        %v387 = vld [vmem:[%s117 + $0x7c0] sm:$0xff]
        %v388 = vld [vmem:[%s117 + $0x7c8] sm:$0xff]
        %v389 = vld [vmem:[%s117 + $0x7d0] sm:$0xff]
        %v390 = vld [vmem:[%s117 + $0x7d8] sm:$0xff]
        %v391 = vld [vmem:[%s117 + $0x7e0] sm:$0xff]
        %v392 = vld [vmem:[%s117 + $0x7e8] sm:$0xff]
        %v393 = vld [vmem:[%s117 + $0x7f0] sm:$0xff]
        %v394 = vld [vmem:[%s117 + $0x7f8] sm:$0xff]
        %v395 = vld [vmem:[%s117 + $0x800] sm:$0xff]
        %v396 = vld [vmem:[%s117 + $0x808] sm:$0xff]
        %v397 = vld [vmem:[%s117 + $0x810] sm:$0xff]
        %v398 = vld [vmem:[%s117 + $0x818] sm:$0xff]
        %v399 = vld [vmem:[%s117 + $0x820] sm:$0xff]
        %v400 = vld [vmem:[%s117 + $0x828] sm:$0xff]
        %v401 = vld [vmem:[%s117 + $0x830] sm:$0xff]
        %v402 = vld [vmem:[%s117 + $0x838] sm:$0xff]
        %v403 = vld [vmem:[%s117 + $0x840] sm:$0xff]
        %v404 = vld [vmem:[%s117 + $0x848] sm:$0xff]
        %v405 = vld [vmem:[%s117 + $0x850] sm:$0xff]
        %v406 = vld [vmem:[%s117 + $0x858] sm:$0xff]
        %v407 = vld [vmem:[%s117 + $0x860] sm:$0xff]
        %v408 = vld [vmem:[%s117 + $0x868] sm:$0xff]
        %v409 = vld [vmem:[%s117 + $0x870] sm:$0xff]
        %v410 = vld [vmem:[%s117 + $0x878] sm:$0xff]
        %v411 = vld [vmem:[%s117 + $0x880] sm:$0xff]
        %v412 = vld [vmem:[%s117 + $0x888] sm:$0xff]
        %v413 = vld [vmem:[%s117 + $0x890] sm:$0xff]
        %v414 = vld [vmem:[%s117 + $0x898] sm:$0xff]
        %v415 = vld [vmem:[%s117 + $0x8a0] sm:$0xff]
        %v416 = vld [vmem:[%s117 + $0x8a8] sm:$0xff]
        %v417 = vld [vmem:[%s117 + $0x8b0] sm:$0xff]
        %v418 = vld [vmem:[%s117 + $0x8b8] sm:$0xff]
        %v419 = vld [vmem:[%s117 + $0x8c0] sm:$0xff]
        %v420 = vld [vmem:[%s117 + $0x8c8] sm:$0xff]
        %v421 = vld [vmem:[%s117 + $0x8d0] sm:$0xff]
        %v422 = vld [vmem:[%s117 + $0x8d8] sm:$0xff]
        %v423 = vld [vmem:[%s117 + $0x8e0] sm:$0xff]
        %v424 = vld [vmem:[%s117 + $0x8e8] sm:$0xff]
        %v425 = vld [vmem:[%s117 + $0x8f0] sm:$0xff]
        %v426 = vld [vmem:[%s117 + $0x8f8] sm:$0xff]
        %v427 = vld [vmem:[%s117 + $0x900] sm:$0xff]
        %v428 = vld [vmem:[%s117 + $0x908] sm:$0xff]
        %v429 = vld [vmem:[%s117 + $0x910] sm:$0xff]
        %v430 = vld [vmem:[%s117 + $0x918] sm:$0xff]
        %v431 = vld [vmem:[%s117 + $0x920] sm:$0xff]
        %v432 = vld [vmem:[%s117 + $0x928] sm:$0xff]
        %v433 = vld [vmem:[%s117 + $0x930] sm:$0xff]
        %v434 = vld [vmem:[%s117 + $0x938] sm:$0xff]
        %v435 = vld [vmem:[%s117 + $0x940] sm:$0xff]
        %v436 = vld [vmem:[%s117 + $0x948] sm:$0xff]
        %v437 = vld [vmem:[%s117 + $0x950] sm:$0xff]
        %v438 = vld [vmem:[%s117 + $0x958] sm:$0xff]
        %v439 = vld [vmem:[%s117 + $0x960] sm:$0xff]
        %v440 = vld [vmem:[%s117 + $0x968] sm:$0xff]
        %v441 = vld [vmem:[%s117 + $0x970] sm:$0xff]
        %v442 = vld [vmem:[%s117 + $0x978] sm:$0xff]
        %v443 = vld [vmem:[%s117 + $0x980] sm:$0xff]
        %v444 = vld [vmem:[%s117 + $0x988] sm:$0xff]
        %v445 = vld [vmem:[%s117 + $0x990] sm:$0xff]
        %v446 = vld [vmem:[%s117 + $0x998] sm:$0xff]
        %v447 = vld [vmem:[%s117 + $0x9a0] sm:$0xff]
        %v448 = vld [vmem:[%s117 + $0x9a8] sm:$0xff]
        %v449 = vld [vmem:[%s117 + $0x9b0] sm:$0xff]
        %v450 = vld [vmem:[%s117 + $0x9b8] sm:$0xff]
        %v451 = vld [vmem:[%s117 + $0x9c0] sm:$0xff]
        %v452 = vld [vmem:[%s117 + $0x9c8] sm:$0xff]
        %v453 = vld [vmem:[%s117 + $0x9d0] sm:$0xff]
        %v454 = vld [vmem:[%s117 + $0x9d8] sm:$0xff]
        %v455 = vld [vmem:[%s117 + $0x9e0] sm:$0xff]
        %v456 = vld [vmem:[%s117 + $0x9e8] sm:$0xff]
        %v457 = vld [vmem:[%s117 + $0x9f0] sm:$0xff]
        %v458 = vld [vmem:[%s117 + $0x9f8] sm:$0xff]
        %v459 = vld [vmem:[%s117 + $0xa00] sm:$0xff]
        %v460 = vld [vmem:[%s117 + $0xa08] sm:$0xff]
        %v461 = vld [vmem:[%s117 + $0xa10] sm:$0xff]
        %v462 = vld [vmem:[%s117 + $0xa18] sm:$0xff]
        %v463 = vld [vmem:[%s117 + $0xa20] sm:$0xff]
        %v464 = vld [vmem:[%s117 + $0xa28] sm:$0xff]
        %v465 = vld [vmem:[%s117 + $0xa30] sm:$0xff]
        %v466 = vld [vmem:[%s117 + $0xa38] sm:$0xff]
        %v467 = vld [vmem:[%s117 + $0xa40] sm:$0xff]
        %v468 = vld [vmem:[%s117 + $0xa48] sm:$0xff]
        %v469 = vld [vmem:[%s117 + $0xa50] sm:$0xff]
        %v470 = vld [vmem:[%s117 + $0xa58] sm:$0xff]
        %v471 = vld [vmem:[%s117 + $0xa60] sm:$0xff]
        %v472 = vld [vmem:[%s117 + $0xa68] sm:$0xff]
        %v473 = vld [vmem:[%s117 + $0xa70] sm:$0xff]
        %v474 = vld [vmem:[%s117 + $0xa78] sm:$0xff]
        %v475 = vld [vmem:[%s117 + $0xa80] sm:$0xff]
        %v476 = vld [vmem:[%s117 + $0xa88] sm:$0xff]
        %v477 = vld [vmem:[%s117 + $0xa90] sm:$0xff]
        %v478 = vld [vmem:[%s117 + $0xa98] sm:$0xff]
        %v479 = vld [vmem:[%s117 + $0xaa0] sm:$0xff]
        %v480 = vld [vmem:[%s117 + $0xaa8] sm:$0xff]
        %v481 = vld [vmem:[%s117 + $0xab0] sm:$0xff]
        %v482 = vld [vmem:[%s117 + $0xab8] sm:$0xff]
        %v483 = vld [vmem:[%s117 + $0xac0] sm:$0xff]
        %v484 = vld [vmem:[%s117 + $0xac8] sm:$0xff]
        %v485 = vld [vmem:[%s117 + $0xad0] sm:$0xff]
        %v486 = vld [vmem:[%s117 + $0xad8] sm:$0xff]
        %v487 = vld [vmem:[%s117 + $0xae0] sm:$0xff]
        %v488 = vld [vmem:[%s117 + $0xae8] sm:$0xff]
        %v489 = vld [vmem:[%s117 + $0xaf0] sm:$0xff]
        %v490 = vld [vmem:[%s117 + $0xaf8] sm:$0xff]
        %v491 = vld [vmem:[%s117 + $0xb00] sm:$0xff]
        %v492 = vld [vmem:[%s117 + $0xb08] sm:$0xff]
        %v493 = vld [vmem:[%s117 + $0xb10] sm:$0xff]
        %v494 = vld [vmem:[%s117 + $0xb18] sm:$0xff]
        %v495 = vld [vmem:[%s117 + $0xb20] sm:$0xff]
        %v496 = vld [vmem:[%s117 + $0xb28] sm:$0xff]
        %v497 = vld [vmem:[%s117 + $0xb30] sm:$0xff]
        %v498 = vld [vmem:[%s117 + $0xb38] sm:$0xff]
        %v499 = vld [vmem:[%s117 + $0xb40] sm:$0xff]
        %v500 = vld [vmem:[%s117 + $0xb48] sm:$0xff]
        %v501 = vld [vmem:[%s117 + $0xb50] sm:$0xff]
        %v502 = vld [vmem:[%s117 + $0xb58] sm:$0xff]
        %v503 = vld [vmem:[%s117 + $0xb60] sm:$0xff]
        %v504 = vld [vmem:[%s117 + $0xb68] sm:$0xff]
        %v505 = vld [vmem:[%s117 + $0xb70] sm:$0xff]
        %v506 = vld [vmem:[%s117 + $0xb78] sm:$0xff]
        %v507 = vld [vmem:[%s117 + $0xb80] sm:$0xff]
        %v508 = vld [vmem:[%s117 + $0xb88] sm:$0xff]
        %v509 = vld [vmem:[%s117 + $0xb90] sm:$0xff]
        %v510 = vld [vmem:[%s117 + $0xb98] sm:$0xff]
        %v511 = vld [vmem:[%s117 + $0xba0] sm:$0xff]
        %v512 = vld [vmem:[%s117 + $0xba8] sm:$0xff]
        %v513 = vld [vmem:[%s117 + $0xbb0] sm:$0xff]
        %v514 = vld [vmem:[%s117 + $0xbb8] sm:$0xff]
        %v515 = vld [vmem:[%s117 + $0xbc0] sm:$0xff]
        %v516 = vld [vmem:[%s117 + $0xbc8] sm:$0xff]
        %v517 = vld [vmem:[%s117 + $0xbd0] sm:$0xff]
        %v518 = vld [vmem:[%s117 + $0xbd8] sm:$0xff]
        %v519 = vld [vmem:[%s117 + $0xbe0] sm:$0xff]
        %v520 = vld [vmem:[%s117 + $0xbe8] sm:$0xff]
        %v521 = vld [vmem:[%s117 + $0xbf0] sm:$0xff]
        %v522 = vld [vmem:[%s117 + $0xbf8] sm:$0xff]
        %v523 = vld [vmem:[%s117 + $0xc00] sm:$0xff]
        %v524 = vld [vmem:[%s117 + $0xc08] sm:$0xff]
        %v525 = vld [vmem:[%s117 + $0xc10] sm:$0xff]
        %v526 = vld [vmem:[%s117 + $0xc18] sm:$0xff]
        %v527 = vld [vmem:[%s117 + $0xc20] sm:$0xff]
        %v528 = vld [vmem:[%s117 + $0xc28] sm:$0xff]
        %v529 = vld [vmem:[%s117 + $0xc30] sm:$0xff]
        %v530 = vld [vmem:[%s117 + $0xc38] sm:$0xff]
        %v531 = vld [vmem:[%s117 + $0xc40] sm:$0xff]
        %v532 = vld [vmem:[%s117 + $0xc48] sm:$0xff]
        %v533 = vld [vmem:[%s117 + $0xc50] sm:$0xff]
        %v534 = vld [vmem:[%s117 + $0xc58] sm:$0xff]
        %v535 = vld [vmem:[%s117 + $0xc60] sm:$0xff]
        %v536 = vld [vmem:[%s117 + $0xc68] sm:$0xff]
        %v537 = vld [vmem:[%s117 + $0xc70] sm:$0xff]
        %v538 = vld [vmem:[%s117 + $0xc78] sm:$0xff]
        %v539 = vld [vmem:[%s117 + $0xc80] sm:$0xff]
        %v540 = vld [vmem:[%s117 + $0xc88] sm:$0xff]
        %v541 = vld [vmem:[%s117 + $0xc90] sm:$0xff]
        %v542 = vld [vmem:[%s117 + $0xc98] sm:$0xff]
        %v543 = vld [vmem:[%s117 + $0xca0] sm:$0xff]
        %v544 = vld [vmem:[%s117 + $0xca8] sm:$0xff]
        %v545 = vld [vmem:[%s117 + $0xcb0] sm:$0xff]
        %v546 = vld [vmem:[%s117 + $0xcb8] sm:$0xff]
        %v547 = vld [vmem:[%s117 + $0xcc0] sm:$0xff]
        %v548 = vld [vmem:[%s117 + $0xcc8] sm:$0xff]
        %v549 = vld [vmem:[%s117 + $0xcd0] sm:$0xff]
        %v550 = vld [vmem:[%s117 + $0xcd8] sm:$0xff]
        %v551 = vld [vmem:[%s117 + $0xce0] sm:$0xff]
        %v552 = vld [vmem:[%s117 + $0xce8] sm:$0xff]
        %v553 = vld [vmem:[%s117 + $0xcf0] sm:$0xff]
        %v554 = vld [vmem:[%s117 + $0xcf8] sm:$0xff]
        %v555 = vld [vmem:[%s117 + $0xd00] sm:$0xff]
        %v556 = vld [vmem:[%s117 + $0xd08] sm:$0xff]
        %v557 = vld [vmem:[%s117 + $0xd10] sm:$0xff]
        %v558 = vld [vmem:[%s117 + $0xd18] sm:$0xff]
        %v559 = vld [vmem:[%s117 + $0xd20] sm:$0xff]
        %v560 = vld [vmem:[%s117 + $0xd28] sm:$0xff]
        %v561 = vld [vmem:[%s117 + $0xd30] sm:$0xff]
        %v562 = vld [vmem:[%s117 + $0xd38] sm:$0xff]
        %v563 = vld [vmem:[%s117 + $0xd40] sm:$0xff]
        %v564 = vld [vmem:[%s117 + $0xd48] sm:$0xff]
        %v565 = vld [vmem:[%s117 + $0xd50] sm:$0xff]
        %v566 = vld [vmem:[%s117 + $0xd58] sm:$0xff]
        %v567 = vld [vmem:[%s117 + $0xd60] sm:$0xff]
        %v568 = vld [vmem:[%s117 + $0xd68] sm:$0xff]
        %v569 = vld [vmem:[%s117 + $0xd70] sm:$0xff]
        %v570 = vld [vmem:[%s117 + $0xd78] sm:$0xff]
        %v571 = vld [vmem:[%s117 + $0xd80] sm:$0xff]
        %v572 = vld [vmem:[%s117 + $0xd88] sm:$0xff]
        %v573 = vld [vmem:[%s117 + $0xd90] sm:$0xff]
        %v574 = vld [vmem:[%s117 + $0xd98] sm:$0xff]
        %v575 = vld [vmem:[%s117 + $0xda0] sm:$0xff]
        %v576 = vld [vmem:[%s117 + $0xda8] sm:$0xff]
        %v577 = vld [vmem:[%s117 + $0xdb0] sm:$0xff]
        %v578 = vld [vmem:[%s117 + $0xdb8] sm:$0xff]
        %v579 = vld [vmem:[%s117 + $0xdc0] sm:$0xff]
        %v580 = vld [vmem:[%s117 + $0xdc8] sm:$0xff]
        %v581 = vld [vmem:[%s117 + $0xdd0] sm:$0xff]
        %v582 = vld [vmem:[%s117 + $0xdd8] sm:$0xff]
        %v583 = vld [vmem:[%s117 + $0xde0] sm:$0xff]
        %v584 = vld [vmem:[%s117 + $0xde8] sm:$0xff]
        %v585 = vld [vmem:[%s117 + $0xdf0] sm:$0xff]
        %v586 = vld [vmem:[%s117 + $0xdf8] sm:$0xff]
        %v587 = vld [vmem:[%s117 + $0xe00] sm:$0xff]
        %v588 = vld [vmem:[%s117 + $0xe08] sm:$0xff]
        %v589 = vld [vmem:[%s117 + $0xe10] sm:$0xff]
        %v590 = vld [vmem:[%s117 + $0xe18] sm:$0xff]
        %v591 = vld [vmem:[%s117 + $0xe20] sm:$0xff]
        %v592 = vld [vmem:[%s117 + $0xe28] sm:$0xff]
        %v593 = vld [vmem:[%s117 + $0xe30] sm:$0xff]
        %v594 = vld [vmem:[%s117 + $0xe38] sm:$0xff]
        %v595 = vld [vmem:[%s117 + $0xe40] sm:$0xff]
        %v596 = vld [vmem:[%s117 + $0xe48] sm:$0xff]
        %v597 = vld [vmem:[%s117 + $0xe50] sm:$0xff]
        %v598 = vld [vmem:[%s117 + $0xe58] sm:$0xff]
        %v599 = vld [vmem:[%s117 + $0xe60] sm:$0xff]
        %v600 = vld [vmem:[%s117 + $0xe68] sm:$0xff]
        %v601 = vld [vmem:[%s117 + $0xe70] sm:$0xff]
        %v602 = vld [vmem:[%s117 + $0xe78] sm:$0xff]
        %v603 = vld [vmem:[%s117 + $0xe80] sm:$0xff]
        %v604 = vld [vmem:[%s117 + $0xe88] sm:$0xff]
        %v605 = vld [vmem:[%s117 + $0xe90] sm:$0xff]
        %v606 = vld [vmem:[%s117 + $0xe98] sm:$0xff]
        %v607 = vld [vmem:[%s117 + $0xea0] sm:$0xff]
        %v608 = vld [vmem:[%s117 + $0xea8] sm:$0xff]
        %v609 = vld [vmem:[%s117 + $0xeb0] sm:$0xff]
        %v610 = vld [vmem:[%s117 + $0xeb8] sm:$0xff]
        %v611 = vld [vmem:[%s117 + $0xec0] sm:$0xff]
        %v612 = vld [vmem:[%s117 + $0xec8] sm:$0xff]
        %v613 = vld [vmem:[%s117 + $0xed0] sm:$0xff]
        %v614 = vld [vmem:[%s117 + $0xed8] sm:$0xff]
        %v615 = vld [vmem:[%s117 + $0xee0] sm:$0xff]
        %v616 = vld [vmem:[%s117 + $0xee8] sm:$0xff]
        %v617 = vld [vmem:[%s117 + $0xef0] sm:$0xff]
        %v618 = vld [vmem:[%s117 + $0xef8] sm:$0xff]
        %v619 = vld [vmem:[%s117 + $0xf00] sm:$0xff]
        %v620 = vld [vmem:[%s117 + $0xf08] sm:$0xff]
        %v621 = vld [vmem:[%s117 + $0xf10] sm:$0xff]
        %v622 = vld [vmem:[%s117 + $0xf18] sm:$0xff]
        %v623 = vld [vmem:[%s117 + $0xf20] sm:$0xff]
        %v624 = vld [vmem:[%s117 + $0xf28] sm:$0xff]
        %v625 = vld [vmem:[%s117 + $0xf30] sm:$0xff]
        %v626 = vld [vmem:[%s117 + $0xf38] sm:$0xff]
        %v627 = vld [vmem:[%s117 + $0xf40] sm:$0xff]
        %v628 = vld [vmem:[%s117 + $0xf48] sm:$0xff]
        %v629 = vld [vmem:[%s117 + $0xf50] sm:$0xff]
        %v630 = vld [vmem:[%s117 + $0xf58] sm:$0xff]
        %v631 = vld [vmem:[%s117 + $0xf60] sm:$0xff]
        %v632 = vld [vmem:[%s117 + $0xf68] sm:$0xff]
        %v633 = vld [vmem:[%s117 + $0xf70] sm:$0xff]
        %v634 = vld [vmem:[%s117 + $0xf78] sm:$0xff]
        %v635 = vld [vmem:[%s117 + $0xf80] sm:$0xff]
        %v636 = vld [vmem:[%s117 + $0xf88] sm:$0xff]
        %v637 = vld [vmem:[%s117 + $0xf90] sm:$0xff]
        %v638 = vld [vmem:[%s117 + $0xf98] sm:$0xff]
        %v639 = vld [vmem:[%s117 + $0xfa0] sm:$0xff]
        %v640 = vld [vmem:[%s117 + $0xfa8] sm:$0xff]
        %v641 = vld [vmem:[%s117 + $0xfb0] sm:$0xff]
        %v642 = vld [vmem:[%s117 + $0xfb8] sm:$0xff]
        %v643 = vld [vmem:[%s117 + $0xfc0] sm:$0xff]
        %v644 = vld [vmem:[%s117 + $0xfc8] sm:$0xff]
        %v645 = vld [vmem:[%s117 + $0xfd0] sm:$0xff]
        %v646 = vld [vmem:[%s117 + $0xfd8] sm:$0xff]
        %v647 = vld [vmem:[%s117 + $0xfe0] sm:$0xff]
        %v648 = vld [vmem:[%s117 + $0xfe8] sm:$0xff]
        %v649 = vld [vmem:[%s117 + $0xff0] sm:$0xff]
        %v650 = vld [vmem:[%s117 + $0xff8] sm:$0xff]
        %v651 = vrsqrt.pop %v139
        %v652 = vmul.f32 %v651, %v139
        %v653 = vmul.f32 %v652, %v651
        %v654 = vmul.f32 0.5, %v653
        %v655 = vsub.f32 1.5, %v654
        %v656 = vmul.f32 %v651, %v655
        %v657 = vmul.f32 %v139, %v656
        %vm658 = vcmp.eq.f32.partialorder %v139, inf
        %v659 = vsel %vm658, %v139, %v657
        %vm660 = vcmp.eq.f32.partialorder %v139, 0.0
        %v661 = vand.u32 %v139, 2147483648
        %v662 = vsel %vm660, %v661, %v659
        %v663 = vrsqrt.pop %v140
        %v664 = vmul.f32 %v663, %v140
        %v665 = vmul.f32 %v664, %v663
        %v666 = vmul.f32 0.5, %v665
        %v667 = vsub.f32 1.5, %v666
        %v668 = vmul.f32 %v663, %v667
        %v669 = vmul.f32 %v140, %v668
        %vm670 = vcmp.eq.f32.partialorder %v140, inf
        %v671 = vsel %vm670, %v140, %v669
        %vm672 = vcmp.eq.f32.partialorder %v140, 0.0
        %v673 = vand.u32 %v140, 2147483648
        %v674 = vsel %vm672, %v673, %v671
        %v675 = vrsqrt.pop %v141
        %v676 = vmul.f32 %v675, %v141
        %v677 = vmul.f32 %v676, %v675
        %v678 = vmul.f32 0.5, %v677
        %v679 = vsub.f32 1.5, %v678
        %v680 = vmul.f32 %v675, %v679
        %v681 = vmul.f32 %v141, %v680
        %vm682 = vcmp.eq.f32.partialorder %v141, inf
        %v683 = vsel %vm682, %v141, %v681
        %vm684 = vcmp.eq.f32.partialorder %v141, 0.0
        %v685 = vand.u32 %v141, 2147483648
        %v686 = vsel %vm684, %v685, %v683
        %v687 = vrsqrt.pop %v142
        %v688 = vmul.f32 %v687, %v142
        %v689 = vmul.f32 %v688, %v687
        %v690 = vmul.f32 0.5, %v689
        %v691 = vsub.f32 1.5, %v690
        %v692 = vmul.f32 %v687, %v691
        %v693 = vmul.f32 %v142, %v692
        %vm694 = vcmp.eq.f32.partialorder %v142, inf
        %v695 = vsel %vm694, %v142, %v693
        %vm696 = vcmp.eq.f32.partialorder %v142, 0.0
        %v697 = vand.u32 %v142, 2147483648
        %v698 = vsel %vm696, %v697, %v695
        %v699 = vrsqrt.pop %v143
        %v700 = vmul.f32 %v699, %v143
        %v701 = vmul.f32 %v700, %v699
        %v702 = vmul.f32 0.5, %v701
        %v703 = vsub.f32 1.5, %v702
        %v704 = vmul.f32 %v699, %v703
        %v705 = vmul.f32 %v143, %v704
        %vm706 = vcmp.eq.f32.partialorder %v143, inf
        %v707 = vsel %vm706, %v143, %v705
        %vm708 = vcmp.eq.f32.partialorder %v143, 0.0
        %v709 = vand.u32 %v143, 2147483648
        %v710 = vsel %vm708, %v709, %v707
        %v711 = vrsqrt.pop %v144
        %v712 = vmul.f32 %v711, %v144
        %v713 = vmul.f32 %v712, %v711
        %v714 = vmul.f32 0.5, %v713
        %v715 = vsub.f32 1.5, %v714
        %v716 = vmul.f32 %v711, %v715
        %v717 = vmul.f32 %v144, %v716
        %vm718 = vcmp.eq.f32.partialorder %v144, inf
        %v719 = vsel %vm718, %v144, %v717
        %vm720 = vcmp.eq.f32.partialorder %v144, 0.0
        %v721 = vand.u32 %v144, 2147483648
        %v722 = vsel %vm720, %v721, %v719
        %v723 = vrsqrt.pop %v145
        %v724 = vmul.f32 %v723, %v145
        %v725 = vmul.f32 %v724, %v723
        %v726 = vmul.f32 0.5, %v725
        %v727 = vsub.f32 1.5, %v726
        %v728 = vmul.f32 %v723, %v727
        %v729 = vmul.f32 %v145, %v728
        %vm730 = vcmp.eq.f32.partialorder %v145, inf
        %v731 = vsel %vm730, %v145, %v729
        %vm732 = vcmp.eq.f32.partialorder %v145, 0.0
        %v733 = vand.u32 %v145, 2147483648
        %v734 = vsel %vm732, %v733, %v731
        %v735 = vrsqrt.pop %v146
        %v736 = vmul.f32 %v735, %v146
        %v737 = vmul.f32 %v736, %v735
        %v738 = vmul.f32 0.5, %v737
        %v739 = vsub.f32 1.5, %v738
        %v740 = vmul.f32 %v735, %v739
        %v741 = vmul.f32 %v146, %v740
        %vm742 = vcmp.eq.f32.partialorder %v146, inf
        %v743 = vsel %vm742, %v146, %v741
        %vm744 = vcmp.eq.f32.partialorder %v146, 0.0
        %v745 = vand.u32 %v146, 2147483648
        %v746 = vsel %vm744, %v745, %v743
        %v747 = vrsqrt.pop %v147
        %v748 = vmul.f32 %v747, %v147
        %v749 = vmul.f32 %v748, %v747
        %v750 = vmul.f32 0.5, %v749
        %v751 = vsub.f32 1.5, %v750
        %v752 = vmul.f32 %v747, %v751
        %v753 = vmul.f32 %v147, %v752
        %vm754 = vcmp.eq.f32.partialorder %v147, inf
        %v755 = vsel %vm754, %v147, %v753
        %vm756 = vcmp.eq.f32.partialorder %v147, 0.0
        %v757 = vand.u32 %v147, 2147483648
        %v758 = vsel %vm756, %v757, %v755
        %v759 = vrsqrt.pop %v148
        %v760 = vmul.f32 %v759, %v148
        %v761 = vmul.f32 %v760, %v759
        %v762 = vmul.f32 0.5, %v761
        %v763 = vsub.f32 1.5, %v762
        %v764 = vmul.f32 %v759, %v763
        %v765 = vmul.f32 %v148, %v764
        %vm766 = vcmp.eq.f32.partialorder %v148, inf
        %v767 = vsel %vm766, %v148, %v765
        %vm768 = vcmp.eq.f32.partialorder %v148, 0.0
        %v769 = vand.u32 %v148, 2147483648
        %v770 = vsel %vm768, %v769, %v767
        %v771 = vrsqrt.pop %v149
        %v772 = vmul.f32 %v771, %v149
        %v773 = vmul.f32 %v772, %v771
        %v774 = vmul.f32 0.5, %v773
        %v775 = vsub.f32 1.5, %v774
        %v776 = vmul.f32 %v771, %v775
        %v777 = vmul.f32 %v149, %v776
        %vm778 = vcmp.eq.f32.partialorder %v149, inf
        %v779 = vsel %vm778, %v149, %v777
        %vm780 = vcmp.eq.f32.partialorder %v149, 0.0
        %v781 = vand.u32 %v149, 2147483648
        %v782 = vsel %vm780, %v781, %v779
        %v783 = vrsqrt.pop %v150
        %v784 = vmul.f32 %v783, %v150
        %v785 = vmul.f32 %v784, %v783
        %v786 = vmul.f32 0.5, %v785
        %v787 = vsub.f32 1.5, %v786
        %v788 = vmul.f32 %v783, %v787
        %v789 = vmul.f32 %v150, %v788
        %vm790 = vcmp.eq.f32.partialorder %v150, inf
        %v791 = vsel %vm790, %v150, %v789
        %vm792 = vcmp.eq.f32.partialorder %v150, 0.0
        %v793 = vand.u32 %v150, 2147483648
        %v794 = vsel %vm792, %v793, %v791
        %v795 = vrsqrt.pop %v151
        %v796 = vmul.f32 %v795, %v151
        %v797 = vmul.f32 %v796, %v795
        %v798 = vmul.f32 0.5, %v797
        %v799 = vsub.f32 1.5, %v798
        %v800 = vmul.f32 %v795, %v799
        %v801 = vmul.f32 %v151, %v800
        %vm802 = vcmp.eq.f32.partialorder %v151, inf
        %v803 = vsel %vm802, %v151, %v801
        %vm804 = vcmp.eq.f32.partialorder %v151, 0.0
        %v805 = vand.u32 %v151, 2147483648
        %v806 = vsel %vm804, %v805, %v803
        %v807 = vrsqrt.pop %v152
        %v808 = vmul.f32 %v807, %v152
        %v809 = vmul.f32 %v808, %v807
        %v810 = vmul.f32 0.5, %v809
        %v811 = vsub.f32 1.5, %v810
        %v812 = vmul.f32 %v807, %v811
        %v813 = vmul.f32 %v152, %v812
        %vm814 = vcmp.eq.f32.partialorder %v152, inf
        %v815 = vsel %vm814, %v152, %v813
        %vm816 = vcmp.eq.f32.partialorder %v152, 0.0
        %v817 = vand.u32 %v152, 2147483648
        %v818 = vsel %vm816, %v817, %v815
        %v819 = vrsqrt.pop %v153
        %v820 = vmul.f32 %v819, %v153
        %v821 = vmul.f32 %v820, %v819
        %v822 = vmul.f32 0.5, %v821
        %v823 = vsub.f32 1.5, %v822
        %v824 = vmul.f32 %v819, %v823
        %v825 = vmul.f32 %v153, %v824
        %vm826 = vcmp.eq.f32.partialorder %v153, inf
        %v827 = vsel %vm826, %v153, %v825
        %vm828 = vcmp.eq.f32.partialorder %v153, 0.0
        %v829 = vand.u32 %v153, 2147483648
        %v830 = vsel %vm828, %v829, %v827
        %v831 = vrsqrt.pop %v154
        %v832 = vmul.f32 %v831, %v154
        %v833 = vmul.f32 %v832, %v831
        %v834 = vmul.f32 0.5, %v833
        %v835 = vsub.f32 1.5, %v834
        %v836 = vmul.f32 %v831, %v835
        %v837 = vmul.f32 %v154, %v836
        %vm838 = vcmp.eq.f32.partialorder %v154, inf
        %v839 = vsel %vm838, %v154, %v837
        %vm840 = vcmp.eq.f32.partialorder %v154, 0.0
        %v841 = vand.u32 %v154, 2147483648
        %v842 = vsel %vm840, %v841, %v839
        %v843 = vrsqrt.pop %v155
        %v844 = vmul.f32 %v843, %v155
        %v845 = vmul.f32 %v844, %v843
        %v846 = vmul.f32 0.5, %v845
        %v847 = vsub.f32 1.5, %v846
        %v848 = vmul.f32 %v843, %v847
        %v849 = vmul.f32 %v155, %v848
        %vm850 = vcmp.eq.f32.partialorder %v155, inf
        %v851 = vsel %vm850, %v155, %v849
        %vm852 = vcmp.eq.f32.partialorder %v155, 0.0
        %v853 = vand.u32 %v155, 2147483648
        %v854 = vsel %vm852, %v853, %v851
        %v855 = vrsqrt.pop %v156
        %v856 = vmul.f32 %v855, %v156
        %v857 = vmul.f32 %v856, %v855
        %v858 = vmul.f32 0.5, %v857
        %v859 = vsub.f32 1.5, %v858
        %v860 = vmul.f32 %v855, %v859
        %v861 = vmul.f32 %v156, %v860
        %vm862 = vcmp.eq.f32.partialorder %v156, inf
        %v863 = vsel %vm862, %v156, %v861
        %vm864 = vcmp.eq.f32.partialorder %v156, 0.0
        %v865 = vand.u32 %v156, 2147483648
        %v866 = vsel %vm864, %v865, %v863
        %v867 = vrsqrt.pop %v157
        %v868 = vmul.f32 %v867, %v157
        %v869 = vmul.f32 %v868, %v867
        %v870 = vmul.f32 0.5, %v869
        %v871 = vsub.f32 1.5, %v870
        %v872 = vmul.f32 %v867, %v871
        %v873 = vmul.f32 %v157, %v872
        %vm874 = vcmp.eq.f32.partialorder %v157, inf
        %v875 = vsel %vm874, %v157, %v873
        %vm876 = vcmp.eq.f32.partialorder %v157, 0.0
        %v877 = vand.u32 %v157, 2147483648
        %v878 = vsel %vm876, %v877, %v875
        %v879 = vrsqrt.pop %v158
        %v880 = vmul.f32 %v879, %v158
        %v881 = vmul.f32 %v880, %v879
        %v882 = vmul.f32 0.5, %v881
        %v883 = vsub.f32 1.5, %v882
        %v884 = vmul.f32 %v879, %v883
        %v885 = vmul.f32 %v158, %v884
        %vm886 = vcmp.eq.f32.partialorder %v158, inf
        %v887 = vsel %vm886, %v158, %v885
        %vm888 = vcmp.eq.f32.partialorder %v158, 0.0
        %v889 = vand.u32 %v158, 2147483648
        %v890 = vsel %vm888, %v889, %v887
        %v891 = vrsqrt.pop %v159
        %v892 = vmul.f32 %v891, %v159
        %v893 = vmul.f32 %v892, %v891
        %v894 = vmul.f32 0.5, %v893
        %v895 = vsub.f32 1.5, %v894
        %v896 = vmul.f32 %v891, %v895
        %v897 = vmul.f32 %v159, %v896
        %vm898 = vcmp.eq.f32.partialorder %v159, inf
        %v899 = vsel %vm898, %v159, %v897
        %vm900 = vcmp.eq.f32.partialorder %v159, 0.0
        %v901 = vand.u32 %v159, 2147483648
        %v902 = vsel %vm900, %v901, %v899
        %v903 = vrsqrt.pop %v160
        %v904 = vmul.f32 %v903, %v160
        %v905 = vmul.f32 %v904, %v903
        %v906 = vmul.f32 0.5, %v905
        %v907 = vsub.f32 1.5, %v906
        %v908 = vmul.f32 %v903, %v907
        %v909 = vmul.f32 %v160, %v908
        %vm910 = vcmp.eq.f32.partialorder %v160, inf
        %v911 = vsel %vm910, %v160, %v909
        %vm912 = vcmp.eq.f32.partialorder %v160, 0.0
        %v913 = vand.u32 %v160, 2147483648
        %v914 = vsel %vm912, %v913, %v911
        %v915 = vrsqrt.pop %v161
        %v916 = vmul.f32 %v915, %v161
        %v917 = vmul.f32 %v916, %v915
        %v918 = vmul.f32 0.5, %v917
        %v919 = vsub.f32 1.5, %v918
        %v920 = vmul.f32 %v915, %v919
        %v921 = vmul.f32 %v161, %v920
        %vm922 = vcmp.eq.f32.partialorder %v161, inf
        %v923 = vsel %vm922, %v161, %v921
        %vm924 = vcmp.eq.f32.partialorder %v161, 0.0
        %v925 = vand.u32 %v161, 2147483648
        %v926 = vsel %vm924, %v925, %v923
        %v927 = vrsqrt.pop %v162
        %v928 = vmul.f32 %v927, %v162
        %v929 = vmul.f32 %v928, %v927
        %v930 = vmul.f32 0.5, %v929
        %v931 = vsub.f32 1.5, %v930
        %v932 = vmul.f32 %v927, %v931
        %v933 = vmul.f32 %v162, %v932
        %vm934 = vcmp.eq.f32.partialorder %v162, inf
        %v935 = vsel %vm934, %v162, %v933
        %vm936 = vcmp.eq.f32.partialorder %v162, 0.0
        %v937 = vand.u32 %v162, 2147483648
        %v938 = vsel %vm936, %v937, %v935
        %v939 = vrsqrt.pop %v163
        %v940 = vmul.f32 %v939, %v163
        %v941 = vmul.f32 %v940, %v939
        %v942 = vmul.f32 0.5, %v941
        %v943 = vsub.f32 1.5, %v942
        %v944 = vmul.f32 %v939, %v943
        %v945 = vmul.f32 %v163, %v944
        %vm946 = vcmp.eq.f32.partialorder %v163, inf
        %v947 = vsel %vm946, %v163, %v945
        %vm948 = vcmp.eq.f32.partialorder %v163, 0.0
        %v949 = vand.u32 %v163, 2147483648
        %v950 = vsel %vm948, %v949, %v947
        %v951 = vrsqrt.pop %v164
        %v952 = vmul.f32 %v951, %v164
        %v953 = vmul.f32 %v952, %v951
        %v954 = vmul.f32 0.5, %v953
        %v955 = vsub.f32 1.5, %v954
        %v956 = vmul.f32 %v951, %v955
        %v957 = vmul.f32 %v164, %v956
        %vm958 = vcmp.eq.f32.partialorder %v164, inf
        %v959 = vsel %vm958, %v164, %v957
        %vm960 = vcmp.eq.f32.partialorder %v164, 0.0
        %v961 = vand.u32 %v164, 2147483648
        %v962 = vsel %vm960, %v961, %v959
        %v963 = vrsqrt.pop %v165
        %v964 = vmul.f32 %v963, %v165
        %v965 = vmul.f32 %v964, %v963
        %v966 = vmul.f32 0.5, %v965
        %v967 = vsub.f32 1.5, %v966
        %v968 = vmul.f32 %v963, %v967
        %v969 = vmul.f32 %v165, %v968
        %vm970 = vcmp.eq.f32.partialorder %v165, inf
        %v971 = vsel %vm970, %v165, %v969
        %vm972 = vcmp.eq.f32.partialorder %v165, 0.0
        %v973 = vand.u32 %v165, 2147483648
        %v974 = vsel %vm972, %v973, %v971
        %v975 = vrsqrt.pop %v166
        %v976 = vmul.f32 %v975, %v166
        %v977 = vmul.f32 %v976, %v975
        %v978 = vmul.f32 0.5, %v977
        %v979 = vsub.f32 1.5, %v978
        %v980 = vmul.f32 %v975, %v979
        %v981 = vmul.f32 %v166, %v980
        %vm982 = vcmp.eq.f32.partialorder %v166, inf
        %v983 = vsel %vm982, %v166, %v981
        %vm984 = vcmp.eq.f32.partialorder %v166, 0.0
        %v985 = vand.u32 %v166, 2147483648
        %v986 = vsel %vm984, %v985, %v983
        %v987 = vrsqrt.pop %v167
        %v988 = vmul.f32 %v987, %v167
        %v989 = vmul.f32 %v988, %v987
        %v990 = vmul.f32 0.5, %v989
        %v991 = vsub.f32 1.5, %v990
        %v992 = vmul.f32 %v987, %v991
        %v993 = vmul.f32 %v167, %v992
        %vm994 = vcmp.eq.f32.partialorder %v167, inf
        %v995 = vsel %vm994, %v167, %v993
        %vm996 = vcmp.eq.f32.partialorder %v167, 0.0
        %v997 = vand.u32 %v167, 2147483648
        %v998 = vsel %vm996, %v997, %v995
        %v999 = vrsqrt.pop %v168
        %v1000 = vmul.f32 %v999, %v168
        %v1001 = vmul.f32 %v1000, %v999
        %v1002 = vmul.f32 0.5, %v1001
        %v1003 = vsub.f32 1.5, %v1002
        %v1004 = vmul.f32 %v999, %v1003
        %v1005 = vmul.f32 %v168, %v1004
        %vm1006 = vcmp.eq.f32.partialorder %v168, inf
        %v1007 = vsel %vm1006, %v168, %v1005
        %vm1008 = vcmp.eq.f32.partialorder %v168, 0.0
        %v1009 = vand.u32 %v168, 2147483648
        %v1010 = vsel %vm1008, %v1009, %v1007
        %v1011 = vrsqrt.pop %v169
        %v1012 = vmul.f32 %v1011, %v169
        %v1013 = vmul.f32 %v1012, %v1011
        %v1014 = vmul.f32 0.5, %v1013
        %v1015 = vsub.f32 1.5, %v1014
        %v1016 = vmul.f32 %v1011, %v1015
        %v1017 = vmul.f32 %v169, %v1016
        %vm1018 = vcmp.eq.f32.partialorder %v169, inf
        %v1019 = vsel %vm1018, %v169, %v1017
        %vm1020 = vcmp.eq.f32.partialorder %v169, 0.0
        %v1021 = vand.u32 %v169, 2147483648
        %v1022 = vsel %vm1020, %v1021, %v1019
        %v1023 = vrsqrt.pop %v170
        %v1024 = vmul.f32 %v1023, %v170
        %v1025 = vmul.f32 %v1024, %v1023
        %v1026 = vmul.f32 0.5, %v1025
        %v1027 = vsub.f32 1.5, %v1026
        %v1028 = vmul.f32 %v1023, %v1027
        %v1029 = vmul.f32 %v170, %v1028
        %vm1030 = vcmp.eq.f32.partialorder %v170, inf
        %v1031 = vsel %vm1030, %v170, %v1029
        %vm1032 = vcmp.eq.f32.partialorder %v170, 0.0
        %v1033 = vand.u32 %v170, 2147483648
        %v1034 = vsel %vm1032, %v1033, %v1031
        %v1035 = vrsqrt.pop %v171
        %v1036 = vmul.f32 %v1035, %v171
        %v1037 = vmul.f32 %v1036, %v1035
        %v1038 = vmul.f32 0.5, %v1037
        %v1039 = vsub.f32 1.5, %v1038
        %v1040 = vmul.f32 %v1035, %v1039
        %v1041 = vmul.f32 %v171, %v1040
        %vm1042 = vcmp.eq.f32.partialorder %v171, inf
        %v1043 = vsel %vm1042, %v171, %v1041
        %vm1044 = vcmp.eq.f32.partialorder %v171, 0.0
        %v1045 = vand.u32 %v171, 2147483648
        %v1046 = vsel %vm1044, %v1045, %v1043
        %v1047 = vrsqrt.pop %v172
        %v1048 = vmul.f32 %v1047, %v172
        %v1049 = vmul.f32 %v1048, %v1047
        %v1050 = vmul.f32 0.5, %v1049
        %v1051 = vsub.f32 1.5, %v1050
        %v1052 = vmul.f32 %v1047, %v1051
        %v1053 = vmul.f32 %v172, %v1052
        %vm1054 = vcmp.eq.f32.partialorder %v172, inf
        %v1055 = vsel %vm1054, %v172, %v1053
        %vm1056 = vcmp.eq.f32.partialorder %v172, 0.0
        %v1057 = vand.u32 %v172, 2147483648
        %v1058 = vsel %vm1056, %v1057, %v1055
        %v1059 = vrsqrt.pop %v173
        %v1060 = vmul.f32 %v1059, %v173
        %v1061 = vmul.f32 %v1060, %v1059
        %v1062 = vmul.f32 0.5, %v1061
        %v1063 = vsub.f32 1.5, %v1062
        %v1064 = vmul.f32 %v1059, %v1063
        %v1065 = vmul.f32 %v173, %v1064
        %vm1066 = vcmp.eq.f32.partialorder %v173, inf
        %v1067 = vsel %vm1066, %v173, %v1065
        %vm1068 = vcmp.eq.f32.partialorder %v173, 0.0
        %v1069 = vand.u32 %v173, 2147483648
        %v1070 = vsel %vm1068, %v1069, %v1067
        %v1071 = vrsqrt.pop %v174
        %v1072 = vmul.f32 %v1071, %v174
        %v1073 = vmul.f32 %v1072, %v1071
        %v1074 = vmul.f32 0.5, %v1073
        %v1075 = vsub.f32 1.5, %v1074
        %v1076 = vmul.f32 %v1071, %v1075
        %v1077 = vmul.f32 %v174, %v1076
        %vm1078 = vcmp.eq.f32.partialorder %v174, inf
        %v1079 = vsel %vm1078, %v174, %v1077
        %vm1080 = vcmp.eq.f32.partialorder %v174, 0.0
        %v1081 = vand.u32 %v174, 2147483648
        %v1082 = vsel %vm1080, %v1081, %v1079
        %v1083 = vrsqrt.pop %v175
        %v1084 = vmul.f32 %v1083, %v175
        %v1085 = vmul.f32 %v1084, %v1083
        %v1086 = vmul.f32 0.5, %v1085
        %v1087 = vsub.f32 1.5, %v1086
        %v1088 = vmul.f32 %v1083, %v1087
        %v1089 = vmul.f32 %v175, %v1088
        %vm1090 = vcmp.eq.f32.partialorder %v175, inf
        %v1091 = vsel %vm1090, %v175, %v1089
        %vm1092 = vcmp.eq.f32.partialorder %v175, 0.0
        %v1093 = vand.u32 %v175, 2147483648
        %v1094 = vsel %vm1092, %v1093, %v1091
        %v1095 = vrsqrt.pop %v176
        %v1096 = vmul.f32 %v1095, %v176
        %v1097 = vmul.f32 %v1096, %v1095
        %v1098 = vmul.f32 0.5, %v1097
        %v1099 = vsub.f32 1.5, %v1098
        %v1100 = vmul.f32 %v1095, %v1099
        %v1101 = vmul.f32 %v176, %v1100
        %vm1102 = vcmp.eq.f32.partialorder %v176, inf
        %v1103 = vsel %vm1102, %v176, %v1101
        %vm1104 = vcmp.eq.f32.partialorder %v176, 0.0
        %v1105 = vand.u32 %v176, 2147483648
        %v1106 = vsel %vm1104, %v1105, %v1103
        %v1107 = vrsqrt.pop %v177
        %v1108 = vmul.f32 %v1107, %v177
        %v1109 = vmul.f32 %v1108, %v1107
        %v1110 = vmul.f32 0.5, %v1109
        %v1111 = vsub.f32 1.5, %v1110
        %v1112 = vmul.f32 %v1107, %v1111
        %v1113 = vmul.f32 %v177, %v1112
        %vm1114 = vcmp.eq.f32.partialorder %v177, inf
        %v1115 = vsel %vm1114, %v177, %v1113
        %vm1116 = vcmp.eq.f32.partialorder %v177, 0.0
        %v1117 = vand.u32 %v177, 2147483648
        %v1118 = vsel %vm1116, %v1117, %v1115
        %v1119 = vrsqrt.pop %v178
        %v1120 = vmul.f32 %v1119, %v178
        %v1121 = vmul.f32 %v1120, %v1119
        %v1122 = vmul.f32 0.5, %v1121
        %v1123 = vsub.f32 1.5, %v1122
        %v1124 = vmul.f32 %v1119, %v1123
        %v1125 = vmul.f32 %v178, %v1124
        %vm1126 = vcmp.eq.f32.partialorder %v178, inf
        %v1127 = vsel %vm1126, %v178, %v1125
        %vm1128 = vcmp.eq.f32.partialorder %v178, 0.0
        %v1129 = vand.u32 %v178, 2147483648
        %v1130 = vsel %vm1128, %v1129, %v1127
        %v1131 = vrsqrt.pop %v179
        %v1132 = vmul.f32 %v1131, %v179
        %v1133 = vmul.f32 %v1132, %v1131
        %v1134 = vmul.f32 0.5, %v1133
        %v1135 = vsub.f32 1.5, %v1134
        %v1136 = vmul.f32 %v1131, %v1135
        %v1137 = vmul.f32 %v179, %v1136
        %vm1138 = vcmp.eq.f32.partialorder %v179, inf
        %v1139 = vsel %vm1138, %v179, %v1137
        %vm1140 = vcmp.eq.f32.partialorder %v179, 0.0
        %v1141 = vand.u32 %v179, 2147483648
        %v1142 = vsel %vm1140, %v1141, %v1139
        %v1143 = vrsqrt.pop %v180
        %v1144 = vmul.f32 %v1143, %v180
        %v1145 = vmul.f32 %v1144, %v1143
        %v1146 = vmul.f32 0.5, %v1145
        %v1147 = vsub.f32 1.5, %v1146
        %v1148 = vmul.f32 %v1143, %v1147
        %v1149 = vmul.f32 %v180, %v1148
        %vm1150 = vcmp.eq.f32.partialorder %v180, inf
        %v1151 = vsel %vm1150, %v180, %v1149
        %vm1152 = vcmp.eq.f32.partialorder %v180, 0.0
        %v1153 = vand.u32 %v180, 2147483648
        %v1154 = vsel %vm1152, %v1153, %v1151
        %v1155 = vrsqrt.pop %v181
        %v1156 = vmul.f32 %v1155, %v181
        %v1157 = vmul.f32 %v1156, %v1155
        %v1158 = vmul.f32 0.5, %v1157
        %v1159 = vsub.f32 1.5, %v1158
        %v1160 = vmul.f32 %v1155, %v1159
        %v1161 = vmul.f32 %v181, %v1160
        %vm1162 = vcmp.eq.f32.partialorder %v181, inf
        %v1163 = vsel %vm1162, %v181, %v1161
        %vm1164 = vcmp.eq.f32.partialorder %v181, 0.0
        %v1165 = vand.u32 %v181, 2147483648
        %v1166 = vsel %vm1164, %v1165, %v1163
        %v1167 = vrsqrt.pop %v182
        %v1168 = vmul.f32 %v1167, %v182
        %v1169 = vmul.f32 %v1168, %v1167
        %v1170 = vmul.f32 0.5, %v1169
        %v1171 = vsub.f32 1.5, %v1170
        %v1172 = vmul.f32 %v1167, %v1171
        %v1173 = vmul.f32 %v182, %v1172
        %vm1174 = vcmp.eq.f32.partialorder %v182, inf
        %v1175 = vsel %vm1174, %v182, %v1173
        %vm1176 = vcmp.eq.f32.partialorder %v182, 0.0
        %v1177 = vand.u32 %v182, 2147483648
        %v1178 = vsel %vm1176, %v1177, %v1175
        %v1179 = vrsqrt.pop %v183
        %v1180 = vmul.f32 %v1179, %v183
        %v1181 = vmul.f32 %v1180, %v1179
        %v1182 = vmul.f32 0.5, %v1181
        %v1183 = vsub.f32 1.5, %v1182
        %v1184 = vmul.f32 %v1179, %v1183
        %v1185 = vmul.f32 %v183, %v1184
        %vm1186 = vcmp.eq.f32.partialorder %v183, inf
        %v1187 = vsel %vm1186, %v183, %v1185
        %vm1188 = vcmp.eq.f32.partialorder %v183, 0.0
        %v1189 = vand.u32 %v183, 2147483648
        %v1190 = vsel %vm1188, %v1189, %v1187
        %v1191 = vrsqrt.pop %v184
        %v1192 = vmul.f32 %v1191, %v184
        %v1193 = vmul.f32 %v1192, %v1191
        %v1194 = vmul.f32 0.5, %v1193
        %v1195 = vsub.f32 1.5, %v1194
        %v1196 = vmul.f32 %v1191, %v1195
        %v1197 = vmul.f32 %v184, %v1196
        %vm1198 = vcmp.eq.f32.partialorder %v184, inf
        %v1199 = vsel %vm1198, %v184, %v1197
        %vm1200 = vcmp.eq.f32.partialorder %v184, 0.0
        %v1201 = vand.u32 %v184, 2147483648
        %v1202 = vsel %vm1200, %v1201, %v1199
        %v1203 = vrsqrt.pop %v185
        %v1204 = vmul.f32 %v1203, %v185
        %v1205 = vmul.f32 %v1204, %v1203
        %v1206 = vmul.f32 0.5, %v1205
        %v1207 = vsub.f32 1.5, %v1206
        %v1208 = vmul.f32 %v1203, %v1207
        %v1209 = vmul.f32 %v185, %v1208
        %vm1210 = vcmp.eq.f32.partialorder %v185, inf
        %v1211 = vsel %vm1210, %v185, %v1209
        %vm1212 = vcmp.eq.f32.partialorder %v185, 0.0
        %v1213 = vand.u32 %v185, 2147483648
        %v1214 = vsel %vm1212, %v1213, %v1211
        %v1215 = vrsqrt.pop %v186
        %v1216 = vmul.f32 %v1215, %v186
        %v1217 = vmul.f32 %v1216, %v1215
        %v1218 = vmul.f32 0.5, %v1217
        %v1219 = vsub.f32 1.5, %v1218
        %v1220 = vmul.f32 %v1215, %v1219
        %v1221 = vmul.f32 %v186, %v1220
        %vm1222 = vcmp.eq.f32.partialorder %v186, inf
        %v1223 = vsel %vm1222, %v186, %v1221
        %vm1224 = vcmp.eq.f32.partialorder %v186, 0.0
        %v1225 = vand.u32 %v186, 2147483648
        %v1226 = vsel %vm1224, %v1225, %v1223
        %v1227 = vrsqrt.pop %v187
        %v1228 = vmul.f32 %v1227, %v187
        %v1229 = vmul.f32 %v1228, %v1227
        %v1230 = vmul.f32 0.5, %v1229
        %v1231 = vsub.f32 1.5, %v1230
        %v1232 = vmul.f32 %v1227, %v1231
        %v1233 = vmul.f32 %v187, %v1232
        %vm1234 = vcmp.eq.f32.partialorder %v187, inf
        %v1235 = vsel %vm1234, %v187, %v1233
        %vm1236 = vcmp.eq.f32.partialorder %v187, 0.0
        %v1237 = vand.u32 %v187, 2147483648
        %v1238 = vsel %vm1236, %v1237, %v1235
        %v1239 = vrsqrt.pop %v188
        %v1240 = vmul.f32 %v1239, %v188
        %v1241 = vmul.f32 %v1240, %v1239
        %v1242 = vmul.f32 0.5, %v1241
        %v1243 = vsub.f32 1.5, %v1242
        %v1244 = vmul.f32 %v1239, %v1243
        %v1245 = vmul.f32 %v188, %v1244
        %vm1246 = vcmp.eq.f32.partialorder %v188, inf
        %v1247 = vsel %vm1246, %v188, %v1245
        %vm1248 = vcmp.eq.f32.partialorder %v188, 0.0
        %v1249 = vand.u32 %v188, 2147483648
        %v1250 = vsel %vm1248, %v1249, %v1247
        %v1251 = vrsqrt.pop %v189
        %v1252 = vmul.f32 %v1251, %v189
        %v1253 = vmul.f32 %v1252, %v1251
        %v1254 = vmul.f32 0.5, %v1253
        %v1255 = vsub.f32 1.5, %v1254
        %v1256 = vmul.f32 %v1251, %v1255
        %v1257 = vmul.f32 %v189, %v1256
        %vm1258 = vcmp.eq.f32.partialorder %v189, inf
        %v1259 = vsel %vm1258, %v189, %v1257
        %vm1260 = vcmp.eq.f32.partialorder %v189, 0.0
        %v1261 = vand.u32 %v189, 2147483648
        %v1262 = vsel %vm1260, %v1261, %v1259
        %v1263 = vrsqrt.pop %v190
        %v1264 = vmul.f32 %v1263, %v190
        %v1265 = vmul.f32 %v1264, %v1263
        %v1266 = vmul.f32 0.5, %v1265
        %v1267 = vsub.f32 1.5, %v1266
        %v1268 = vmul.f32 %v1263, %v1267
        %v1269 = vmul.f32 %v190, %v1268
        %vm1270 = vcmp.eq.f32.partialorder %v190, inf
        %v1271 = vsel %vm1270, %v190, %v1269
        %vm1272 = vcmp.eq.f32.partialorder %v190, 0.0
        %v1273 = vand.u32 %v190, 2147483648
        %v1274 = vsel %vm1272, %v1273, %v1271
        %v1275 = vrsqrt.pop %v191
        %v1276 = vmul.f32 %v1275, %v191
        %v1277 = vmul.f32 %v1276, %v1275
        %v1278 = vmul.f32 0.5, %v1277
        %v1279 = vsub.f32 1.5, %v1278
        %v1280 = vmul.f32 %v1275, %v1279
        %v1281 = vmul.f32 %v191, %v1280
        %vm1282 = vcmp.eq.f32.partialorder %v191, inf
        %v1283 = vsel %vm1282, %v191, %v1281
        %vm1284 = vcmp.eq.f32.partialorder %v191, 0.0
        %v1285 = vand.u32 %v191, 2147483648
        %v1286 = vsel %vm1284, %v1285, %v1283
        %v1287 = vrsqrt.pop %v192
        %v1288 = vmul.f32 %v1287, %v192
        %v1289 = vmul.f32 %v1288, %v1287
        %v1290 = vmul.f32 0.5, %v1289
        %v1291 = vsub.f32 1.5, %v1290
        %v1292 = vmul.f32 %v1287, %v1291
        %v1293 = vmul.f32 %v192, %v1292
        %vm1294 = vcmp.eq.f32.partialorder %v192, inf
        %v1295 = vsel %vm1294, %v192, %v1293
        %vm1296 = vcmp.eq.f32.partialorder %v192, 0.0
        %v1297 = vand.u32 %v192, 2147483648
        %v1298 = vsel %vm1296, %v1297, %v1295
        %v1299 = vrsqrt.pop %v193
        %v1300 = vmul.f32 %v1299, %v193
        %v1301 = vmul.f32 %v1300, %v1299
        %v1302 = vmul.f32 0.5, %v1301
        %v1303 = vsub.f32 1.5, %v1302
        %v1304 = vmul.f32 %v1299, %v1303
        %v1305 = vmul.f32 %v193, %v1304
        %vm1306 = vcmp.eq.f32.partialorder %v193, inf
        %v1307 = vsel %vm1306, %v193, %v1305
        %vm1308 = vcmp.eq.f32.partialorder %v193, 0.0
        %v1309 = vand.u32 %v193, 2147483648
        %v1310 = vsel %vm1308, %v1309, %v1307
        %v1311 = vrsqrt.pop %v194
        %v1312 = vmul.f32 %v1311, %v194
        %v1313 = vmul.f32 %v1312, %v1311
        %v1314 = vmul.f32 0.5, %v1313
        %v1315 = vsub.f32 1.5, %v1314
        %v1316 = vmul.f32 %v1311, %v1315
        %v1317 = vmul.f32 %v194, %v1316
        %vm1318 = vcmp.eq.f32.partialorder %v194, inf
        %v1319 = vsel %vm1318, %v194, %v1317
        %vm1320 = vcmp.eq.f32.partialorder %v194, 0.0
        %v1321 = vand.u32 %v194, 2147483648
        %v1322 = vsel %vm1320, %v1321, %v1319
        %v1323 = vrsqrt.pop %v195
        %v1324 = vmul.f32 %v1323, %v195
        %v1325 = vmul.f32 %v1324, %v1323
        %v1326 = vmul.f32 0.5, %v1325
        %v1327 = vsub.f32 1.5, %v1326
        %v1328 = vmul.f32 %v1323, %v1327
        %v1329 = vmul.f32 %v195, %v1328
        %vm1330 = vcmp.eq.f32.partialorder %v195, inf
        %v1331 = vsel %vm1330, %v195, %v1329
        %vm1332 = vcmp.eq.f32.partialorder %v195, 0.0
        %v1333 = vand.u32 %v195, 2147483648
        %v1334 = vsel %vm1332, %v1333, %v1331
        %v1335 = vrsqrt.pop %v196
        %v1336 = vmul.f32 %v1335, %v196
        %v1337 = vmul.f32 %v1336, %v1335
        %v1338 = vmul.f32 0.5, %v1337
        %v1339 = vsub.f32 1.5, %v1338
        %v1340 = vmul.f32 %v1335, %v1339
        %v1341 = vmul.f32 %v196, %v1340
        %vm1342 = vcmp.eq.f32.partialorder %v196, inf
        %v1343 = vsel %vm1342, %v196, %v1341
        %vm1344 = vcmp.eq.f32.partialorder %v196, 0.0
        %v1345 = vand.u32 %v196, 2147483648
        %v1346 = vsel %vm1344, %v1345, %v1343
        %v1347 = vrsqrt.pop %v197
        %v1348 = vmul.f32 %v1347, %v197
        %v1349 = vmul.f32 %v1348, %v1347
        %v1350 = vmul.f32 0.5, %v1349
        %v1351 = vsub.f32 1.5, %v1350
        %v1352 = vmul.f32 %v1347, %v1351
        %v1353 = vmul.f32 %v197, %v1352
        %vm1354 = vcmp.eq.f32.partialorder %v197, inf
        %v1355 = vsel %vm1354, %v197, %v1353
        %vm1356 = vcmp.eq.f32.partialorder %v197, 0.0
        %v1357 = vand.u32 %v197, 2147483648
        %v1358 = vsel %vm1356, %v1357, %v1355
        %v1359 = vrsqrt.pop %v198
        %v1360 = vmul.f32 %v1359, %v198
        %v1361 = vmul.f32 %v1360, %v1359
        %v1362 = vmul.f32 0.5, %v1361
        %v1363 = vsub.f32 1.5, %v1362
        %v1364 = vmul.f32 %v1359, %v1363
        %v1365 = vmul.f32 %v198, %v1364
        %vm1366 = vcmp.eq.f32.partialorder %v198, inf
        %v1367 = vsel %vm1366, %v198, %v1365
        %vm1368 = vcmp.eq.f32.partialorder %v198, 0.0
        %v1369 = vand.u32 %v198, 2147483648
        %v1370 = vsel %vm1368, %v1369, %v1367
        %v1371 = vrsqrt.pop %v199
        %v1372 = vmul.f32 %v1371, %v199
        %v1373 = vmul.f32 %v1372, %v1371
        %v1374 = vmul.f32 0.5, %v1373
        %v1375 = vsub.f32 1.5, %v1374
        %v1376 = vmul.f32 %v1371, %v1375
        %v1377 = vmul.f32 %v199, %v1376
        %vm1378 = vcmp.eq.f32.partialorder %v199, inf
        %v1379 = vsel %vm1378, %v199, %v1377
        %vm1380 = vcmp.eq.f32.partialorder %v199, 0.0
        %v1381 = vand.u32 %v199, 2147483648
        %v1382 = vsel %vm1380, %v1381, %v1379
        %v1383 = vrsqrt.pop %v200
        %v1384 = vmul.f32 %v1383, %v200
        %v1385 = vmul.f32 %v1384, %v1383
        %v1386 = vmul.f32 0.5, %v1385
        %v1387 = vsub.f32 1.5, %v1386
        %v1388 = vmul.f32 %v1383, %v1387
        %v1389 = vmul.f32 %v200, %v1388
        %vm1390 = vcmp.eq.f32.partialorder %v200, inf
        %v1391 = vsel %vm1390, %v200, %v1389
        %vm1392 = vcmp.eq.f32.partialorder %v200, 0.0
        %v1393 = vand.u32 %v200, 2147483648
        %v1394 = vsel %vm1392, %v1393, %v1391
        %v1395 = vrsqrt.pop %v201
        %v1396 = vmul.f32 %v1395, %v201
        %v1397 = vmul.f32 %v1396, %v1395
        %v1398 = vmul.f32 0.5, %v1397
        %v1399 = vsub.f32 1.5, %v1398
        %v1400 = vmul.f32 %v1395, %v1399
        %v1401 = vmul.f32 %v201, %v1400
        %vm1402 = vcmp.eq.f32.partialorder %v201, inf
        %v1403 = vsel %vm1402, %v201, %v1401
        %vm1404 = vcmp.eq.f32.partialorder %v201, 0.0
        %v1405 = vand.u32 %v201, 2147483648
        %v1406 = vsel %vm1404, %v1405, %v1403
        %v1407 = vrsqrt.pop %v202
        %v1408 = vmul.f32 %v1407, %v202
        %v1409 = vmul.f32 %v1408, %v1407
        %v1410 = vmul.f32 0.5, %v1409
        %v1411 = vsub.f32 1.5, %v1410
        %v1412 = vmul.f32 %v1407, %v1411
        %v1413 = vmul.f32 %v202, %v1412
        %vm1414 = vcmp.eq.f32.partialorder %v202, inf
        %v1415 = vsel %vm1414, %v202, %v1413
        %vm1416 = vcmp.eq.f32.partialorder %v202, 0.0
        %v1417 = vand.u32 %v202, 2147483648
        %v1418 = vsel %vm1416, %v1417, %v1415
        %v1419 = vrsqrt.pop %v203
        %v1420 = vmul.f32 %v1419, %v203
        %v1421 = vmul.f32 %v1420, %v1419
        %v1422 = vmul.f32 0.5, %v1421
        %v1423 = vsub.f32 1.5, %v1422
        %v1424 = vmul.f32 %v1419, %v1423
        %v1425 = vmul.f32 %v203, %v1424
        %vm1426 = vcmp.eq.f32.partialorder %v203, inf
        %v1427 = vsel %vm1426, %v203, %v1425
        %vm1428 = vcmp.eq.f32.partialorder %v203, 0.0
        %v1429 = vand.u32 %v203, 2147483648
        %v1430 = vsel %vm1428, %v1429, %v1427
        %v1431 = vrsqrt.pop %v204
        %v1432 = vmul.f32 %v1431, %v204
        %v1433 = vmul.f32 %v1432, %v1431
        %v1434 = vmul.f32 0.5, %v1433
        %v1435 = vsub.f32 1.5, %v1434
        %v1436 = vmul.f32 %v1431, %v1435
        %v1437 = vmul.f32 %v204, %v1436
        %vm1438 = vcmp.eq.f32.partialorder %v204, inf
        %v1439 = vsel %vm1438, %v204, %v1437
        %vm1440 = vcmp.eq.f32.partialorder %v204, 0.0
        %v1441 = vand.u32 %v204, 2147483648
        %v1442 = vsel %vm1440, %v1441, %v1439
        %v1443 = vrsqrt.pop %v205
        %v1444 = vmul.f32 %v1443, %v205
        %v1445 = vmul.f32 %v1444, %v1443
        %v1446 = vmul.f32 0.5, %v1445
        %v1447 = vsub.f32 1.5, %v1446
        %v1448 = vmul.f32 %v1443, %v1447
        %v1449 = vmul.f32 %v205, %v1448
        %vm1450 = vcmp.eq.f32.partialorder %v205, inf
        %v1451 = vsel %vm1450, %v205, %v1449
        %vm1452 = vcmp.eq.f32.partialorder %v205, 0.0
        %v1453 = vand.u32 %v205, 2147483648
        %v1454 = vsel %vm1452, %v1453, %v1451
        %v1455 = vrsqrt.pop %v206
        %v1456 = vmul.f32 %v1455, %v206
        %v1457 = vmul.f32 %v1456, %v1455
        %v1458 = vmul.f32 0.5, %v1457
        %v1459 = vsub.f32 1.5, %v1458
        %v1460 = vmul.f32 %v1455, %v1459
        %v1461 = vmul.f32 %v206, %v1460
        %vm1462 = vcmp.eq.f32.partialorder %v206, inf
        %v1463 = vsel %vm1462, %v206, %v1461
        %vm1464 = vcmp.eq.f32.partialorder %v206, 0.0
        %v1465 = vand.u32 %v206, 2147483648
        %v1466 = vsel %vm1464, %v1465, %v1463
        %v1467 = vrsqrt.pop %v207
        %v1468 = vmul.f32 %v1467, %v207
        %v1469 = vmul.f32 %v1468, %v1467
        %v1470 = vmul.f32 0.5, %v1469
        %v1471 = vsub.f32 1.5, %v1470
        %v1472 = vmul.f32 %v1467, %v1471
        %v1473 = vmul.f32 %v207, %v1472
        %vm1474 = vcmp.eq.f32.partialorder %v207, inf
        %v1475 = vsel %vm1474, %v207, %v1473
        %vm1476 = vcmp.eq.f32.partialorder %v207, 0.0
        %v1477 = vand.u32 %v207, 2147483648
        %v1478 = vsel %vm1476, %v1477, %v1475
        %v1479 = vrsqrt.pop %v208
        %v1480 = vmul.f32 %v1479, %v208
        %v1481 = vmul.f32 %v1480, %v1479
        %v1482 = vmul.f32 0.5, %v1481
        %v1483 = vsub.f32 1.5, %v1482
        %v1484 = vmul.f32 %v1479, %v1483
        %v1485 = vmul.f32 %v208, %v1484
        %vm1486 = vcmp.eq.f32.partialorder %v208, inf
        %v1487 = vsel %vm1486, %v208, %v1485
        %vm1488 = vcmp.eq.f32.partialorder %v208, 0.0
        %v1489 = vand.u32 %v208, 2147483648
        %v1490 = vsel %vm1488, %v1489, %v1487
        %v1491 = vrsqrt.pop %v209
        %v1492 = vmul.f32 %v1491, %v209
        %v1493 = vmul.f32 %v1492, %v1491
        %v1494 = vmul.f32 0.5, %v1493
        %v1495 = vsub.f32 1.5, %v1494
        %v1496 = vmul.f32 %v1491, %v1495
        %v1497 = vmul.f32 %v209, %v1496
        %vm1498 = vcmp.eq.f32.partialorder %v209, inf
        %v1499 = vsel %vm1498, %v209, %v1497
        %vm1500 = vcmp.eq.f32.partialorder %v209, 0.0
        %v1501 = vand.u32 %v209, 2147483648
        %v1502 = vsel %vm1500, %v1501, %v1499
        %v1503 = vrsqrt.pop %v210
        %v1504 = vmul.f32 %v1503, %v210
        %v1505 = vmul.f32 %v1504, %v1503
        %v1506 = vmul.f32 0.5, %v1505
        %v1507 = vsub.f32 1.5, %v1506
        %v1508 = vmul.f32 %v1503, %v1507
        %v1509 = vmul.f32 %v210, %v1508
        %vm1510 = vcmp.eq.f32.partialorder %v210, inf
        %v1511 = vsel %vm1510, %v210, %v1509
        %vm1512 = vcmp.eq.f32.partialorder %v210, 0.0
        %v1513 = vand.u32 %v210, 2147483648
        %v1514 = vsel %vm1512, %v1513, %v1511
        %v1515 = vrsqrt.pop %v211
        %v1516 = vmul.f32 %v1515, %v211
        %v1517 = vmul.f32 %v1516, %v1515
        %v1518 = vmul.f32 0.5, %v1517
        %v1519 = vsub.f32 1.5, %v1518
        %v1520 = vmul.f32 %v1515, %v1519
        %v1521 = vmul.f32 %v211, %v1520
        %vm1522 = vcmp.eq.f32.partialorder %v211, inf
        %v1523 = vsel %vm1522, %v211, %v1521
        %vm1524 = vcmp.eq.f32.partialorder %v211, 0.0
        %v1525 = vand.u32 %v211, 2147483648
        %v1526 = vsel %vm1524, %v1525, %v1523
        %v1527 = vrsqrt.pop %v212
        %v1528 = vmul.f32 %v1527, %v212
        %v1529 = vmul.f32 %v1528, %v1527
        %v1530 = vmul.f32 0.5, %v1529
        %v1531 = vsub.f32 1.5, %v1530
        %v1532 = vmul.f32 %v1527, %v1531
        %v1533 = vmul.f32 %v212, %v1532
        %vm1534 = vcmp.eq.f32.partialorder %v212, inf
        %v1535 = vsel %vm1534, %v212, %v1533
        %vm1536 = vcmp.eq.f32.partialorder %v212, 0.0
        %v1537 = vand.u32 %v212, 2147483648
        %v1538 = vsel %vm1536, %v1537, %v1535
        %v1539 = vrsqrt.pop %v213
        %v1540 = vmul.f32 %v1539, %v213
        %v1541 = vmul.f32 %v1540, %v1539
        %v1542 = vmul.f32 0.5, %v1541
        %v1543 = vsub.f32 1.5, %v1542
        %v1544 = vmul.f32 %v1539, %v1543
        %v1545 = vmul.f32 %v213, %v1544
        %vm1546 = vcmp.eq.f32.partialorder %v213, inf
        %v1547 = vsel %vm1546, %v213, %v1545
        %vm1548 = vcmp.eq.f32.partialorder %v213, 0.0
        %v1549 = vand.u32 %v213, 2147483648
        %v1550 = vsel %vm1548, %v1549, %v1547
        %v1551 = vrsqrt.pop %v214
        %v1552 = vmul.f32 %v1551, %v214
        %v1553 = vmul.f32 %v1552, %v1551
        %v1554 = vmul.f32 0.5, %v1553
        %v1555 = vsub.f32 1.5, %v1554
        %v1556 = vmul.f32 %v1551, %v1555
        %v1557 = vmul.f32 %v214, %v1556
        %vm1558 = vcmp.eq.f32.partialorder %v214, inf
        %v1559 = vsel %vm1558, %v214, %v1557
        %vm1560 = vcmp.eq.f32.partialorder %v214, 0.0
        %v1561 = vand.u32 %v214, 2147483648
        %v1562 = vsel %vm1560, %v1561, %v1559
        %v1563 = vrsqrt.pop %v215
        %v1564 = vmul.f32 %v1563, %v215
        %v1565 = vmul.f32 %v1564, %v1563
        %v1566 = vmul.f32 0.5, %v1565
        %v1567 = vsub.f32 1.5, %v1566
        %v1568 = vmul.f32 %v1563, %v1567
        %v1569 = vmul.f32 %v215, %v1568
        %vm1570 = vcmp.eq.f32.partialorder %v215, inf
        %v1571 = vsel %vm1570, %v215, %v1569
        %vm1572 = vcmp.eq.f32.partialorder %v215, 0.0
        %v1573 = vand.u32 %v215, 2147483648
        %v1574 = vsel %vm1572, %v1573, %v1571
        %v1575 = vrsqrt.pop %v216
        %v1576 = vmul.f32 %v1575, %v216
        %v1577 = vmul.f32 %v1576, %v1575
        %v1578 = vmul.f32 0.5, %v1577
        %v1579 = vsub.f32 1.5, %v1578
        %v1580 = vmul.f32 %v1575, %v1579
        %v1581 = vmul.f32 %v216, %v1580
        %vm1582 = vcmp.eq.f32.partialorder %v216, inf
        %v1583 = vsel %vm1582, %v216, %v1581
        %vm1584 = vcmp.eq.f32.partialorder %v216, 0.0
        %v1585 = vand.u32 %v216, 2147483648
        %v1586 = vsel %vm1584, %v1585, %v1583
        %v1587 = vrsqrt.pop %v217
        %v1588 = vmul.f32 %v1587, %v217
        %v1589 = vmul.f32 %v1588, %v1587
        %v1590 = vmul.f32 0.5, %v1589
        %v1591 = vsub.f32 1.5, %v1590
        %v1592 = vmul.f32 %v1587, %v1591
        %v1593 = vmul.f32 %v217, %v1592
        %vm1594 = vcmp.eq.f32.partialorder %v217, inf
        %v1595 = vsel %vm1594, %v217, %v1593
        %vm1596 = vcmp.eq.f32.partialorder %v217, 0.0
        %v1597 = vand.u32 %v217, 2147483648
        %v1598 = vsel %vm1596, %v1597, %v1595
        %v1599 = vrsqrt.pop %v218
        %v1600 = vmul.f32 %v1599, %v218
        %v1601 = vmul.f32 %v1600, %v1599
        %v1602 = vmul.f32 0.5, %v1601
        %v1603 = vsub.f32 1.5, %v1602
        %v1604 = vmul.f32 %v1599, %v1603
        %v1605 = vmul.f32 %v218, %v1604
        %vm1606 = vcmp.eq.f32.partialorder %v218, inf
        %v1607 = vsel %vm1606, %v218, %v1605
        %vm1608 = vcmp.eq.f32.partialorder %v218, 0.0
        %v1609 = vand.u32 %v218, 2147483648
        %v1610 = vsel %vm1608, %v1609, %v1607
        %v1611 = vrsqrt.pop %v219
        %v1612 = vmul.f32 %v1611, %v219
        %v1613 = vmul.f32 %v1612, %v1611
        %v1614 = vmul.f32 0.5, %v1613
        %v1615 = vsub.f32 1.5, %v1614
        %v1616 = vmul.f32 %v1611, %v1615
        %v1617 = vmul.f32 %v219, %v1616
        %vm1618 = vcmp.eq.f32.partialorder %v219, inf
        %v1619 = vsel %vm1618, %v219, %v1617
        %vm1620 = vcmp.eq.f32.partialorder %v219, 0.0
        %v1621 = vand.u32 %v219, 2147483648
        %v1622 = vsel %vm1620, %v1621, %v1619
        %v1623 = vrsqrt.pop %v220
        %v1624 = vmul.f32 %v1623, %v220
        %v1625 = vmul.f32 %v1624, %v1623
        %v1626 = vmul.f32 0.5, %v1625
        %v1627 = vsub.f32 1.5, %v1626
        %v1628 = vmul.f32 %v1623, %v1627
        %v1629 = vmul.f32 %v220, %v1628
        %vm1630 = vcmp.eq.f32.partialorder %v220, inf
        %v1631 = vsel %vm1630, %v220, %v1629
        %vm1632 = vcmp.eq.f32.partialorder %v220, 0.0
        %v1633 = vand.u32 %v220, 2147483648
        %v1634 = vsel %vm1632, %v1633, %v1631
        %v1635 = vrsqrt.pop %v221
        %v1636 = vmul.f32 %v1635, %v221
        %v1637 = vmul.f32 %v1636, %v1635
        %v1638 = vmul.f32 0.5, %v1637
        %v1639 = vsub.f32 1.5, %v1638
        %v1640 = vmul.f32 %v1635, %v1639
        %v1641 = vmul.f32 %v221, %v1640
        %vm1642 = vcmp.eq.f32.partialorder %v221, inf
        %v1643 = vsel %vm1642, %v221, %v1641
        %vm1644 = vcmp.eq.f32.partialorder %v221, 0.0
        %v1645 = vand.u32 %v221, 2147483648
        %v1646 = vsel %vm1644, %v1645, %v1643
        %v1647 = vrsqrt.pop %v222
        %v1648 = vmul.f32 %v1647, %v222
        %v1649 = vmul.f32 %v1648, %v1647
        %v1650 = vmul.f32 0.5, %v1649
        %v1651 = vsub.f32 1.5, %v1650
        %v1652 = vmul.f32 %v1647, %v1651
        %v1653 = vmul.f32 %v222, %v1652
        %vm1654 = vcmp.eq.f32.partialorder %v222, inf
        %v1655 = vsel %vm1654, %v222, %v1653
        %vm1656 = vcmp.eq.f32.partialorder %v222, 0.0
        %v1657 = vand.u32 %v222, 2147483648
        %v1658 = vsel %vm1656, %v1657, %v1655
        %v1659 = vrsqrt.pop %v223
        %v1660 = vmul.f32 %v1659, %v223
        %v1661 = vmul.f32 %v1660, %v1659
        %v1662 = vmul.f32 0.5, %v1661
        %v1663 = vsub.f32 1.5, %v1662
        %v1664 = vmul.f32 %v1659, %v1663
        %v1665 = vmul.f32 %v223, %v1664
        %vm1666 = vcmp.eq.f32.partialorder %v223, inf
        %v1667 = vsel %vm1666, %v223, %v1665
        %vm1668 = vcmp.eq.f32.partialorder %v223, 0.0
        %v1669 = vand.u32 %v223, 2147483648
        %v1670 = vsel %vm1668, %v1669, %v1667
        %v1671 = vrsqrt.pop %v224
        %v1672 = vmul.f32 %v1671, %v224
        %v1673 = vmul.f32 %v1672, %v1671
        %v1674 = vmul.f32 0.5, %v1673
        %v1675 = vsub.f32 1.5, %v1674
        %v1676 = vmul.f32 %v1671, %v1675
        %v1677 = vmul.f32 %v224, %v1676
        %vm1678 = vcmp.eq.f32.partialorder %v224, inf
        %v1679 = vsel %vm1678, %v224, %v1677
        %vm1680 = vcmp.eq.f32.partialorder %v224, 0.0
        %v1681 = vand.u32 %v224, 2147483648
        %v1682 = vsel %vm1680, %v1681, %v1679
        %v1683 = vrsqrt.pop %v225
        %v1684 = vmul.f32 %v1683, %v225
        %v1685 = vmul.f32 %v1684, %v1683
        %v1686 = vmul.f32 0.5, %v1685
        %v1687 = vsub.f32 1.5, %v1686
        %v1688 = vmul.f32 %v1683, %v1687
        %v1689 = vmul.f32 %v225, %v1688
        %vm1690 = vcmp.eq.f32.partialorder %v225, inf
        %v1691 = vsel %vm1690, %v225, %v1689
        %vm1692 = vcmp.eq.f32.partialorder %v225, 0.0
        %v1693 = vand.u32 %v225, 2147483648
        %v1694 = vsel %vm1692, %v1693, %v1691
        %v1695 = vrsqrt.pop %v226
        %v1696 = vmul.f32 %v1695, %v226
        %v1697 = vmul.f32 %v1696, %v1695
        %v1698 = vmul.f32 0.5, %v1697
        %v1699 = vsub.f32 1.5, %v1698
        %v1700 = vmul.f32 %v1695, %v1699
        %v1701 = vmul.f32 %v226, %v1700
        %vm1702 = vcmp.eq.f32.partialorder %v226, inf
        %v1703 = vsel %vm1702, %v226, %v1701
        %vm1704 = vcmp.eq.f32.partialorder %v226, 0.0
        %v1705 = vand.u32 %v226, 2147483648
        %v1706 = vsel %vm1704, %v1705, %v1703
        %v1707 = vrsqrt.pop %v227
        %v1708 = vmul.f32 %v1707, %v227
        %v1709 = vmul.f32 %v1708, %v1707
        %v1710 = vmul.f32 0.5, %v1709
        %v1711 = vsub.f32 1.5, %v1710
        %v1712 = vmul.f32 %v1707, %v1711
        %v1713 = vmul.f32 %v227, %v1712
        %vm1714 = vcmp.eq.f32.partialorder %v227, inf
        %v1715 = vsel %vm1714, %v227, %v1713
        %vm1716 = vcmp.eq.f32.partialorder %v227, 0.0
        %v1717 = vand.u32 %v227, 2147483648
        %v1718 = vsel %vm1716, %v1717, %v1715
        %v1719 = vrsqrt.pop %v228
        %v1720 = vmul.f32 %v1719, %v228
        %v1721 = vmul.f32 %v1720, %v1719
        %v1722 = vmul.f32 0.5, %v1721
        %v1723 = vsub.f32 1.5, %v1722
        %v1724 = vmul.f32 %v1719, %v1723
        %v1725 = vmul.f32 %v228, %v1724
        %vm1726 = vcmp.eq.f32.partialorder %v228, inf
        %v1727 = vsel %vm1726, %v228, %v1725
        %vm1728 = vcmp.eq.f32.partialorder %v228, 0.0
        %v1729 = vand.u32 %v228, 2147483648
        %v1730 = vsel %vm1728, %v1729, %v1727
        %v1731 = vrsqrt.pop %v229
        %v1732 = vmul.f32 %v1731, %v229
        %v1733 = vmul.f32 %v1732, %v1731
        %v1734 = vmul.f32 0.5, %v1733
        %v1735 = vsub.f32 1.5, %v1734
        %v1736 = vmul.f32 %v1731, %v1735
        %v1737 = vmul.f32 %v229, %v1736
        %vm1738 = vcmp.eq.f32.partialorder %v229, inf
        %v1739 = vsel %vm1738, %v229, %v1737
        %vm1740 = vcmp.eq.f32.partialorder %v229, 0.0
        %v1741 = vand.u32 %v229, 2147483648
        %v1742 = vsel %vm1740, %v1741, %v1739
        %v1743 = vrsqrt.pop %v230
        %v1744 = vmul.f32 %v1743, %v230
        %v1745 = vmul.f32 %v1744, %v1743
        %v1746 = vmul.f32 0.5, %v1745
        %v1747 = vsub.f32 1.5, %v1746
        %v1748 = vmul.f32 %v1743, %v1747
        %v1749 = vmul.f32 %v230, %v1748
        %vm1750 = vcmp.eq.f32.partialorder %v230, inf
        %v1751 = vsel %vm1750, %v230, %v1749
        %vm1752 = vcmp.eq.f32.partialorder %v230, 0.0
        %v1753 = vand.u32 %v230, 2147483648
        %v1754 = vsel %vm1752, %v1753, %v1751
        %v1755 = vrsqrt.pop %v231
        %v1756 = vmul.f32 %v1755, %v231
        %v1757 = vmul.f32 %v1756, %v1755
        %v1758 = vmul.f32 0.5, %v1757
        %v1759 = vsub.f32 1.5, %v1758
        %v1760 = vmul.f32 %v1755, %v1759
        %v1761 = vmul.f32 %v231, %v1760
        %vm1762 = vcmp.eq.f32.partialorder %v231, inf
        %v1763 = vsel %vm1762, %v231, %v1761
        %vm1764 = vcmp.eq.f32.partialorder %v231, 0.0
        %v1765 = vand.u32 %v231, 2147483648
        %v1766 = vsel %vm1764, %v1765, %v1763
        %v1767 = vrsqrt.pop %v232
        %v1768 = vmul.f32 %v1767, %v232
        %v1769 = vmul.f32 %v1768, %v1767
        %v1770 = vmul.f32 0.5, %v1769
        %v1771 = vsub.f32 1.5, %v1770
        %v1772 = vmul.f32 %v1767, %v1771
        %v1773 = vmul.f32 %v232, %v1772
        %vm1774 = vcmp.eq.f32.partialorder %v232, inf
        %v1775 = vsel %vm1774, %v232, %v1773
        %vm1776 = vcmp.eq.f32.partialorder %v232, 0.0
        %v1777 = vand.u32 %v232, 2147483648
        %v1778 = vsel %vm1776, %v1777, %v1775
        %v1779 = vrsqrt.pop %v233
        %v1780 = vmul.f32 %v1779, %v233
        %v1781 = vmul.f32 %v1780, %v1779
        %v1782 = vmul.f32 0.5, %v1781
        %v1783 = vsub.f32 1.5, %v1782
        %v1784 = vmul.f32 %v1779, %v1783
        %v1785 = vmul.f32 %v233, %v1784
        %vm1786 = vcmp.eq.f32.partialorder %v233, inf
        %v1787 = vsel %vm1786, %v233, %v1785
        %vm1788 = vcmp.eq.f32.partialorder %v233, 0.0
        %v1789 = vand.u32 %v233, 2147483648
        %v1790 = vsel %vm1788, %v1789, %v1787
        %v1791 = vrsqrt.pop %v234
        %v1792 = vmul.f32 %v1791, %v234
        %v1793 = vmul.f32 %v1792, %v1791
        %v1794 = vmul.f32 0.5, %v1793
        %v1795 = vsub.f32 1.5, %v1794
        %v1796 = vmul.f32 %v1791, %v1795
        %v1797 = vmul.f32 %v234, %v1796
        %vm1798 = vcmp.eq.f32.partialorder %v234, inf
        %v1799 = vsel %vm1798, %v234, %v1797
        %vm1800 = vcmp.eq.f32.partialorder %v234, 0.0
        %v1801 = vand.u32 %v234, 2147483648
        %v1802 = vsel %vm1800, %v1801, %v1799
        %v1803 = vrsqrt.pop %v235
        %v1804 = vmul.f32 %v1803, %v235
        %v1805 = vmul.f32 %v1804, %v1803
        %v1806 = vmul.f32 0.5, %v1805
        %v1807 = vsub.f32 1.5, %v1806
        %v1808 = vmul.f32 %v1803, %v1807
        %v1809 = vmul.f32 %v235, %v1808
        %vm1810 = vcmp.eq.f32.partialorder %v235, inf
        %v1811 = vsel %vm1810, %v235, %v1809
        %vm1812 = vcmp.eq.f32.partialorder %v235, 0.0
        %v1813 = vand.u32 %v235, 2147483648
        %v1814 = vsel %vm1812, %v1813, %v1811
        %v1815 = vrsqrt.pop %v236
        %v1816 = vmul.f32 %v1815, %v236
        %v1817 = vmul.f32 %v1816, %v1815
        %v1818 = vmul.f32 0.5, %v1817
        %v1819 = vsub.f32 1.5, %v1818
        %v1820 = vmul.f32 %v1815, %v1819
        %v1821 = vmul.f32 %v236, %v1820
        %vm1822 = vcmp.eq.f32.partialorder %v236, inf
        %v1823 = vsel %vm1822, %v236, %v1821
        %vm1824 = vcmp.eq.f32.partialorder %v236, 0.0
        %v1825 = vand.u32 %v236, 2147483648
        %v1826 = vsel %vm1824, %v1825, %v1823
        %v1827 = vrsqrt.pop %v237
        %v1828 = vmul.f32 %v1827, %v237
        %v1829 = vmul.f32 %v1828, %v1827
        %v1830 = vmul.f32 0.5, %v1829
        %v1831 = vsub.f32 1.5, %v1830
        %v1832 = vmul.f32 %v1827, %v1831
        %v1833 = vmul.f32 %v237, %v1832
        %vm1834 = vcmp.eq.f32.partialorder %v237, inf
        %v1835 = vsel %vm1834, %v237, %v1833
        %vm1836 = vcmp.eq.f32.partialorder %v237, 0.0
        %v1837 = vand.u32 %v237, 2147483648
        %v1838 = vsel %vm1836, %v1837, %v1835
        %v1839 = vrsqrt.pop %v238
        %v1840 = vmul.f32 %v1839, %v238
        %v1841 = vmul.f32 %v1840, %v1839
        %v1842 = vmul.f32 0.5, %v1841
        %v1843 = vsub.f32 1.5, %v1842
        %v1844 = vmul.f32 %v1839, %v1843
        %v1845 = vmul.f32 %v238, %v1844
        %vm1846 = vcmp.eq.f32.partialorder %v238, inf
        %v1847 = vsel %vm1846, %v238, %v1845
        %vm1848 = vcmp.eq.f32.partialorder %v238, 0.0
        %v1849 = vand.u32 %v238, 2147483648
        %v1850 = vsel %vm1848, %v1849, %v1847
        %v1851 = vrsqrt.pop %v239
        %v1852 = vmul.f32 %v1851, %v239
        %v1853 = vmul.f32 %v1852, %v1851
        %v1854 = vmul.f32 0.5, %v1853
        %v1855 = vsub.f32 1.5, %v1854
        %v1856 = vmul.f32 %v1851, %v1855
        %v1857 = vmul.f32 %v239, %v1856
        %vm1858 = vcmp.eq.f32.partialorder %v239, inf
        %v1859 = vsel %vm1858, %v239, %v1857
        %vm1860 = vcmp.eq.f32.partialorder %v239, 0.0
        %v1861 = vand.u32 %v239, 2147483648
        %v1862 = vsel %vm1860, %v1861, %v1859
        %v1863 = vrsqrt.pop %v240
        %v1864 = vmul.f32 %v1863, %v240
        %v1865 = vmul.f32 %v1864, %v1863
        %v1866 = vmul.f32 0.5, %v1865
        %v1867 = vsub.f32 1.5, %v1866
        %v1868 = vmul.f32 %v1863, %v1867
        %v1869 = vmul.f32 %v240, %v1868
        %vm1870 = vcmp.eq.f32.partialorder %v240, inf
        %v1871 = vsel %vm1870, %v240, %v1869
        %vm1872 = vcmp.eq.f32.partialorder %v240, 0.0
        %v1873 = vand.u32 %v240, 2147483648
        %v1874 = vsel %vm1872, %v1873, %v1871
        %v1875 = vrsqrt.pop %v241
        %v1876 = vmul.f32 %v1875, %v241
        %v1877 = vmul.f32 %v1876, %v1875
        %v1878 = vmul.f32 0.5, %v1877
        %v1879 = vsub.f32 1.5, %v1878
        %v1880 = vmul.f32 %v1875, %v1879
        %v1881 = vmul.f32 %v241, %v1880
        %vm1882 = vcmp.eq.f32.partialorder %v241, inf
        %v1883 = vsel %vm1882, %v241, %v1881
        %vm1884 = vcmp.eq.f32.partialorder %v241, 0.0
        %v1885 = vand.u32 %v241, 2147483648
        %v1886 = vsel %vm1884, %v1885, %v1883
        %v1887 = vrsqrt.pop %v242
        %v1888 = vmul.f32 %v1887, %v242
        %v1889 = vmul.f32 %v1888, %v1887
        %v1890 = vmul.f32 0.5, %v1889
        %v1891 = vsub.f32 1.5, %v1890
        %v1892 = vmul.f32 %v1887, %v1891
        %v1893 = vmul.f32 %v242, %v1892
        %vm1894 = vcmp.eq.f32.partialorder %v242, inf
        %v1895 = vsel %vm1894, %v242, %v1893
        %vm1896 = vcmp.eq.f32.partialorder %v242, 0.0
        %v1897 = vand.u32 %v242, 2147483648
        %v1898 = vsel %vm1896, %v1897, %v1895
        %v1899 = vrsqrt.pop %v243
        %v1900 = vmul.f32 %v1899, %v243
        %v1901 = vmul.f32 %v1900, %v1899
        %v1902 = vmul.f32 0.5, %v1901
        %v1903 = vsub.f32 1.5, %v1902
        %v1904 = vmul.f32 %v1899, %v1903
        %v1905 = vmul.f32 %v243, %v1904
        %vm1906 = vcmp.eq.f32.partialorder %v243, inf
        %v1907 = vsel %vm1906, %v243, %v1905
        %vm1908 = vcmp.eq.f32.partialorder %v243, 0.0
        %v1909 = vand.u32 %v243, 2147483648
        %v1910 = vsel %vm1908, %v1909, %v1907
        %v1911 = vrsqrt.pop %v244
        %v1912 = vmul.f32 %v1911, %v244
        %v1913 = vmul.f32 %v1912, %v1911
        %v1914 = vmul.f32 0.5, %v1913
        %v1915 = vsub.f32 1.5, %v1914
        %v1916 = vmul.f32 %v1911, %v1915
        %v1917 = vmul.f32 %v244, %v1916
        %vm1918 = vcmp.eq.f32.partialorder %v244, inf
        %v1919 = vsel %vm1918, %v244, %v1917
        %vm1920 = vcmp.eq.f32.partialorder %v244, 0.0
        %v1921 = vand.u32 %v244, 2147483648
        %v1922 = vsel %vm1920, %v1921, %v1919
        %v1923 = vrsqrt.pop %v245
        %v1924 = vmul.f32 %v1923, %v245
        %v1925 = vmul.f32 %v1924, %v1923
        %v1926 = vmul.f32 0.5, %v1925
        %v1927 = vsub.f32 1.5, %v1926
        %v1928 = vmul.f32 %v1923, %v1927
        %v1929 = vmul.f32 %v245, %v1928
        %vm1930 = vcmp.eq.f32.partialorder %v245, inf
        %v1931 = vsel %vm1930, %v245, %v1929
        %vm1932 = vcmp.eq.f32.partialorder %v245, 0.0
        %v1933 = vand.u32 %v245, 2147483648
        %v1934 = vsel %vm1932, %v1933, %v1931
        %v1935 = vrsqrt.pop %v246
        %v1936 = vmul.f32 %v1935, %v246
        %v1937 = vmul.f32 %v1936, %v1935
        %v1938 = vmul.f32 0.5, %v1937
        %v1939 = vsub.f32 1.5, %v1938
        %v1940 = vmul.f32 %v1935, %v1939
        %v1941 = vmul.f32 %v246, %v1940
        %vm1942 = vcmp.eq.f32.partialorder %v246, inf
        %v1943 = vsel %vm1942, %v246, %v1941
        %vm1944 = vcmp.eq.f32.partialorder %v246, 0.0
        %v1945 = vand.u32 %v246, 2147483648
        %v1946 = vsel %vm1944, %v1945, %v1943
        %v1947 = vrsqrt.pop %v247
        %v1948 = vmul.f32 %v1947, %v247
        %v1949 = vmul.f32 %v1948, %v1947
        %v1950 = vmul.f32 0.5, %v1949
        %v1951 = vsub.f32 1.5, %v1950
        %v1952 = vmul.f32 %v1947, %v1951
        %v1953 = vmul.f32 %v247, %v1952
        %vm1954 = vcmp.eq.f32.partialorder %v247, inf
        %v1955 = vsel %vm1954, %v247, %v1953
        %vm1956 = vcmp.eq.f32.partialorder %v247, 0.0
        %v1957 = vand.u32 %v247, 2147483648
        %v1958 = vsel %vm1956, %v1957, %v1955
        %v1959 = vrsqrt.pop %v248
        %v1960 = vmul.f32 %v1959, %v248
        %v1961 = vmul.f32 %v1960, %v1959
        %v1962 = vmul.f32 0.5, %v1961
        %v1963 = vsub.f32 1.5, %v1962
        %v1964 = vmul.f32 %v1959, %v1963
        %v1965 = vmul.f32 %v248, %v1964
        %vm1966 = vcmp.eq.f32.partialorder %v248, inf
        %v1967 = vsel %vm1966, %v248, %v1965
        %vm1968 = vcmp.eq.f32.partialorder %v248, 0.0
        %v1969 = vand.u32 %v248, 2147483648
        %v1970 = vsel %vm1968, %v1969, %v1967
        %v1971 = vrsqrt.pop %v249
        %v1972 = vmul.f32 %v1971, %v249
        %v1973 = vmul.f32 %v1972, %v1971
        %v1974 = vmul.f32 0.5, %v1973
        %v1975 = vsub.f32 1.5, %v1974
        %v1976 = vmul.f32 %v1971, %v1975
        %v1977 = vmul.f32 %v249, %v1976
        %vm1978 = vcmp.eq.f32.partialorder %v249, inf
        %v1979 = vsel %vm1978, %v249, %v1977
        %vm1980 = vcmp.eq.f32.partialorder %v249, 0.0
        %v1981 = vand.u32 %v249, 2147483648
        %v1982 = vsel %vm1980, %v1981, %v1979
        %v1983 = vrsqrt.pop %v250
        %v1984 = vmul.f32 %v1983, %v250
        %v1985 = vmul.f32 %v1984, %v1983
        %v1986 = vmul.f32 0.5, %v1985
        %v1987 = vsub.f32 1.5, %v1986
        %v1988 = vmul.f32 %v1983, %v1987
        %v1989 = vmul.f32 %v250, %v1988
        %vm1990 = vcmp.eq.f32.partialorder %v250, inf
        %v1991 = vsel %vm1990, %v250, %v1989
        %vm1992 = vcmp.eq.f32.partialorder %v250, 0.0
        %v1993 = vand.u32 %v250, 2147483648
        %v1994 = vsel %vm1992, %v1993, %v1991
        %v1995 = vrsqrt.pop %v251
        %v1996 = vmul.f32 %v1995, %v251
        %v1997 = vmul.f32 %v1996, %v1995
        %v1998 = vmul.f32 0.5, %v1997
        %v1999 = vsub.f32 1.5, %v1998
        %v2000 = vmul.f32 %v1995, %v1999
        %v2001 = vmul.f32 %v251, %v2000
        %vm2002 = vcmp.eq.f32.partialorder %v251, inf
        %v2003 = vsel %vm2002, %v251, %v2001
        %vm2004 = vcmp.eq.f32.partialorder %v251, 0.0
        %v2005 = vand.u32 %v251, 2147483648
        %v2006 = vsel %vm2004, %v2005, %v2003
        %v2007 = vrsqrt.pop %v252
        %v2008 = vmul.f32 %v2007, %v252
        %v2009 = vmul.f32 %v2008, %v2007
        %v2010 = vmul.f32 0.5, %v2009
        %v2011 = vsub.f32 1.5, %v2010
        %v2012 = vmul.f32 %v2007, %v2011
        %v2013 = vmul.f32 %v252, %v2012
        %vm2014 = vcmp.eq.f32.partialorder %v252, inf
        %v2015 = vsel %vm2014, %v252, %v2013
        %vm2016 = vcmp.eq.f32.partialorder %v252, 0.0
        %v2017 = vand.u32 %v252, 2147483648
        %v2018 = vsel %vm2016, %v2017, %v2015
        %v2019 = vrsqrt.pop %v253
        %v2020 = vmul.f32 %v2019, %v253
        %v2021 = vmul.f32 %v2020, %v2019
        %v2022 = vmul.f32 0.5, %v2021
        %v2023 = vsub.f32 1.5, %v2022
        %v2024 = vmul.f32 %v2019, %v2023
        %v2025 = vmul.f32 %v253, %v2024
        %vm2026 = vcmp.eq.f32.partialorder %v253, inf
        %v2027 = vsel %vm2026, %v253, %v2025
        %vm2028 = vcmp.eq.f32.partialorder %v253, 0.0
        %v2029 = vand.u32 %v253, 2147483648
        %v2030 = vsel %vm2028, %v2029, %v2027
        %v2031 = vrsqrt.pop %v254
        %v2032 = vmul.f32 %v2031, %v254
        %v2033 = vmul.f32 %v2032, %v2031
        %v2034 = vmul.f32 0.5, %v2033
        %v2035 = vsub.f32 1.5, %v2034
        %v2036 = vmul.f32 %v2031, %v2035
        %v2037 = vmul.f32 %v254, %v2036
        %vm2038 = vcmp.eq.f32.partialorder %v254, inf
        %v2039 = vsel %vm2038, %v254, %v2037
        %vm2040 = vcmp.eq.f32.partialorder %v254, 0.0
        %v2041 = vand.u32 %v254, 2147483648
        %v2042 = vsel %vm2040, %v2041, %v2039
        %v2043 = vrsqrt.pop %v255
        %v2044 = vmul.f32 %v2043, %v255
        %v2045 = vmul.f32 %v2044, %v2043
        %v2046 = vmul.f32 0.5, %v2045
        %v2047 = vsub.f32 1.5, %v2046
        %v2048 = vmul.f32 %v2043, %v2047
        %v2049 = vmul.f32 %v255, %v2048
        %vm2050 = vcmp.eq.f32.partialorder %v255, inf
        %v2051 = vsel %vm2050, %v255, %v2049
        %vm2052 = vcmp.eq.f32.partialorder %v255, 0.0
        %v2053 = vand.u32 %v255, 2147483648
        %v2054 = vsel %vm2052, %v2053, %v2051
        %v2055 = vrsqrt.pop %v256
        %v2056 = vmul.f32 %v2055, %v256
        %v2057 = vmul.f32 %v2056, %v2055
        %v2058 = vmul.f32 0.5, %v2057
        %v2059 = vsub.f32 1.5, %v2058
        %v2060 = vmul.f32 %v2055, %v2059
        %v2061 = vmul.f32 %v256, %v2060
        %vm2062 = vcmp.eq.f32.partialorder %v256, inf
        %v2063 = vsel %vm2062, %v256, %v2061
        %vm2064 = vcmp.eq.f32.partialorder %v256, 0.0
        %v2065 = vand.u32 %v256, 2147483648
        %v2066 = vsel %vm2064, %v2065, %v2063
        %v2067 = vrsqrt.pop %v257
        %v2068 = vmul.f32 %v2067, %v257
        %v2069 = vmul.f32 %v2068, %v2067
        %v2070 = vmul.f32 0.5, %v2069
        %v2071 = vsub.f32 1.5, %v2070
        %v2072 = vmul.f32 %v2067, %v2071
        %v2073 = vmul.f32 %v257, %v2072
        %vm2074 = vcmp.eq.f32.partialorder %v257, inf
        %v2075 = vsel %vm2074, %v257, %v2073
        %vm2076 = vcmp.eq.f32.partialorder %v257, 0.0
        %v2077 = vand.u32 %v257, 2147483648
        %v2078 = vsel %vm2076, %v2077, %v2075
        %v2079 = vrsqrt.pop %v258
        %v2080 = vmul.f32 %v2079, %v258
        %v2081 = vmul.f32 %v2080, %v2079
        %v2082 = vmul.f32 0.5, %v2081
        %v2083 = vsub.f32 1.5, %v2082
        %v2084 = vmul.f32 %v2079, %v2083
        %v2085 = vmul.f32 %v258, %v2084
        %vm2086 = vcmp.eq.f32.partialorder %v258, inf
        %v2087 = vsel %vm2086, %v258, %v2085
        %vm2088 = vcmp.eq.f32.partialorder %v258, 0.0
        %v2089 = vand.u32 %v258, 2147483648
        %v2090 = vsel %vm2088, %v2089, %v2087
        %v2091 = vrsqrt.pop %v259
        %v2092 = vmul.f32 %v2091, %v259
        %v2093 = vmul.f32 %v2092, %v2091
        %v2094 = vmul.f32 0.5, %v2093
        %v2095 = vsub.f32 1.5, %v2094
        %v2096 = vmul.f32 %v2091, %v2095
        %v2097 = vmul.f32 %v259, %v2096
        %vm2098 = vcmp.eq.f32.partialorder %v259, inf
        %v2099 = vsel %vm2098, %v259, %v2097
        %vm2100 = vcmp.eq.f32.partialorder %v259, 0.0
        %v2101 = vand.u32 %v259, 2147483648
        %v2102 = vsel %vm2100, %v2101, %v2099
        %v2103 = vrsqrt.pop %v260
        %v2104 = vmul.f32 %v2103, %v260
        %v2105 = vmul.f32 %v2104, %v2103
        %v2106 = vmul.f32 0.5, %v2105
        %v2107 = vsub.f32 1.5, %v2106
        %v2108 = vmul.f32 %v2103, %v2107
        %v2109 = vmul.f32 %v260, %v2108
        %vm2110 = vcmp.eq.f32.partialorder %v260, inf
        %v2111 = vsel %vm2110, %v260, %v2109
        %vm2112 = vcmp.eq.f32.partialorder %v260, 0.0
        %v2113 = vand.u32 %v260, 2147483648
        %v2114 = vsel %vm2112, %v2113, %v2111
        %v2115 = vrsqrt.pop %v261
        %v2116 = vmul.f32 %v2115, %v261
        %v2117 = vmul.f32 %v2116, %v2115
        %v2118 = vmul.f32 0.5, %v2117
        %v2119 = vsub.f32 1.5, %v2118
        %v2120 = vmul.f32 %v2115, %v2119
        %v2121 = vmul.f32 %v261, %v2120
        %vm2122 = vcmp.eq.f32.partialorder %v261, inf
        %v2123 = vsel %vm2122, %v261, %v2121
        %vm2124 = vcmp.eq.f32.partialorder %v261, 0.0
        %v2125 = vand.u32 %v261, 2147483648
        %v2126 = vsel %vm2124, %v2125, %v2123
        %v2127 = vrsqrt.pop %v262
        %v2128 = vmul.f32 %v2127, %v262
        %v2129 = vmul.f32 %v2128, %v2127
        %v2130 = vmul.f32 0.5, %v2129
        %v2131 = vsub.f32 1.5, %v2130
        %v2132 = vmul.f32 %v2127, %v2131
        %v2133 = vmul.f32 %v262, %v2132
        %vm2134 = vcmp.eq.f32.partialorder %v262, inf
        %v2135 = vsel %vm2134, %v262, %v2133
        %vm2136 = vcmp.eq.f32.partialorder %v262, 0.0
        %v2137 = vand.u32 %v262, 2147483648
        %v2138 = vsel %vm2136, %v2137, %v2135
        %v2139 = vrsqrt.pop %v263
        %v2140 = vmul.f32 %v2139, %v263
        %v2141 = vmul.f32 %v2140, %v2139
        %v2142 = vmul.f32 0.5, %v2141
        %v2143 = vsub.f32 1.5, %v2142
        %v2144 = vmul.f32 %v2139, %v2143
        %v2145 = vmul.f32 %v263, %v2144
        %vm2146 = vcmp.eq.f32.partialorder %v263, inf
        %v2147 = vsel %vm2146, %v263, %v2145
        %vm2148 = vcmp.eq.f32.partialorder %v263, 0.0
        %v2149 = vand.u32 %v263, 2147483648
        %v2150 = vsel %vm2148, %v2149, %v2147
        %v2151 = vrsqrt.pop %v264
        %v2152 = vmul.f32 %v2151, %v264
        %v2153 = vmul.f32 %v2152, %v2151
        %v2154 = vmul.f32 0.5, %v2153
        %v2155 = vsub.f32 1.5, %v2154
        %v2156 = vmul.f32 %v2151, %v2155
        %v2157 = vmul.f32 %v264, %v2156
        %vm2158 = vcmp.eq.f32.partialorder %v264, inf
        %v2159 = vsel %vm2158, %v264, %v2157
        %vm2160 = vcmp.eq.f32.partialorder %v264, 0.0
        %v2161 = vand.u32 %v264, 2147483648
        %v2162 = vsel %vm2160, %v2161, %v2159
        %v2163 = vrsqrt.pop %v265
        %v2164 = vmul.f32 %v2163, %v265
        %v2165 = vmul.f32 %v2164, %v2163
        %v2166 = vmul.f32 0.5, %v2165
        %v2167 = vsub.f32 1.5, %v2166
        %v2168 = vmul.f32 %v2163, %v2167
        %v2169 = vmul.f32 %v265, %v2168
        %vm2170 = vcmp.eq.f32.partialorder %v265, inf
        %v2171 = vsel %vm2170, %v265, %v2169
        %vm2172 = vcmp.eq.f32.partialorder %v265, 0.0
        %v2173 = vand.u32 %v265, 2147483648
        %v2174 = vsel %vm2172, %v2173, %v2171
        %v2175 = vrsqrt.pop %v266
        %v2176 = vmul.f32 %v2175, %v266
        %v2177 = vmul.f32 %v2176, %v2175
        %v2178 = vmul.f32 0.5, %v2177
        %v2179 = vsub.f32 1.5, %v2178
        %v2180 = vmul.f32 %v2175, %v2179
        %v2181 = vmul.f32 %v266, %v2180
        %vm2182 = vcmp.eq.f32.partialorder %v266, inf
        %v2183 = vsel %vm2182, %v266, %v2181
        %vm2184 = vcmp.eq.f32.partialorder %v266, 0.0
        %v2185 = vand.u32 %v266, 2147483648
        %v2186 = vsel %vm2184, %v2185, %v2183
        %v2187 = vrsqrt.pop %v267
        %v2188 = vmul.f32 %v2187, %v267
        %v2189 = vmul.f32 %v2188, %v2187
        %v2190 = vmul.f32 0.5, %v2189
        %v2191 = vsub.f32 1.5, %v2190
        %v2192 = vmul.f32 %v2187, %v2191
        %v2193 = vmul.f32 %v267, %v2192
        %vm2194 = vcmp.eq.f32.partialorder %v267, inf
        %v2195 = vsel %vm2194, %v267, %v2193
        %vm2196 = vcmp.eq.f32.partialorder %v267, 0.0
        %v2197 = vand.u32 %v267, 2147483648
        %v2198 = vsel %vm2196, %v2197, %v2195
        %v2199 = vrsqrt.pop %v268
        %v2200 = vmul.f32 %v2199, %v268
        %v2201 = vmul.f32 %v2200, %v2199
        %v2202 = vmul.f32 0.5, %v2201
        %v2203 = vsub.f32 1.5, %v2202
        %v2204 = vmul.f32 %v2199, %v2203
        %v2205 = vmul.f32 %v268, %v2204
        %vm2206 = vcmp.eq.f32.partialorder %v268, inf
        %v2207 = vsel %vm2206, %v268, %v2205
        %vm2208 = vcmp.eq.f32.partialorder %v268, 0.0
        %v2209 = vand.u32 %v268, 2147483648
        %v2210 = vsel %vm2208, %v2209, %v2207
        %v2211 = vrsqrt.pop %v269
        %v2212 = vmul.f32 %v2211, %v269
        %v2213 = vmul.f32 %v2212, %v2211
        %v2214 = vmul.f32 0.5, %v2213
        %v2215 = vsub.f32 1.5, %v2214
        %v2216 = vmul.f32 %v2211, %v2215
        %v2217 = vmul.f32 %v269, %v2216
        %vm2218 = vcmp.eq.f32.partialorder %v269, inf
        %v2219 = vsel %vm2218, %v269, %v2217
        %vm2220 = vcmp.eq.f32.partialorder %v269, 0.0
        %v2221 = vand.u32 %v269, 2147483648
        %v2222 = vsel %vm2220, %v2221, %v2219
        %v2223 = vrsqrt.pop %v270
        %v2224 = vmul.f32 %v2223, %v270
        %v2225 = vmul.f32 %v2224, %v2223
        %v2226 = vmul.f32 0.5, %v2225
        %v2227 = vsub.f32 1.5, %v2226
        %v2228 = vmul.f32 %v2223, %v2227
        %v2229 = vmul.f32 %v270, %v2228
        %vm2230 = vcmp.eq.f32.partialorder %v270, inf
        %v2231 = vsel %vm2230, %v270, %v2229
        %vm2232 = vcmp.eq.f32.partialorder %v270, 0.0
        %v2233 = vand.u32 %v270, 2147483648
        %v2234 = vsel %vm2232, %v2233, %v2231
        %v2235 = vrsqrt.pop %v271
        %v2236 = vmul.f32 %v2235, %v271
        %v2237 = vmul.f32 %v2236, %v2235
        %v2238 = vmul.f32 0.5, %v2237
        %v2239 = vsub.f32 1.5, %v2238
        %v2240 = vmul.f32 %v2235, %v2239
        %v2241 = vmul.f32 %v271, %v2240
        %vm2242 = vcmp.eq.f32.partialorder %v271, inf
        %v2243 = vsel %vm2242, %v271, %v2241
        %vm2244 = vcmp.eq.f32.partialorder %v271, 0.0
        %v2245 = vand.u32 %v271, 2147483648
        %v2246 = vsel %vm2244, %v2245, %v2243
        %v2247 = vrsqrt.pop %v272
        %v2248 = vmul.f32 %v2247, %v272
        %v2249 = vmul.f32 %v2248, %v2247
        %v2250 = vmul.f32 0.5, %v2249
        %v2251 = vsub.f32 1.5, %v2250
        %v2252 = vmul.f32 %v2247, %v2251
        %v2253 = vmul.f32 %v272, %v2252
        %vm2254 = vcmp.eq.f32.partialorder %v272, inf
        %v2255 = vsel %vm2254, %v272, %v2253
        %vm2256 = vcmp.eq.f32.partialorder %v272, 0.0
        %v2257 = vand.u32 %v272, 2147483648
        %v2258 = vsel %vm2256, %v2257, %v2255
        %v2259 = vrsqrt.pop %v273
        %v2260 = vmul.f32 %v2259, %v273
        %v2261 = vmul.f32 %v2260, %v2259
        %v2262 = vmul.f32 0.5, %v2261
        %v2263 = vsub.f32 1.5, %v2262
        %v2264 = vmul.f32 %v2259, %v2263
        %v2265 = vmul.f32 %v273, %v2264
        %vm2266 = vcmp.eq.f32.partialorder %v273, inf
        %v2267 = vsel %vm2266, %v273, %v2265
        %vm2268 = vcmp.eq.f32.partialorder %v273, 0.0
        %v2269 = vand.u32 %v273, 2147483648
        %v2270 = vsel %vm2268, %v2269, %v2267
        %v2271 = vrsqrt.pop %v274
        %v2272 = vmul.f32 %v2271, %v274
        %v2273 = vmul.f32 %v2272, %v2271
        %v2274 = vmul.f32 0.5, %v2273
        %v2275 = vsub.f32 1.5, %v2274
        %v2276 = vmul.f32 %v2271, %v2275
        %v2277 = vmul.f32 %v274, %v2276
        %vm2278 = vcmp.eq.f32.partialorder %v274, inf
        %v2279 = vsel %vm2278, %v274, %v2277
        %vm2280 = vcmp.eq.f32.partialorder %v274, 0.0
        %v2281 = vand.u32 %v274, 2147483648
        %v2282 = vsel %vm2280, %v2281, %v2279
        %v2283 = vrsqrt.pop %v275
        %v2284 = vmul.f32 %v2283, %v275
        %v2285 = vmul.f32 %v2284, %v2283
        %v2286 = vmul.f32 0.5, %v2285
        %v2287 = vsub.f32 1.5, %v2286
        %v2288 = vmul.f32 %v2283, %v2287
        %v2289 = vmul.f32 %v275, %v2288
        %vm2290 = vcmp.eq.f32.partialorder %v275, inf
        %v2291 = vsel %vm2290, %v275, %v2289
        %vm2292 = vcmp.eq.f32.partialorder %v275, 0.0
        %v2293 = vand.u32 %v275, 2147483648
        %v2294 = vsel %vm2292, %v2293, %v2291
        %v2295 = vrsqrt.pop %v276
        %v2296 = vmul.f32 %v2295, %v276
        %v2297 = vmul.f32 %v2296, %v2295
        %v2298 = vmul.f32 0.5, %v2297
        %v2299 = vsub.f32 1.5, %v2298
        %v2300 = vmul.f32 %v2295, %v2299
        %v2301 = vmul.f32 %v276, %v2300
        %vm2302 = vcmp.eq.f32.partialorder %v276, inf
        %v2303 = vsel %vm2302, %v276, %v2301
        %vm2304 = vcmp.eq.f32.partialorder %v276, 0.0
        %v2305 = vand.u32 %v276, 2147483648
        %v2306 = vsel %vm2304, %v2305, %v2303
        %v2307 = vrsqrt.pop %v277
        %v2308 = vmul.f32 %v2307, %v277
        %v2309 = vmul.f32 %v2308, %v2307
        %v2310 = vmul.f32 0.5, %v2309
        %v2311 = vsub.f32 1.5, %v2310
        %v2312 = vmul.f32 %v2307, %v2311
        %v2313 = vmul.f32 %v277, %v2312
        %vm2314 = vcmp.eq.f32.partialorder %v277, inf
        %v2315 = vsel %vm2314, %v277, %v2313
        %vm2316 = vcmp.eq.f32.partialorder %v277, 0.0
        %v2317 = vand.u32 %v277, 2147483648
        %v2318 = vsel %vm2316, %v2317, %v2315
        %v2319 = vrsqrt.pop %v278
        %v2320 = vmul.f32 %v2319, %v278
        %v2321 = vmul.f32 %v2320, %v2319
        %v2322 = vmul.f32 0.5, %v2321
        %v2323 = vsub.f32 1.5, %v2322
        %v2324 = vmul.f32 %v2319, %v2323
        %v2325 = vmul.f32 %v278, %v2324
        %vm2326 = vcmp.eq.f32.partialorder %v278, inf
        %v2327 = vsel %vm2326, %v278, %v2325
        %vm2328 = vcmp.eq.f32.partialorder %v278, 0.0
        %v2329 = vand.u32 %v278, 2147483648
        %v2330 = vsel %vm2328, %v2329, %v2327
        %v2331 = vrsqrt.pop %v279
        %v2332 = vmul.f32 %v2331, %v279
        %v2333 = vmul.f32 %v2332, %v2331
        %v2334 = vmul.f32 0.5, %v2333
        %v2335 = vsub.f32 1.5, %v2334
        %v2336 = vmul.f32 %v2331, %v2335
        %v2337 = vmul.f32 %v279, %v2336
        %vm2338 = vcmp.eq.f32.partialorder %v279, inf
        %v2339 = vsel %vm2338, %v279, %v2337
        %vm2340 = vcmp.eq.f32.partialorder %v279, 0.0
        %v2341 = vand.u32 %v279, 2147483648
        %v2342 = vsel %vm2340, %v2341, %v2339
        %v2343 = vrsqrt.pop %v280
        %v2344 = vmul.f32 %v2343, %v280
        %v2345 = vmul.f32 %v2344, %v2343
        %v2346 = vmul.f32 0.5, %v2345
        %v2347 = vsub.f32 1.5, %v2346
        %v2348 = vmul.f32 %v2343, %v2347
        %v2349 = vmul.f32 %v280, %v2348
        %vm2350 = vcmp.eq.f32.partialorder %v280, inf
        %v2351 = vsel %vm2350, %v280, %v2349
        %vm2352 = vcmp.eq.f32.partialorder %v280, 0.0
        %v2353 = vand.u32 %v280, 2147483648
        %v2354 = vsel %vm2352, %v2353, %v2351
        %v2355 = vrsqrt.pop %v281
        %v2356 = vmul.f32 %v2355, %v281
        %v2357 = vmul.f32 %v2356, %v2355
        %v2358 = vmul.f32 0.5, %v2357
        %v2359 = vsub.f32 1.5, %v2358
        %v2360 = vmul.f32 %v2355, %v2359
        %v2361 = vmul.f32 %v281, %v2360
        %vm2362 = vcmp.eq.f32.partialorder %v281, inf
        %v2363 = vsel %vm2362, %v281, %v2361
        %vm2364 = vcmp.eq.f32.partialorder %v281, 0.0
        %v2365 = vand.u32 %v281, 2147483648
        %v2366 = vsel %vm2364, %v2365, %v2363
        %v2367 = vrsqrt.pop %v282
        %v2368 = vmul.f32 %v2367, %v282
        %v2369 = vmul.f32 %v2368, %v2367
        %v2370 = vmul.f32 0.5, %v2369
        %v2371 = vsub.f32 1.5, %v2370
        %v2372 = vmul.f32 %v2367, %v2371
        %v2373 = vmul.f32 %v282, %v2372
        %vm2374 = vcmp.eq.f32.partialorder %v282, inf
        %v2375 = vsel %vm2374, %v282, %v2373
        %vm2376 = vcmp.eq.f32.partialorder %v282, 0.0
        %v2377 = vand.u32 %v282, 2147483648
        %v2378 = vsel %vm2376, %v2377, %v2375
        %v2379 = vrsqrt.pop %v283
        %v2380 = vmul.f32 %v2379, %v283
        %v2381 = vmul.f32 %v2380, %v2379
        %v2382 = vmul.f32 0.5, %v2381
        %v2383 = vsub.f32 1.5, %v2382
        %v2384 = vmul.f32 %v2379, %v2383
        %v2385 = vmul.f32 %v283, %v2384
        %vm2386 = vcmp.eq.f32.partialorder %v283, inf
        %v2387 = vsel %vm2386, %v283, %v2385
        %vm2388 = vcmp.eq.f32.partialorder %v283, 0.0
        %v2389 = vand.u32 %v283, 2147483648
        %v2390 = vsel %vm2388, %v2389, %v2387
        %v2391 = vrsqrt.pop %v284
        %v2392 = vmul.f32 %v2391, %v284
        %v2393 = vmul.f32 %v2392, %v2391
        %v2394 = vmul.f32 0.5, %v2393
        %v2395 = vsub.f32 1.5, %v2394
        %v2396 = vmul.f32 %v2391, %v2395
        %v2397 = vmul.f32 %v284, %v2396
        %vm2398 = vcmp.eq.f32.partialorder %v284, inf
        %v2399 = vsel %vm2398, %v284, %v2397
        %vm2400 = vcmp.eq.f32.partialorder %v284, 0.0
        %v2401 = vand.u32 %v284, 2147483648
        %v2402 = vsel %vm2400, %v2401, %v2399
        %v2403 = vrsqrt.pop %v285
        %v2404 = vmul.f32 %v2403, %v285
        %v2405 = vmul.f32 %v2404, %v2403
        %v2406 = vmul.f32 0.5, %v2405
        %v2407 = vsub.f32 1.5, %v2406
        %v2408 = vmul.f32 %v2403, %v2407
        %v2409 = vmul.f32 %v285, %v2408
        %vm2410 = vcmp.eq.f32.partialorder %v285, inf
        %v2411 = vsel %vm2410, %v285, %v2409
        %vm2412 = vcmp.eq.f32.partialorder %v285, 0.0
        %v2413 = vand.u32 %v285, 2147483648
        %v2414 = vsel %vm2412, %v2413, %v2411
        %v2415 = vrsqrt.pop %v286
        %v2416 = vmul.f32 %v2415, %v286
        %v2417 = vmul.f32 %v2416, %v2415
        %v2418 = vmul.f32 0.5, %v2417
        %v2419 = vsub.f32 1.5, %v2418
        %v2420 = vmul.f32 %v2415, %v2419
        %v2421 = vmul.f32 %v286, %v2420
        %vm2422 = vcmp.eq.f32.partialorder %v286, inf
        %v2423 = vsel %vm2422, %v286, %v2421
        %vm2424 = vcmp.eq.f32.partialorder %v286, 0.0
        %v2425 = vand.u32 %v286, 2147483648
        %v2426 = vsel %vm2424, %v2425, %v2423
        %v2427 = vrsqrt.pop %v287
        %v2428 = vmul.f32 %v2427, %v287
        %v2429 = vmul.f32 %v2428, %v2427
        %v2430 = vmul.f32 0.5, %v2429
        %v2431 = vsub.f32 1.5, %v2430
        %v2432 = vmul.f32 %v2427, %v2431
        %v2433 = vmul.f32 %v287, %v2432
        %vm2434 = vcmp.eq.f32.partialorder %v287, inf
        %v2435 = vsel %vm2434, %v287, %v2433
        %vm2436 = vcmp.eq.f32.partialorder %v287, 0.0
        %v2437 = vand.u32 %v287, 2147483648
        %v2438 = vsel %vm2436, %v2437, %v2435
        %v2439 = vrsqrt.pop %v288
        %v2440 = vmul.f32 %v2439, %v288
        %v2441 = vmul.f32 %v2440, %v2439
        %v2442 = vmul.f32 0.5, %v2441
        %v2443 = vsub.f32 1.5, %v2442
        %v2444 = vmul.f32 %v2439, %v2443
        %v2445 = vmul.f32 %v288, %v2444
        %vm2446 = vcmp.eq.f32.partialorder %v288, inf
        %v2447 = vsel %vm2446, %v288, %v2445
        %vm2448 = vcmp.eq.f32.partialorder %v288, 0.0
        %v2449 = vand.u32 %v288, 2147483648
        %v2450 = vsel %vm2448, %v2449, %v2447
        %v2451 = vrsqrt.pop %v289
        %v2452 = vmul.f32 %v2451, %v289
        %v2453 = vmul.f32 %v2452, %v2451
        %v2454 = vmul.f32 0.5, %v2453
        %v2455 = vsub.f32 1.5, %v2454
        %v2456 = vmul.f32 %v2451, %v2455
        %v2457 = vmul.f32 %v289, %v2456
        %vm2458 = vcmp.eq.f32.partialorder %v289, inf
        %v2459 = vsel %vm2458, %v289, %v2457
        %vm2460 = vcmp.eq.f32.partialorder %v289, 0.0
        %v2461 = vand.u32 %v289, 2147483648
        %v2462 = vsel %vm2460, %v2461, %v2459
        %v2463 = vrsqrt.pop %v290
        %v2464 = vmul.f32 %v2463, %v290
        %v2465 = vmul.f32 %v2464, %v2463
        %v2466 = vmul.f32 0.5, %v2465
        %v2467 = vsub.f32 1.5, %v2466
        %v2468 = vmul.f32 %v2463, %v2467
        %v2469 = vmul.f32 %v290, %v2468
        %vm2470 = vcmp.eq.f32.partialorder %v290, inf
        %v2471 = vsel %vm2470, %v290, %v2469
        %vm2472 = vcmp.eq.f32.partialorder %v290, 0.0
        %v2473 = vand.u32 %v290, 2147483648
        %v2474 = vsel %vm2472, %v2473, %v2471
        %v2475 = vrsqrt.pop %v291
        %v2476 = vmul.f32 %v2475, %v291
        %v2477 = vmul.f32 %v2476, %v2475
        %v2478 = vmul.f32 0.5, %v2477
        %v2479 = vsub.f32 1.5, %v2478
        %v2480 = vmul.f32 %v2475, %v2479
        %v2481 = vmul.f32 %v291, %v2480
        %vm2482 = vcmp.eq.f32.partialorder %v291, inf
        %v2483 = vsel %vm2482, %v291, %v2481
        %vm2484 = vcmp.eq.f32.partialorder %v291, 0.0
        %v2485 = vand.u32 %v291, 2147483648
        %v2486 = vsel %vm2484, %v2485, %v2483
        %v2487 = vrsqrt.pop %v292
        %v2488 = vmul.f32 %v2487, %v292
        %v2489 = vmul.f32 %v2488, %v2487
        %v2490 = vmul.f32 0.5, %v2489
        %v2491 = vsub.f32 1.5, %v2490
        %v2492 = vmul.f32 %v2487, %v2491
        %v2493 = vmul.f32 %v292, %v2492
        %vm2494 = vcmp.eq.f32.partialorder %v292, inf
        %v2495 = vsel %vm2494, %v292, %v2493
        %vm2496 = vcmp.eq.f32.partialorder %v292, 0.0
        %v2497 = vand.u32 %v292, 2147483648
        %v2498 = vsel %vm2496, %v2497, %v2495
        %v2499 = vrsqrt.pop %v293
        %v2500 = vmul.f32 %v2499, %v293
        %v2501 = vmul.f32 %v2500, %v2499
        %v2502 = vmul.f32 0.5, %v2501
        %v2503 = vsub.f32 1.5, %v2502
        %v2504 = vmul.f32 %v2499, %v2503
        %v2505 = vmul.f32 %v293, %v2504
        %vm2506 = vcmp.eq.f32.partialorder %v293, inf
        %v2507 = vsel %vm2506, %v293, %v2505
        %vm2508 = vcmp.eq.f32.partialorder %v293, 0.0
        %v2509 = vand.u32 %v293, 2147483648
        %v2510 = vsel %vm2508, %v2509, %v2507
        %v2511 = vrsqrt.pop %v294
        %v2512 = vmul.f32 %v2511, %v294
        %v2513 = vmul.f32 %v2512, %v2511
        %v2514 = vmul.f32 0.5, %v2513
        %v2515 = vsub.f32 1.5, %v2514
        %v2516 = vmul.f32 %v2511, %v2515
        %v2517 = vmul.f32 %v294, %v2516
        %vm2518 = vcmp.eq.f32.partialorder %v294, inf
        %v2519 = vsel %vm2518, %v294, %v2517
        %vm2520 = vcmp.eq.f32.partialorder %v294, 0.0
        %v2521 = vand.u32 %v294, 2147483648
        %v2522 = vsel %vm2520, %v2521, %v2519
        %v2523 = vrsqrt.pop %v295
        %v2524 = vmul.f32 %v2523, %v295
        %v2525 = vmul.f32 %v2524, %v2523
        %v2526 = vmul.f32 0.5, %v2525
        %v2527 = vsub.f32 1.5, %v2526
        %v2528 = vmul.f32 %v2523, %v2527
        %v2529 = vmul.f32 %v295, %v2528
        %vm2530 = vcmp.eq.f32.partialorder %v295, inf
        %v2531 = vsel %vm2530, %v295, %v2529
        %vm2532 = vcmp.eq.f32.partialorder %v295, 0.0
        %v2533 = vand.u32 %v295, 2147483648
        %v2534 = vsel %vm2532, %v2533, %v2531
        %v2535 = vrsqrt.pop %v296
        %v2536 = vmul.f32 %v2535, %v296
        %v2537 = vmul.f32 %v2536, %v2535
        %v2538 = vmul.f32 0.5, %v2537
        %v2539 = vsub.f32 1.5, %v2538
        %v2540 = vmul.f32 %v2535, %v2539
        %v2541 = vmul.f32 %v296, %v2540
        %vm2542 = vcmp.eq.f32.partialorder %v296, inf
        %v2543 = vsel %vm2542, %v296, %v2541
        %vm2544 = vcmp.eq.f32.partialorder %v296, 0.0
        %v2545 = vand.u32 %v296, 2147483648
        %v2546 = vsel %vm2544, %v2545, %v2543
        %v2547 = vrsqrt.pop %v297
        %v2548 = vmul.f32 %v2547, %v297
        %v2549 = vmul.f32 %v2548, %v2547
        %v2550 = vmul.f32 0.5, %v2549
        %v2551 = vsub.f32 1.5, %v2550
        %v2552 = vmul.f32 %v2547, %v2551
        %v2553 = vmul.f32 %v297, %v2552
        %vm2554 = vcmp.eq.f32.partialorder %v297, inf
        %v2555 = vsel %vm2554, %v297, %v2553
        %vm2556 = vcmp.eq.f32.partialorder %v297, 0.0
        %v2557 = vand.u32 %v297, 2147483648
        %v2558 = vsel %vm2556, %v2557, %v2555
        %v2559 = vrsqrt.pop %v298
        %v2560 = vmul.f32 %v2559, %v298
        %v2561 = vmul.f32 %v2560, %v2559
        %v2562 = vmul.f32 0.5, %v2561
        %v2563 = vsub.f32 1.5, %v2562
        %v2564 = vmul.f32 %v2559, %v2563
        %v2565 = vmul.f32 %v298, %v2564
        %vm2566 = vcmp.eq.f32.partialorder %v298, inf
        %v2567 = vsel %vm2566, %v298, %v2565
        %vm2568 = vcmp.eq.f32.partialorder %v298, 0.0
        %v2569 = vand.u32 %v298, 2147483648
        %v2570 = vsel %vm2568, %v2569, %v2567
        %v2571 = vrsqrt.pop %v299
        %v2572 = vmul.f32 %v2571, %v299
        %v2573 = vmul.f32 %v2572, %v2571
        %v2574 = vmul.f32 0.5, %v2573
        %v2575 = vsub.f32 1.5, %v2574
        %v2576 = vmul.f32 %v2571, %v2575
        %v2577 = vmul.f32 %v299, %v2576
        %vm2578 = vcmp.eq.f32.partialorder %v299, inf
        %v2579 = vsel %vm2578, %v299, %v2577
        %vm2580 = vcmp.eq.f32.partialorder %v299, 0.0
        %v2581 = vand.u32 %v299, 2147483648
        %v2582 = vsel %vm2580, %v2581, %v2579
        %v2583 = vrsqrt.pop %v300
        %v2584 = vmul.f32 %v2583, %v300
        %v2585 = vmul.f32 %v2584, %v2583
        %v2586 = vmul.f32 0.5, %v2585
        %v2587 = vsub.f32 1.5, %v2586
        %v2588 = vmul.f32 %v2583, %v2587
        %v2589 = vmul.f32 %v300, %v2588
        %vm2590 = vcmp.eq.f32.partialorder %v300, inf
        %v2591 = vsel %vm2590, %v300, %v2589
        %vm2592 = vcmp.eq.f32.partialorder %v300, 0.0
        %v2593 = vand.u32 %v300, 2147483648
        %v2594 = vsel %vm2592, %v2593, %v2591
        %v2595 = vrsqrt.pop %v301
        %v2596 = vmul.f32 %v2595, %v301
        %v2597 = vmul.f32 %v2596, %v2595
        %v2598 = vmul.f32 0.5, %v2597
        %v2599 = vsub.f32 1.5, %v2598
        %v2600 = vmul.f32 %v2595, %v2599
        %v2601 = vmul.f32 %v301, %v2600
        %vm2602 = vcmp.eq.f32.partialorder %v301, inf
        %v2603 = vsel %vm2602, %v301, %v2601
        %vm2604 = vcmp.eq.f32.partialorder %v301, 0.0
        %v2605 = vand.u32 %v301, 2147483648
        %v2606 = vsel %vm2604, %v2605, %v2603
        %v2607 = vrsqrt.pop %v302
        %v2608 = vmul.f32 %v2607, %v302
        %v2609 = vmul.f32 %v2608, %v2607
        %v2610 = vmul.f32 0.5, %v2609
        %v2611 = vsub.f32 1.5, %v2610
        %v2612 = vmul.f32 %v2607, %v2611
        %v2613 = vmul.f32 %v302, %v2612
        %vm2614 = vcmp.eq.f32.partialorder %v302, inf
        %v2615 = vsel %vm2614, %v302, %v2613
        %vm2616 = vcmp.eq.f32.partialorder %v302, 0.0
        %v2617 = vand.u32 %v302, 2147483648
        %v2618 = vsel %vm2616, %v2617, %v2615
        %v2619 = vrsqrt.pop %v303
        %v2620 = vmul.f32 %v2619, %v303
        %v2621 = vmul.f32 %v2620, %v2619
        %v2622 = vmul.f32 0.5, %v2621
        %v2623 = vsub.f32 1.5, %v2622
        %v2624 = vmul.f32 %v2619, %v2623
        %v2625 = vmul.f32 %v303, %v2624
        %vm2626 = vcmp.eq.f32.partialorder %v303, inf
        %v2627 = vsel %vm2626, %v303, %v2625
        %vm2628 = vcmp.eq.f32.partialorder %v303, 0.0
        %v2629 = vand.u32 %v303, 2147483648
        %v2630 = vsel %vm2628, %v2629, %v2627
        %v2631 = vrsqrt.pop %v304
        %v2632 = vmul.f32 %v2631, %v304
        %v2633 = vmul.f32 %v2632, %v2631
        %v2634 = vmul.f32 0.5, %v2633
        %v2635 = vsub.f32 1.5, %v2634
        %v2636 = vmul.f32 %v2631, %v2635
        %v2637 = vmul.f32 %v304, %v2636
        %vm2638 = vcmp.eq.f32.partialorder %v304, inf
        %v2639 = vsel %vm2638, %v304, %v2637
        %vm2640 = vcmp.eq.f32.partialorder %v304, 0.0
        %v2641 = vand.u32 %v304, 2147483648
        %v2642 = vsel %vm2640, %v2641, %v2639
        %v2643 = vrsqrt.pop %v305
        %v2644 = vmul.f32 %v2643, %v305
        %v2645 = vmul.f32 %v2644, %v2643
        %v2646 = vmul.f32 0.5, %v2645
        %v2647 = vsub.f32 1.5, %v2646
        %v2648 = vmul.f32 %v2643, %v2647
        %v2649 = vmul.f32 %v305, %v2648
        %vm2650 = vcmp.eq.f32.partialorder %v305, inf
        %v2651 = vsel %vm2650, %v305, %v2649
        %vm2652 = vcmp.eq.f32.partialorder %v305, 0.0
        %v2653 = vand.u32 %v305, 2147483648
        %v2654 = vsel %vm2652, %v2653, %v2651
        %v2655 = vrsqrt.pop %v306
        %v2656 = vmul.f32 %v2655, %v306
        %v2657 = vmul.f32 %v2656, %v2655
        %v2658 = vmul.f32 0.5, %v2657
        %v2659 = vsub.f32 1.5, %v2658
        %v2660 = vmul.f32 %v2655, %v2659
        %v2661 = vmul.f32 %v306, %v2660
        %vm2662 = vcmp.eq.f32.partialorder %v306, inf
        %v2663 = vsel %vm2662, %v306, %v2661
        %vm2664 = vcmp.eq.f32.partialorder %v306, 0.0
        %v2665 = vand.u32 %v306, 2147483648
        %v2666 = vsel %vm2664, %v2665, %v2663
        %v2667 = vrsqrt.pop %v307
        %v2668 = vmul.f32 %v2667, %v307
        %v2669 = vmul.f32 %v2668, %v2667
        %v2670 = vmul.f32 0.5, %v2669
        %v2671 = vsub.f32 1.5, %v2670
        %v2672 = vmul.f32 %v2667, %v2671
        %v2673 = vmul.f32 %v307, %v2672
        %vm2674 = vcmp.eq.f32.partialorder %v307, inf
        %v2675 = vsel %vm2674, %v307, %v2673
        %vm2676 = vcmp.eq.f32.partialorder %v307, 0.0
        %v2677 = vand.u32 %v307, 2147483648
        %v2678 = vsel %vm2676, %v2677, %v2675
        %v2679 = vrsqrt.pop %v308
        %v2680 = vmul.f32 %v2679, %v308
        %v2681 = vmul.f32 %v2680, %v2679
        %v2682 = vmul.f32 0.5, %v2681
        %v2683 = vsub.f32 1.5, %v2682
        %v2684 = vmul.f32 %v2679, %v2683
        %v2685 = vmul.f32 %v308, %v2684
        %vm2686 = vcmp.eq.f32.partialorder %v308, inf
        %v2687 = vsel %vm2686, %v308, %v2685
        %vm2688 = vcmp.eq.f32.partialorder %v308, 0.0
        %v2689 = vand.u32 %v308, 2147483648
        %v2690 = vsel %vm2688, %v2689, %v2687
        %v2691 = vrsqrt.pop %v309
        %v2692 = vmul.f32 %v2691, %v309
        %v2693 = vmul.f32 %v2692, %v2691
        %v2694 = vmul.f32 0.5, %v2693
        %v2695 = vsub.f32 1.5, %v2694
        %v2696 = vmul.f32 %v2691, %v2695
        %v2697 = vmul.f32 %v309, %v2696
        %vm2698 = vcmp.eq.f32.partialorder %v309, inf
        %v2699 = vsel %vm2698, %v309, %v2697
        %vm2700 = vcmp.eq.f32.partialorder %v309, 0.0
        %v2701 = vand.u32 %v309, 2147483648
        %v2702 = vsel %vm2700, %v2701, %v2699
        %v2703 = vrsqrt.pop %v310
        %v2704 = vmul.f32 %v2703, %v310
        %v2705 = vmul.f32 %v2704, %v2703
        %v2706 = vmul.f32 0.5, %v2705
        %v2707 = vsub.f32 1.5, %v2706
        %v2708 = vmul.f32 %v2703, %v2707
        %v2709 = vmul.f32 %v310, %v2708
        %vm2710 = vcmp.eq.f32.partialorder %v310, inf
        %v2711 = vsel %vm2710, %v310, %v2709
        %vm2712 = vcmp.eq.f32.partialorder %v310, 0.0
        %v2713 = vand.u32 %v310, 2147483648
        %v2714 = vsel %vm2712, %v2713, %v2711
        %v2715 = vrsqrt.pop %v311
        %v2716 = vmul.f32 %v2715, %v311
        %v2717 = vmul.f32 %v2716, %v2715
        %v2718 = vmul.f32 0.5, %v2717
        %v2719 = vsub.f32 1.5, %v2718
        %v2720 = vmul.f32 %v2715, %v2719
        %v2721 = vmul.f32 %v311, %v2720
        %vm2722 = vcmp.eq.f32.partialorder %v311, inf
        %v2723 = vsel %vm2722, %v311, %v2721
        %vm2724 = vcmp.eq.f32.partialorder %v311, 0.0
        %v2725 = vand.u32 %v311, 2147483648
        %v2726 = vsel %vm2724, %v2725, %v2723
        %v2727 = vrsqrt.pop %v312
        %v2728 = vmul.f32 %v2727, %v312
        %v2729 = vmul.f32 %v2728, %v2727
        %v2730 = vmul.f32 0.5, %v2729
        %v2731 = vsub.f32 1.5, %v2730
        %v2732 = vmul.f32 %v2727, %v2731
        %v2733 = vmul.f32 %v312, %v2732
        %vm2734 = vcmp.eq.f32.partialorder %v312, inf
        %v2735 = vsel %vm2734, %v312, %v2733
        %vm2736 = vcmp.eq.f32.partialorder %v312, 0.0
        %v2737 = vand.u32 %v312, 2147483648
        %v2738 = vsel %vm2736, %v2737, %v2735
        %v2739 = vrsqrt.pop %v313
        %v2740 = vmul.f32 %v2739, %v313
        %v2741 = vmul.f32 %v2740, %v2739
        %v2742 = vmul.f32 0.5, %v2741
        %v2743 = vsub.f32 1.5, %v2742
        %v2744 = vmul.f32 %v2739, %v2743
        %v2745 = vmul.f32 %v313, %v2744
        %vm2746 = vcmp.eq.f32.partialorder %v313, inf
        %v2747 = vsel %vm2746, %v313, %v2745
        %vm2748 = vcmp.eq.f32.partialorder %v313, 0.0
        %v2749 = vand.u32 %v313, 2147483648
        %v2750 = vsel %vm2748, %v2749, %v2747
        %v2751 = vrsqrt.pop %v314
        %v2752 = vmul.f32 %v2751, %v314
        %v2753 = vmul.f32 %v2752, %v2751
        %v2754 = vmul.f32 0.5, %v2753
        %v2755 = vsub.f32 1.5, %v2754
        %v2756 = vmul.f32 %v2751, %v2755
        %v2757 = vmul.f32 %v314, %v2756
        %vm2758 = vcmp.eq.f32.partialorder %v314, inf
        %v2759 = vsel %vm2758, %v314, %v2757
        %vm2760 = vcmp.eq.f32.partialorder %v314, 0.0
        %v2761 = vand.u32 %v314, 2147483648
        %v2762 = vsel %vm2760, %v2761, %v2759
        %v2763 = vrsqrt.pop %v315
        %v2764 = vmul.f32 %v2763, %v315
        %v2765 = vmul.f32 %v2764, %v2763
        %v2766 = vmul.f32 0.5, %v2765
        %v2767 = vsub.f32 1.5, %v2766
        %v2768 = vmul.f32 %v2763, %v2767
        %v2769 = vmul.f32 %v315, %v2768
        %vm2770 = vcmp.eq.f32.partialorder %v315, inf
        %v2771 = vsel %vm2770, %v315, %v2769
        %vm2772 = vcmp.eq.f32.partialorder %v315, 0.0
        %v2773 = vand.u32 %v315, 2147483648
        %v2774 = vsel %vm2772, %v2773, %v2771
        %v2775 = vrsqrt.pop %v316
        %v2776 = vmul.f32 %v2775, %v316
        %v2777 = vmul.f32 %v2776, %v2775
        %v2778 = vmul.f32 0.5, %v2777
        %v2779 = vsub.f32 1.5, %v2778
        %v2780 = vmul.f32 %v2775, %v2779
        %v2781 = vmul.f32 %v316, %v2780
        %vm2782 = vcmp.eq.f32.partialorder %v316, inf
        %v2783 = vsel %vm2782, %v316, %v2781
        %vm2784 = vcmp.eq.f32.partialorder %v316, 0.0
        %v2785 = vand.u32 %v316, 2147483648
        %v2786 = vsel %vm2784, %v2785, %v2783
        %v2787 = vrsqrt.pop %v317
        %v2788 = vmul.f32 %v2787, %v317
        %v2789 = vmul.f32 %v2788, %v2787
        %v2790 = vmul.f32 0.5, %v2789
        %v2791 = vsub.f32 1.5, %v2790
        %v2792 = vmul.f32 %v2787, %v2791
        %v2793 = vmul.f32 %v317, %v2792
        %vm2794 = vcmp.eq.f32.partialorder %v317, inf
        %v2795 = vsel %vm2794, %v317, %v2793
        %vm2796 = vcmp.eq.f32.partialorder %v317, 0.0
        %v2797 = vand.u32 %v317, 2147483648
        %v2798 = vsel %vm2796, %v2797, %v2795
        %v2799 = vrsqrt.pop %v318
        %v2800 = vmul.f32 %v2799, %v318
        %v2801 = vmul.f32 %v2800, %v2799
        %v2802 = vmul.f32 0.5, %v2801
        %v2803 = vsub.f32 1.5, %v2802
        %v2804 = vmul.f32 %v2799, %v2803
        %v2805 = vmul.f32 %v318, %v2804
        %vm2806 = vcmp.eq.f32.partialorder %v318, inf
        %v2807 = vsel %vm2806, %v318, %v2805
        %vm2808 = vcmp.eq.f32.partialorder %v318, 0.0
        %v2809 = vand.u32 %v318, 2147483648
        %v2810 = vsel %vm2808, %v2809, %v2807
        %v2811 = vrsqrt.pop %v319
        %v2812 = vmul.f32 %v2811, %v319
        %v2813 = vmul.f32 %v2812, %v2811
        %v2814 = vmul.f32 0.5, %v2813
        %v2815 = vsub.f32 1.5, %v2814
        %v2816 = vmul.f32 %v2811, %v2815
        %v2817 = vmul.f32 %v319, %v2816
        %vm2818 = vcmp.eq.f32.partialorder %v319, inf
        %v2819 = vsel %vm2818, %v319, %v2817
        %vm2820 = vcmp.eq.f32.partialorder %v319, 0.0
        %v2821 = vand.u32 %v319, 2147483648
        %v2822 = vsel %vm2820, %v2821, %v2819
        %v2823 = vrsqrt.pop %v320
        %v2824 = vmul.f32 %v2823, %v320
        %v2825 = vmul.f32 %v2824, %v2823
        %v2826 = vmul.f32 0.5, %v2825
        %v2827 = vsub.f32 1.5, %v2826
        %v2828 = vmul.f32 %v2823, %v2827
        %v2829 = vmul.f32 %v320, %v2828
        %vm2830 = vcmp.eq.f32.partialorder %v320, inf
        %v2831 = vsel %vm2830, %v320, %v2829
        %vm2832 = vcmp.eq.f32.partialorder %v320, 0.0
        %v2833 = vand.u32 %v320, 2147483648
        %v2834 = vsel %vm2832, %v2833, %v2831
        %v2835 = vrsqrt.pop %v321
        %v2836 = vmul.f32 %v2835, %v321
        %v2837 = vmul.f32 %v2836, %v2835
        %v2838 = vmul.f32 0.5, %v2837
        %v2839 = vsub.f32 1.5, %v2838
        %v2840 = vmul.f32 %v2835, %v2839
        %v2841 = vmul.f32 %v321, %v2840
        %vm2842 = vcmp.eq.f32.partialorder %v321, inf
        %v2843 = vsel %vm2842, %v321, %v2841
        %vm2844 = vcmp.eq.f32.partialorder %v321, 0.0
        %v2845 = vand.u32 %v321, 2147483648
        %v2846 = vsel %vm2844, %v2845, %v2843
        %v2847 = vrsqrt.pop %v322
        %v2848 = vmul.f32 %v2847, %v322
        %v2849 = vmul.f32 %v2848, %v2847
        %v2850 = vmul.f32 0.5, %v2849
        %v2851 = vsub.f32 1.5, %v2850
        %v2852 = vmul.f32 %v2847, %v2851
        %v2853 = vmul.f32 %v322, %v2852
        %vm2854 = vcmp.eq.f32.partialorder %v322, inf
        %v2855 = vsel %vm2854, %v322, %v2853
        %vm2856 = vcmp.eq.f32.partialorder %v322, 0.0
        %v2857 = vand.u32 %v322, 2147483648
        %v2858 = vsel %vm2856, %v2857, %v2855
        %v2859 = vrsqrt.pop %v323
        %v2860 = vmul.f32 %v2859, %v323
        %v2861 = vmul.f32 %v2860, %v2859
        %v2862 = vmul.f32 0.5, %v2861
        %v2863 = vsub.f32 1.5, %v2862
        %v2864 = vmul.f32 %v2859, %v2863
        %v2865 = vmul.f32 %v323, %v2864
        %vm2866 = vcmp.eq.f32.partialorder %v323, inf
        %v2867 = vsel %vm2866, %v323, %v2865
        %vm2868 = vcmp.eq.f32.partialorder %v323, 0.0
        %v2869 = vand.u32 %v323, 2147483648
        %v2870 = vsel %vm2868, %v2869, %v2867
        %v2871 = vrsqrt.pop %v324
        %v2872 = vmul.f32 %v2871, %v324
        %v2873 = vmul.f32 %v2872, %v2871
        %v2874 = vmul.f32 0.5, %v2873
        %v2875 = vsub.f32 1.5, %v2874
        %v2876 = vmul.f32 %v2871, %v2875
        %v2877 = vmul.f32 %v324, %v2876
        %vm2878 = vcmp.eq.f32.partialorder %v324, inf
        %v2879 = vsel %vm2878, %v324, %v2877
        %vm2880 = vcmp.eq.f32.partialorder %v324, 0.0
        %v2881 = vand.u32 %v324, 2147483648
        %v2882 = vsel %vm2880, %v2881, %v2879
        %v2883 = vrsqrt.pop %v325
        %v2884 = vmul.f32 %v2883, %v325
        %v2885 = vmul.f32 %v2884, %v2883
        %v2886 = vmul.f32 0.5, %v2885
        %v2887 = vsub.f32 1.5, %v2886
        %v2888 = vmul.f32 %v2883, %v2887
        %v2889 = vmul.f32 %v325, %v2888
        %vm2890 = vcmp.eq.f32.partialorder %v325, inf
        %v2891 = vsel %vm2890, %v325, %v2889
        %vm2892 = vcmp.eq.f32.partialorder %v325, 0.0
        %v2893 = vand.u32 %v325, 2147483648
        %v2894 = vsel %vm2892, %v2893, %v2891
        %v2895 = vrsqrt.pop %v326
        %v2896 = vmul.f32 %v2895, %v326
        %v2897 = vmul.f32 %v2896, %v2895
        %v2898 = vmul.f32 0.5, %v2897
        %v2899 = vsub.f32 1.5, %v2898
        %v2900 = vmul.f32 %v2895, %v2899
        %v2901 = vmul.f32 %v326, %v2900
        %vm2902 = vcmp.eq.f32.partialorder %v326, inf
        %v2903 = vsel %vm2902, %v326, %v2901
        %vm2904 = vcmp.eq.f32.partialorder %v326, 0.0
        %v2905 = vand.u32 %v326, 2147483648
        %v2906 = vsel %vm2904, %v2905, %v2903
        %v2907 = vrsqrt.pop %v327
        %v2908 = vmul.f32 %v2907, %v327
        %v2909 = vmul.f32 %v2908, %v2907
        %v2910 = vmul.f32 0.5, %v2909
        %v2911 = vsub.f32 1.5, %v2910
        %v2912 = vmul.f32 %v2907, %v2911
        %v2913 = vmul.f32 %v327, %v2912
        %vm2914 = vcmp.eq.f32.partialorder %v327, inf
        %v2915 = vsel %vm2914, %v327, %v2913
        %vm2916 = vcmp.eq.f32.partialorder %v327, 0.0
        %v2917 = vand.u32 %v327, 2147483648
        %v2918 = vsel %vm2916, %v2917, %v2915
        %v2919 = vrsqrt.pop %v328
        %v2920 = vmul.f32 %v2919, %v328
        %v2921 = vmul.f32 %v2920, %v2919
        %v2922 = vmul.f32 0.5, %v2921
        %v2923 = vsub.f32 1.5, %v2922
        %v2924 = vmul.f32 %v2919, %v2923
        %v2925 = vmul.f32 %v328, %v2924
        %vm2926 = vcmp.eq.f32.partialorder %v328, inf
        %v2927 = vsel %vm2926, %v328, %v2925
        %vm2928 = vcmp.eq.f32.partialorder %v328, 0.0
        %v2929 = vand.u32 %v328, 2147483648
        %v2930 = vsel %vm2928, %v2929, %v2927
        %v2931 = vrsqrt.pop %v329
        %v2932 = vmul.f32 %v2931, %v329
        %v2933 = vmul.f32 %v2932, %v2931
        %v2934 = vmul.f32 0.5, %v2933
        %v2935 = vsub.f32 1.5, %v2934
        %v2936 = vmul.f32 %v2931, %v2935
        %v2937 = vmul.f32 %v329, %v2936
        %vm2938 = vcmp.eq.f32.partialorder %v329, inf
        %v2939 = vsel %vm2938, %v329, %v2937
        %vm2940 = vcmp.eq.f32.partialorder %v329, 0.0
        %v2941 = vand.u32 %v329, 2147483648
        %v2942 = vsel %vm2940, %v2941, %v2939
        %v2943 = vrsqrt.pop %v330
        %v2944 = vmul.f32 %v2943, %v330
        %v2945 = vmul.f32 %v2944, %v2943
        %v2946 = vmul.f32 0.5, %v2945
        %v2947 = vsub.f32 1.5, %v2946
        %v2948 = vmul.f32 %v2943, %v2947
        %v2949 = vmul.f32 %v330, %v2948
        %vm2950 = vcmp.eq.f32.partialorder %v330, inf
        %v2951 = vsel %vm2950, %v330, %v2949
        %vm2952 = vcmp.eq.f32.partialorder %v330, 0.0
        %v2953 = vand.u32 %v330, 2147483648
        %v2954 = vsel %vm2952, %v2953, %v2951
        %v2955 = vrsqrt.pop %v331
        %v2956 = vmul.f32 %v2955, %v331
        %v2957 = vmul.f32 %v2956, %v2955
        %v2958 = vmul.f32 0.5, %v2957
        %v2959 = vsub.f32 1.5, %v2958
        %v2960 = vmul.f32 %v2955, %v2959
        %v2961 = vmul.f32 %v331, %v2960
        %vm2962 = vcmp.eq.f32.partialorder %v331, inf
        %v2963 = vsel %vm2962, %v331, %v2961
        %vm2964 = vcmp.eq.f32.partialorder %v331, 0.0
        %v2965 = vand.u32 %v331, 2147483648
        %v2966 = vsel %vm2964, %v2965, %v2963
        %v2967 = vrsqrt.pop %v332
        %v2968 = vmul.f32 %v2967, %v332
        %v2969 = vmul.f32 %v2968, %v2967
        %v2970 = vmul.f32 0.5, %v2969
        %v2971 = vsub.f32 1.5, %v2970
        %v2972 = vmul.f32 %v2967, %v2971
        %v2973 = vmul.f32 %v332, %v2972
        %vm2974 = vcmp.eq.f32.partialorder %v332, inf
        %v2975 = vsel %vm2974, %v332, %v2973
        %vm2976 = vcmp.eq.f32.partialorder %v332, 0.0
        %v2977 = vand.u32 %v332, 2147483648
        %v2978 = vsel %vm2976, %v2977, %v2975
        %v2979 = vrsqrt.pop %v333
        %v2980 = vmul.f32 %v2979, %v333
        %v2981 = vmul.f32 %v2980, %v2979
        %v2982 = vmul.f32 0.5, %v2981
        %v2983 = vsub.f32 1.5, %v2982
        %v2984 = vmul.f32 %v2979, %v2983
        %v2985 = vmul.f32 %v333, %v2984
        %vm2986 = vcmp.eq.f32.partialorder %v333, inf
        %v2987 = vsel %vm2986, %v333, %v2985
        %vm2988 = vcmp.eq.f32.partialorder %v333, 0.0
        %v2989 = vand.u32 %v333, 2147483648
        %v2990 = vsel %vm2988, %v2989, %v2987
        %v2991 = vrsqrt.pop %v334
        %v2992 = vmul.f32 %v2991, %v334
        %v2993 = vmul.f32 %v2992, %v2991
        %v2994 = vmul.f32 0.5, %v2993
        %v2995 = vsub.f32 1.5, %v2994
        %v2996 = vmul.f32 %v2991, %v2995
        %v2997 = vmul.f32 %v334, %v2996
        %vm2998 = vcmp.eq.f32.partialorder %v334, inf
        %v2999 = vsel %vm2998, %v334, %v2997
        %vm3000 = vcmp.eq.f32.partialorder %v334, 0.0
        %v3001 = vand.u32 %v334, 2147483648
        %v3002 = vsel %vm3000, %v3001, %v2999
        %v3003 = vrsqrt.pop %v335
        %v3004 = vmul.f32 %v3003, %v335
        %v3005 = vmul.f32 %v3004, %v3003
        %v3006 = vmul.f32 0.5, %v3005
        %v3007 = vsub.f32 1.5, %v3006
        %v3008 = vmul.f32 %v3003, %v3007
        %v3009 = vmul.f32 %v335, %v3008
        %vm3010 = vcmp.eq.f32.partialorder %v335, inf
        %v3011 = vsel %vm3010, %v335, %v3009
        %vm3012 = vcmp.eq.f32.partialorder %v335, 0.0
        %v3013 = vand.u32 %v335, 2147483648
        %v3014 = vsel %vm3012, %v3013, %v3011
        %v3015 = vrsqrt.pop %v336
        %v3016 = vmul.f32 %v3015, %v336
        %v3017 = vmul.f32 %v3016, %v3015
        %v3018 = vmul.f32 0.5, %v3017
        %v3019 = vsub.f32 1.5, %v3018
        %v3020 = vmul.f32 %v3015, %v3019
        %v3021 = vmul.f32 %v336, %v3020
        %vm3022 = vcmp.eq.f32.partialorder %v336, inf
        %v3023 = vsel %vm3022, %v336, %v3021
        %vm3024 = vcmp.eq.f32.partialorder %v336, 0.0
        %v3025 = vand.u32 %v336, 2147483648
        %v3026 = vsel %vm3024, %v3025, %v3023
        %v3027 = vrsqrt.pop %v337
        %v3028 = vmul.f32 %v3027, %v337
        %v3029 = vmul.f32 %v3028, %v3027
        %v3030 = vmul.f32 0.5, %v3029
        %v3031 = vsub.f32 1.5, %v3030
        %v3032 = vmul.f32 %v3027, %v3031
        %v3033 = vmul.f32 %v337, %v3032
        %vm3034 = vcmp.eq.f32.partialorder %v337, inf
        %v3035 = vsel %vm3034, %v337, %v3033
        %vm3036 = vcmp.eq.f32.partialorder %v337, 0.0
        %v3037 = vand.u32 %v337, 2147483648
        %v3038 = vsel %vm3036, %v3037, %v3035
        %v3039 = vrsqrt.pop %v338
        %v3040 = vmul.f32 %v3039, %v338
        %v3041 = vmul.f32 %v3040, %v3039
        %v3042 = vmul.f32 0.5, %v3041
        %v3043 = vsub.f32 1.5, %v3042
        %v3044 = vmul.f32 %v3039, %v3043
        %v3045 = vmul.f32 %v338, %v3044
        %vm3046 = vcmp.eq.f32.partialorder %v338, inf
        %v3047 = vsel %vm3046, %v338, %v3045
        %vm3048 = vcmp.eq.f32.partialorder %v338, 0.0
        %v3049 = vand.u32 %v338, 2147483648
        %v3050 = vsel %vm3048, %v3049, %v3047
        %v3051 = vrsqrt.pop %v339
        %v3052 = vmul.f32 %v3051, %v339
        %v3053 = vmul.f32 %v3052, %v3051
        %v3054 = vmul.f32 0.5, %v3053
        %v3055 = vsub.f32 1.5, %v3054
        %v3056 = vmul.f32 %v3051, %v3055
        %v3057 = vmul.f32 %v339, %v3056
        %vm3058 = vcmp.eq.f32.partialorder %v339, inf
        %v3059 = vsel %vm3058, %v339, %v3057
        %vm3060 = vcmp.eq.f32.partialorder %v339, 0.0
        %v3061 = vand.u32 %v339, 2147483648
        %v3062 = vsel %vm3060, %v3061, %v3059
        %v3063 = vrsqrt.pop %v340
        %v3064 = vmul.f32 %v3063, %v340
        %v3065 = vmul.f32 %v3064, %v3063
        %v3066 = vmul.f32 0.5, %v3065
        %v3067 = vsub.f32 1.5, %v3066
        %v3068 = vmul.f32 %v3063, %v3067
        %v3069 = vmul.f32 %v340, %v3068
        %vm3070 = vcmp.eq.f32.partialorder %v340, inf
        %v3071 = vsel %vm3070, %v340, %v3069
        %vm3072 = vcmp.eq.f32.partialorder %v340, 0.0
        %v3073 = vand.u32 %v340, 2147483648
        %v3074 = vsel %vm3072, %v3073, %v3071
        %v3075 = vrsqrt.pop %v341
        %v3076 = vmul.f32 %v3075, %v341
        %v3077 = vmul.f32 %v3076, %v3075
        %v3078 = vmul.f32 0.5, %v3077
        %v3079 = vsub.f32 1.5, %v3078
        %v3080 = vmul.f32 %v3075, %v3079
        %v3081 = vmul.f32 %v341, %v3080
        %vm3082 = vcmp.eq.f32.partialorder %v341, inf
        %v3083 = vsel %vm3082, %v341, %v3081
        %vm3084 = vcmp.eq.f32.partialorder %v341, 0.0
        %v3085 = vand.u32 %v341, 2147483648
        %v3086 = vsel %vm3084, %v3085, %v3083
        %v3087 = vrsqrt.pop %v342
        %v3088 = vmul.f32 %v3087, %v342
        %v3089 = vmul.f32 %v3088, %v3087
        %v3090 = vmul.f32 0.5, %v3089
        %v3091 = vsub.f32 1.5, %v3090
        %v3092 = vmul.f32 %v3087, %v3091
        %v3093 = vmul.f32 %v342, %v3092
        %vm3094 = vcmp.eq.f32.partialorder %v342, inf
        %v3095 = vsel %vm3094, %v342, %v3093
        %vm3096 = vcmp.eq.f32.partialorder %v342, 0.0
        %v3097 = vand.u32 %v342, 2147483648
        %v3098 = vsel %vm3096, %v3097, %v3095
        %v3099 = vrsqrt.pop %v343
        %v3100 = vmul.f32 %v3099, %v343
        %v3101 = vmul.f32 %v3100, %v3099
        %v3102 = vmul.f32 0.5, %v3101
        %v3103 = vsub.f32 1.5, %v3102
        %v3104 = vmul.f32 %v3099, %v3103
        %v3105 = vmul.f32 %v343, %v3104
        %vm3106 = vcmp.eq.f32.partialorder %v343, inf
        %v3107 = vsel %vm3106, %v343, %v3105
        %vm3108 = vcmp.eq.f32.partialorder %v343, 0.0
        %v3109 = vand.u32 %v343, 2147483648
        %v3110 = vsel %vm3108, %v3109, %v3107
        %v3111 = vrsqrt.pop %v344
        %v3112 = vmul.f32 %v3111, %v344
        %v3113 = vmul.f32 %v3112, %v3111
        %v3114 = vmul.f32 0.5, %v3113
        %v3115 = vsub.f32 1.5, %v3114
        %v3116 = vmul.f32 %v3111, %v3115
        %v3117 = vmul.f32 %v344, %v3116
        %vm3118 = vcmp.eq.f32.partialorder %v344, inf
        %v3119 = vsel %vm3118, %v344, %v3117
        %vm3120 = vcmp.eq.f32.partialorder %v344, 0.0
        %v3121 = vand.u32 %v344, 2147483648
        %v3122 = vsel %vm3120, %v3121, %v3119
        %v3123 = vrsqrt.pop %v345
        %v3124 = vmul.f32 %v3123, %v345
        %v3125 = vmul.f32 %v3124, %v3123
        %v3126 = vmul.f32 0.5, %v3125
        %v3127 = vsub.f32 1.5, %v3126
        %v3128 = vmul.f32 %v3123, %v3127
        %v3129 = vmul.f32 %v345, %v3128
        %vm3130 = vcmp.eq.f32.partialorder %v345, inf
        %v3131 = vsel %vm3130, %v345, %v3129
        %vm3132 = vcmp.eq.f32.partialorder %v345, 0.0
        %v3133 = vand.u32 %v345, 2147483648
        %v3134 = vsel %vm3132, %v3133, %v3131
        %v3135 = vrsqrt.pop %v346
        %v3136 = vmul.f32 %v3135, %v346
        %v3137 = vmul.f32 %v3136, %v3135
        %v3138 = vmul.f32 0.5, %v3137
        %v3139 = vsub.f32 1.5, %v3138
        %v3140 = vmul.f32 %v3135, %v3139
        %v3141 = vmul.f32 %v346, %v3140
        %vm3142 = vcmp.eq.f32.partialorder %v346, inf
        %v3143 = vsel %vm3142, %v346, %v3141
        %vm3144 = vcmp.eq.f32.partialorder %v346, 0.0
        %v3145 = vand.u32 %v346, 2147483648
        %v3146 = vsel %vm3144, %v3145, %v3143
        %v3147 = vrsqrt.pop %v347
        %v3148 = vmul.f32 %v3147, %v347
        %v3149 = vmul.f32 %v3148, %v3147
        %v3150 = vmul.f32 0.5, %v3149
        %v3151 = vsub.f32 1.5, %v3150
        %v3152 = vmul.f32 %v3147, %v3151
        %v3153 = vmul.f32 %v347, %v3152
        %vm3154 = vcmp.eq.f32.partialorder %v347, inf
        %v3155 = vsel %vm3154, %v347, %v3153
        %vm3156 = vcmp.eq.f32.partialorder %v347, 0.0
        %v3157 = vand.u32 %v347, 2147483648
        %v3158 = vsel %vm3156, %v3157, %v3155
        %v3159 = vrsqrt.pop %v348
        %v3160 = vmul.f32 %v3159, %v348
        %v3161 = vmul.f32 %v3160, %v3159
        %v3162 = vmul.f32 0.5, %v3161
        %v3163 = vsub.f32 1.5, %v3162
        %v3164 = vmul.f32 %v3159, %v3163
        %v3165 = vmul.f32 %v348, %v3164
        %vm3166 = vcmp.eq.f32.partialorder %v348, inf
        %v3167 = vsel %vm3166, %v348, %v3165
        %vm3168 = vcmp.eq.f32.partialorder %v348, 0.0
        %v3169 = vand.u32 %v348, 2147483648
        %v3170 = vsel %vm3168, %v3169, %v3167
        %v3171 = vrsqrt.pop %v349
        %v3172 = vmul.f32 %v3171, %v349
        %v3173 = vmul.f32 %v3172, %v3171
        %v3174 = vmul.f32 0.5, %v3173
        %v3175 = vsub.f32 1.5, %v3174
        %v3176 = vmul.f32 %v3171, %v3175
        %v3177 = vmul.f32 %v349, %v3176
        %vm3178 = vcmp.eq.f32.partialorder %v349, inf
        %v3179 = vsel %vm3178, %v349, %v3177
        %vm3180 = vcmp.eq.f32.partialorder %v349, 0.0
        %v3181 = vand.u32 %v349, 2147483648
        %v3182 = vsel %vm3180, %v3181, %v3179
        %v3183 = vrsqrt.pop %v350
        %v3184 = vmul.f32 %v3183, %v350
        %v3185 = vmul.f32 %v3184, %v3183
        %v3186 = vmul.f32 0.5, %v3185
        %v3187 = vsub.f32 1.5, %v3186
        %v3188 = vmul.f32 %v3183, %v3187
        %v3189 = vmul.f32 %v350, %v3188
        %vm3190 = vcmp.eq.f32.partialorder %v350, inf
        %v3191 = vsel %vm3190, %v350, %v3189
        %vm3192 = vcmp.eq.f32.partialorder %v350, 0.0
        %v3193 = vand.u32 %v350, 2147483648
        %v3194 = vsel %vm3192, %v3193, %v3191
        %v3195 = vrsqrt.pop %v351
        %v3196 = vmul.f32 %v3195, %v351
        %v3197 = vmul.f32 %v3196, %v3195
        %v3198 = vmul.f32 0.5, %v3197
        %v3199 = vsub.f32 1.5, %v3198
        %v3200 = vmul.f32 %v3195, %v3199
        %v3201 = vmul.f32 %v351, %v3200
        %vm3202 = vcmp.eq.f32.partialorder %v351, inf
        %v3203 = vsel %vm3202, %v351, %v3201
        %vm3204 = vcmp.eq.f32.partialorder %v351, 0.0
        %v3205 = vand.u32 %v351, 2147483648
        %v3206 = vsel %vm3204, %v3205, %v3203
        %v3207 = vrsqrt.pop %v352
        %v3208 = vmul.f32 %v3207, %v352
        %v3209 = vmul.f32 %v3208, %v3207
        %v3210 = vmul.f32 0.5, %v3209
        %v3211 = vsub.f32 1.5, %v3210
        %v3212 = vmul.f32 %v3207, %v3211
        %v3213 = vmul.f32 %v352, %v3212
        %vm3214 = vcmp.eq.f32.partialorder %v352, inf
        %v3215 = vsel %vm3214, %v352, %v3213
        %vm3216 = vcmp.eq.f32.partialorder %v352, 0.0
        %v3217 = vand.u32 %v352, 2147483648
        %v3218 = vsel %vm3216, %v3217, %v3215
        %v3219 = vrsqrt.pop %v353
        %v3220 = vmul.f32 %v3219, %v353
        %v3221 = vmul.f32 %v3220, %v3219
        %v3222 = vmul.f32 0.5, %v3221
        %v3223 = vsub.f32 1.5, %v3222
        %v3224 = vmul.f32 %v3219, %v3223
        %v3225 = vmul.f32 %v353, %v3224
        %vm3226 = vcmp.eq.f32.partialorder %v353, inf
        %v3227 = vsel %vm3226, %v353, %v3225
        %vm3228 = vcmp.eq.f32.partialorder %v353, 0.0
        %v3229 = vand.u32 %v353, 2147483648
        %v3230 = vsel %vm3228, %v3229, %v3227
        %v3231 = vrsqrt.pop %v354
        %v3232 = vmul.f32 %v3231, %v354
        %v3233 = vmul.f32 %v3232, %v3231
        %v3234 = vmul.f32 0.5, %v3233
        %v3235 = vsub.f32 1.5, %v3234
        %v3236 = vmul.f32 %v3231, %v3235
        %v3237 = vmul.f32 %v354, %v3236
        %vm3238 = vcmp.eq.f32.partialorder %v354, inf
        %v3239 = vsel %vm3238, %v354, %v3237
        %vm3240 = vcmp.eq.f32.partialorder %v354, 0.0
        %v3241 = vand.u32 %v354, 2147483648
        %v3242 = vsel %vm3240, %v3241, %v3239
        %v3243 = vrsqrt.pop %v355
        %v3244 = vmul.f32 %v3243, %v355
        %v3245 = vmul.f32 %v3244, %v3243
        %v3246 = vmul.f32 0.5, %v3245
        %v3247 = vsub.f32 1.5, %v3246
        %v3248 = vmul.f32 %v3243, %v3247
        %v3249 = vmul.f32 %v355, %v3248
        %vm3250 = vcmp.eq.f32.partialorder %v355, inf
        %v3251 = vsel %vm3250, %v355, %v3249
        %vm3252 = vcmp.eq.f32.partialorder %v355, 0.0
        %v3253 = vand.u32 %v355, 2147483648
        %v3254 = vsel %vm3252, %v3253, %v3251
        %v3255 = vrsqrt.pop %v356
        %v3256 = vmul.f32 %v3255, %v356
        %v3257 = vmul.f32 %v3256, %v3255
        %v3258 = vmul.f32 0.5, %v3257
        %v3259 = vsub.f32 1.5, %v3258
        %v3260 = vmul.f32 %v3255, %v3259
        %v3261 = vmul.f32 %v356, %v3260
        %vm3262 = vcmp.eq.f32.partialorder %v356, inf
        %v3263 = vsel %vm3262, %v356, %v3261
        %vm3264 = vcmp.eq.f32.partialorder %v356, 0.0
        %v3265 = vand.u32 %v356, 2147483648
        %v3266 = vsel %vm3264, %v3265, %v3263
        %v3267 = vrsqrt.pop %v357
        %v3268 = vmul.f32 %v3267, %v357
        %v3269 = vmul.f32 %v3268, %v3267
        %v3270 = vmul.f32 0.5, %v3269
        %v3271 = vsub.f32 1.5, %v3270
        %v3272 = vmul.f32 %v3267, %v3271
        %v3273 = vmul.f32 %v357, %v3272
        %vm3274 = vcmp.eq.f32.partialorder %v357, inf
        %v3275 = vsel %vm3274, %v357, %v3273
        %vm3276 = vcmp.eq.f32.partialorder %v357, 0.0
        %v3277 = vand.u32 %v357, 2147483648
        %v3278 = vsel %vm3276, %v3277, %v3275
        %v3279 = vrsqrt.pop %v358
        %v3280 = vmul.f32 %v3279, %v358
        %v3281 = vmul.f32 %v3280, %v3279
        %v3282 = vmul.f32 0.5, %v3281
        %v3283 = vsub.f32 1.5, %v3282
        %v3284 = vmul.f32 %v3279, %v3283
        %v3285 = vmul.f32 %v358, %v3284
        %vm3286 = vcmp.eq.f32.partialorder %v358, inf
        %v3287 = vsel %vm3286, %v358, %v3285
        %vm3288 = vcmp.eq.f32.partialorder %v358, 0.0
        %v3289 = vand.u32 %v358, 2147483648
        %v3290 = vsel %vm3288, %v3289, %v3287
        %v3291 = vrsqrt.pop %v359
        %v3292 = vmul.f32 %v3291, %v359
        %v3293 = vmul.f32 %v3292, %v3291
        %v3294 = vmul.f32 0.5, %v3293
        %v3295 = vsub.f32 1.5, %v3294
        %v3296 = vmul.f32 %v3291, %v3295
        %v3297 = vmul.f32 %v359, %v3296
        %vm3298 = vcmp.eq.f32.partialorder %v359, inf
        %v3299 = vsel %vm3298, %v359, %v3297
        %vm3300 = vcmp.eq.f32.partialorder %v359, 0.0
        %v3301 = vand.u32 %v359, 2147483648
        %v3302 = vsel %vm3300, %v3301, %v3299
        %v3303 = vrsqrt.pop %v360
        %v3304 = vmul.f32 %v3303, %v360
        %v3305 = vmul.f32 %v3304, %v3303
        %v3306 = vmul.f32 0.5, %v3305
        %v3307 = vsub.f32 1.5, %v3306
        %v3308 = vmul.f32 %v3303, %v3307
        %v3309 = vmul.f32 %v360, %v3308
        %vm3310 = vcmp.eq.f32.partialorder %v360, inf
        %v3311 = vsel %vm3310, %v360, %v3309
        %vm3312 = vcmp.eq.f32.partialorder %v360, 0.0
        %v3313 = vand.u32 %v360, 2147483648
        %v3314 = vsel %vm3312, %v3313, %v3311
        %v3315 = vrsqrt.pop %v361
        %v3316 = vmul.f32 %v3315, %v361
        %v3317 = vmul.f32 %v3316, %v3315
        %v3318 = vmul.f32 0.5, %v3317
        %v3319 = vsub.f32 1.5, %v3318
        %v3320 = vmul.f32 %v3315, %v3319
        %v3321 = vmul.f32 %v361, %v3320
        %vm3322 = vcmp.eq.f32.partialorder %v361, inf
        %v3323 = vsel %vm3322, %v361, %v3321
        %vm3324 = vcmp.eq.f32.partialorder %v361, 0.0
        %v3325 = vand.u32 %v361, 2147483648
        %v3326 = vsel %vm3324, %v3325, %v3323
        %v3327 = vrsqrt.pop %v362
        %v3328 = vmul.f32 %v3327, %v362
        %v3329 = vmul.f32 %v3328, %v3327
        %v3330 = vmul.f32 0.5, %v3329
        %v3331 = vsub.f32 1.5, %v3330
        %v3332 = vmul.f32 %v3327, %v3331
        %v3333 = vmul.f32 %v362, %v3332
        %vm3334 = vcmp.eq.f32.partialorder %v362, inf
        %v3335 = vsel %vm3334, %v362, %v3333
        %vm3336 = vcmp.eq.f32.partialorder %v362, 0.0
        %v3337 = vand.u32 %v362, 2147483648
        %v3338 = vsel %vm3336, %v3337, %v3335
        %v3339 = vrsqrt.pop %v363
        %v3340 = vmul.f32 %v3339, %v363
        %v3341 = vmul.f32 %v3340, %v3339
        %v3342 = vmul.f32 0.5, %v3341
        %v3343 = vsub.f32 1.5, %v3342
        %v3344 = vmul.f32 %v3339, %v3343
        %v3345 = vmul.f32 %v363, %v3344
        %vm3346 = vcmp.eq.f32.partialorder %v363, inf
        %v3347 = vsel %vm3346, %v363, %v3345
        %vm3348 = vcmp.eq.f32.partialorder %v363, 0.0
        %v3349 = vand.u32 %v363, 2147483648
        %v3350 = vsel %vm3348, %v3349, %v3347
        %v3351 = vrsqrt.pop %v364
        %v3352 = vmul.f32 %v3351, %v364
        %v3353 = vmul.f32 %v3352, %v3351
        %v3354 = vmul.f32 0.5, %v3353
        %v3355 = vsub.f32 1.5, %v3354
        %v3356 = vmul.f32 %v3351, %v3355
        %v3357 = vmul.f32 %v364, %v3356
        %vm3358 = vcmp.eq.f32.partialorder %v364, inf
        %v3359 = vsel %vm3358, %v364, %v3357
        %vm3360 = vcmp.eq.f32.partialorder %v364, 0.0
        %v3361 = vand.u32 %v364, 2147483648
        %v3362 = vsel %vm3360, %v3361, %v3359
        %v3363 = vrsqrt.pop %v365
        %v3364 = vmul.f32 %v3363, %v365
        %v3365 = vmul.f32 %v3364, %v3363
        %v3366 = vmul.f32 0.5, %v3365
        %v3367 = vsub.f32 1.5, %v3366
        %v3368 = vmul.f32 %v3363, %v3367
        %v3369 = vmul.f32 %v365, %v3368
        %vm3370 = vcmp.eq.f32.partialorder %v365, inf
        %v3371 = vsel %vm3370, %v365, %v3369
        %vm3372 = vcmp.eq.f32.partialorder %v365, 0.0
        %v3373 = vand.u32 %v365, 2147483648
        %v3374 = vsel %vm3372, %v3373, %v3371
        %v3375 = vrsqrt.pop %v366
        %v3376 = vmul.f32 %v3375, %v366
        %v3377 = vmul.f32 %v3376, %v3375
        %v3378 = vmul.f32 0.5, %v3377
        %v3379 = vsub.f32 1.5, %v3378
        %v3380 = vmul.f32 %v3375, %v3379
        %v3381 = vmul.f32 %v366, %v3380
        %vm3382 = vcmp.eq.f32.partialorder %v366, inf
        %v3383 = vsel %vm3382, %v366, %v3381
        %vm3384 = vcmp.eq.f32.partialorder %v366, 0.0
        %v3385 = vand.u32 %v366, 2147483648
        %v3386 = vsel %vm3384, %v3385, %v3383
        %v3387 = vrsqrt.pop %v367
        %v3388 = vmul.f32 %v3387, %v367
        %v3389 = vmul.f32 %v3388, %v3387
        %v3390 = vmul.f32 0.5, %v3389
        %v3391 = vsub.f32 1.5, %v3390
        %v3392 = vmul.f32 %v3387, %v3391
        %v3393 = vmul.f32 %v367, %v3392
        %vm3394 = vcmp.eq.f32.partialorder %v367, inf
        %v3395 = vsel %vm3394, %v367, %v3393
        %vm3396 = vcmp.eq.f32.partialorder %v367, 0.0
        %v3397 = vand.u32 %v367, 2147483648
        %v3398 = vsel %vm3396, %v3397, %v3395
        %v3399 = vrsqrt.pop %v368
        %v3400 = vmul.f32 %v3399, %v368
        %v3401 = vmul.f32 %v3400, %v3399
        %v3402 = vmul.f32 0.5, %v3401
        %v3403 = vsub.f32 1.5, %v3402
        %v3404 = vmul.f32 %v3399, %v3403
        %v3405 = vmul.f32 %v368, %v3404
        %vm3406 = vcmp.eq.f32.partialorder %v368, inf
        %v3407 = vsel %vm3406, %v368, %v3405
        %vm3408 = vcmp.eq.f32.partialorder %v368, 0.0
        %v3409 = vand.u32 %v368, 2147483648
        %v3410 = vsel %vm3408, %v3409, %v3407
        %v3411 = vrsqrt.pop %v369
        %v3412 = vmul.f32 %v3411, %v369
        %v3413 = vmul.f32 %v3412, %v3411
        %v3414 = vmul.f32 0.5, %v3413
        %v3415 = vsub.f32 1.5, %v3414
        %v3416 = vmul.f32 %v3411, %v3415
        %v3417 = vmul.f32 %v369, %v3416
        %vm3418 = vcmp.eq.f32.partialorder %v369, inf
        %v3419 = vsel %vm3418, %v369, %v3417
        %vm3420 = vcmp.eq.f32.partialorder %v369, 0.0
        %v3421 = vand.u32 %v369, 2147483648
        %v3422 = vsel %vm3420, %v3421, %v3419
        %v3423 = vrsqrt.pop %v370
        %v3424 = vmul.f32 %v3423, %v370
        %v3425 = vmul.f32 %v3424, %v3423
        %v3426 = vmul.f32 0.5, %v3425
        %v3427 = vsub.f32 1.5, %v3426
        %v3428 = vmul.f32 %v3423, %v3427
        %v3429 = vmul.f32 %v370, %v3428
        %vm3430 = vcmp.eq.f32.partialorder %v370, inf
        %v3431 = vsel %vm3430, %v370, %v3429
        %vm3432 = vcmp.eq.f32.partialorder %v370, 0.0
        %v3433 = vand.u32 %v370, 2147483648
        %v3434 = vsel %vm3432, %v3433, %v3431
        %v3435 = vrsqrt.pop %v371
        %v3436 = vmul.f32 %v3435, %v371
        %v3437 = vmul.f32 %v3436, %v3435
        %v3438 = vmul.f32 0.5, %v3437
        %v3439 = vsub.f32 1.5, %v3438
        %v3440 = vmul.f32 %v3435, %v3439
        %v3441 = vmul.f32 %v371, %v3440
        %vm3442 = vcmp.eq.f32.partialorder %v371, inf
        %v3443 = vsel %vm3442, %v371, %v3441
        %vm3444 = vcmp.eq.f32.partialorder %v371, 0.0
        %v3445 = vand.u32 %v371, 2147483648
        %v3446 = vsel %vm3444, %v3445, %v3443
        %v3447 = vrsqrt.pop %v372
        %v3448 = vmul.f32 %v3447, %v372
        %v3449 = vmul.f32 %v3448, %v3447
        %v3450 = vmul.f32 0.5, %v3449
        %v3451 = vsub.f32 1.5, %v3450
        %v3452 = vmul.f32 %v3447, %v3451
        %v3453 = vmul.f32 %v372, %v3452
        %vm3454 = vcmp.eq.f32.partialorder %v372, inf
        %v3455 = vsel %vm3454, %v372, %v3453
        %vm3456 = vcmp.eq.f32.partialorder %v372, 0.0
        %v3457 = vand.u32 %v372, 2147483648
        %v3458 = vsel %vm3456, %v3457, %v3455
        %v3459 = vrsqrt.pop %v373
        %v3460 = vmul.f32 %v3459, %v373
        %v3461 = vmul.f32 %v3460, %v3459
        %v3462 = vmul.f32 0.5, %v3461
        %v3463 = vsub.f32 1.5, %v3462
        %v3464 = vmul.f32 %v3459, %v3463
        %v3465 = vmul.f32 %v373, %v3464
        %vm3466 = vcmp.eq.f32.partialorder %v373, inf
        %v3467 = vsel %vm3466, %v373, %v3465
        %vm3468 = vcmp.eq.f32.partialorder %v373, 0.0
        %v3469 = vand.u32 %v373, 2147483648
        %v3470 = vsel %vm3468, %v3469, %v3467
        %v3471 = vrsqrt.pop %v374
        %v3472 = vmul.f32 %v3471, %v374
        %v3473 = vmul.f32 %v3472, %v3471
        %v3474 = vmul.f32 0.5, %v3473
        %v3475 = vsub.f32 1.5, %v3474
        %v3476 = vmul.f32 %v3471, %v3475
        %v3477 = vmul.f32 %v374, %v3476
        %vm3478 = vcmp.eq.f32.partialorder %v374, inf
        %v3479 = vsel %vm3478, %v374, %v3477
        %vm3480 = vcmp.eq.f32.partialorder %v374, 0.0
        %v3481 = vand.u32 %v374, 2147483648
        %v3482 = vsel %vm3480, %v3481, %v3479
        %v3483 = vrsqrt.pop %v375
        %v3484 = vmul.f32 %v3483, %v375
        %v3485 = vmul.f32 %v3484, %v3483
        %v3486 = vmul.f32 0.5, %v3485
        %v3487 = vsub.f32 1.5, %v3486
        %v3488 = vmul.f32 %v3483, %v3487
        %v3489 = vmul.f32 %v375, %v3488
        %vm3490 = vcmp.eq.f32.partialorder %v375, inf
        %v3491 = vsel %vm3490, %v375, %v3489
        %vm3492 = vcmp.eq.f32.partialorder %v375, 0.0
        %v3493 = vand.u32 %v375, 2147483648
        %v3494 = vsel %vm3492, %v3493, %v3491
        %v3495 = vrsqrt.pop %v376
        %v3496 = vmul.f32 %v3495, %v376
        %v3497 = vmul.f32 %v3496, %v3495
        %v3498 = vmul.f32 0.5, %v3497
        %v3499 = vsub.f32 1.5, %v3498
        %v3500 = vmul.f32 %v3495, %v3499
        %v3501 = vmul.f32 %v376, %v3500
        %vm3502 = vcmp.eq.f32.partialorder %v376, inf
        %v3503 = vsel %vm3502, %v376, %v3501
        %vm3504 = vcmp.eq.f32.partialorder %v376, 0.0
        %v3505 = vand.u32 %v376, 2147483648
        %v3506 = vsel %vm3504, %v3505, %v3503
        %v3507 = vrsqrt.pop %v377
        %v3508 = vmul.f32 %v3507, %v377
        %v3509 = vmul.f32 %v3508, %v3507
        %v3510 = vmul.f32 0.5, %v3509
        %v3511 = vsub.f32 1.5, %v3510
        %v3512 = vmul.f32 %v3507, %v3511
        %v3513 = vmul.f32 %v377, %v3512
        %vm3514 = vcmp.eq.f32.partialorder %v377, inf
        %v3515 = vsel %vm3514, %v377, %v3513
        %vm3516 = vcmp.eq.f32.partialorder %v377, 0.0
        %v3517 = vand.u32 %v377, 2147483648
        %v3518 = vsel %vm3516, %v3517, %v3515
        %v3519 = vrsqrt.pop %v378
        %v3520 = vmul.f32 %v3519, %v378
        %v3521 = vmul.f32 %v3520, %v3519
        %v3522 = vmul.f32 0.5, %v3521
        %v3523 = vsub.f32 1.5, %v3522
        %v3524 = vmul.f32 %v3519, %v3523
        %v3525 = vmul.f32 %v378, %v3524
        %vm3526 = vcmp.eq.f32.partialorder %v378, inf
        %v3527 = vsel %vm3526, %v378, %v3525
        %vm3528 = vcmp.eq.f32.partialorder %v378, 0.0
        %v3529 = vand.u32 %v378, 2147483648
        %v3530 = vsel %vm3528, %v3529, %v3527
        %v3531 = vrsqrt.pop %v379
        %v3532 = vmul.f32 %v3531, %v379
        %v3533 = vmul.f32 %v3532, %v3531
        %v3534 = vmul.f32 0.5, %v3533
        %v3535 = vsub.f32 1.5, %v3534
        %v3536 = vmul.f32 %v3531, %v3535
        %v3537 = vmul.f32 %v379, %v3536
        %vm3538 = vcmp.eq.f32.partialorder %v379, inf
        %v3539 = vsel %vm3538, %v379, %v3537
        %vm3540 = vcmp.eq.f32.partialorder %v379, 0.0
        %v3541 = vand.u32 %v379, 2147483648
        %v3542 = vsel %vm3540, %v3541, %v3539
        %v3543 = vrsqrt.pop %v380
        %v3544 = vmul.f32 %v3543, %v380
        %v3545 = vmul.f32 %v3544, %v3543
        %v3546 = vmul.f32 0.5, %v3545
        %v3547 = vsub.f32 1.5, %v3546
        %v3548 = vmul.f32 %v3543, %v3547
        %v3549 = vmul.f32 %v380, %v3548
        %vm3550 = vcmp.eq.f32.partialorder %v380, inf
        %v3551 = vsel %vm3550, %v380, %v3549
        %vm3552 = vcmp.eq.f32.partialorder %v380, 0.0
        %v3553 = vand.u32 %v380, 2147483648
        %v3554 = vsel %vm3552, %v3553, %v3551
        %v3555 = vrsqrt.pop %v381
        %v3556 = vmul.f32 %v3555, %v381
        %v3557 = vmul.f32 %v3556, %v3555
        %v3558 = vmul.f32 0.5, %v3557
        %v3559 = vsub.f32 1.5, %v3558
        %v3560 = vmul.f32 %v3555, %v3559
        %v3561 = vmul.f32 %v381, %v3560
        %vm3562 = vcmp.eq.f32.partialorder %v381, inf
        %v3563 = vsel %vm3562, %v381, %v3561
        %vm3564 = vcmp.eq.f32.partialorder %v381, 0.0
        %v3565 = vand.u32 %v381, 2147483648
        %v3566 = vsel %vm3564, %v3565, %v3563
        %v3567 = vrsqrt.pop %v382
        %v3568 = vmul.f32 %v3567, %v382
        %v3569 = vmul.f32 %v3568, %v3567
        %v3570 = vmul.f32 0.5, %v3569
        %v3571 = vsub.f32 1.5, %v3570
        %v3572 = vmul.f32 %v3567, %v3571
        %v3573 = vmul.f32 %v382, %v3572
        %vm3574 = vcmp.eq.f32.partialorder %v382, inf
        %v3575 = vsel %vm3574, %v382, %v3573
        %vm3576 = vcmp.eq.f32.partialorder %v382, 0.0
        %v3577 = vand.u32 %v382, 2147483648
        %v3578 = vsel %vm3576, %v3577, %v3575
        %v3579 = vrsqrt.pop %v383
        %v3580 = vmul.f32 %v3579, %v383
        %v3581 = vmul.f32 %v3580, %v3579
        %v3582 = vmul.f32 0.5, %v3581
        %v3583 = vsub.f32 1.5, %v3582
        %v3584 = vmul.f32 %v3579, %v3583
        %v3585 = vmul.f32 %v383, %v3584
        %vm3586 = vcmp.eq.f32.partialorder %v383, inf
        %v3587 = vsel %vm3586, %v383, %v3585
        %vm3588 = vcmp.eq.f32.partialorder %v383, 0.0
        %v3589 = vand.u32 %v383, 2147483648
        %v3590 = vsel %vm3588, %v3589, %v3587
        %v3591 = vrsqrt.pop %v384
        %v3592 = vmul.f32 %v3591, %v384
        %v3593 = vmul.f32 %v3592, %v3591
        %v3594 = vmul.f32 0.5, %v3593
        %v3595 = vsub.f32 1.5, %v3594
        %v3596 = vmul.f32 %v3591, %v3595
        %v3597 = vmul.f32 %v384, %v3596
        %vm3598 = vcmp.eq.f32.partialorder %v384, inf
        %v3599 = vsel %vm3598, %v384, %v3597
        %vm3600 = vcmp.eq.f32.partialorder %v384, 0.0
        %v3601 = vand.u32 %v384, 2147483648
        %v3602 = vsel %vm3600, %v3601, %v3599
        %v3603 = vrsqrt.pop %v385
        %v3604 = vmul.f32 %v3603, %v385
        %v3605 = vmul.f32 %v3604, %v3603
        %v3606 = vmul.f32 0.5, %v3605
        %v3607 = vsub.f32 1.5, %v3606
        %v3608 = vmul.f32 %v3603, %v3607
        %v3609 = vmul.f32 %v385, %v3608
        %vm3610 = vcmp.eq.f32.partialorder %v385, inf
        %v3611 = vsel %vm3610, %v385, %v3609
        %vm3612 = vcmp.eq.f32.partialorder %v385, 0.0
        %v3613 = vand.u32 %v385, 2147483648
        %v3614 = vsel %vm3612, %v3613, %v3611
        %v3615 = vrsqrt.pop %v386
        %v3616 = vmul.f32 %v3615, %v386
        %v3617 = vmul.f32 %v3616, %v3615
        %v3618 = vmul.f32 0.5, %v3617
        %v3619 = vsub.f32 1.5, %v3618
        %v3620 = vmul.f32 %v3615, %v3619
        %v3621 = vmul.f32 %v386, %v3620
        %vm3622 = vcmp.eq.f32.partialorder %v386, inf
        %v3623 = vsel %vm3622, %v386, %v3621
        %vm3624 = vcmp.eq.f32.partialorder %v386, 0.0
        %v3625 = vand.u32 %v386, 2147483648
        %v3626 = vsel %vm3624, %v3625, %v3623
        %v3627 = vrsqrt.pop %v387
        %v3628 = vmul.f32 %v3627, %v387
        %v3629 = vmul.f32 %v3628, %v3627
        %v3630 = vmul.f32 0.5, %v3629
        %v3631 = vsub.f32 1.5, %v3630
        %v3632 = vmul.f32 %v3627, %v3631
        %v3633 = vmul.f32 %v387, %v3632
        %vm3634 = vcmp.eq.f32.partialorder %v387, inf
        %v3635 = vsel %vm3634, %v387, %v3633
        %vm3636 = vcmp.eq.f32.partialorder %v387, 0.0
        %v3637 = vand.u32 %v387, 2147483648
        %v3638 = vsel %vm3636, %v3637, %v3635
        %v3639 = vrsqrt.pop %v388
        %v3640 = vmul.f32 %v3639, %v388
        %v3641 = vmul.f32 %v3640, %v3639
        %v3642 = vmul.f32 0.5, %v3641
        %v3643 = vsub.f32 1.5, %v3642
        %v3644 = vmul.f32 %v3639, %v3643
        %v3645 = vmul.f32 %v388, %v3644
        %vm3646 = vcmp.eq.f32.partialorder %v388, inf
        %v3647 = vsel %vm3646, %v388, %v3645
        %vm3648 = vcmp.eq.f32.partialorder %v388, 0.0
        %v3649 = vand.u32 %v388, 2147483648
        %v3650 = vsel %vm3648, %v3649, %v3647
        %v3651 = vrsqrt.pop %v389
        %v3652 = vmul.f32 %v3651, %v389
        %v3653 = vmul.f32 %v3652, %v3651
        %v3654 = vmul.f32 0.5, %v3653
        %v3655 = vsub.f32 1.5, %v3654
        %v3656 = vmul.f32 %v3651, %v3655
        %v3657 = vmul.f32 %v389, %v3656
        %vm3658 = vcmp.eq.f32.partialorder %v389, inf
        %v3659 = vsel %vm3658, %v389, %v3657
        %vm3660 = vcmp.eq.f32.partialorder %v389, 0.0
        %v3661 = vand.u32 %v389, 2147483648
        %v3662 = vsel %vm3660, %v3661, %v3659
        %v3663 = vrsqrt.pop %v390
        %v3664 = vmul.f32 %v3663, %v390
        %v3665 = vmul.f32 %v3664, %v3663
        %v3666 = vmul.f32 0.5, %v3665
        %v3667 = vsub.f32 1.5, %v3666
        %v3668 = vmul.f32 %v3663, %v3667
        %v3669 = vmul.f32 %v390, %v3668
        %vm3670 = vcmp.eq.f32.partialorder %v390, inf
        %v3671 = vsel %vm3670, %v390, %v3669
        %vm3672 = vcmp.eq.f32.partialorder %v390, 0.0
        %v3673 = vand.u32 %v390, 2147483648
        %v3674 = vsel %vm3672, %v3673, %v3671
        %v3675 = vrsqrt.pop %v391
        %v3676 = vmul.f32 %v3675, %v391
        %v3677 = vmul.f32 %v3676, %v3675
        %v3678 = vmul.f32 0.5, %v3677
        %v3679 = vsub.f32 1.5, %v3678
        %v3680 = vmul.f32 %v3675, %v3679
        %v3681 = vmul.f32 %v391, %v3680
        %vm3682 = vcmp.eq.f32.partialorder %v391, inf
        %v3683 = vsel %vm3682, %v391, %v3681
        %vm3684 = vcmp.eq.f32.partialorder %v391, 0.0
        %v3685 = vand.u32 %v391, 2147483648
        %v3686 = vsel %vm3684, %v3685, %v3683
        %v3687 = vrsqrt.pop %v392
        %v3688 = vmul.f32 %v3687, %v392
        %v3689 = vmul.f32 %v3688, %v3687
        %v3690 = vmul.f32 0.5, %v3689
        %v3691 = vsub.f32 1.5, %v3690
        %v3692 = vmul.f32 %v3687, %v3691
        %v3693 = vmul.f32 %v392, %v3692
        %vm3694 = vcmp.eq.f32.partialorder %v392, inf
        %v3695 = vsel %vm3694, %v392, %v3693
        %vm3696 = vcmp.eq.f32.partialorder %v392, 0.0
        %v3697 = vand.u32 %v392, 2147483648
        %v3698 = vsel %vm3696, %v3697, %v3695
        %v3699 = vrsqrt.pop %v393
        %v3700 = vmul.f32 %v3699, %v393
        %v3701 = vmul.f32 %v3700, %v3699
        %v3702 = vmul.f32 0.5, %v3701
        %v3703 = vsub.f32 1.5, %v3702
        %v3704 = vmul.f32 %v3699, %v3703
        %v3705 = vmul.f32 %v393, %v3704
        %vm3706 = vcmp.eq.f32.partialorder %v393, inf
        %v3707 = vsel %vm3706, %v393, %v3705
        %vm3708 = vcmp.eq.f32.partialorder %v393, 0.0
        %v3709 = vand.u32 %v393, 2147483648
        %v3710 = vsel %vm3708, %v3709, %v3707
        %v3711 = vrsqrt.pop %v394
        %v3712 = vmul.f32 %v3711, %v394
        %v3713 = vmul.f32 %v3712, %v3711
        %v3714 = vmul.f32 0.5, %v3713
        %v3715 = vsub.f32 1.5, %v3714
        %v3716 = vmul.f32 %v3711, %v3715
        %v3717 = vmul.f32 %v394, %v3716
        %vm3718 = vcmp.eq.f32.partialorder %v394, inf
        %v3719 = vsel %vm3718, %v394, %v3717
        %vm3720 = vcmp.eq.f32.partialorder %v394, 0.0
        %v3721 = vand.u32 %v394, 2147483648
        %v3722 = vsel %vm3720, %v3721, %v3719
        %v3723 = vrsqrt.pop %v395
        %v3724 = vmul.f32 %v3723, %v395
        %v3725 = vmul.f32 %v3724, %v3723
        %v3726 = vmul.f32 0.5, %v3725
        %v3727 = vsub.f32 1.5, %v3726
        %v3728 = vmul.f32 %v3723, %v3727
        %v3729 = vmul.f32 %v395, %v3728
        %vm3730 = vcmp.eq.f32.partialorder %v395, inf
        %v3731 = vsel %vm3730, %v395, %v3729
        %vm3732 = vcmp.eq.f32.partialorder %v395, 0.0
        %v3733 = vand.u32 %v395, 2147483648
        %v3734 = vsel %vm3732, %v3733, %v3731
        %v3735 = vrsqrt.pop %v396
        %v3736 = vmul.f32 %v3735, %v396
        %v3737 = vmul.f32 %v3736, %v3735
        %v3738 = vmul.f32 0.5, %v3737
        %v3739 = vsub.f32 1.5, %v3738
        %v3740 = vmul.f32 %v3735, %v3739
        %v3741 = vmul.f32 %v396, %v3740
        %vm3742 = vcmp.eq.f32.partialorder %v396, inf
        %v3743 = vsel %vm3742, %v396, %v3741
        %vm3744 = vcmp.eq.f32.partialorder %v396, 0.0
        %v3745 = vand.u32 %v396, 2147483648
        %v3746 = vsel %vm3744, %v3745, %v3743
        %v3747 = vrsqrt.pop %v397
        %v3748 = vmul.f32 %v3747, %v397
        %v3749 = vmul.f32 %v3748, %v3747
        %v3750 = vmul.f32 0.5, %v3749
        %v3751 = vsub.f32 1.5, %v3750
        %v3752 = vmul.f32 %v3747, %v3751
        %v3753 = vmul.f32 %v397, %v3752
        %vm3754 = vcmp.eq.f32.partialorder %v397, inf
        %v3755 = vsel %vm3754, %v397, %v3753
        %vm3756 = vcmp.eq.f32.partialorder %v397, 0.0
        %v3757 = vand.u32 %v397, 2147483648
        %v3758 = vsel %vm3756, %v3757, %v3755
        %v3759 = vrsqrt.pop %v398
        %v3760 = vmul.f32 %v3759, %v398
        %v3761 = vmul.f32 %v3760, %v3759
        %v3762 = vmul.f32 0.5, %v3761
        %v3763 = vsub.f32 1.5, %v3762
        %v3764 = vmul.f32 %v3759, %v3763
        %v3765 = vmul.f32 %v398, %v3764
        %vm3766 = vcmp.eq.f32.partialorder %v398, inf
        %v3767 = vsel %vm3766, %v398, %v3765
        %vm3768 = vcmp.eq.f32.partialorder %v398, 0.0
        %v3769 = vand.u32 %v398, 2147483648
        %v3770 = vsel %vm3768, %v3769, %v3767
        %v3771 = vrsqrt.pop %v399
        %v3772 = vmul.f32 %v3771, %v399
        %v3773 = vmul.f32 %v3772, %v3771
        %v3774 = vmul.f32 0.5, %v3773
        %v3775 = vsub.f32 1.5, %v3774
        %v3776 = vmul.f32 %v3771, %v3775
        %v3777 = vmul.f32 %v399, %v3776
        %vm3778 = vcmp.eq.f32.partialorder %v399, inf
        %v3779 = vsel %vm3778, %v399, %v3777
        %vm3780 = vcmp.eq.f32.partialorder %v399, 0.0
        %v3781 = vand.u32 %v399, 2147483648
        %v3782 = vsel %vm3780, %v3781, %v3779
        %v3783 = vrsqrt.pop %v400
        %v3784 = vmul.f32 %v3783, %v400
        %v3785 = vmul.f32 %v3784, %v3783
        %v3786 = vmul.f32 0.5, %v3785
        %v3787 = vsub.f32 1.5, %v3786
        %v3788 = vmul.f32 %v3783, %v3787
        %v3789 = vmul.f32 %v400, %v3788
        %vm3790 = vcmp.eq.f32.partialorder %v400, inf
        %v3791 = vsel %vm3790, %v400, %v3789
        %vm3792 = vcmp.eq.f32.partialorder %v400, 0.0
        %v3793 = vand.u32 %v400, 2147483648
        %v3794 = vsel %vm3792, %v3793, %v3791
        %v3795 = vrsqrt.pop %v401
        %v3796 = vmul.f32 %v3795, %v401
        %v3797 = vmul.f32 %v3796, %v3795
        %v3798 = vmul.f32 0.5, %v3797
        %v3799 = vsub.f32 1.5, %v3798
        %v3800 = vmul.f32 %v3795, %v3799
        %v3801 = vmul.f32 %v401, %v3800
        %vm3802 = vcmp.eq.f32.partialorder %v401, inf
        %v3803 = vsel %vm3802, %v401, %v3801
        %vm3804 = vcmp.eq.f32.partialorder %v401, 0.0
        %v3805 = vand.u32 %v401, 2147483648
        %v3806 = vsel %vm3804, %v3805, %v3803
        %v3807 = vrsqrt.pop %v402
        %v3808 = vmul.f32 %v3807, %v402
        %v3809 = vmul.f32 %v3808, %v3807
        %v3810 = vmul.f32 0.5, %v3809
        %v3811 = vsub.f32 1.5, %v3810
        %v3812 = vmul.f32 %v3807, %v3811
        %v3813 = vmul.f32 %v402, %v3812
        %vm3814 = vcmp.eq.f32.partialorder %v402, inf
        %v3815 = vsel %vm3814, %v402, %v3813
        %vm3816 = vcmp.eq.f32.partialorder %v402, 0.0
        %v3817 = vand.u32 %v402, 2147483648
        %v3818 = vsel %vm3816, %v3817, %v3815
        %v3819 = vrsqrt.pop %v403
        %v3820 = vmul.f32 %v3819, %v403
        %v3821 = vmul.f32 %v3820, %v3819
        %v3822 = vmul.f32 0.5, %v3821
        %v3823 = vsub.f32 1.5, %v3822
        %v3824 = vmul.f32 %v3819, %v3823
        %v3825 = vmul.f32 %v403, %v3824
        %vm3826 = vcmp.eq.f32.partialorder %v403, inf
        %v3827 = vsel %vm3826, %v403, %v3825
        %vm3828 = vcmp.eq.f32.partialorder %v403, 0.0
        %v3829 = vand.u32 %v403, 2147483648
        %v3830 = vsel %vm3828, %v3829, %v3827
        %v3831 = vrsqrt.pop %v404
        %v3832 = vmul.f32 %v3831, %v404
        %v3833 = vmul.f32 %v3832, %v3831
        %v3834 = vmul.f32 0.5, %v3833
        %v3835 = vsub.f32 1.5, %v3834
        %v3836 = vmul.f32 %v3831, %v3835
        %v3837 = vmul.f32 %v404, %v3836
        %vm3838 = vcmp.eq.f32.partialorder %v404, inf
        %v3839 = vsel %vm3838, %v404, %v3837
        %vm3840 = vcmp.eq.f32.partialorder %v404, 0.0
        %v3841 = vand.u32 %v404, 2147483648
        %v3842 = vsel %vm3840, %v3841, %v3839
        %v3843 = vrsqrt.pop %v405
        %v3844 = vmul.f32 %v3843, %v405
        %v3845 = vmul.f32 %v3844, %v3843
        %v3846 = vmul.f32 0.5, %v3845
        %v3847 = vsub.f32 1.5, %v3846
        %v3848 = vmul.f32 %v3843, %v3847
        %v3849 = vmul.f32 %v405, %v3848
        %vm3850 = vcmp.eq.f32.partialorder %v405, inf
        %v3851 = vsel %vm3850, %v405, %v3849
        %vm3852 = vcmp.eq.f32.partialorder %v405, 0.0
        %v3853 = vand.u32 %v405, 2147483648
        %v3854 = vsel %vm3852, %v3853, %v3851
        %v3855 = vrsqrt.pop %v406
        %v3856 = vmul.f32 %v3855, %v406
        %v3857 = vmul.f32 %v3856, %v3855
        %v3858 = vmul.f32 0.5, %v3857
        %v3859 = vsub.f32 1.5, %v3858
        %v3860 = vmul.f32 %v3855, %v3859
        %v3861 = vmul.f32 %v406, %v3860
        %vm3862 = vcmp.eq.f32.partialorder %v406, inf
        %v3863 = vsel %vm3862, %v406, %v3861
        %vm3864 = vcmp.eq.f32.partialorder %v406, 0.0
        %v3865 = vand.u32 %v406, 2147483648
        %v3866 = vsel %vm3864, %v3865, %v3863
        %v3867 = vrsqrt.pop %v407
        %v3868 = vmul.f32 %v3867, %v407
        %v3869 = vmul.f32 %v3868, %v3867
        %v3870 = vmul.f32 0.5, %v3869
        %v3871 = vsub.f32 1.5, %v3870
        %v3872 = vmul.f32 %v3867, %v3871
        %v3873 = vmul.f32 %v407, %v3872
        %vm3874 = vcmp.eq.f32.partialorder %v407, inf
        %v3875 = vsel %vm3874, %v407, %v3873
        %vm3876 = vcmp.eq.f32.partialorder %v407, 0.0
        %v3877 = vand.u32 %v407, 2147483648
        %v3878 = vsel %vm3876, %v3877, %v3875
        %v3879 = vrsqrt.pop %v408
        %v3880 = vmul.f32 %v3879, %v408
        %v3881 = vmul.f32 %v3880, %v3879
        %v3882 = vmul.f32 0.5, %v3881
        %v3883 = vsub.f32 1.5, %v3882
        %v3884 = vmul.f32 %v3879, %v3883
        %v3885 = vmul.f32 %v408, %v3884
        %vm3886 = vcmp.eq.f32.partialorder %v408, inf
        %v3887 = vsel %vm3886, %v408, %v3885
        %vm3888 = vcmp.eq.f32.partialorder %v408, 0.0
        %v3889 = vand.u32 %v408, 2147483648
        %v3890 = vsel %vm3888, %v3889, %v3887
        %v3891 = vrsqrt.pop %v409
        %v3892 = vmul.f32 %v3891, %v409
        %v3893 = vmul.f32 %v3892, %v3891
        %v3894 = vmul.f32 0.5, %v3893
        %v3895 = vsub.f32 1.5, %v3894
        %v3896 = vmul.f32 %v3891, %v3895
        %v3897 = vmul.f32 %v409, %v3896
        %vm3898 = vcmp.eq.f32.partialorder %v409, inf
        %v3899 = vsel %vm3898, %v409, %v3897
        %vm3900 = vcmp.eq.f32.partialorder %v409, 0.0
        %v3901 = vand.u32 %v409, 2147483648
        %v3902 = vsel %vm3900, %v3901, %v3899
        %v3903 = vrsqrt.pop %v410
        %v3904 = vmul.f32 %v3903, %v410
        %v3905 = vmul.f32 %v3904, %v3903
        %v3906 = vmul.f32 0.5, %v3905
        %v3907 = vsub.f32 1.5, %v3906
        %v3908 = vmul.f32 %v3903, %v3907
        %v3909 = vmul.f32 %v410, %v3908
        %vm3910 = vcmp.eq.f32.partialorder %v410, inf
        %v3911 = vsel %vm3910, %v410, %v3909
        %vm3912 = vcmp.eq.f32.partialorder %v410, 0.0
        %v3913 = vand.u32 %v410, 2147483648
        %v3914 = vsel %vm3912, %v3913, %v3911
        %v3915 = vrsqrt.pop %v411
        %v3916 = vmul.f32 %v3915, %v411
        %v3917 = vmul.f32 %v3916, %v3915
        %v3918 = vmul.f32 0.5, %v3917
        %v3919 = vsub.f32 1.5, %v3918
        %v3920 = vmul.f32 %v3915, %v3919
        %v3921 = vmul.f32 %v411, %v3920
        %vm3922 = vcmp.eq.f32.partialorder %v411, inf
        %v3923 = vsel %vm3922, %v411, %v3921
        %vm3924 = vcmp.eq.f32.partialorder %v411, 0.0
        %v3925 = vand.u32 %v411, 2147483648
        %v3926 = vsel %vm3924, %v3925, %v3923
        %v3927 = vrsqrt.pop %v412
        %v3928 = vmul.f32 %v3927, %v412
        %v3929 = vmul.f32 %v3928, %v3927
        %v3930 = vmul.f32 0.5, %v3929
        %v3931 = vsub.f32 1.5, %v3930
        %v3932 = vmul.f32 %v3927, %v3931
        %v3933 = vmul.f32 %v412, %v3932
        %vm3934 = vcmp.eq.f32.partialorder %v412, inf
        %v3935 = vsel %vm3934, %v412, %v3933
        %vm3936 = vcmp.eq.f32.partialorder %v412, 0.0
        %v3937 = vand.u32 %v412, 2147483648
        %v3938 = vsel %vm3936, %v3937, %v3935
        %v3939 = vrsqrt.pop %v413
        %v3940 = vmul.f32 %v3939, %v413
        %v3941 = vmul.f32 %v3940, %v3939
        %v3942 = vmul.f32 0.5, %v3941
        %v3943 = vsub.f32 1.5, %v3942
        %v3944 = vmul.f32 %v3939, %v3943
        %v3945 = vmul.f32 %v413, %v3944
        %vm3946 = vcmp.eq.f32.partialorder %v413, inf
        %v3947 = vsel %vm3946, %v413, %v3945
        %vm3948 = vcmp.eq.f32.partialorder %v413, 0.0
        %v3949 = vand.u32 %v413, 2147483648
        %v3950 = vsel %vm3948, %v3949, %v3947
        %v3951 = vrsqrt.pop %v414
        %v3952 = vmul.f32 %v3951, %v414
        %v3953 = vmul.f32 %v3952, %v3951
        %v3954 = vmul.f32 0.5, %v3953
        %v3955 = vsub.f32 1.5, %v3954
        %v3956 = vmul.f32 %v3951, %v3955
        %v3957 = vmul.f32 %v414, %v3956
        %vm3958 = vcmp.eq.f32.partialorder %v414, inf
        %v3959 = vsel %vm3958, %v414, %v3957
        %vm3960 = vcmp.eq.f32.partialorder %v414, 0.0
        %v3961 = vand.u32 %v414, 2147483648
        %v3962 = vsel %vm3960, %v3961, %v3959
        %v3963 = vrsqrt.pop %v415
        %v3964 = vmul.f32 %v3963, %v415
        %v3965 = vmul.f32 %v3964, %v3963
        %v3966 = vmul.f32 0.5, %v3965
        %v3967 = vsub.f32 1.5, %v3966
        %v3968 = vmul.f32 %v3963, %v3967
        %v3969 = vmul.f32 %v415, %v3968
        %vm3970 = vcmp.eq.f32.partialorder %v415, inf
        %v3971 = vsel %vm3970, %v415, %v3969
        %vm3972 = vcmp.eq.f32.partialorder %v415, 0.0
        %v3973 = vand.u32 %v415, 2147483648
        %v3974 = vsel %vm3972, %v3973, %v3971
        %v3975 = vrsqrt.pop %v416
        %v3976 = vmul.f32 %v3975, %v416
        %v3977 = vmul.f32 %v3976, %v3975
        %v3978 = vmul.f32 0.5, %v3977
        %v3979 = vsub.f32 1.5, %v3978
        %v3980 = vmul.f32 %v3975, %v3979
        %v3981 = vmul.f32 %v416, %v3980
        %vm3982 = vcmp.eq.f32.partialorder %v416, inf
        %v3983 = vsel %vm3982, %v416, %v3981
        %vm3984 = vcmp.eq.f32.partialorder %v416, 0.0
        %v3985 = vand.u32 %v416, 2147483648
        %v3986 = vsel %vm3984, %v3985, %v3983
        %v3987 = vrsqrt.pop %v417
        %v3988 = vmul.f32 %v3987, %v417
        %v3989 = vmul.f32 %v3988, %v3987
        %v3990 = vmul.f32 0.5, %v3989
        %v3991 = vsub.f32 1.5, %v3990
        %v3992 = vmul.f32 %v3987, %v3991
        %v3993 = vmul.f32 %v417, %v3992
        %vm3994 = vcmp.eq.f32.partialorder %v417, inf
        %v3995 = vsel %vm3994, %v417, %v3993
        %vm3996 = vcmp.eq.f32.partialorder %v417, 0.0
        %v3997 = vand.u32 %v417, 2147483648
        %v3998 = vsel %vm3996, %v3997, %v3995
        %v3999 = vrsqrt.pop %v418
        %v4000 = vmul.f32 %v3999, %v418
        %v4001 = vmul.f32 %v4000, %v3999
        %v4002 = vmul.f32 0.5, %v4001
        %v4003 = vsub.f32 1.5, %v4002
        %v4004 = vmul.f32 %v3999, %v4003
        %v4005 = vmul.f32 %v418, %v4004
        %vm4006 = vcmp.eq.f32.partialorder %v418, inf
        %v4007 = vsel %vm4006, %v418, %v4005
        %vm4008 = vcmp.eq.f32.partialorder %v418, 0.0
        %v4009 = vand.u32 %v418, 2147483648
        %v4010 = vsel %vm4008, %v4009, %v4007
        %v4011 = vrsqrt.pop %v419
        %v4012 = vmul.f32 %v4011, %v419
        %v4013 = vmul.f32 %v4012, %v4011
        %v4014 = vmul.f32 0.5, %v4013
        %v4015 = vsub.f32 1.5, %v4014
        %v4016 = vmul.f32 %v4011, %v4015
        %v4017 = vmul.f32 %v419, %v4016
        %vm4018 = vcmp.eq.f32.partialorder %v419, inf
        %v4019 = vsel %vm4018, %v419, %v4017
        %vm4020 = vcmp.eq.f32.partialorder %v419, 0.0
        %v4021 = vand.u32 %v419, 2147483648
        %v4022 = vsel %vm4020, %v4021, %v4019
        %v4023 = vrsqrt.pop %v420
        %v4024 = vmul.f32 %v4023, %v420
        %v4025 = vmul.f32 %v4024, %v4023
        %v4026 = vmul.f32 0.5, %v4025
        %v4027 = vsub.f32 1.5, %v4026
        %v4028 = vmul.f32 %v4023, %v4027
        %v4029 = vmul.f32 %v420, %v4028
        %vm4030 = vcmp.eq.f32.partialorder %v420, inf
        %v4031 = vsel %vm4030, %v420, %v4029
        %vm4032 = vcmp.eq.f32.partialorder %v420, 0.0
        %v4033 = vand.u32 %v420, 2147483648
        %v4034 = vsel %vm4032, %v4033, %v4031
        %v4035 = vrsqrt.pop %v421
        %v4036 = vmul.f32 %v4035, %v421
        %v4037 = vmul.f32 %v4036, %v4035
        %v4038 = vmul.f32 0.5, %v4037
        %v4039 = vsub.f32 1.5, %v4038
        %v4040 = vmul.f32 %v4035, %v4039
        %v4041 = vmul.f32 %v421, %v4040
        %vm4042 = vcmp.eq.f32.partialorder %v421, inf
        %v4043 = vsel %vm4042, %v421, %v4041
        %vm4044 = vcmp.eq.f32.partialorder %v421, 0.0
        %v4045 = vand.u32 %v421, 2147483648
        %v4046 = vsel %vm4044, %v4045, %v4043
        %v4047 = vrsqrt.pop %v422
        %v4048 = vmul.f32 %v4047, %v422
        %v4049 = vmul.f32 %v4048, %v4047
        %v4050 = vmul.f32 0.5, %v4049
        %v4051 = vsub.f32 1.5, %v4050
        %v4052 = vmul.f32 %v4047, %v4051
        %v4053 = vmul.f32 %v422, %v4052
        %vm4054 = vcmp.eq.f32.partialorder %v422, inf
        %v4055 = vsel %vm4054, %v422, %v4053
        %vm4056 = vcmp.eq.f32.partialorder %v422, 0.0
        %v4057 = vand.u32 %v422, 2147483648
        %v4058 = vsel %vm4056, %v4057, %v4055
        %v4059 = vrsqrt.pop %v423
        %v4060 = vmul.f32 %v4059, %v423
        %v4061 = vmul.f32 %v4060, %v4059
        %v4062 = vmul.f32 0.5, %v4061
        %v4063 = vsub.f32 1.5, %v4062
        %v4064 = vmul.f32 %v4059, %v4063
        %v4065 = vmul.f32 %v423, %v4064
        %vm4066 = vcmp.eq.f32.partialorder %v423, inf
        %v4067 = vsel %vm4066, %v423, %v4065
        %vm4068 = vcmp.eq.f32.partialorder %v423, 0.0
        %v4069 = vand.u32 %v423, 2147483648
        %v4070 = vsel %vm4068, %v4069, %v4067
        %v4071 = vrsqrt.pop %v424
        %v4072 = vmul.f32 %v4071, %v424
        %v4073 = vmul.f32 %v4072, %v4071
        %v4074 = vmul.f32 0.5, %v4073
        %v4075 = vsub.f32 1.5, %v4074
        %v4076 = vmul.f32 %v4071, %v4075
        %v4077 = vmul.f32 %v424, %v4076
        %vm4078 = vcmp.eq.f32.partialorder %v424, inf
        %v4079 = vsel %vm4078, %v424, %v4077
        %vm4080 = vcmp.eq.f32.partialorder %v424, 0.0
        %v4081 = vand.u32 %v424, 2147483648
        %v4082 = vsel %vm4080, %v4081, %v4079
        %v4083 = vrsqrt.pop %v425
        %v4084 = vmul.f32 %v4083, %v425
        %v4085 = vmul.f32 %v4084, %v4083
        %v4086 = vmul.f32 0.5, %v4085
        %v4087 = vsub.f32 1.5, %v4086
        %v4088 = vmul.f32 %v4083, %v4087
        %v4089 = vmul.f32 %v425, %v4088
        %vm4090 = vcmp.eq.f32.partialorder %v425, inf
        %v4091 = vsel %vm4090, %v425, %v4089
        %vm4092 = vcmp.eq.f32.partialorder %v425, 0.0
        %v4093 = vand.u32 %v425, 2147483648
        %v4094 = vsel %vm4092, %v4093, %v4091
        %v4095 = vrsqrt.pop %v426
        %v4096 = vmul.f32 %v4095, %v426
        %v4097 = vmul.f32 %v4096, %v4095
        %v4098 = vmul.f32 0.5, %v4097
        %v4099 = vsub.f32 1.5, %v4098
        %v4100 = vmul.f32 %v4095, %v4099
        %v4101 = vmul.f32 %v426, %v4100
        %vm4102 = vcmp.eq.f32.partialorder %v426, inf
        %v4103 = vsel %vm4102, %v426, %v4101
        %vm4104 = vcmp.eq.f32.partialorder %v426, 0.0
        %v4105 = vand.u32 %v426, 2147483648
        %v4106 = vsel %vm4104, %v4105, %v4103
        %v4107 = vrsqrt.pop %v427
        %v4108 = vmul.f32 %v4107, %v427
        %v4109 = vmul.f32 %v4108, %v4107
        %v4110 = vmul.f32 0.5, %v4109
        %v4111 = vsub.f32 1.5, %v4110
        %v4112 = vmul.f32 %v4107, %v4111
        %v4113 = vmul.f32 %v427, %v4112
        %vm4114 = vcmp.eq.f32.partialorder %v427, inf
        %v4115 = vsel %vm4114, %v427, %v4113
        %vm4116 = vcmp.eq.f32.partialorder %v427, 0.0
        %v4117 = vand.u32 %v427, 2147483648
        %v4118 = vsel %vm4116, %v4117, %v4115
        %v4119 = vrsqrt.pop %v428
        %v4120 = vmul.f32 %v4119, %v428
        %v4121 = vmul.f32 %v4120, %v4119
        %v4122 = vmul.f32 0.5, %v4121
        %v4123 = vsub.f32 1.5, %v4122
        %v4124 = vmul.f32 %v4119, %v4123
        %v4125 = vmul.f32 %v428, %v4124
        %vm4126 = vcmp.eq.f32.partialorder %v428, inf
        %v4127 = vsel %vm4126, %v428, %v4125
        %vm4128 = vcmp.eq.f32.partialorder %v428, 0.0
        %v4129 = vand.u32 %v428, 2147483648
        %v4130 = vsel %vm4128, %v4129, %v4127
        %v4131 = vrsqrt.pop %v429
        %v4132 = vmul.f32 %v4131, %v429
        %v4133 = vmul.f32 %v4132, %v4131
        %v4134 = vmul.f32 0.5, %v4133
        %v4135 = vsub.f32 1.5, %v4134
        %v4136 = vmul.f32 %v4131, %v4135
        %v4137 = vmul.f32 %v429, %v4136
        %vm4138 = vcmp.eq.f32.partialorder %v429, inf
        %v4139 = vsel %vm4138, %v429, %v4137
        %vm4140 = vcmp.eq.f32.partialorder %v429, 0.0
        %v4141 = vand.u32 %v429, 2147483648
        %v4142 = vsel %vm4140, %v4141, %v4139
        %v4143 = vrsqrt.pop %v430
        %v4144 = vmul.f32 %v4143, %v430
        %v4145 = vmul.f32 %v4144, %v4143
        %v4146 = vmul.f32 0.5, %v4145
        %v4147 = vsub.f32 1.5, %v4146
        %v4148 = vmul.f32 %v4143, %v4147
        %v4149 = vmul.f32 %v430, %v4148
        %vm4150 = vcmp.eq.f32.partialorder %v430, inf
        %v4151 = vsel %vm4150, %v430, %v4149
        %vm4152 = vcmp.eq.f32.partialorder %v430, 0.0
        %v4153 = vand.u32 %v430, 2147483648
        %v4154 = vsel %vm4152, %v4153, %v4151
        %v4155 = vrsqrt.pop %v431
        %v4156 = vmul.f32 %v4155, %v431
        %v4157 = vmul.f32 %v4156, %v4155
        %v4158 = vmul.f32 0.5, %v4157
        %v4159 = vsub.f32 1.5, %v4158
        %v4160 = vmul.f32 %v4155, %v4159
        %v4161 = vmul.f32 %v431, %v4160
        %vm4162 = vcmp.eq.f32.partialorder %v431, inf
        %v4163 = vsel %vm4162, %v431, %v4161
        %vm4164 = vcmp.eq.f32.partialorder %v431, 0.0
        %v4165 = vand.u32 %v431, 2147483648
        %v4166 = vsel %vm4164, %v4165, %v4163
        %v4167 = vrsqrt.pop %v432
        %v4168 = vmul.f32 %v4167, %v432
        %v4169 = vmul.f32 %v4168, %v4167
        %v4170 = vmul.f32 0.5, %v4169
        %v4171 = vsub.f32 1.5, %v4170
        %v4172 = vmul.f32 %v4167, %v4171
        %v4173 = vmul.f32 %v432, %v4172
        %vm4174 = vcmp.eq.f32.partialorder %v432, inf
        %v4175 = vsel %vm4174, %v432, %v4173
        %vm4176 = vcmp.eq.f32.partialorder %v432, 0.0
        %v4177 = vand.u32 %v432, 2147483648
        %v4178 = vsel %vm4176, %v4177, %v4175
        %v4179 = vrsqrt.pop %v433
        %v4180 = vmul.f32 %v4179, %v433
        %v4181 = vmul.f32 %v4180, %v4179
        %v4182 = vmul.f32 0.5, %v4181
        %v4183 = vsub.f32 1.5, %v4182
        %v4184 = vmul.f32 %v4179, %v4183
        %v4185 = vmul.f32 %v433, %v4184
        %vm4186 = vcmp.eq.f32.partialorder %v433, inf
        %v4187 = vsel %vm4186, %v433, %v4185
        %vm4188 = vcmp.eq.f32.partialorder %v433, 0.0
        %v4189 = vand.u32 %v433, 2147483648
        %v4190 = vsel %vm4188, %v4189, %v4187
        %v4191 = vrsqrt.pop %v434
        %v4192 = vmul.f32 %v4191, %v434
        %v4193 = vmul.f32 %v4192, %v4191
        %v4194 = vmul.f32 0.5, %v4193
        %v4195 = vsub.f32 1.5, %v4194
        %v4196 = vmul.f32 %v4191, %v4195
        %v4197 = vmul.f32 %v434, %v4196
        %vm4198 = vcmp.eq.f32.partialorder %v434, inf
        %v4199 = vsel %vm4198, %v434, %v4197
        %vm4200 = vcmp.eq.f32.partialorder %v434, 0.0
        %v4201 = vand.u32 %v434, 2147483648
        %v4202 = vsel %vm4200, %v4201, %v4199
        %v4203 = vrsqrt.pop %v435
        %v4204 = vmul.f32 %v4203, %v435
        %v4205 = vmul.f32 %v4204, %v4203
        %v4206 = vmul.f32 0.5, %v4205
        %v4207 = vsub.f32 1.5, %v4206
        %v4208 = vmul.f32 %v4203, %v4207
        %v4209 = vmul.f32 %v435, %v4208
        %vm4210 = vcmp.eq.f32.partialorder %v435, inf
        %v4211 = vsel %vm4210, %v435, %v4209
        %vm4212 = vcmp.eq.f32.partialorder %v435, 0.0
        %v4213 = vand.u32 %v435, 2147483648
        %v4214 = vsel %vm4212, %v4213, %v4211
        %v4215 = vrsqrt.pop %v436
        %v4216 = vmul.f32 %v4215, %v436
        %v4217 = vmul.f32 %v4216, %v4215
        %v4218 = vmul.f32 0.5, %v4217
        %v4219 = vsub.f32 1.5, %v4218
        %v4220 = vmul.f32 %v4215, %v4219
        %v4221 = vmul.f32 %v436, %v4220
        %vm4222 = vcmp.eq.f32.partialorder %v436, inf
        %v4223 = vsel %vm4222, %v436, %v4221
        %vm4224 = vcmp.eq.f32.partialorder %v436, 0.0
        %v4225 = vand.u32 %v436, 2147483648
        %v4226 = vsel %vm4224, %v4225, %v4223
        %v4227 = vrsqrt.pop %v437
        %v4228 = vmul.f32 %v4227, %v437
        %v4229 = vmul.f32 %v4228, %v4227
        %v4230 = vmul.f32 0.5, %v4229
        %v4231 = vsub.f32 1.5, %v4230
        %v4232 = vmul.f32 %v4227, %v4231
        %v4233 = vmul.f32 %v437, %v4232
        %vm4234 = vcmp.eq.f32.partialorder %v437, inf
        %v4235 = vsel %vm4234, %v437, %v4233
        %vm4236 = vcmp.eq.f32.partialorder %v437, 0.0
        %v4237 = vand.u32 %v437, 2147483648
        %v4238 = vsel %vm4236, %v4237, %v4235
        %v4239 = vrsqrt.pop %v438
        %v4240 = vmul.f32 %v4239, %v438
        %v4241 = vmul.f32 %v4240, %v4239
        %v4242 = vmul.f32 0.5, %v4241
        %v4243 = vsub.f32 1.5, %v4242
        %v4244 = vmul.f32 %v4239, %v4243
        %v4245 = vmul.f32 %v438, %v4244
        %vm4246 = vcmp.eq.f32.partialorder %v438, inf
        %v4247 = vsel %vm4246, %v438, %v4245
        %vm4248 = vcmp.eq.f32.partialorder %v438, 0.0
        %v4249 = vand.u32 %v438, 2147483648
        %v4250 = vsel %vm4248, %v4249, %v4247
        %v4251 = vrsqrt.pop %v439
        %v4252 = vmul.f32 %v4251, %v439
        %v4253 = vmul.f32 %v4252, %v4251
        %v4254 = vmul.f32 0.5, %v4253
        %v4255 = vsub.f32 1.5, %v4254
        %v4256 = vmul.f32 %v4251, %v4255
        %v4257 = vmul.f32 %v439, %v4256
        %vm4258 = vcmp.eq.f32.partialorder %v439, inf
        %v4259 = vsel %vm4258, %v439, %v4257
        %vm4260 = vcmp.eq.f32.partialorder %v439, 0.0
        %v4261 = vand.u32 %v439, 2147483648
        %v4262 = vsel %vm4260, %v4261, %v4259
        %v4263 = vrsqrt.pop %v440
        %v4264 = vmul.f32 %v4263, %v440
        %v4265 = vmul.f32 %v4264, %v4263
        %v4266 = vmul.f32 0.5, %v4265
        %v4267 = vsub.f32 1.5, %v4266
        %v4268 = vmul.f32 %v4263, %v4267
        %v4269 = vmul.f32 %v440, %v4268
        %vm4270 = vcmp.eq.f32.partialorder %v440, inf
        %v4271 = vsel %vm4270, %v440, %v4269
        %vm4272 = vcmp.eq.f32.partialorder %v440, 0.0
        %v4273 = vand.u32 %v440, 2147483648
        %v4274 = vsel %vm4272, %v4273, %v4271
        %v4275 = vrsqrt.pop %v441
        %v4276 = vmul.f32 %v4275, %v441
        %v4277 = vmul.f32 %v4276, %v4275
        %v4278 = vmul.f32 0.5, %v4277
        %v4279 = vsub.f32 1.5, %v4278
        %v4280 = vmul.f32 %v4275, %v4279
        %v4281 = vmul.f32 %v441, %v4280
        %vm4282 = vcmp.eq.f32.partialorder %v441, inf
        %v4283 = vsel %vm4282, %v441, %v4281
        %vm4284 = vcmp.eq.f32.partialorder %v441, 0.0
        %v4285 = vand.u32 %v441, 2147483648
        %v4286 = vsel %vm4284, %v4285, %v4283
        %v4287 = vrsqrt.pop %v442
        %v4288 = vmul.f32 %v4287, %v442
        %v4289 = vmul.f32 %v4288, %v4287
        %v4290 = vmul.f32 0.5, %v4289
        %v4291 = vsub.f32 1.5, %v4290
        %v4292 = vmul.f32 %v4287, %v4291
        %v4293 = vmul.f32 %v442, %v4292
        %vm4294 = vcmp.eq.f32.partialorder %v442, inf
        %v4295 = vsel %vm4294, %v442, %v4293
        %vm4296 = vcmp.eq.f32.partialorder %v442, 0.0
        %v4297 = vand.u32 %v442, 2147483648
        %v4298 = vsel %vm4296, %v4297, %v4295
        %v4299 = vrsqrt.pop %v443
        %v4300 = vmul.f32 %v4299, %v443
        %v4301 = vmul.f32 %v4300, %v4299
        %v4302 = vmul.f32 0.5, %v4301
        %v4303 = vsub.f32 1.5, %v4302
        %v4304 = vmul.f32 %v4299, %v4303
        %v4305 = vmul.f32 %v443, %v4304
        %vm4306 = vcmp.eq.f32.partialorder %v443, inf
        %v4307 = vsel %vm4306, %v443, %v4305
        %vm4308 = vcmp.eq.f32.partialorder %v443, 0.0
        %v4309 = vand.u32 %v443, 2147483648
        %v4310 = vsel %vm4308, %v4309, %v4307
        %v4311 = vrsqrt.pop %v444
        %v4312 = vmul.f32 %v4311, %v444
        %v4313 = vmul.f32 %v4312, %v4311
        %v4314 = vmul.f32 0.5, %v4313
        %v4315 = vsub.f32 1.5, %v4314
        %v4316 = vmul.f32 %v4311, %v4315
        %v4317 = vmul.f32 %v444, %v4316
        %vm4318 = vcmp.eq.f32.partialorder %v444, inf
        %v4319 = vsel %vm4318, %v444, %v4317
        %vm4320 = vcmp.eq.f32.partialorder %v444, 0.0
        %v4321 = vand.u32 %v444, 2147483648
        %v4322 = vsel %vm4320, %v4321, %v4319
        %v4323 = vrsqrt.pop %v445
        %v4324 = vmul.f32 %v4323, %v445
        %v4325 = vmul.f32 %v4324, %v4323
        %v4326 = vmul.f32 0.5, %v4325
        %v4327 = vsub.f32 1.5, %v4326
        %v4328 = vmul.f32 %v4323, %v4327
        %v4329 = vmul.f32 %v445, %v4328
        %vm4330 = vcmp.eq.f32.partialorder %v445, inf
        %v4331 = vsel %vm4330, %v445, %v4329
        %vm4332 = vcmp.eq.f32.partialorder %v445, 0.0
        %v4333 = vand.u32 %v445, 2147483648
        %v4334 = vsel %vm4332, %v4333, %v4331
        %v4335 = vrsqrt.pop %v446
        %v4336 = vmul.f32 %v4335, %v446
        %v4337 = vmul.f32 %v4336, %v4335
        %v4338 = vmul.f32 0.5, %v4337
        %v4339 = vsub.f32 1.5, %v4338
        %v4340 = vmul.f32 %v4335, %v4339
        %v4341 = vmul.f32 %v446, %v4340
        %vm4342 = vcmp.eq.f32.partialorder %v446, inf
        %v4343 = vsel %vm4342, %v446, %v4341
        %vm4344 = vcmp.eq.f32.partialorder %v446, 0.0
        %v4345 = vand.u32 %v446, 2147483648
        %v4346 = vsel %vm4344, %v4345, %v4343
        %v4347 = vrsqrt.pop %v447
        %v4348 = vmul.f32 %v4347, %v447
        %v4349 = vmul.f32 %v4348, %v4347
        %v4350 = vmul.f32 0.5, %v4349
        %v4351 = vsub.f32 1.5, %v4350
        %v4352 = vmul.f32 %v4347, %v4351
        %v4353 = vmul.f32 %v447, %v4352
        %vm4354 = vcmp.eq.f32.partialorder %v447, inf
        %v4355 = vsel %vm4354, %v447, %v4353
        %vm4356 = vcmp.eq.f32.partialorder %v447, 0.0
        %v4357 = vand.u32 %v447, 2147483648
        %v4358 = vsel %vm4356, %v4357, %v4355
        %v4359 = vrsqrt.pop %v448
        %v4360 = vmul.f32 %v4359, %v448
        %v4361 = vmul.f32 %v4360, %v4359
        %v4362 = vmul.f32 0.5, %v4361
        %v4363 = vsub.f32 1.5, %v4362
        %v4364 = vmul.f32 %v4359, %v4363
        %v4365 = vmul.f32 %v448, %v4364
        %vm4366 = vcmp.eq.f32.partialorder %v448, inf
        %v4367 = vsel %vm4366, %v448, %v4365
        %vm4368 = vcmp.eq.f32.partialorder %v448, 0.0
        %v4369 = vand.u32 %v448, 2147483648
        %v4370 = vsel %vm4368, %v4369, %v4367
        %v4371 = vrsqrt.pop %v449
        %v4372 = vmul.f32 %v4371, %v449
        %v4373 = vmul.f32 %v4372, %v4371
        %v4374 = vmul.f32 0.5, %v4373
        %v4375 = vsub.f32 1.5, %v4374
        %v4376 = vmul.f32 %v4371, %v4375
        %v4377 = vmul.f32 %v449, %v4376
        %vm4378 = vcmp.eq.f32.partialorder %v449, inf
        %v4379 = vsel %vm4378, %v449, %v4377
        %vm4380 = vcmp.eq.f32.partialorder %v449, 0.0
        %v4381 = vand.u32 %v449, 2147483648
        %v4382 = vsel %vm4380, %v4381, %v4379
        %v4383 = vrsqrt.pop %v450
        %v4384 = vmul.f32 %v4383, %v450
        %v4385 = vmul.f32 %v4384, %v4383
        %v4386 = vmul.f32 0.5, %v4385
        %v4387 = vsub.f32 1.5, %v4386
        %v4388 = vmul.f32 %v4383, %v4387
        %v4389 = vmul.f32 %v450, %v4388
        %vm4390 = vcmp.eq.f32.partialorder %v450, inf
        %v4391 = vsel %vm4390, %v450, %v4389
        %vm4392 = vcmp.eq.f32.partialorder %v450, 0.0
        %v4393 = vand.u32 %v450, 2147483648
        %v4394 = vsel %vm4392, %v4393, %v4391
        %v4395 = vrsqrt.pop %v451
        %v4396 = vmul.f32 %v4395, %v451
        %v4397 = vmul.f32 %v4396, %v4395
        %v4398 = vmul.f32 0.5, %v4397
        %v4399 = vsub.f32 1.5, %v4398
        %v4400 = vmul.f32 %v4395, %v4399
        %v4401 = vmul.f32 %v451, %v4400
        %vm4402 = vcmp.eq.f32.partialorder %v451, inf
        %v4403 = vsel %vm4402, %v451, %v4401
        %vm4404 = vcmp.eq.f32.partialorder %v451, 0.0
        %v4405 = vand.u32 %v451, 2147483648
        %v4406 = vsel %vm4404, %v4405, %v4403
        %v4407 = vrsqrt.pop %v452
        %v4408 = vmul.f32 %v4407, %v452
        %v4409 = vmul.f32 %v4408, %v4407
        %v4410 = vmul.f32 0.5, %v4409
        %v4411 = vsub.f32 1.5, %v4410
        %v4412 = vmul.f32 %v4407, %v4411
        %v4413 = vmul.f32 %v452, %v4412
        %vm4414 = vcmp.eq.f32.partialorder %v452, inf
        %v4415 = vsel %vm4414, %v452, %v4413
        %vm4416 = vcmp.eq.f32.partialorder %v452, 0.0
        %v4417 = vand.u32 %v452, 2147483648
        %v4418 = vsel %vm4416, %v4417, %v4415
        %v4419 = vrsqrt.pop %v453
        %v4420 = vmul.f32 %v4419, %v453
        %v4421 = vmul.f32 %v4420, %v4419
        %v4422 = vmul.f32 0.5, %v4421
        %v4423 = vsub.f32 1.5, %v4422
        %v4424 = vmul.f32 %v4419, %v4423
        %v4425 = vmul.f32 %v453, %v4424
        %vm4426 = vcmp.eq.f32.partialorder %v453, inf
        %v4427 = vsel %vm4426, %v453, %v4425
        %vm4428 = vcmp.eq.f32.partialorder %v453, 0.0
        %v4429 = vand.u32 %v453, 2147483648
        %v4430 = vsel %vm4428, %v4429, %v4427
        %v4431 = vrsqrt.pop %v454
        %v4432 = vmul.f32 %v4431, %v454
        %v4433 = vmul.f32 %v4432, %v4431
        %v4434 = vmul.f32 0.5, %v4433
        %v4435 = vsub.f32 1.5, %v4434
        %v4436 = vmul.f32 %v4431, %v4435
        %v4437 = vmul.f32 %v454, %v4436
        %vm4438 = vcmp.eq.f32.partialorder %v454, inf
        %v4439 = vsel %vm4438, %v454, %v4437
        %vm4440 = vcmp.eq.f32.partialorder %v454, 0.0
        %v4441 = vand.u32 %v454, 2147483648
        %v4442 = vsel %vm4440, %v4441, %v4439
        %v4443 = vrsqrt.pop %v455
        %v4444 = vmul.f32 %v4443, %v455
        %v4445 = vmul.f32 %v4444, %v4443
        %v4446 = vmul.f32 0.5, %v4445
        %v4447 = vsub.f32 1.5, %v4446
        %v4448 = vmul.f32 %v4443, %v4447
        %v4449 = vmul.f32 %v455, %v4448
        %vm4450 = vcmp.eq.f32.partialorder %v455, inf
        %v4451 = vsel %vm4450, %v455, %v4449
        %vm4452 = vcmp.eq.f32.partialorder %v455, 0.0
        %v4453 = vand.u32 %v455, 2147483648
        %v4454 = vsel %vm4452, %v4453, %v4451
        %v4455 = vrsqrt.pop %v456
        %v4456 = vmul.f32 %v4455, %v456
        %v4457 = vmul.f32 %v4456, %v4455
        %v4458 = vmul.f32 0.5, %v4457
        %v4459 = vsub.f32 1.5, %v4458
        %v4460 = vmul.f32 %v4455, %v4459
        %v4461 = vmul.f32 %v456, %v4460
        %vm4462 = vcmp.eq.f32.partialorder %v456, inf
        %v4463 = vsel %vm4462, %v456, %v4461
        %vm4464 = vcmp.eq.f32.partialorder %v456, 0.0
        %v4465 = vand.u32 %v456, 2147483648
        %v4466 = vsel %vm4464, %v4465, %v4463
        %v4467 = vrsqrt.pop %v457
        %v4468 = vmul.f32 %v4467, %v457
        %v4469 = vmul.f32 %v4468, %v4467
        %v4470 = vmul.f32 0.5, %v4469
        %v4471 = vsub.f32 1.5, %v4470
        %v4472 = vmul.f32 %v4467, %v4471
        %v4473 = vmul.f32 %v457, %v4472
        %vm4474 = vcmp.eq.f32.partialorder %v457, inf
        %v4475 = vsel %vm4474, %v457, %v4473
        %vm4476 = vcmp.eq.f32.partialorder %v457, 0.0
        %v4477 = vand.u32 %v457, 2147483648
        %v4478 = vsel %vm4476, %v4477, %v4475
        %v4479 = vrsqrt.pop %v458
        %v4480 = vmul.f32 %v4479, %v458
        %v4481 = vmul.f32 %v4480, %v4479
        %v4482 = vmul.f32 0.5, %v4481
        %v4483 = vsub.f32 1.5, %v4482
        %v4484 = vmul.f32 %v4479, %v4483
        %v4485 = vmul.f32 %v458, %v4484
        %vm4486 = vcmp.eq.f32.partialorder %v458, inf
        %v4487 = vsel %vm4486, %v458, %v4485
        %vm4488 = vcmp.eq.f32.partialorder %v458, 0.0
        %v4489 = vand.u32 %v458, 2147483648
        %v4490 = vsel %vm4488, %v4489, %v4487
        %v4491 = vrsqrt.pop %v459
        %v4492 = vmul.f32 %v4491, %v459
        %v4493 = vmul.f32 %v4492, %v4491
        %v4494 = vmul.f32 0.5, %v4493
        %v4495 = vsub.f32 1.5, %v4494
        %v4496 = vmul.f32 %v4491, %v4495
        %v4497 = vmul.f32 %v459, %v4496
        %vm4498 = vcmp.eq.f32.partialorder %v459, inf
        %v4499 = vsel %vm4498, %v459, %v4497
        %vm4500 = vcmp.eq.f32.partialorder %v459, 0.0
        %v4501 = vand.u32 %v459, 2147483648
        %v4502 = vsel %vm4500, %v4501, %v4499
        %v4503 = vrsqrt.pop %v460
        %v4504 = vmul.f32 %v4503, %v460
        %v4505 = vmul.f32 %v4504, %v4503
        %v4506 = vmul.f32 0.5, %v4505
        %v4507 = vsub.f32 1.5, %v4506
        %v4508 = vmul.f32 %v4503, %v4507
        %v4509 = vmul.f32 %v460, %v4508
        %vm4510 = vcmp.eq.f32.partialorder %v460, inf
        %v4511 = vsel %vm4510, %v460, %v4509
        %vm4512 = vcmp.eq.f32.partialorder %v460, 0.0
        %v4513 = vand.u32 %v460, 2147483648
        %v4514 = vsel %vm4512, %v4513, %v4511
        %v4515 = vrsqrt.pop %v461
        %v4516 = vmul.f32 %v4515, %v461
        %v4517 = vmul.f32 %v4516, %v4515
        %v4518 = vmul.f32 0.5, %v4517
        %v4519 = vsub.f32 1.5, %v4518
        %v4520 = vmul.f32 %v4515, %v4519
        %v4521 = vmul.f32 %v461, %v4520
        %vm4522 = vcmp.eq.f32.partialorder %v461, inf
        %v4523 = vsel %vm4522, %v461, %v4521
        %vm4524 = vcmp.eq.f32.partialorder %v461, 0.0
        %v4525 = vand.u32 %v461, 2147483648
        %v4526 = vsel %vm4524, %v4525, %v4523
        %v4527 = vrsqrt.pop %v462
        %v4528 = vmul.f32 %v4527, %v462
        %v4529 = vmul.f32 %v4528, %v4527
        %v4530 = vmul.f32 0.5, %v4529
        %v4531 = vsub.f32 1.5, %v4530
        %v4532 = vmul.f32 %v4527, %v4531
        %v4533 = vmul.f32 %v462, %v4532
        %vm4534 = vcmp.eq.f32.partialorder %v462, inf
        %v4535 = vsel %vm4534, %v462, %v4533
        %vm4536 = vcmp.eq.f32.partialorder %v462, 0.0
        %v4537 = vand.u32 %v462, 2147483648
        %v4538 = vsel %vm4536, %v4537, %v4535
        %v4539 = vrsqrt.pop %v463
        %v4540 = vmul.f32 %v4539, %v463
        %v4541 = vmul.f32 %v4540, %v4539
        %v4542 = vmul.f32 0.5, %v4541
        %v4543 = vsub.f32 1.5, %v4542
        %v4544 = vmul.f32 %v4539, %v4543
        %v4545 = vmul.f32 %v463, %v4544
        %vm4546 = vcmp.eq.f32.partialorder %v463, inf
        %v4547 = vsel %vm4546, %v463, %v4545
        %vm4548 = vcmp.eq.f32.partialorder %v463, 0.0
        %v4549 = vand.u32 %v463, 2147483648
        %v4550 = vsel %vm4548, %v4549, %v4547
        %v4551 = vrsqrt.pop %v464
        %v4552 = vmul.f32 %v4551, %v464
        %v4553 = vmul.f32 %v4552, %v4551
        %v4554 = vmul.f32 0.5, %v4553
        %v4555 = vsub.f32 1.5, %v4554
        %v4556 = vmul.f32 %v4551, %v4555
        %v4557 = vmul.f32 %v464, %v4556
        %vm4558 = vcmp.eq.f32.partialorder %v464, inf
        %v4559 = vsel %vm4558, %v464, %v4557
        %vm4560 = vcmp.eq.f32.partialorder %v464, 0.0
        %v4561 = vand.u32 %v464, 2147483648
        %v4562 = vsel %vm4560, %v4561, %v4559
        %v4563 = vrsqrt.pop %v465
        %v4564 = vmul.f32 %v4563, %v465
        %v4565 = vmul.f32 %v4564, %v4563
        %v4566 = vmul.f32 0.5, %v4565
        %v4567 = vsub.f32 1.5, %v4566
        %v4568 = vmul.f32 %v4563, %v4567
        %v4569 = vmul.f32 %v465, %v4568
        %vm4570 = vcmp.eq.f32.partialorder %v465, inf
        %v4571 = vsel %vm4570, %v465, %v4569
        %vm4572 = vcmp.eq.f32.partialorder %v465, 0.0
        %v4573 = vand.u32 %v465, 2147483648
        %v4574 = vsel %vm4572, %v4573, %v4571
        %v4575 = vrsqrt.pop %v466
        %v4576 = vmul.f32 %v4575, %v466
        %v4577 = vmul.f32 %v4576, %v4575
        %v4578 = vmul.f32 0.5, %v4577
        %v4579 = vsub.f32 1.5, %v4578
        %v4580 = vmul.f32 %v4575, %v4579
        %v4581 = vmul.f32 %v466, %v4580
        %vm4582 = vcmp.eq.f32.partialorder %v466, inf
        %v4583 = vsel %vm4582, %v466, %v4581
        %vm4584 = vcmp.eq.f32.partialorder %v466, 0.0
        %v4585 = vand.u32 %v466, 2147483648
        %v4586 = vsel %vm4584, %v4585, %v4583
        %v4587 = vrsqrt.pop %v467
        %v4588 = vmul.f32 %v4587, %v467
        %v4589 = vmul.f32 %v4588, %v4587
        %v4590 = vmul.f32 0.5, %v4589
        %v4591 = vsub.f32 1.5, %v4590
        %v4592 = vmul.f32 %v4587, %v4591
        %v4593 = vmul.f32 %v467, %v4592
        %vm4594 = vcmp.eq.f32.partialorder %v467, inf
        %v4595 = vsel %vm4594, %v467, %v4593
        %vm4596 = vcmp.eq.f32.partialorder %v467, 0.0
        %v4597 = vand.u32 %v467, 2147483648
        %v4598 = vsel %vm4596, %v4597, %v4595
        %v4599 = vrsqrt.pop %v468
        %v4600 = vmul.f32 %v4599, %v468
        %v4601 = vmul.f32 %v4600, %v4599
        %v4602 = vmul.f32 0.5, %v4601
        %v4603 = vsub.f32 1.5, %v4602
        %v4604 = vmul.f32 %v4599, %v4603
        %v4605 = vmul.f32 %v468, %v4604
        %vm4606 = vcmp.eq.f32.partialorder %v468, inf
        %v4607 = vsel %vm4606, %v468, %v4605
        %vm4608 = vcmp.eq.f32.partialorder %v468, 0.0
        %v4609 = vand.u32 %v468, 2147483648
        %v4610 = vsel %vm4608, %v4609, %v4607
        %v4611 = vrsqrt.pop %v469
        %v4612 = vmul.f32 %v4611, %v469
        %v4613 = vmul.f32 %v4612, %v4611
        %v4614 = vmul.f32 0.5, %v4613
        %v4615 = vsub.f32 1.5, %v4614
        %v4616 = vmul.f32 %v4611, %v4615
        %v4617 = vmul.f32 %v469, %v4616
        %vm4618 = vcmp.eq.f32.partialorder %v469, inf
        %v4619 = vsel %vm4618, %v469, %v4617
        %vm4620 = vcmp.eq.f32.partialorder %v469, 0.0
        %v4621 = vand.u32 %v469, 2147483648
        %v4622 = vsel %vm4620, %v4621, %v4619
        %v4623 = vrsqrt.pop %v470
        %v4624 = vmul.f32 %v4623, %v470
        %v4625 = vmul.f32 %v4624, %v4623
        %v4626 = vmul.f32 0.5, %v4625
        %v4627 = vsub.f32 1.5, %v4626
        %v4628 = vmul.f32 %v4623, %v4627
        %v4629 = vmul.f32 %v470, %v4628
        %vm4630 = vcmp.eq.f32.partialorder %v470, inf
        %v4631 = vsel %vm4630, %v470, %v4629
        %vm4632 = vcmp.eq.f32.partialorder %v470, 0.0
        %v4633 = vand.u32 %v470, 2147483648
        %v4634 = vsel %vm4632, %v4633, %v4631
        %v4635 = vrsqrt.pop %v471
        %v4636 = vmul.f32 %v4635, %v471
        %v4637 = vmul.f32 %v4636, %v4635
        %v4638 = vmul.f32 0.5, %v4637
        %v4639 = vsub.f32 1.5, %v4638
        %v4640 = vmul.f32 %v4635, %v4639
        %v4641 = vmul.f32 %v471, %v4640
        %vm4642 = vcmp.eq.f32.partialorder %v471, inf
        %v4643 = vsel %vm4642, %v471, %v4641
        %vm4644 = vcmp.eq.f32.partialorder %v471, 0.0
        %v4645 = vand.u32 %v471, 2147483648
        %v4646 = vsel %vm4644, %v4645, %v4643
        %v4647 = vrsqrt.pop %v472
        %v4648 = vmul.f32 %v4647, %v472
        %v4649 = vmul.f32 %v4648, %v4647
        %v4650 = vmul.f32 0.5, %v4649
        %v4651 = vsub.f32 1.5, %v4650
        %v4652 = vmul.f32 %v4647, %v4651
        %v4653 = vmul.f32 %v472, %v4652
        %vm4654 = vcmp.eq.f32.partialorder %v472, inf
        %v4655 = vsel %vm4654, %v472, %v4653
        %vm4656 = vcmp.eq.f32.partialorder %v472, 0.0
        %v4657 = vand.u32 %v472, 2147483648
        %v4658 = vsel %vm4656, %v4657, %v4655
        %v4659 = vrsqrt.pop %v473
        %v4660 = vmul.f32 %v4659, %v473
        %v4661 = vmul.f32 %v4660, %v4659
        %v4662 = vmul.f32 0.5, %v4661
        %v4663 = vsub.f32 1.5, %v4662
        %v4664 = vmul.f32 %v4659, %v4663
        %v4665 = vmul.f32 %v473, %v4664
        %vm4666 = vcmp.eq.f32.partialorder %v473, inf
        %v4667 = vsel %vm4666, %v473, %v4665
        %vm4668 = vcmp.eq.f32.partialorder %v473, 0.0
        %v4669 = vand.u32 %v473, 2147483648
        %v4670 = vsel %vm4668, %v4669, %v4667
        %v4671 = vrsqrt.pop %v474
        %v4672 = vmul.f32 %v4671, %v474
        %v4673 = vmul.f32 %v4672, %v4671
        %v4674 = vmul.f32 0.5, %v4673
        %v4675 = vsub.f32 1.5, %v4674
        %v4676 = vmul.f32 %v4671, %v4675
        %v4677 = vmul.f32 %v474, %v4676
        %vm4678 = vcmp.eq.f32.partialorder %v474, inf
        %v4679 = vsel %vm4678, %v474, %v4677
        %vm4680 = vcmp.eq.f32.partialorder %v474, 0.0
        %v4681 = vand.u32 %v474, 2147483648
        %v4682 = vsel %vm4680, %v4681, %v4679
        %v4683 = vrsqrt.pop %v475
        %v4684 = vmul.f32 %v4683, %v475
        %v4685 = vmul.f32 %v4684, %v4683
        %v4686 = vmul.f32 0.5, %v4685
        %v4687 = vsub.f32 1.5, %v4686
        %v4688 = vmul.f32 %v4683, %v4687
        %v4689 = vmul.f32 %v475, %v4688
        %vm4690 = vcmp.eq.f32.partialorder %v475, inf
        %v4691 = vsel %vm4690, %v475, %v4689
        %vm4692 = vcmp.eq.f32.partialorder %v475, 0.0
        %v4693 = vand.u32 %v475, 2147483648
        %v4694 = vsel %vm4692, %v4693, %v4691
        %v4695 = vrsqrt.pop %v476
        %v4696 = vmul.f32 %v4695, %v476
        %v4697 = vmul.f32 %v4696, %v4695
        %v4698 = vmul.f32 0.5, %v4697
        %v4699 = vsub.f32 1.5, %v4698
        %v4700 = vmul.f32 %v4695, %v4699
        %v4701 = vmul.f32 %v476, %v4700
        %vm4702 = vcmp.eq.f32.partialorder %v476, inf
        %v4703 = vsel %vm4702, %v476, %v4701
        %vm4704 = vcmp.eq.f32.partialorder %v476, 0.0
        %v4705 = vand.u32 %v476, 2147483648
        %v4706 = vsel %vm4704, %v4705, %v4703
        %v4707 = vrsqrt.pop %v477
        %v4708 = vmul.f32 %v4707, %v477
        %v4709 = vmul.f32 %v4708, %v4707
        %v4710 = vmul.f32 0.5, %v4709
        %v4711 = vsub.f32 1.5, %v4710
        %v4712 = vmul.f32 %v4707, %v4711
        %v4713 = vmul.f32 %v477, %v4712
        %vm4714 = vcmp.eq.f32.partialorder %v477, inf
        %v4715 = vsel %vm4714, %v477, %v4713
        %vm4716 = vcmp.eq.f32.partialorder %v477, 0.0
        %v4717 = vand.u32 %v477, 2147483648
        %v4718 = vsel %vm4716, %v4717, %v4715
        %v4719 = vrsqrt.pop %v478
        %v4720 = vmul.f32 %v4719, %v478
        %v4721 = vmul.f32 %v4720, %v4719
        %v4722 = vmul.f32 0.5, %v4721
        %v4723 = vsub.f32 1.5, %v4722
        %v4724 = vmul.f32 %v4719, %v4723
        %v4725 = vmul.f32 %v478, %v4724
        %vm4726 = vcmp.eq.f32.partialorder %v478, inf
        %v4727 = vsel %vm4726, %v478, %v4725
        %vm4728 = vcmp.eq.f32.partialorder %v478, 0.0
        %v4729 = vand.u32 %v478, 2147483648
        %v4730 = vsel %vm4728, %v4729, %v4727
        %v4731 = vrsqrt.pop %v479
        %v4732 = vmul.f32 %v4731, %v479
        %v4733 = vmul.f32 %v4732, %v4731
        %v4734 = vmul.f32 0.5, %v4733
        %v4735 = vsub.f32 1.5, %v4734
        %v4736 = vmul.f32 %v4731, %v4735
        %v4737 = vmul.f32 %v479, %v4736
        %vm4738 = vcmp.eq.f32.partialorder %v479, inf
        %v4739 = vsel %vm4738, %v479, %v4737
        %vm4740 = vcmp.eq.f32.partialorder %v479, 0.0
        %v4741 = vand.u32 %v479, 2147483648
        %v4742 = vsel %vm4740, %v4741, %v4739
        %v4743 = vrsqrt.pop %v480
        %v4744 = vmul.f32 %v4743, %v480
        %v4745 = vmul.f32 %v4744, %v4743
        %v4746 = vmul.f32 0.5, %v4745
        %v4747 = vsub.f32 1.5, %v4746
        %v4748 = vmul.f32 %v4743, %v4747
        %v4749 = vmul.f32 %v480, %v4748
        %vm4750 = vcmp.eq.f32.partialorder %v480, inf
        %v4751 = vsel %vm4750, %v480, %v4749
        %vm4752 = vcmp.eq.f32.partialorder %v480, 0.0
        %v4753 = vand.u32 %v480, 2147483648
        %v4754 = vsel %vm4752, %v4753, %v4751
        %v4755 = vrsqrt.pop %v481
        %v4756 = vmul.f32 %v4755, %v481
        %v4757 = vmul.f32 %v4756, %v4755
        %v4758 = vmul.f32 0.5, %v4757
        %v4759 = vsub.f32 1.5, %v4758
        %v4760 = vmul.f32 %v4755, %v4759
        %v4761 = vmul.f32 %v481, %v4760
        %vm4762 = vcmp.eq.f32.partialorder %v481, inf
        %v4763 = vsel %vm4762, %v481, %v4761
        %vm4764 = vcmp.eq.f32.partialorder %v481, 0.0
        %v4765 = vand.u32 %v481, 2147483648
        %v4766 = vsel %vm4764, %v4765, %v4763
        %v4767 = vrsqrt.pop %v482
        %v4768 = vmul.f32 %v4767, %v482
        %v4769 = vmul.f32 %v4768, %v4767
        %v4770 = vmul.f32 0.5, %v4769
        %v4771 = vsub.f32 1.5, %v4770
        %v4772 = vmul.f32 %v4767, %v4771
        %v4773 = vmul.f32 %v482, %v4772
        %vm4774 = vcmp.eq.f32.partialorder %v482, inf
        %v4775 = vsel %vm4774, %v482, %v4773
        %vm4776 = vcmp.eq.f32.partialorder %v482, 0.0
        %v4777 = vand.u32 %v482, 2147483648
        %v4778 = vsel %vm4776, %v4777, %v4775
        %v4779 = vrsqrt.pop %v483
        %v4780 = vmul.f32 %v4779, %v483
        %v4781 = vmul.f32 %v4780, %v4779
        %v4782 = vmul.f32 0.5, %v4781
        %v4783 = vsub.f32 1.5, %v4782
        %v4784 = vmul.f32 %v4779, %v4783
        %v4785 = vmul.f32 %v483, %v4784
        %vm4786 = vcmp.eq.f32.partialorder %v483, inf
        %v4787 = vsel %vm4786, %v483, %v4785
        %vm4788 = vcmp.eq.f32.partialorder %v483, 0.0
        %v4789 = vand.u32 %v483, 2147483648
        %v4790 = vsel %vm4788, %v4789, %v4787
        %v4791 = vrsqrt.pop %v484
        %v4792 = vmul.f32 %v4791, %v484
        %v4793 = vmul.f32 %v4792, %v4791
        %v4794 = vmul.f32 0.5, %v4793
        %v4795 = vsub.f32 1.5, %v4794
        %v4796 = vmul.f32 %v4791, %v4795
        %v4797 = vmul.f32 %v484, %v4796
        %vm4798 = vcmp.eq.f32.partialorder %v484, inf
        %v4799 = vsel %vm4798, %v484, %v4797
        %vm4800 = vcmp.eq.f32.partialorder %v484, 0.0
        %v4801 = vand.u32 %v484, 2147483648
        %v4802 = vsel %vm4800, %v4801, %v4799
        %v4803 = vrsqrt.pop %v485
        %v4804 = vmul.f32 %v4803, %v485
        %v4805 = vmul.f32 %v4804, %v4803
        %v4806 = vmul.f32 0.5, %v4805
        %v4807 = vsub.f32 1.5, %v4806
        %v4808 = vmul.f32 %v4803, %v4807
        %v4809 = vmul.f32 %v485, %v4808
        %vm4810 = vcmp.eq.f32.partialorder %v485, inf
        %v4811 = vsel %vm4810, %v485, %v4809
        %vm4812 = vcmp.eq.f32.partialorder %v485, 0.0
        %v4813 = vand.u32 %v485, 2147483648
        %v4814 = vsel %vm4812, %v4813, %v4811
        %v4815 = vrsqrt.pop %v486
        %v4816 = vmul.f32 %v4815, %v486
        %v4817 = vmul.f32 %v4816, %v4815
        %v4818 = vmul.f32 0.5, %v4817
        %v4819 = vsub.f32 1.5, %v4818
        %v4820 = vmul.f32 %v4815, %v4819
        %v4821 = vmul.f32 %v486, %v4820
        %vm4822 = vcmp.eq.f32.partialorder %v486, inf
        %v4823 = vsel %vm4822, %v486, %v4821
        %vm4824 = vcmp.eq.f32.partialorder %v486, 0.0
        %v4825 = vand.u32 %v486, 2147483648
        %v4826 = vsel %vm4824, %v4825, %v4823
        %v4827 = vrsqrt.pop %v487
        %v4828 = vmul.f32 %v4827, %v487
        %v4829 = vmul.f32 %v4828, %v4827
        %v4830 = vmul.f32 0.5, %v4829
        %v4831 = vsub.f32 1.5, %v4830
        %v4832 = vmul.f32 %v4827, %v4831
        %v4833 = vmul.f32 %v487, %v4832
        %vm4834 = vcmp.eq.f32.partialorder %v487, inf
        %v4835 = vsel %vm4834, %v487, %v4833
        %vm4836 = vcmp.eq.f32.partialorder %v487, 0.0
        %v4837 = vand.u32 %v487, 2147483648
        %v4838 = vsel %vm4836, %v4837, %v4835
        %v4839 = vrsqrt.pop %v488
        %v4840 = vmul.f32 %v4839, %v488
        %v4841 = vmul.f32 %v4840, %v4839
        %v4842 = vmul.f32 0.5, %v4841
        %v4843 = vsub.f32 1.5, %v4842
        %v4844 = vmul.f32 %v4839, %v4843
        %v4845 = vmul.f32 %v488, %v4844
        %vm4846 = vcmp.eq.f32.partialorder %v488, inf
        %v4847 = vsel %vm4846, %v488, %v4845
        %vm4848 = vcmp.eq.f32.partialorder %v488, 0.0
        %v4849 = vand.u32 %v488, 2147483648
        %v4850 = vsel %vm4848, %v4849, %v4847
        %v4851 = vrsqrt.pop %v489
        %v4852 = vmul.f32 %v4851, %v489
        %v4853 = vmul.f32 %v4852, %v4851
        %v4854 = vmul.f32 0.5, %v4853
        %v4855 = vsub.f32 1.5, %v4854
        %v4856 = vmul.f32 %v4851, %v4855
        %v4857 = vmul.f32 %v489, %v4856
        %vm4858 = vcmp.eq.f32.partialorder %v489, inf
        %v4859 = vsel %vm4858, %v489, %v4857
        %vm4860 = vcmp.eq.f32.partialorder %v489, 0.0
        %v4861 = vand.u32 %v489, 2147483648
        %v4862 = vsel %vm4860, %v4861, %v4859
        %v4863 = vrsqrt.pop %v490
        %v4864 = vmul.f32 %v4863, %v490
        %v4865 = vmul.f32 %v4864, %v4863
        %v4866 = vmul.f32 0.5, %v4865
        %v4867 = vsub.f32 1.5, %v4866
        %v4868 = vmul.f32 %v4863, %v4867
        %v4869 = vmul.f32 %v490, %v4868
        %vm4870 = vcmp.eq.f32.partialorder %v490, inf
        %v4871 = vsel %vm4870, %v490, %v4869
        %vm4872 = vcmp.eq.f32.partialorder %v490, 0.0
        %v4873 = vand.u32 %v490, 2147483648
        %v4874 = vsel %vm4872, %v4873, %v4871
        %v4875 = vrsqrt.pop %v491
        %v4876 = vmul.f32 %v4875, %v491
        %v4877 = vmul.f32 %v4876, %v4875
        %v4878 = vmul.f32 0.5, %v4877
        %v4879 = vsub.f32 1.5, %v4878
        %v4880 = vmul.f32 %v4875, %v4879
        %v4881 = vmul.f32 %v491, %v4880
        %vm4882 = vcmp.eq.f32.partialorder %v491, inf
        %v4883 = vsel %vm4882, %v491, %v4881
        %vm4884 = vcmp.eq.f32.partialorder %v491, 0.0
        %v4885 = vand.u32 %v491, 2147483648
        %v4886 = vsel %vm4884, %v4885, %v4883
        %v4887 = vrsqrt.pop %v492
        %v4888 = vmul.f32 %v4887, %v492
        %v4889 = vmul.f32 %v4888, %v4887
        %v4890 = vmul.f32 0.5, %v4889
        %v4891 = vsub.f32 1.5, %v4890
        %v4892 = vmul.f32 %v4887, %v4891
        %v4893 = vmul.f32 %v492, %v4892
        %vm4894 = vcmp.eq.f32.partialorder %v492, inf
        %v4895 = vsel %vm4894, %v492, %v4893
        %vm4896 = vcmp.eq.f32.partialorder %v492, 0.0
        %v4897 = vand.u32 %v492, 2147483648
        %v4898 = vsel %vm4896, %v4897, %v4895
        %v4899 = vrsqrt.pop %v493
        %v4900 = vmul.f32 %v4899, %v493
        %v4901 = vmul.f32 %v4900, %v4899
        %v4902 = vmul.f32 0.5, %v4901
        %v4903 = vsub.f32 1.5, %v4902
        %v4904 = vmul.f32 %v4899, %v4903
        %v4905 = vmul.f32 %v493, %v4904
        %vm4906 = vcmp.eq.f32.partialorder %v493, inf
        %v4907 = vsel %vm4906, %v493, %v4905
        %vm4908 = vcmp.eq.f32.partialorder %v493, 0.0
        %v4909 = vand.u32 %v493, 2147483648
        %v4910 = vsel %vm4908, %v4909, %v4907
        %v4911 = vrsqrt.pop %v494
        %v4912 = vmul.f32 %v4911, %v494
        %v4913 = vmul.f32 %v4912, %v4911
        %v4914 = vmul.f32 0.5, %v4913
        %v4915 = vsub.f32 1.5, %v4914
        %v4916 = vmul.f32 %v4911, %v4915
        %v4917 = vmul.f32 %v494, %v4916
        %vm4918 = vcmp.eq.f32.partialorder %v494, inf
        %v4919 = vsel %vm4918, %v494, %v4917
        %vm4920 = vcmp.eq.f32.partialorder %v494, 0.0
        %v4921 = vand.u32 %v494, 2147483648
        %v4922 = vsel %vm4920, %v4921, %v4919
        %v4923 = vrsqrt.pop %v495
        %v4924 = vmul.f32 %v4923, %v495
        %v4925 = vmul.f32 %v4924, %v4923
        %v4926 = vmul.f32 0.5, %v4925
        %v4927 = vsub.f32 1.5, %v4926
        %v4928 = vmul.f32 %v4923, %v4927
        %v4929 = vmul.f32 %v495, %v4928
        %vm4930 = vcmp.eq.f32.partialorder %v495, inf
        %v4931 = vsel %vm4930, %v495, %v4929
        %vm4932 = vcmp.eq.f32.partialorder %v495, 0.0
        %v4933 = vand.u32 %v495, 2147483648
        %v4934 = vsel %vm4932, %v4933, %v4931
        %v4935 = vrsqrt.pop %v496
        %v4936 = vmul.f32 %v4935, %v496
        %v4937 = vmul.f32 %v4936, %v4935
        %v4938 = vmul.f32 0.5, %v4937
        %v4939 = vsub.f32 1.5, %v4938
        %v4940 = vmul.f32 %v4935, %v4939
        %v4941 = vmul.f32 %v496, %v4940
        %vm4942 = vcmp.eq.f32.partialorder %v496, inf
        %v4943 = vsel %vm4942, %v496, %v4941
        %vm4944 = vcmp.eq.f32.partialorder %v496, 0.0
        %v4945 = vand.u32 %v496, 2147483648
        %v4946 = vsel %vm4944, %v4945, %v4943
        %v4947 = vrsqrt.pop %v497
        %v4948 = vmul.f32 %v4947, %v497
        %v4949 = vmul.f32 %v4948, %v4947
        %v4950 = vmul.f32 0.5, %v4949
        %v4951 = vsub.f32 1.5, %v4950
        %v4952 = vmul.f32 %v4947, %v4951
        %v4953 = vmul.f32 %v497, %v4952
        %vm4954 = vcmp.eq.f32.partialorder %v497, inf
        %v4955 = vsel %vm4954, %v497, %v4953
        %vm4956 = vcmp.eq.f32.partialorder %v497, 0.0
        %v4957 = vand.u32 %v497, 2147483648
        %v4958 = vsel %vm4956, %v4957, %v4955
        %v4959 = vrsqrt.pop %v498
        %v4960 = vmul.f32 %v4959, %v498
        %v4961 = vmul.f32 %v4960, %v4959
        %v4962 = vmul.f32 0.5, %v4961
        %v4963 = vsub.f32 1.5, %v4962
        %v4964 = vmul.f32 %v4959, %v4963
        %v4965 = vmul.f32 %v498, %v4964
        %vm4966 = vcmp.eq.f32.partialorder %v498, inf
        %v4967 = vsel %vm4966, %v498, %v4965
        %vm4968 = vcmp.eq.f32.partialorder %v498, 0.0
        %v4969 = vand.u32 %v498, 2147483648
        %v4970 = vsel %vm4968, %v4969, %v4967
        %v4971 = vrsqrt.pop %v499
        %v4972 = vmul.f32 %v4971, %v499
        %v4973 = vmul.f32 %v4972, %v4971
        %v4974 = vmul.f32 0.5, %v4973
        %v4975 = vsub.f32 1.5, %v4974
        %v4976 = vmul.f32 %v4971, %v4975
        %v4977 = vmul.f32 %v499, %v4976
        %vm4978 = vcmp.eq.f32.partialorder %v499, inf
        %v4979 = vsel %vm4978, %v499, %v4977
        %vm4980 = vcmp.eq.f32.partialorder %v499, 0.0
        %v4981 = vand.u32 %v499, 2147483648
        %v4982 = vsel %vm4980, %v4981, %v4979
        %v4983 = vrsqrt.pop %v500
        %v4984 = vmul.f32 %v4983, %v500
        %v4985 = vmul.f32 %v4984, %v4983
        %v4986 = vmul.f32 0.5, %v4985
        %v4987 = vsub.f32 1.5, %v4986
        %v4988 = vmul.f32 %v4983, %v4987
        %v4989 = vmul.f32 %v500, %v4988
        %vm4990 = vcmp.eq.f32.partialorder %v500, inf
        %v4991 = vsel %vm4990, %v500, %v4989
        %vm4992 = vcmp.eq.f32.partialorder %v500, 0.0
        %v4993 = vand.u32 %v500, 2147483648
        %v4994 = vsel %vm4992, %v4993, %v4991
        %v4995 = vrsqrt.pop %v501
        %v4996 = vmul.f32 %v4995, %v501
        %v4997 = vmul.f32 %v4996, %v4995
        %v4998 = vmul.f32 0.5, %v4997
        %v4999 = vsub.f32 1.5, %v4998
        %v5000 = vmul.f32 %v4995, %v4999
        %v5001 = vmul.f32 %v501, %v5000
        %vm5002 = vcmp.eq.f32.partialorder %v501, inf
        %v5003 = vsel %vm5002, %v501, %v5001
        %vm5004 = vcmp.eq.f32.partialorder %v501, 0.0
        %v5005 = vand.u32 %v501, 2147483648
        %v5006 = vsel %vm5004, %v5005, %v5003
        %v5007 = vrsqrt.pop %v502
        %v5008 = vmul.f32 %v5007, %v502
        %v5009 = vmul.f32 %v5008, %v5007
        %v5010 = vmul.f32 0.5, %v5009
        %v5011 = vsub.f32 1.5, %v5010
        %v5012 = vmul.f32 %v5007, %v5011
        %v5013 = vmul.f32 %v502, %v5012
        %vm5014 = vcmp.eq.f32.partialorder %v502, inf
        %v5015 = vsel %vm5014, %v502, %v5013
        %vm5016 = vcmp.eq.f32.partialorder %v502, 0.0
        %v5017 = vand.u32 %v502, 2147483648
        %v5018 = vsel %vm5016, %v5017, %v5015
        %v5019 = vrsqrt.pop %v503
        %v5020 = vmul.f32 %v5019, %v503
        %v5021 = vmul.f32 %v5020, %v5019
        %v5022 = vmul.f32 0.5, %v5021
        %v5023 = vsub.f32 1.5, %v5022
        %v5024 = vmul.f32 %v5019, %v5023
        %v5025 = vmul.f32 %v503, %v5024
        %vm5026 = vcmp.eq.f32.partialorder %v503, inf
        %v5027 = vsel %vm5026, %v503, %v5025
        %vm5028 = vcmp.eq.f32.partialorder %v503, 0.0
        %v5029 = vand.u32 %v503, 2147483648
        %v5030 = vsel %vm5028, %v5029, %v5027
        %v5031 = vrsqrt.pop %v504
        %v5032 = vmul.f32 %v5031, %v504
        %v5033 = vmul.f32 %v5032, %v5031
        %v5034 = vmul.f32 0.5, %v5033
        %v5035 = vsub.f32 1.5, %v5034
        %v5036 = vmul.f32 %v5031, %v5035
        %v5037 = vmul.f32 %v504, %v5036
        %vm5038 = vcmp.eq.f32.partialorder %v504, inf
        %v5039 = vsel %vm5038, %v504, %v5037
        %vm5040 = vcmp.eq.f32.partialorder %v504, 0.0
        %v5041 = vand.u32 %v504, 2147483648
        %v5042 = vsel %vm5040, %v5041, %v5039
        %v5043 = vrsqrt.pop %v505
        %v5044 = vmul.f32 %v5043, %v505
        %v5045 = vmul.f32 %v5044, %v5043
        %v5046 = vmul.f32 0.5, %v5045
        %v5047 = vsub.f32 1.5, %v5046
        %v5048 = vmul.f32 %v5043, %v5047
        %v5049 = vmul.f32 %v505, %v5048
        %vm5050 = vcmp.eq.f32.partialorder %v505, inf
        %v5051 = vsel %vm5050, %v505, %v5049
        %vm5052 = vcmp.eq.f32.partialorder %v505, 0.0
        %v5053 = vand.u32 %v505, 2147483648
        %v5054 = vsel %vm5052, %v5053, %v5051
        %v5055 = vrsqrt.pop %v506
        %v5056 = vmul.f32 %v5055, %v506
        %v5057 = vmul.f32 %v5056, %v5055
        %v5058 = vmul.f32 0.5, %v5057
        %v5059 = vsub.f32 1.5, %v5058
        %v5060 = vmul.f32 %v5055, %v5059
        %v5061 = vmul.f32 %v506, %v5060
        %vm5062 = vcmp.eq.f32.partialorder %v506, inf
        %v5063 = vsel %vm5062, %v506, %v5061
        %vm5064 = vcmp.eq.f32.partialorder %v506, 0.0
        %v5065 = vand.u32 %v506, 2147483648
        %v5066 = vsel %vm5064, %v5065, %v5063
        %v5067 = vrsqrt.pop %v507
        %v5068 = vmul.f32 %v5067, %v507
        %v5069 = vmul.f32 %v5068, %v5067
        %v5070 = vmul.f32 0.5, %v5069
        %v5071 = vsub.f32 1.5, %v5070
        %v5072 = vmul.f32 %v5067, %v5071
        %v5073 = vmul.f32 %v507, %v5072
        %vm5074 = vcmp.eq.f32.partialorder %v507, inf
        %v5075 = vsel %vm5074, %v507, %v5073
        %vm5076 = vcmp.eq.f32.partialorder %v507, 0.0
        %v5077 = vand.u32 %v507, 2147483648
        %v5078 = vsel %vm5076, %v5077, %v5075
        %v5079 = vrsqrt.pop %v508
        %v5080 = vmul.f32 %v5079, %v508
        %v5081 = vmul.f32 %v5080, %v5079
        %v5082 = vmul.f32 0.5, %v5081
        %v5083 = vsub.f32 1.5, %v5082
        %v5084 = vmul.f32 %v5079, %v5083
        %v5085 = vmul.f32 %v508, %v5084
        %vm5086 = vcmp.eq.f32.partialorder %v508, inf
        %v5087 = vsel %vm5086, %v508, %v5085
        %vm5088 = vcmp.eq.f32.partialorder %v508, 0.0
        %v5089 = vand.u32 %v508, 2147483648
        %v5090 = vsel %vm5088, %v5089, %v5087
        %v5091 = vrsqrt.pop %v509
        %v5092 = vmul.f32 %v5091, %v509
        %v5093 = vmul.f32 %v5092, %v5091
        %v5094 = vmul.f32 0.5, %v5093
        %v5095 = vsub.f32 1.5, %v5094
        %v5096 = vmul.f32 %v5091, %v5095
        %v5097 = vmul.f32 %v509, %v5096
        %vm5098 = vcmp.eq.f32.partialorder %v509, inf
        %v5099 = vsel %vm5098, %v509, %v5097
        %vm5100 = vcmp.eq.f32.partialorder %v509, 0.0
        %v5101 = vand.u32 %v509, 2147483648
        %v5102 = vsel %vm5100, %v5101, %v5099
        %v5103 = vrsqrt.pop %v510
        %v5104 = vmul.f32 %v5103, %v510
        %v5105 = vmul.f32 %v5104, %v5103
        %v5106 = vmul.f32 0.5, %v5105
        %v5107 = vsub.f32 1.5, %v5106
        %v5108 = vmul.f32 %v5103, %v5107
        %v5109 = vmul.f32 %v510, %v5108
        %vm5110 = vcmp.eq.f32.partialorder %v510, inf
        %v5111 = vsel %vm5110, %v510, %v5109
        %vm5112 = vcmp.eq.f32.partialorder %v510, 0.0
        %v5113 = vand.u32 %v510, 2147483648
        %v5114 = vsel %vm5112, %v5113, %v5111
        %v5115 = vrsqrt.pop %v511
        %v5116 = vmul.f32 %v5115, %v511
        %v5117 = vmul.f32 %v5116, %v5115
        %v5118 = vmul.f32 0.5, %v5117
        %v5119 = vsub.f32 1.5, %v5118
        %v5120 = vmul.f32 %v5115, %v5119
        %v5121 = vmul.f32 %v511, %v5120
        %vm5122 = vcmp.eq.f32.partialorder %v511, inf
        %v5123 = vsel %vm5122, %v511, %v5121
        %vm5124 = vcmp.eq.f32.partialorder %v511, 0.0
        %v5125 = vand.u32 %v511, 2147483648
        %v5126 = vsel %vm5124, %v5125, %v5123
        %v5127 = vrsqrt.pop %v512
        %v5128 = vmul.f32 %v5127, %v512
        %v5129 = vmul.f32 %v5128, %v5127
        %v5130 = vmul.f32 0.5, %v5129
        %v5131 = vsub.f32 1.5, %v5130
        %v5132 = vmul.f32 %v5127, %v5131
        %v5133 = vmul.f32 %v512, %v5132
        %vm5134 = vcmp.eq.f32.partialorder %v512, inf
        %v5135 = vsel %vm5134, %v512, %v5133
        %vm5136 = vcmp.eq.f32.partialorder %v512, 0.0
        %v5137 = vand.u32 %v512, 2147483648
        %v5138 = vsel %vm5136, %v5137, %v5135
        %v5139 = vrsqrt.pop %v513
        %v5140 = vmul.f32 %v5139, %v513
        %v5141 = vmul.f32 %v5140, %v5139
        %v5142 = vmul.f32 0.5, %v5141
        %v5143 = vsub.f32 1.5, %v5142
        %v5144 = vmul.f32 %v5139, %v5143
        %v5145 = vmul.f32 %v513, %v5144
        %vm5146 = vcmp.eq.f32.partialorder %v513, inf
        %v5147 = vsel %vm5146, %v513, %v5145
        %vm5148 = vcmp.eq.f32.partialorder %v513, 0.0
        %v5149 = vand.u32 %v513, 2147483648
        %v5150 = vsel %vm5148, %v5149, %v5147
        %v5151 = vrsqrt.pop %v514
        %v5152 = vmul.f32 %v5151, %v514
        %v5153 = vmul.f32 %v5152, %v5151
        %v5154 = vmul.f32 0.5, %v5153
        %v5155 = vsub.f32 1.5, %v5154
        %v5156 = vmul.f32 %v5151, %v5155
        %v5157 = vmul.f32 %v514, %v5156
        %vm5158 = vcmp.eq.f32.partialorder %v514, inf
        %v5159 = vsel %vm5158, %v514, %v5157
        %vm5160 = vcmp.eq.f32.partialorder %v514, 0.0
        %v5161 = vand.u32 %v514, 2147483648
        %v5162 = vsel %vm5160, %v5161, %v5159
        %v5163 = vrsqrt.pop %v515
        %v5164 = vmul.f32 %v5163, %v515
        %v5165 = vmul.f32 %v5164, %v5163
        %v5166 = vmul.f32 0.5, %v5165
        %v5167 = vsub.f32 1.5, %v5166
        %v5168 = vmul.f32 %v5163, %v5167
        %v5169 = vmul.f32 %v515, %v5168
        %vm5170 = vcmp.eq.f32.partialorder %v515, inf
        %v5171 = vsel %vm5170, %v515, %v5169
        %vm5172 = vcmp.eq.f32.partialorder %v515, 0.0
        %v5173 = vand.u32 %v515, 2147483648
        %v5174 = vsel %vm5172, %v5173, %v5171
        %v5175 = vrsqrt.pop %v516
        %v5176 = vmul.f32 %v5175, %v516
        %v5177 = vmul.f32 %v5176, %v5175
        %v5178 = vmul.f32 0.5, %v5177
        %v5179 = vsub.f32 1.5, %v5178
        %v5180 = vmul.f32 %v5175, %v5179
        %v5181 = vmul.f32 %v516, %v5180
        %vm5182 = vcmp.eq.f32.partialorder %v516, inf
        %v5183 = vsel %vm5182, %v516, %v5181
        %vm5184 = vcmp.eq.f32.partialorder %v516, 0.0
        %v5185 = vand.u32 %v516, 2147483648
        %v5186 = vsel %vm5184, %v5185, %v5183
        %v5187 = vrsqrt.pop %v517
        %v5188 = vmul.f32 %v5187, %v517
        %v5189 = vmul.f32 %v5188, %v5187
        %v5190 = vmul.f32 0.5, %v5189
        %v5191 = vsub.f32 1.5, %v5190
        %v5192 = vmul.f32 %v5187, %v5191
        %v5193 = vmul.f32 %v517, %v5192
        %vm5194 = vcmp.eq.f32.partialorder %v517, inf
        %v5195 = vsel %vm5194, %v517, %v5193
        %vm5196 = vcmp.eq.f32.partialorder %v517, 0.0
        %v5197 = vand.u32 %v517, 2147483648
        %v5198 = vsel %vm5196, %v5197, %v5195
        %v5199 = vrsqrt.pop %v518
        %v5200 = vmul.f32 %v5199, %v518
        %v5201 = vmul.f32 %v5200, %v5199
        %v5202 = vmul.f32 0.5, %v5201
        %v5203 = vsub.f32 1.5, %v5202
        %v5204 = vmul.f32 %v5199, %v5203
        %v5205 = vmul.f32 %v518, %v5204
        %vm5206 = vcmp.eq.f32.partialorder %v518, inf
        %v5207 = vsel %vm5206, %v518, %v5205
        %vm5208 = vcmp.eq.f32.partialorder %v518, 0.0
        %v5209 = vand.u32 %v518, 2147483648
        %v5210 = vsel %vm5208, %v5209, %v5207
        %v5211 = vrsqrt.pop %v519
        %v5212 = vmul.f32 %v5211, %v519
        %v5213 = vmul.f32 %v5212, %v5211
        %v5214 = vmul.f32 0.5, %v5213
        %v5215 = vsub.f32 1.5, %v5214
        %v5216 = vmul.f32 %v5211, %v5215
        %v5217 = vmul.f32 %v519, %v5216
        %vm5218 = vcmp.eq.f32.partialorder %v519, inf
        %v5219 = vsel %vm5218, %v519, %v5217
        %vm5220 = vcmp.eq.f32.partialorder %v519, 0.0
        %v5221 = vand.u32 %v519, 2147483648
        %v5222 = vsel %vm5220, %v5221, %v5219
        %v5223 = vrsqrt.pop %v520
        %v5224 = vmul.f32 %v5223, %v520
        %v5225 = vmul.f32 %v5224, %v5223
        %v5226 = vmul.f32 0.5, %v5225
        %v5227 = vsub.f32 1.5, %v5226
        %v5228 = vmul.f32 %v5223, %v5227
        %v5229 = vmul.f32 %v520, %v5228
        %vm5230 = vcmp.eq.f32.partialorder %v520, inf
        %v5231 = vsel %vm5230, %v520, %v5229
        %vm5232 = vcmp.eq.f32.partialorder %v520, 0.0
        %v5233 = vand.u32 %v520, 2147483648
        %v5234 = vsel %vm5232, %v5233, %v5231
        %v5235 = vrsqrt.pop %v521
        %v5236 = vmul.f32 %v5235, %v521
        %v5237 = vmul.f32 %v5236, %v5235
        %v5238 = vmul.f32 0.5, %v5237
        %v5239 = vsub.f32 1.5, %v5238
        %v5240 = vmul.f32 %v5235, %v5239
        %v5241 = vmul.f32 %v521, %v5240
        %vm5242 = vcmp.eq.f32.partialorder %v521, inf
        %v5243 = vsel %vm5242, %v521, %v5241
        %vm5244 = vcmp.eq.f32.partialorder %v521, 0.0
        %v5245 = vand.u32 %v521, 2147483648
        %v5246 = vsel %vm5244, %v5245, %v5243
        %v5247 = vrsqrt.pop %v522
        %v5248 = vmul.f32 %v5247, %v522
        %v5249 = vmul.f32 %v5248, %v5247
        %v5250 = vmul.f32 0.5, %v5249
        %v5251 = vsub.f32 1.5, %v5250
        %v5252 = vmul.f32 %v5247, %v5251
        %v5253 = vmul.f32 %v522, %v5252
        %vm5254 = vcmp.eq.f32.partialorder %v522, inf
        %v5255 = vsel %vm5254, %v522, %v5253
        %vm5256 = vcmp.eq.f32.partialorder %v522, 0.0
        %v5257 = vand.u32 %v522, 2147483648
        %v5258 = vsel %vm5256, %v5257, %v5255
        %v5259 = vrsqrt.pop %v523
        %v5260 = vmul.f32 %v5259, %v523
        %v5261 = vmul.f32 %v5260, %v5259
        %v5262 = vmul.f32 0.5, %v5261
        %v5263 = vsub.f32 1.5, %v5262
        %v5264 = vmul.f32 %v5259, %v5263
        %v5265 = vmul.f32 %v523, %v5264
        %vm5266 = vcmp.eq.f32.partialorder %v523, inf
        %v5267 = vsel %vm5266, %v523, %v5265
        %vm5268 = vcmp.eq.f32.partialorder %v523, 0.0
        %v5269 = vand.u32 %v523, 2147483648
        %v5270 = vsel %vm5268, %v5269, %v5267
        %v5271 = vrsqrt.pop %v524
        %v5272 = vmul.f32 %v5271, %v524
        %v5273 = vmul.f32 %v5272, %v5271
        %v5274 = vmul.f32 0.5, %v5273
        %v5275 = vsub.f32 1.5, %v5274
        %v5276 = vmul.f32 %v5271, %v5275
        %v5277 = vmul.f32 %v524, %v5276
        %vm5278 = vcmp.eq.f32.partialorder %v524, inf
        %v5279 = vsel %vm5278, %v524, %v5277
        %vm5280 = vcmp.eq.f32.partialorder %v524, 0.0
        %v5281 = vand.u32 %v524, 2147483648
        %v5282 = vsel %vm5280, %v5281, %v5279
        %v5283 = vrsqrt.pop %v525
        %v5284 = vmul.f32 %v5283, %v525
        %v5285 = vmul.f32 %v5284, %v5283
        %v5286 = vmul.f32 0.5, %v5285
        %v5287 = vsub.f32 1.5, %v5286
        %v5288 = vmul.f32 %v5283, %v5287
        %v5289 = vmul.f32 %v525, %v5288
        %vm5290 = vcmp.eq.f32.partialorder %v525, inf
        %v5291 = vsel %vm5290, %v525, %v5289
        %vm5292 = vcmp.eq.f32.partialorder %v525, 0.0
        %v5293 = vand.u32 %v525, 2147483648
        %v5294 = vsel %vm5292, %v5293, %v5291
        %v5295 = vrsqrt.pop %v526
        %v5296 = vmul.f32 %v5295, %v526
        %v5297 = vmul.f32 %v5296, %v5295
        %v5298 = vmul.f32 0.5, %v5297
        %v5299 = vsub.f32 1.5, %v5298
        %v5300 = vmul.f32 %v5295, %v5299
        %v5301 = vmul.f32 %v526, %v5300
        %vm5302 = vcmp.eq.f32.partialorder %v526, inf
        %v5303 = vsel %vm5302, %v526, %v5301
        %vm5304 = vcmp.eq.f32.partialorder %v526, 0.0
        %v5305 = vand.u32 %v526, 2147483648
        %v5306 = vsel %vm5304, %v5305, %v5303
        %v5307 = vrsqrt.pop %v527
        %v5308 = vmul.f32 %v5307, %v527
        %v5309 = vmul.f32 %v5308, %v5307
        %v5310 = vmul.f32 0.5, %v5309
        %v5311 = vsub.f32 1.5, %v5310
        %v5312 = vmul.f32 %v5307, %v5311
        %v5313 = vmul.f32 %v527, %v5312
        %vm5314 = vcmp.eq.f32.partialorder %v527, inf
        %v5315 = vsel %vm5314, %v527, %v5313
        %vm5316 = vcmp.eq.f32.partialorder %v527, 0.0
        %v5317 = vand.u32 %v527, 2147483648
        %v5318 = vsel %vm5316, %v5317, %v5315
        %v5319 = vrsqrt.pop %v528
        %v5320 = vmul.f32 %v5319, %v528
        %v5321 = vmul.f32 %v5320, %v5319
        %v5322 = vmul.f32 0.5, %v5321
        %v5323 = vsub.f32 1.5, %v5322
        %v5324 = vmul.f32 %v5319, %v5323
        %v5325 = vmul.f32 %v528, %v5324
        %vm5326 = vcmp.eq.f32.partialorder %v528, inf
        %v5327 = vsel %vm5326, %v528, %v5325
        %vm5328 = vcmp.eq.f32.partialorder %v528, 0.0
        %v5329 = vand.u32 %v528, 2147483648
        %v5330 = vsel %vm5328, %v5329, %v5327
        %v5331 = vrsqrt.pop %v529
        %v5332 = vmul.f32 %v5331, %v529
        %v5333 = vmul.f32 %v5332, %v5331
        %v5334 = vmul.f32 0.5, %v5333
        %v5335 = vsub.f32 1.5, %v5334
        %v5336 = vmul.f32 %v5331, %v5335
        %v5337 = vmul.f32 %v529, %v5336
        %vm5338 = vcmp.eq.f32.partialorder %v529, inf
        %v5339 = vsel %vm5338, %v529, %v5337
        %vm5340 = vcmp.eq.f32.partialorder %v529, 0.0
        %v5341 = vand.u32 %v529, 2147483648
        %v5342 = vsel %vm5340, %v5341, %v5339
        %v5343 = vrsqrt.pop %v530
        %v5344 = vmul.f32 %v5343, %v530
        %v5345 = vmul.f32 %v5344, %v5343
        %v5346 = vmul.f32 0.5, %v5345
        %v5347 = vsub.f32 1.5, %v5346
        %v5348 = vmul.f32 %v5343, %v5347
        %v5349 = vmul.f32 %v530, %v5348
        %vm5350 = vcmp.eq.f32.partialorder %v530, inf
        %v5351 = vsel %vm5350, %v530, %v5349
        %vm5352 = vcmp.eq.f32.partialorder %v530, 0.0
        %v5353 = vand.u32 %v530, 2147483648
        %v5354 = vsel %vm5352, %v5353, %v5351
        %v5355 = vrsqrt.pop %v531
        %v5356 = vmul.f32 %v5355, %v531
        %v5357 = vmul.f32 %v5356, %v5355
        %v5358 = vmul.f32 0.5, %v5357
        %v5359 = vsub.f32 1.5, %v5358
        %v5360 = vmul.f32 %v5355, %v5359
        %v5361 = vmul.f32 %v531, %v5360
        %vm5362 = vcmp.eq.f32.partialorder %v531, inf
        %v5363 = vsel %vm5362, %v531, %v5361
        %vm5364 = vcmp.eq.f32.partialorder %v531, 0.0
        %v5365 = vand.u32 %v531, 2147483648
        %v5366 = vsel %vm5364, %v5365, %v5363
        %v5367 = vrsqrt.pop %v532
        %v5368 = vmul.f32 %v5367, %v532
        %v5369 = vmul.f32 %v5368, %v5367
        %v5370 = vmul.f32 0.5, %v5369
        %v5371 = vsub.f32 1.5, %v5370
        %v5372 = vmul.f32 %v5367, %v5371
        %v5373 = vmul.f32 %v532, %v5372
        %vm5374 = vcmp.eq.f32.partialorder %v532, inf
        %v5375 = vsel %vm5374, %v532, %v5373
        %vm5376 = vcmp.eq.f32.partialorder %v532, 0.0
        %v5377 = vand.u32 %v532, 2147483648
        %v5378 = vsel %vm5376, %v5377, %v5375
        %v5379 = vrsqrt.pop %v533
        %v5380 = vmul.f32 %v5379, %v533
        %v5381 = vmul.f32 %v5380, %v5379
        %v5382 = vmul.f32 0.5, %v5381
        %v5383 = vsub.f32 1.5, %v5382
        %v5384 = vmul.f32 %v5379, %v5383
        %v5385 = vmul.f32 %v533, %v5384
        %vm5386 = vcmp.eq.f32.partialorder %v533, inf
        %v5387 = vsel %vm5386, %v533, %v5385
        %vm5388 = vcmp.eq.f32.partialorder %v533, 0.0
        %v5389 = vand.u32 %v533, 2147483648
        %v5390 = vsel %vm5388, %v5389, %v5387
        %v5391 = vrsqrt.pop %v534
        %v5392 = vmul.f32 %v5391, %v534
        %v5393 = vmul.f32 %v5392, %v5391
        %v5394 = vmul.f32 0.5, %v5393
        %v5395 = vsub.f32 1.5, %v5394
        %v5396 = vmul.f32 %v5391, %v5395
        %v5397 = vmul.f32 %v534, %v5396
        %vm5398 = vcmp.eq.f32.partialorder %v534, inf
        %v5399 = vsel %vm5398, %v534, %v5397
        %vm5400 = vcmp.eq.f32.partialorder %v534, 0.0
        %v5401 = vand.u32 %v534, 2147483648
        %v5402 = vsel %vm5400, %v5401, %v5399
        %v5403 = vrsqrt.pop %v535
        %v5404 = vmul.f32 %v5403, %v535
        %v5405 = vmul.f32 %v5404, %v5403
        %v5406 = vmul.f32 0.5, %v5405
        %v5407 = vsub.f32 1.5, %v5406
        %v5408 = vmul.f32 %v5403, %v5407
        %v5409 = vmul.f32 %v535, %v5408
        %vm5410 = vcmp.eq.f32.partialorder %v535, inf
        %v5411 = vsel %vm5410, %v535, %v5409
        %vm5412 = vcmp.eq.f32.partialorder %v535, 0.0
        %v5413 = vand.u32 %v535, 2147483648
        %v5414 = vsel %vm5412, %v5413, %v5411
        %v5415 = vrsqrt.pop %v536
        %v5416 = vmul.f32 %v5415, %v536
        %v5417 = vmul.f32 %v5416, %v5415
        %v5418 = vmul.f32 0.5, %v5417
        %v5419 = vsub.f32 1.5, %v5418
        %v5420 = vmul.f32 %v5415, %v5419
        %v5421 = vmul.f32 %v536, %v5420
        %vm5422 = vcmp.eq.f32.partialorder %v536, inf
        %v5423 = vsel %vm5422, %v536, %v5421
        %vm5424 = vcmp.eq.f32.partialorder %v536, 0.0
        %v5425 = vand.u32 %v536, 2147483648
        %v5426 = vsel %vm5424, %v5425, %v5423
        %v5427 = vrsqrt.pop %v537
        %v5428 = vmul.f32 %v5427, %v537
        %v5429 = vmul.f32 %v5428, %v5427
        %v5430 = vmul.f32 0.5, %v5429
        %v5431 = vsub.f32 1.5, %v5430
        %v5432 = vmul.f32 %v5427, %v5431
        %v5433 = vmul.f32 %v537, %v5432
        %vm5434 = vcmp.eq.f32.partialorder %v537, inf
        %v5435 = vsel %vm5434, %v537, %v5433
        %vm5436 = vcmp.eq.f32.partialorder %v537, 0.0
        %v5437 = vand.u32 %v537, 2147483648
        %v5438 = vsel %vm5436, %v5437, %v5435
        %v5439 = vrsqrt.pop %v538
        %v5440 = vmul.f32 %v5439, %v538
        %v5441 = vmul.f32 %v5440, %v5439
        %v5442 = vmul.f32 0.5, %v5441
        %v5443 = vsub.f32 1.5, %v5442
        %v5444 = vmul.f32 %v5439, %v5443
        %v5445 = vmul.f32 %v538, %v5444
        %vm5446 = vcmp.eq.f32.partialorder %v538, inf
        %v5447 = vsel %vm5446, %v538, %v5445
        %vm5448 = vcmp.eq.f32.partialorder %v538, 0.0
        %v5449 = vand.u32 %v538, 2147483648
        %v5450 = vsel %vm5448, %v5449, %v5447
        %v5451 = vrsqrt.pop %v539
        %v5452 = vmul.f32 %v5451, %v539
        %v5453 = vmul.f32 %v5452, %v5451
        %v5454 = vmul.f32 0.5, %v5453
        %v5455 = vsub.f32 1.5, %v5454
        %v5456 = vmul.f32 %v5451, %v5455
        %v5457 = vmul.f32 %v539, %v5456
        %vm5458 = vcmp.eq.f32.partialorder %v539, inf
        %v5459 = vsel %vm5458, %v539, %v5457
        %vm5460 = vcmp.eq.f32.partialorder %v539, 0.0
        %v5461 = vand.u32 %v539, 2147483648
        %v5462 = vsel %vm5460, %v5461, %v5459
        %v5463 = vrsqrt.pop %v540
        %v5464 = vmul.f32 %v5463, %v540
        %v5465 = vmul.f32 %v5464, %v5463
        %v5466 = vmul.f32 0.5, %v5465
        %v5467 = vsub.f32 1.5, %v5466
        %v5468 = vmul.f32 %v5463, %v5467
        %v5469 = vmul.f32 %v540, %v5468
        %vm5470 = vcmp.eq.f32.partialorder %v540, inf
        %v5471 = vsel %vm5470, %v540, %v5469
        %vm5472 = vcmp.eq.f32.partialorder %v540, 0.0
        %v5473 = vand.u32 %v540, 2147483648
        %v5474 = vsel %vm5472, %v5473, %v5471
        %v5475 = vrsqrt.pop %v541
        %v5476 = vmul.f32 %v5475, %v541
        %v5477 = vmul.f32 %v5476, %v5475
        %v5478 = vmul.f32 0.5, %v5477
        %v5479 = vsub.f32 1.5, %v5478
        %v5480 = vmul.f32 %v5475, %v5479
        %v5481 = vmul.f32 %v541, %v5480
        %vm5482 = vcmp.eq.f32.partialorder %v541, inf
        %v5483 = vsel %vm5482, %v541, %v5481
        %vm5484 = vcmp.eq.f32.partialorder %v541, 0.0
        %v5485 = vand.u32 %v541, 2147483648
        %v5486 = vsel %vm5484, %v5485, %v5483
        %v5487 = vrsqrt.pop %v542
        %v5488 = vmul.f32 %v5487, %v542
        %v5489 = vmul.f32 %v5488, %v5487
        %v5490 = vmul.f32 0.5, %v5489
        %v5491 = vsub.f32 1.5, %v5490
        %v5492 = vmul.f32 %v5487, %v5491
        %v5493 = vmul.f32 %v542, %v5492
        %vm5494 = vcmp.eq.f32.partialorder %v542, inf
        %v5495 = vsel %vm5494, %v542, %v5493
        %vm5496 = vcmp.eq.f32.partialorder %v542, 0.0
        %v5497 = vand.u32 %v542, 2147483648
        %v5498 = vsel %vm5496, %v5497, %v5495
        %v5499 = vrsqrt.pop %v543
        %v5500 = vmul.f32 %v5499, %v543
        %v5501 = vmul.f32 %v5500, %v5499
        %v5502 = vmul.f32 0.5, %v5501
        %v5503 = vsub.f32 1.5, %v5502
        %v5504 = vmul.f32 %v5499, %v5503
        %v5505 = vmul.f32 %v543, %v5504
        %vm5506 = vcmp.eq.f32.partialorder %v543, inf
        %v5507 = vsel %vm5506, %v543, %v5505
        %vm5508 = vcmp.eq.f32.partialorder %v543, 0.0
        %v5509 = vand.u32 %v543, 2147483648
        %v5510 = vsel %vm5508, %v5509, %v5507
        %v5511 = vrsqrt.pop %v544
        %v5512 = vmul.f32 %v5511, %v544
        %v5513 = vmul.f32 %v5512, %v5511
        %v5514 = vmul.f32 0.5, %v5513
        %v5515 = vsub.f32 1.5, %v5514
        %v5516 = vmul.f32 %v5511, %v5515
        %v5517 = vmul.f32 %v544, %v5516
        %vm5518 = vcmp.eq.f32.partialorder %v544, inf
        %v5519 = vsel %vm5518, %v544, %v5517
        %vm5520 = vcmp.eq.f32.partialorder %v544, 0.0
        %v5521 = vand.u32 %v544, 2147483648
        %v5522 = vsel %vm5520, %v5521, %v5519
        %v5523 = vrsqrt.pop %v545
        %v5524 = vmul.f32 %v5523, %v545
        %v5525 = vmul.f32 %v5524, %v5523
        %v5526 = vmul.f32 0.5, %v5525
        %v5527 = vsub.f32 1.5, %v5526
        %v5528 = vmul.f32 %v5523, %v5527
        %v5529 = vmul.f32 %v545, %v5528
        %vm5530 = vcmp.eq.f32.partialorder %v545, inf
        %v5531 = vsel %vm5530, %v545, %v5529
        %vm5532 = vcmp.eq.f32.partialorder %v545, 0.0
        %v5533 = vand.u32 %v545, 2147483648
        %v5534 = vsel %vm5532, %v5533, %v5531
        %v5535 = vrsqrt.pop %v546
        %v5536 = vmul.f32 %v5535, %v546
        %v5537 = vmul.f32 %v5536, %v5535
        %v5538 = vmul.f32 0.5, %v5537
        %v5539 = vsub.f32 1.5, %v5538
        %v5540 = vmul.f32 %v5535, %v5539
        %v5541 = vmul.f32 %v546, %v5540
        %vm5542 = vcmp.eq.f32.partialorder %v546, inf
        %v5543 = vsel %vm5542, %v546, %v5541
        %vm5544 = vcmp.eq.f32.partialorder %v546, 0.0
        %v5545 = vand.u32 %v546, 2147483648
        %v5546 = vsel %vm5544, %v5545, %v5543
        %v5547 = vrsqrt.pop %v547
        %v5548 = vmul.f32 %v5547, %v547
        %v5549 = vmul.f32 %v5548, %v5547
        %v5550 = vmul.f32 0.5, %v5549
        %v5551 = vsub.f32 1.5, %v5550
        %v5552 = vmul.f32 %v5547, %v5551
        %v5553 = vmul.f32 %v547, %v5552
        %vm5554 = vcmp.eq.f32.partialorder %v547, inf
        %v5555 = vsel %vm5554, %v547, %v5553
        %vm5556 = vcmp.eq.f32.partialorder %v547, 0.0
        %v5557 = vand.u32 %v547, 2147483648
        %v5558 = vsel %vm5556, %v5557, %v5555
        %v5559 = vrsqrt.pop %v548
        %v5560 = vmul.f32 %v5559, %v548
        %v5561 = vmul.f32 %v5560, %v5559
        %v5562 = vmul.f32 0.5, %v5561
        %v5563 = vsub.f32 1.5, %v5562
        %v5564 = vmul.f32 %v5559, %v5563
        %v5565 = vmul.f32 %v548, %v5564
        %vm5566 = vcmp.eq.f32.partialorder %v548, inf
        %v5567 = vsel %vm5566, %v548, %v5565
        %vm5568 = vcmp.eq.f32.partialorder %v548, 0.0
        %v5569 = vand.u32 %v548, 2147483648
        %v5570 = vsel %vm5568, %v5569, %v5567
        %v5571 = vrsqrt.pop %v549
        %v5572 = vmul.f32 %v5571, %v549
        %v5573 = vmul.f32 %v5572, %v5571
        %v5574 = vmul.f32 0.5, %v5573
        %v5575 = vsub.f32 1.5, %v5574
        %v5576 = vmul.f32 %v5571, %v5575
        %v5577 = vmul.f32 %v549, %v5576
        %vm5578 = vcmp.eq.f32.partialorder %v549, inf
        %v5579 = vsel %vm5578, %v549, %v5577
        %vm5580 = vcmp.eq.f32.partialorder %v549, 0.0
        %v5581 = vand.u32 %v549, 2147483648
        %v5582 = vsel %vm5580, %v5581, %v5579
        %v5583 = vrsqrt.pop %v550
        %v5584 = vmul.f32 %v5583, %v550
        %v5585 = vmul.f32 %v5584, %v5583
        %v5586 = vmul.f32 0.5, %v5585
        %v5587 = vsub.f32 1.5, %v5586
        %v5588 = vmul.f32 %v5583, %v5587
        %v5589 = vmul.f32 %v550, %v5588
        %vm5590 = vcmp.eq.f32.partialorder %v550, inf
        %v5591 = vsel %vm5590, %v550, %v5589
        %vm5592 = vcmp.eq.f32.partialorder %v550, 0.0
        %v5593 = vand.u32 %v550, 2147483648
        %v5594 = vsel %vm5592, %v5593, %v5591
        %v5595 = vrsqrt.pop %v551
        %v5596 = vmul.f32 %v5595, %v551
        %v5597 = vmul.f32 %v5596, %v5595
        %v5598 = vmul.f32 0.5, %v5597
        %v5599 = vsub.f32 1.5, %v5598
        %v5600 = vmul.f32 %v5595, %v5599
        %v5601 = vmul.f32 %v551, %v5600
        %vm5602 = vcmp.eq.f32.partialorder %v551, inf
        %v5603 = vsel %vm5602, %v551, %v5601
        %vm5604 = vcmp.eq.f32.partialorder %v551, 0.0
        %v5605 = vand.u32 %v551, 2147483648
        %v5606 = vsel %vm5604, %v5605, %v5603
        %v5607 = vrsqrt.pop %v552
        %v5608 = vmul.f32 %v5607, %v552
        %v5609 = vmul.f32 %v5608, %v5607
        %v5610 = vmul.f32 0.5, %v5609
        %v5611 = vsub.f32 1.5, %v5610
        %v5612 = vmul.f32 %v5607, %v5611
        %v5613 = vmul.f32 %v552, %v5612
        %vm5614 = vcmp.eq.f32.partialorder %v552, inf
        %v5615 = vsel %vm5614, %v552, %v5613
        %vm5616 = vcmp.eq.f32.partialorder %v552, 0.0
        %v5617 = vand.u32 %v552, 2147483648
        %v5618 = vsel %vm5616, %v5617, %v5615
        %v5619 = vrsqrt.pop %v553
        %v5620 = vmul.f32 %v5619, %v553
        %v5621 = vmul.f32 %v5620, %v5619
        %v5622 = vmul.f32 0.5, %v5621
        %v5623 = vsub.f32 1.5, %v5622
        %v5624 = vmul.f32 %v5619, %v5623
        %v5625 = vmul.f32 %v553, %v5624
        %vm5626 = vcmp.eq.f32.partialorder %v553, inf
        %v5627 = vsel %vm5626, %v553, %v5625
        %vm5628 = vcmp.eq.f32.partialorder %v553, 0.0
        %v5629 = vand.u32 %v553, 2147483648
        %v5630 = vsel %vm5628, %v5629, %v5627
        %v5631 = vrsqrt.pop %v554
        %v5632 = vmul.f32 %v5631, %v554
        %v5633 = vmul.f32 %v5632, %v5631
        %v5634 = vmul.f32 0.5, %v5633
        %v5635 = vsub.f32 1.5, %v5634
        %v5636 = vmul.f32 %v5631, %v5635
        %v5637 = vmul.f32 %v554, %v5636
        %vm5638 = vcmp.eq.f32.partialorder %v554, inf
        %v5639 = vsel %vm5638, %v554, %v5637
        %vm5640 = vcmp.eq.f32.partialorder %v554, 0.0
        %v5641 = vand.u32 %v554, 2147483648
        %v5642 = vsel %vm5640, %v5641, %v5639
        %v5643 = vrsqrt.pop %v555
        %v5644 = vmul.f32 %v5643, %v555
        %v5645 = vmul.f32 %v5644, %v5643
        %v5646 = vmul.f32 0.5, %v5645
        %v5647 = vsub.f32 1.5, %v5646
        %v5648 = vmul.f32 %v5643, %v5647
        %v5649 = vmul.f32 %v555, %v5648
        %vm5650 = vcmp.eq.f32.partialorder %v555, inf
        %v5651 = vsel %vm5650, %v555, %v5649
        %vm5652 = vcmp.eq.f32.partialorder %v555, 0.0
        %v5653 = vand.u32 %v555, 2147483648
        %v5654 = vsel %vm5652, %v5653, %v5651
        %v5655 = vrsqrt.pop %v556
        %v5656 = vmul.f32 %v5655, %v556
        %v5657 = vmul.f32 %v5656, %v5655
        %v5658 = vmul.f32 0.5, %v5657
        %v5659 = vsub.f32 1.5, %v5658
        %v5660 = vmul.f32 %v5655, %v5659
        %v5661 = vmul.f32 %v556, %v5660
        %vm5662 = vcmp.eq.f32.partialorder %v556, inf
        %v5663 = vsel %vm5662, %v556, %v5661
        %vm5664 = vcmp.eq.f32.partialorder %v556, 0.0
        %v5665 = vand.u32 %v556, 2147483648
        %v5666 = vsel %vm5664, %v5665, %v5663
        %v5667 = vrsqrt.pop %v557
        %v5668 = vmul.f32 %v5667, %v557
        %v5669 = vmul.f32 %v5668, %v5667
        %v5670 = vmul.f32 0.5, %v5669
        %v5671 = vsub.f32 1.5, %v5670
        %v5672 = vmul.f32 %v5667, %v5671
        %v5673 = vmul.f32 %v557, %v5672
        %vm5674 = vcmp.eq.f32.partialorder %v557, inf
        %v5675 = vsel %vm5674, %v557, %v5673
        %vm5676 = vcmp.eq.f32.partialorder %v557, 0.0
        %v5677 = vand.u32 %v557, 2147483648
        %v5678 = vsel %vm5676, %v5677, %v5675
        %v5679 = vrsqrt.pop %v558
        %v5680 = vmul.f32 %v5679, %v558
        %v5681 = vmul.f32 %v5680, %v5679
        %v5682 = vmul.f32 0.5, %v5681
        %v5683 = vsub.f32 1.5, %v5682
        %v5684 = vmul.f32 %v5679, %v5683
        %v5685 = vmul.f32 %v558, %v5684
        %vm5686 = vcmp.eq.f32.partialorder %v558, inf
        %v5687 = vsel %vm5686, %v558, %v5685
        %vm5688 = vcmp.eq.f32.partialorder %v558, 0.0
        %v5689 = vand.u32 %v558, 2147483648
        %v5690 = vsel %vm5688, %v5689, %v5687
        %v5691 = vrsqrt.pop %v559
        %v5692 = vmul.f32 %v5691, %v559
        %v5693 = vmul.f32 %v5692, %v5691
        %v5694 = vmul.f32 0.5, %v5693
        %v5695 = vsub.f32 1.5, %v5694
        %v5696 = vmul.f32 %v5691, %v5695
        %v5697 = vmul.f32 %v559, %v5696
        %vm5698 = vcmp.eq.f32.partialorder %v559, inf
        %v5699 = vsel %vm5698, %v559, %v5697
        %vm5700 = vcmp.eq.f32.partialorder %v559, 0.0
        %v5701 = vand.u32 %v559, 2147483648
        %v5702 = vsel %vm5700, %v5701, %v5699
        %v5703 = vrsqrt.pop %v560
        %v5704 = vmul.f32 %v5703, %v560
        %v5705 = vmul.f32 %v5704, %v5703
        %v5706 = vmul.f32 0.5, %v5705
        %v5707 = vsub.f32 1.5, %v5706
        %v5708 = vmul.f32 %v5703, %v5707
        %v5709 = vmul.f32 %v560, %v5708
        %vm5710 = vcmp.eq.f32.partialorder %v560, inf
        %v5711 = vsel %vm5710, %v560, %v5709
        %vm5712 = vcmp.eq.f32.partialorder %v560, 0.0
        %v5713 = vand.u32 %v560, 2147483648
        %v5714 = vsel %vm5712, %v5713, %v5711
        %v5715 = vrsqrt.pop %v561
        %v5716 = vmul.f32 %v5715, %v561
        %v5717 = vmul.f32 %v5716, %v5715
        %v5718 = vmul.f32 0.5, %v5717
        %v5719 = vsub.f32 1.5, %v5718
        %v5720 = vmul.f32 %v5715, %v5719
        %v5721 = vmul.f32 %v561, %v5720
        %vm5722 = vcmp.eq.f32.partialorder %v561, inf
        %v5723 = vsel %vm5722, %v561, %v5721
        %vm5724 = vcmp.eq.f32.partialorder %v561, 0.0
        %v5725 = vand.u32 %v561, 2147483648
        %v5726 = vsel %vm5724, %v5725, %v5723
        %v5727 = vrsqrt.pop %v562
        %v5728 = vmul.f32 %v5727, %v562
        %v5729 = vmul.f32 %v5728, %v5727
        %v5730 = vmul.f32 0.5, %v5729
        %v5731 = vsub.f32 1.5, %v5730
        %v5732 = vmul.f32 %v5727, %v5731
        %v5733 = vmul.f32 %v562, %v5732
        %vm5734 = vcmp.eq.f32.partialorder %v562, inf
        %v5735 = vsel %vm5734, %v562, %v5733
        %vm5736 = vcmp.eq.f32.partialorder %v562, 0.0
        %v5737 = vand.u32 %v562, 2147483648
        %v5738 = vsel %vm5736, %v5737, %v5735
        %v5739 = vrsqrt.pop %v563
        %v5740 = vmul.f32 %v5739, %v563
        %v5741 = vmul.f32 %v5740, %v5739
        %v5742 = vmul.f32 0.5, %v5741
        %v5743 = vsub.f32 1.5, %v5742
        %v5744 = vmul.f32 %v5739, %v5743
        %v5745 = vmul.f32 %v563, %v5744
        %vm5746 = vcmp.eq.f32.partialorder %v563, inf
        %v5747 = vsel %vm5746, %v563, %v5745
        %vm5748 = vcmp.eq.f32.partialorder %v563, 0.0
        %v5749 = vand.u32 %v563, 2147483648
        %v5750 = vsel %vm5748, %v5749, %v5747
        %v5751 = vrsqrt.pop %v564
        %v5752 = vmul.f32 %v5751, %v564
        %v5753 = vmul.f32 %v5752, %v5751
        %v5754 = vmul.f32 0.5, %v5753
        %v5755 = vsub.f32 1.5, %v5754
        %v5756 = vmul.f32 %v5751, %v5755
        %v5757 = vmul.f32 %v564, %v5756
        %vm5758 = vcmp.eq.f32.partialorder %v564, inf
        %v5759 = vsel %vm5758, %v564, %v5757
        %vm5760 = vcmp.eq.f32.partialorder %v564, 0.0
        %v5761 = vand.u32 %v564, 2147483648
        %v5762 = vsel %vm5760, %v5761, %v5759
        %v5763 = vrsqrt.pop %v565
        %v5764 = vmul.f32 %v5763, %v565
        %v5765 = vmul.f32 %v5764, %v5763
        %v5766 = vmul.f32 0.5, %v5765
        %v5767 = vsub.f32 1.5, %v5766
        %v5768 = vmul.f32 %v5763, %v5767
        %v5769 = vmul.f32 %v565, %v5768
        %vm5770 = vcmp.eq.f32.partialorder %v565, inf
        %v5771 = vsel %vm5770, %v565, %v5769
        %vm5772 = vcmp.eq.f32.partialorder %v565, 0.0
        %v5773 = vand.u32 %v565, 2147483648
        %v5774 = vsel %vm5772, %v5773, %v5771
        %v5775 = vrsqrt.pop %v566
        %v5776 = vmul.f32 %v5775, %v566
        %v5777 = vmul.f32 %v5776, %v5775
        %v5778 = vmul.f32 0.5, %v5777
        %v5779 = vsub.f32 1.5, %v5778
        %v5780 = vmul.f32 %v5775, %v5779
        %v5781 = vmul.f32 %v566, %v5780
        %vm5782 = vcmp.eq.f32.partialorder %v566, inf
        %v5783 = vsel %vm5782, %v566, %v5781
        %vm5784 = vcmp.eq.f32.partialorder %v566, 0.0
        %v5785 = vand.u32 %v566, 2147483648
        %v5786 = vsel %vm5784, %v5785, %v5783
        %v5787 = vrsqrt.pop %v567
        %v5788 = vmul.f32 %v5787, %v567
        %v5789 = vmul.f32 %v5788, %v5787
        %v5790 = vmul.f32 0.5, %v5789
        %v5791 = vsub.f32 1.5, %v5790
        %v5792 = vmul.f32 %v5787, %v5791
        %v5793 = vmul.f32 %v567, %v5792
        %vm5794 = vcmp.eq.f32.partialorder %v567, inf
        %v5795 = vsel %vm5794, %v567, %v5793
        %vm5796 = vcmp.eq.f32.partialorder %v567, 0.0
        %v5797 = vand.u32 %v567, 2147483648
        %v5798 = vsel %vm5796, %v5797, %v5795
        %v5799 = vrsqrt.pop %v568
        %v5800 = vmul.f32 %v5799, %v568
        %v5801 = vmul.f32 %v5800, %v5799
        %v5802 = vmul.f32 0.5, %v5801
        %v5803 = vsub.f32 1.5, %v5802
        %v5804 = vmul.f32 %v5799, %v5803
        %v5805 = vmul.f32 %v568, %v5804
        %vm5806 = vcmp.eq.f32.partialorder %v568, inf
        %v5807 = vsel %vm5806, %v568, %v5805
        %vm5808 = vcmp.eq.f32.partialorder %v568, 0.0
        %v5809 = vand.u32 %v568, 2147483648
        %v5810 = vsel %vm5808, %v5809, %v5807
        %v5811 = vrsqrt.pop %v569
        %v5812 = vmul.f32 %v5811, %v569
        %v5813 = vmul.f32 %v5812, %v5811
        %v5814 = vmul.f32 0.5, %v5813
        %v5815 = vsub.f32 1.5, %v5814
        %v5816 = vmul.f32 %v5811, %v5815
        %v5817 = vmul.f32 %v569, %v5816
        %vm5818 = vcmp.eq.f32.partialorder %v569, inf
        %v5819 = vsel %vm5818, %v569, %v5817
        %vm5820 = vcmp.eq.f32.partialorder %v569, 0.0
        %v5821 = vand.u32 %v569, 2147483648
        %v5822 = vsel %vm5820, %v5821, %v5819
        %v5823 = vrsqrt.pop %v570
        %v5824 = vmul.f32 %v5823, %v570
        %v5825 = vmul.f32 %v5824, %v5823
        %v5826 = vmul.f32 0.5, %v5825
        %v5827 = vsub.f32 1.5, %v5826
        %v5828 = vmul.f32 %v5823, %v5827
        %v5829 = vmul.f32 %v570, %v5828
        %vm5830 = vcmp.eq.f32.partialorder %v570, inf
        %v5831 = vsel %vm5830, %v570, %v5829
        %vm5832 = vcmp.eq.f32.partialorder %v570, 0.0
        %v5833 = vand.u32 %v570, 2147483648
        %v5834 = vsel %vm5832, %v5833, %v5831
        %v5835 = vrsqrt.pop %v571
        %v5836 = vmul.f32 %v5835, %v571
        %v5837 = vmul.f32 %v5836, %v5835
        %v5838 = vmul.f32 0.5, %v5837
        %v5839 = vsub.f32 1.5, %v5838
        %v5840 = vmul.f32 %v5835, %v5839
        %v5841 = vmul.f32 %v571, %v5840
        %vm5842 = vcmp.eq.f32.partialorder %v571, inf
        %v5843 = vsel %vm5842, %v571, %v5841
        %vm5844 = vcmp.eq.f32.partialorder %v571, 0.0
        %v5845 = vand.u32 %v571, 2147483648
        %v5846 = vsel %vm5844, %v5845, %v5843
        %v5847 = vrsqrt.pop %v572
        %v5848 = vmul.f32 %v5847, %v572
        %v5849 = vmul.f32 %v5848, %v5847
        %v5850 = vmul.f32 0.5, %v5849
        %v5851 = vsub.f32 1.5, %v5850
        %v5852 = vmul.f32 %v5847, %v5851
        %v5853 = vmul.f32 %v572, %v5852
        %vm5854 = vcmp.eq.f32.partialorder %v572, inf
        %v5855 = vsel %vm5854, %v572, %v5853
        %vm5856 = vcmp.eq.f32.partialorder %v572, 0.0
        %v5857 = vand.u32 %v572, 2147483648
        %v5858 = vsel %vm5856, %v5857, %v5855
        %v5859 = vrsqrt.pop %v573
        %v5860 = vmul.f32 %v5859, %v573
        %v5861 = vmul.f32 %v5860, %v5859
        %v5862 = vmul.f32 0.5, %v5861
        %v5863 = vsub.f32 1.5, %v5862
        %v5864 = vmul.f32 %v5859, %v5863
        %v5865 = vmul.f32 %v573, %v5864
        %vm5866 = vcmp.eq.f32.partialorder %v573, inf
        %v5867 = vsel %vm5866, %v573, %v5865
        %vm5868 = vcmp.eq.f32.partialorder %v573, 0.0
        %v5869 = vand.u32 %v573, 2147483648
        %v5870 = vsel %vm5868, %v5869, %v5867
        %v5871 = vrsqrt.pop %v574
        %v5872 = vmul.f32 %v5871, %v574
        %v5873 = vmul.f32 %v5872, %v5871
        %v5874 = vmul.f32 0.5, %v5873
        %v5875 = vsub.f32 1.5, %v5874
        %v5876 = vmul.f32 %v5871, %v5875
        %v5877 = vmul.f32 %v574, %v5876
        %vm5878 = vcmp.eq.f32.partialorder %v574, inf
        %v5879 = vsel %vm5878, %v574, %v5877
        %vm5880 = vcmp.eq.f32.partialorder %v574, 0.0
        %v5881 = vand.u32 %v574, 2147483648
        %v5882 = vsel %vm5880, %v5881, %v5879
        %v5883 = vrsqrt.pop %v575
        %v5884 = vmul.f32 %v5883, %v575
        %v5885 = vmul.f32 %v5884, %v5883
        %v5886 = vmul.f32 0.5, %v5885
        %v5887 = vsub.f32 1.5, %v5886
        %v5888 = vmul.f32 %v5883, %v5887
        %v5889 = vmul.f32 %v575, %v5888
        %vm5890 = vcmp.eq.f32.partialorder %v575, inf
        %v5891 = vsel %vm5890, %v575, %v5889
        %vm5892 = vcmp.eq.f32.partialorder %v575, 0.0
        %v5893 = vand.u32 %v575, 2147483648
        %v5894 = vsel %vm5892, %v5893, %v5891
        %v5895 = vrsqrt.pop %v576
        %v5896 = vmul.f32 %v5895, %v576
        %v5897 = vmul.f32 %v5896, %v5895
        %v5898 = vmul.f32 0.5, %v5897
        %v5899 = vsub.f32 1.5, %v5898
        %v5900 = vmul.f32 %v5895, %v5899
        %v5901 = vmul.f32 %v576, %v5900
        %vm5902 = vcmp.eq.f32.partialorder %v576, inf
        %v5903 = vsel %vm5902, %v576, %v5901
        %vm5904 = vcmp.eq.f32.partialorder %v576, 0.0
        %v5905 = vand.u32 %v576, 2147483648
        %v5906 = vsel %vm5904, %v5905, %v5903
        %v5907 = vrsqrt.pop %v577
        %v5908 = vmul.f32 %v5907, %v577
        %v5909 = vmul.f32 %v5908, %v5907
        %v5910 = vmul.f32 0.5, %v5909
        %v5911 = vsub.f32 1.5, %v5910
        %v5912 = vmul.f32 %v5907, %v5911
        %v5913 = vmul.f32 %v577, %v5912
        %vm5914 = vcmp.eq.f32.partialorder %v577, inf
        %v5915 = vsel %vm5914, %v577, %v5913
        %vm5916 = vcmp.eq.f32.partialorder %v577, 0.0
        %v5917 = vand.u32 %v577, 2147483648
        %v5918 = vsel %vm5916, %v5917, %v5915
        %v5919 = vrsqrt.pop %v578
        %v5920 = vmul.f32 %v5919, %v578
        %v5921 = vmul.f32 %v5920, %v5919
        %v5922 = vmul.f32 0.5, %v5921
        %v5923 = vsub.f32 1.5, %v5922
        %v5924 = vmul.f32 %v5919, %v5923
        %v5925 = vmul.f32 %v578, %v5924
        %vm5926 = vcmp.eq.f32.partialorder %v578, inf
        %v5927 = vsel %vm5926, %v578, %v5925
        %vm5928 = vcmp.eq.f32.partialorder %v578, 0.0
        %v5929 = vand.u32 %v578, 2147483648
        %v5930 = vsel %vm5928, %v5929, %v5927
        %v5931 = vrsqrt.pop %v579
        %v5932 = vmul.f32 %v5931, %v579
        %v5933 = vmul.f32 %v5932, %v5931
        %v5934 = vmul.f32 0.5, %v5933
        %v5935 = vsub.f32 1.5, %v5934
        %v5936 = vmul.f32 %v5931, %v5935
        %v5937 = vmul.f32 %v579, %v5936
        %vm5938 = vcmp.eq.f32.partialorder %v579, inf
        %v5939 = vsel %vm5938, %v579, %v5937
        %vm5940 = vcmp.eq.f32.partialorder %v579, 0.0
        %v5941 = vand.u32 %v579, 2147483648
        %v5942 = vsel %vm5940, %v5941, %v5939
        %v5943 = vrsqrt.pop %v580
        %v5944 = vmul.f32 %v5943, %v580
        %v5945 = vmul.f32 %v5944, %v5943
        %v5946 = vmul.f32 0.5, %v5945
        %v5947 = vsub.f32 1.5, %v5946
        %v5948 = vmul.f32 %v5943, %v5947
        %v5949 = vmul.f32 %v580, %v5948
        %vm5950 = vcmp.eq.f32.partialorder %v580, inf
        %v5951 = vsel %vm5950, %v580, %v5949
        %vm5952 = vcmp.eq.f32.partialorder %v580, 0.0
        %v5953 = vand.u32 %v580, 2147483648
        %v5954 = vsel %vm5952, %v5953, %v5951
        %v5955 = vrsqrt.pop %v581
        %v5956 = vmul.f32 %v5955, %v581
        %v5957 = vmul.f32 %v5956, %v5955
        %v5958 = vmul.f32 0.5, %v5957
        %v5959 = vsub.f32 1.5, %v5958
        %v5960 = vmul.f32 %v5955, %v5959
        %v5961 = vmul.f32 %v581, %v5960
        %vm5962 = vcmp.eq.f32.partialorder %v581, inf
        %v5963 = vsel %vm5962, %v581, %v5961
        %vm5964 = vcmp.eq.f32.partialorder %v581, 0.0
        %v5965 = vand.u32 %v581, 2147483648
        %v5966 = vsel %vm5964, %v5965, %v5963
        %v5967 = vrsqrt.pop %v582
        %v5968 = vmul.f32 %v5967, %v582
        %v5969 = vmul.f32 %v5968, %v5967
        %v5970 = vmul.f32 0.5, %v5969
        %v5971 = vsub.f32 1.5, %v5970
        %v5972 = vmul.f32 %v5967, %v5971
        %v5973 = vmul.f32 %v582, %v5972
        %vm5974 = vcmp.eq.f32.partialorder %v582, inf
        %v5975 = vsel %vm5974, %v582, %v5973
        %vm5976 = vcmp.eq.f32.partialorder %v582, 0.0
        %v5977 = vand.u32 %v582, 2147483648
        %v5978 = vsel %vm5976, %v5977, %v5975
        %v5979 = vrsqrt.pop %v583
        %v5980 = vmul.f32 %v5979, %v583
        %v5981 = vmul.f32 %v5980, %v5979
        %v5982 = vmul.f32 0.5, %v5981
        %v5983 = vsub.f32 1.5, %v5982
        %v5984 = vmul.f32 %v5979, %v5983
        %v5985 = vmul.f32 %v583, %v5984
        %vm5986 = vcmp.eq.f32.partialorder %v583, inf
        %v5987 = vsel %vm5986, %v583, %v5985
        %vm5988 = vcmp.eq.f32.partialorder %v583, 0.0
        %v5989 = vand.u32 %v583, 2147483648
        %v5990 = vsel %vm5988, %v5989, %v5987
        %v5991 = vrsqrt.pop %v584
        %v5992 = vmul.f32 %v5991, %v584
        %v5993 = vmul.f32 %v5992, %v5991
        %v5994 = vmul.f32 0.5, %v5993
        %v5995 = vsub.f32 1.5, %v5994
        %v5996 = vmul.f32 %v5991, %v5995
        %v5997 = vmul.f32 %v584, %v5996
        %vm5998 = vcmp.eq.f32.partialorder %v584, inf
        %v5999 = vsel %vm5998, %v584, %v5997
        %vm6000 = vcmp.eq.f32.partialorder %v584, 0.0
        %v6001 = vand.u32 %v584, 2147483648
        %v6002 = vsel %vm6000, %v6001, %v5999
        %v6003 = vrsqrt.pop %v585
        %v6004 = vmul.f32 %v6003, %v585
        %v6005 = vmul.f32 %v6004, %v6003
        %v6006 = vmul.f32 0.5, %v6005
        %v6007 = vsub.f32 1.5, %v6006
        %v6008 = vmul.f32 %v6003, %v6007
        %v6009 = vmul.f32 %v585, %v6008
        %vm6010 = vcmp.eq.f32.partialorder %v585, inf
        %v6011 = vsel %vm6010, %v585, %v6009
        %vm6012 = vcmp.eq.f32.partialorder %v585, 0.0
        %v6013 = vand.u32 %v585, 2147483648
        %v6014 = vsel %vm6012, %v6013, %v6011
        %v6015 = vrsqrt.pop %v586
        %v6016 = vmul.f32 %v6015, %v586
        %v6017 = vmul.f32 %v6016, %v6015
        %v6018 = vmul.f32 0.5, %v6017
        %v6019 = vsub.f32 1.5, %v6018
        %v6020 = vmul.f32 %v6015, %v6019
        %v6021 = vmul.f32 %v586, %v6020
        %vm6022 = vcmp.eq.f32.partialorder %v586, inf
        %v6023 = vsel %vm6022, %v586, %v6021
        %vm6024 = vcmp.eq.f32.partialorder %v586, 0.0
        %v6025 = vand.u32 %v586, 2147483648
        %v6026 = vsel %vm6024, %v6025, %v6023
        %v6027 = vrsqrt.pop %v587
        %v6028 = vmul.f32 %v6027, %v587
        %v6029 = vmul.f32 %v6028, %v6027
        %v6030 = vmul.f32 0.5, %v6029
        %v6031 = vsub.f32 1.5, %v6030
        %v6032 = vmul.f32 %v6027, %v6031
        %v6033 = vmul.f32 %v587, %v6032
        %vm6034 = vcmp.eq.f32.partialorder %v587, inf
        %v6035 = vsel %vm6034, %v587, %v6033
        %vm6036 = vcmp.eq.f32.partialorder %v587, 0.0
        %v6037 = vand.u32 %v587, 2147483648
        %v6038 = vsel %vm6036, %v6037, %v6035
        %v6039 = vrsqrt.pop %v588
        %v6040 = vmul.f32 %v6039, %v588
        %v6041 = vmul.f32 %v6040, %v6039
        %v6042 = vmul.f32 0.5, %v6041
        %v6043 = vsub.f32 1.5, %v6042
        %v6044 = vmul.f32 %v6039, %v6043
        %v6045 = vmul.f32 %v588, %v6044
        %vm6046 = vcmp.eq.f32.partialorder %v588, inf
        %v6047 = vsel %vm6046, %v588, %v6045
        %vm6048 = vcmp.eq.f32.partialorder %v588, 0.0
        %v6049 = vand.u32 %v588, 2147483648
        %v6050 = vsel %vm6048, %v6049, %v6047
        %v6051 = vrsqrt.pop %v589
        %v6052 = vmul.f32 %v6051, %v589
        %v6053 = vmul.f32 %v6052, %v6051
        %v6054 = vmul.f32 0.5, %v6053
        %v6055 = vsub.f32 1.5, %v6054
        %v6056 = vmul.f32 %v6051, %v6055
        %v6057 = vmul.f32 %v589, %v6056
        %vm6058 = vcmp.eq.f32.partialorder %v589, inf
        %v6059 = vsel %vm6058, %v589, %v6057
        %vm6060 = vcmp.eq.f32.partialorder %v589, 0.0
        %v6061 = vand.u32 %v589, 2147483648
        %v6062 = vsel %vm6060, %v6061, %v6059
        %v6063 = vrsqrt.pop %v590
        %v6064 = vmul.f32 %v6063, %v590
        %v6065 = vmul.f32 %v6064, %v6063
        %v6066 = vmul.f32 0.5, %v6065
        %v6067 = vsub.f32 1.5, %v6066
        %v6068 = vmul.f32 %v6063, %v6067
        %v6069 = vmul.f32 %v590, %v6068
        %vm6070 = vcmp.eq.f32.partialorder %v590, inf
        %v6071 = vsel %vm6070, %v590, %v6069
        %vm6072 = vcmp.eq.f32.partialorder %v590, 0.0
        %v6073 = vand.u32 %v590, 2147483648
        %v6074 = vsel %vm6072, %v6073, %v6071
        %v6075 = vrsqrt.pop %v591
        %v6076 = vmul.f32 %v6075, %v591
        %v6077 = vmul.f32 %v6076, %v6075
        %v6078 = vmul.f32 0.5, %v6077
        %v6079 = vsub.f32 1.5, %v6078
        %v6080 = vmul.f32 %v6075, %v6079
        %v6081 = vmul.f32 %v591, %v6080
        %vm6082 = vcmp.eq.f32.partialorder %v591, inf
        %v6083 = vsel %vm6082, %v591, %v6081
        %vm6084 = vcmp.eq.f32.partialorder %v591, 0.0
        %v6085 = vand.u32 %v591, 2147483648
        %v6086 = vsel %vm6084, %v6085, %v6083
        %v6087 = vrsqrt.pop %v592
        %v6088 = vmul.f32 %v6087, %v592
        %v6089 = vmul.f32 %v6088, %v6087
        %v6090 = vmul.f32 0.5, %v6089
        %v6091 = vsub.f32 1.5, %v6090
        %v6092 = vmul.f32 %v6087, %v6091
        %v6093 = vmul.f32 %v592, %v6092
        %vm6094 = vcmp.eq.f32.partialorder %v592, inf
        %v6095 = vsel %vm6094, %v592, %v6093
        %vm6096 = vcmp.eq.f32.partialorder %v592, 0.0
        %v6097 = vand.u32 %v592, 2147483648
        %v6098 = vsel %vm6096, %v6097, %v6095
        %v6099 = vrsqrt.pop %v593
        %v6100 = vmul.f32 %v6099, %v593
        %v6101 = vmul.f32 %v6100, %v6099
        %v6102 = vmul.f32 0.5, %v6101
        %v6103 = vsub.f32 1.5, %v6102
        %v6104 = vmul.f32 %v6099, %v6103
        %v6105 = vmul.f32 %v593, %v6104
        %vm6106 = vcmp.eq.f32.partialorder %v593, inf
        %v6107 = vsel %vm6106, %v593, %v6105
        %vm6108 = vcmp.eq.f32.partialorder %v593, 0.0
        %v6109 = vand.u32 %v593, 2147483648
        %v6110 = vsel %vm6108, %v6109, %v6107
        %v6111 = vrsqrt.pop %v594
        %v6112 = vmul.f32 %v6111, %v594
        %v6113 = vmul.f32 %v6112, %v6111
        %v6114 = vmul.f32 0.5, %v6113
        %v6115 = vsub.f32 1.5, %v6114
        %v6116 = vmul.f32 %v6111, %v6115
        %v6117 = vmul.f32 %v594, %v6116
        %vm6118 = vcmp.eq.f32.partialorder %v594, inf
        %v6119 = vsel %vm6118, %v594, %v6117
        %vm6120 = vcmp.eq.f32.partialorder %v594, 0.0
        %v6121 = vand.u32 %v594, 2147483648
        %v6122 = vsel %vm6120, %v6121, %v6119
        %v6123 = vrsqrt.pop %v595
        %v6124 = vmul.f32 %v6123, %v595
        %v6125 = vmul.f32 %v6124, %v6123
        %v6126 = vmul.f32 0.5, %v6125
        %v6127 = vsub.f32 1.5, %v6126
        %v6128 = vmul.f32 %v6123, %v6127
        %v6129 = vmul.f32 %v595, %v6128
        %vm6130 = vcmp.eq.f32.partialorder %v595, inf
        %v6131 = vsel %vm6130, %v595, %v6129
        %vm6132 = vcmp.eq.f32.partialorder %v595, 0.0
        %v6133 = vand.u32 %v595, 2147483648
        %v6134 = vsel %vm6132, %v6133, %v6131
        %v6135 = vrsqrt.pop %v596
        %v6136 = vmul.f32 %v6135, %v596
        %v6137 = vmul.f32 %v6136, %v6135
        %v6138 = vmul.f32 0.5, %v6137
        %v6139 = vsub.f32 1.5, %v6138
        %v6140 = vmul.f32 %v6135, %v6139
        %v6141 = vmul.f32 %v596, %v6140
        %vm6142 = vcmp.eq.f32.partialorder %v596, inf
        %v6143 = vsel %vm6142, %v596, %v6141
        %vm6144 = vcmp.eq.f32.partialorder %v596, 0.0
        %v6145 = vand.u32 %v596, 2147483648
        %v6146 = vsel %vm6144, %v6145, %v6143
        %v6147 = vrsqrt.pop %v597
        %v6148 = vmul.f32 %v6147, %v597
        %v6149 = vmul.f32 %v6148, %v6147
        %v6150 = vmul.f32 0.5, %v6149
        %v6151 = vsub.f32 1.5, %v6150
        %v6152 = vmul.f32 %v6147, %v6151
        %v6153 = vmul.f32 %v597, %v6152
        %vm6154 = vcmp.eq.f32.partialorder %v597, inf
        %v6155 = vsel %vm6154, %v597, %v6153
        %vm6156 = vcmp.eq.f32.partialorder %v597, 0.0
        %v6157 = vand.u32 %v597, 2147483648
        %v6158 = vsel %vm6156, %v6157, %v6155
        %v6159 = vrsqrt.pop %v598
        %v6160 = vmul.f32 %v6159, %v598
        %v6161 = vmul.f32 %v6160, %v6159
        %v6162 = vmul.f32 0.5, %v6161
        %v6163 = vsub.f32 1.5, %v6162
        %v6164 = vmul.f32 %v6159, %v6163
        %v6165 = vmul.f32 %v598, %v6164
        %vm6166 = vcmp.eq.f32.partialorder %v598, inf
        %v6167 = vsel %vm6166, %v598, %v6165
        %vm6168 = vcmp.eq.f32.partialorder %v598, 0.0
        %v6169 = vand.u32 %v598, 2147483648
        %v6170 = vsel %vm6168, %v6169, %v6167
        %v6171 = vrsqrt.pop %v599
        %v6172 = vmul.f32 %v6171, %v599
        %v6173 = vmul.f32 %v6172, %v6171
        %v6174 = vmul.f32 0.5, %v6173
        %v6175 = vsub.f32 1.5, %v6174
        %v6176 = vmul.f32 %v6171, %v6175
        %v6177 = vmul.f32 %v599, %v6176
        %vm6178 = vcmp.eq.f32.partialorder %v599, inf
        %v6179 = vsel %vm6178, %v599, %v6177
        %vm6180 = vcmp.eq.f32.partialorder %v599, 0.0
        %v6181 = vand.u32 %v599, 2147483648
        %v6182 = vsel %vm6180, %v6181, %v6179
        %v6183 = vrsqrt.pop %v600
        %v6184 = vmul.f32 %v6183, %v600
        %v6185 = vmul.f32 %v6184, %v6183
        %v6186 = vmul.f32 0.5, %v6185
        %v6187 = vsub.f32 1.5, %v6186
        %v6188 = vmul.f32 %v6183, %v6187
        %v6189 = vmul.f32 %v600, %v6188
        %vm6190 = vcmp.eq.f32.partialorder %v600, inf
        %v6191 = vsel %vm6190, %v600, %v6189
        %vm6192 = vcmp.eq.f32.partialorder %v600, 0.0
        %v6193 = vand.u32 %v600, 2147483648
        %v6194 = vsel %vm6192, %v6193, %v6191
        %v6195 = vrsqrt.pop %v601
        %v6196 = vmul.f32 %v6195, %v601
        %v6197 = vmul.f32 %v6196, %v6195
        %v6198 = vmul.f32 0.5, %v6197
        %v6199 = vsub.f32 1.5, %v6198
        %v6200 = vmul.f32 %v6195, %v6199
        %v6201 = vmul.f32 %v601, %v6200
        %vm6202 = vcmp.eq.f32.partialorder %v601, inf
        %v6203 = vsel %vm6202, %v601, %v6201
        %vm6204 = vcmp.eq.f32.partialorder %v601, 0.0
        %v6205 = vand.u32 %v601, 2147483648
        %v6206 = vsel %vm6204, %v6205, %v6203
        %v6207 = vrsqrt.pop %v602
        %v6208 = vmul.f32 %v6207, %v602
        %v6209 = vmul.f32 %v6208, %v6207
        %v6210 = vmul.f32 0.5, %v6209
        %v6211 = vsub.f32 1.5, %v6210
        %v6212 = vmul.f32 %v6207, %v6211
        %v6213 = vmul.f32 %v602, %v6212
        %vm6214 = vcmp.eq.f32.partialorder %v602, inf
        %v6215 = vsel %vm6214, %v602, %v6213
        %vm6216 = vcmp.eq.f32.partialorder %v602, 0.0
        %v6217 = vand.u32 %v602, 2147483648
        %v6218 = vsel %vm6216, %v6217, %v6215
        %v6219 = vrsqrt.pop %v603
        %v6220 = vmul.f32 %v6219, %v603
        %v6221 = vmul.f32 %v6220, %v6219
        %v6222 = vmul.f32 0.5, %v6221
        %v6223 = vsub.f32 1.5, %v6222
        %v6224 = vmul.f32 %v6219, %v6223
        %v6225 = vmul.f32 %v603, %v6224
        %vm6226 = vcmp.eq.f32.partialorder %v603, inf
        %v6227 = vsel %vm6226, %v603, %v6225
        %vm6228 = vcmp.eq.f32.partialorder %v603, 0.0
        %v6229 = vand.u32 %v603, 2147483648
        %v6230 = vsel %vm6228, %v6229, %v6227
        %v6231 = vrsqrt.pop %v604
        %v6232 = vmul.f32 %v6231, %v604
        %v6233 = vmul.f32 %v6232, %v6231
        %v6234 = vmul.f32 0.5, %v6233
        %v6235 = vsub.f32 1.5, %v6234
        %v6236 = vmul.f32 %v6231, %v6235
        %v6237 = vmul.f32 %v604, %v6236
        %vm6238 = vcmp.eq.f32.partialorder %v604, inf
        %v6239 = vsel %vm6238, %v604, %v6237
        %vm6240 = vcmp.eq.f32.partialorder %v604, 0.0
        %v6241 = vand.u32 %v604, 2147483648
        %v6242 = vsel %vm6240, %v6241, %v6239
        %v6243 = vrsqrt.pop %v605
        %v6244 = vmul.f32 %v6243, %v605
        %v6245 = vmul.f32 %v6244, %v6243
        %v6246 = vmul.f32 0.5, %v6245
        %v6247 = vsub.f32 1.5, %v6246
        %v6248 = vmul.f32 %v6243, %v6247
        %v6249 = vmul.f32 %v605, %v6248
        %vm6250 = vcmp.eq.f32.partialorder %v605, inf
        %v6251 = vsel %vm6250, %v605, %v6249
        %vm6252 = vcmp.eq.f32.partialorder %v605, 0.0
        %v6253 = vand.u32 %v605, 2147483648
        %v6254 = vsel %vm6252, %v6253, %v6251
        %v6255 = vrsqrt.pop %v606
        %v6256 = vmul.f32 %v6255, %v606
        %v6257 = vmul.f32 %v6256, %v6255
        %v6258 = vmul.f32 0.5, %v6257
        %v6259 = vsub.f32 1.5, %v6258
        %v6260 = vmul.f32 %v6255, %v6259
        %v6261 = vmul.f32 %v606, %v6260
        %vm6262 = vcmp.eq.f32.partialorder %v606, inf
        %v6263 = vsel %vm6262, %v606, %v6261
        %vm6264 = vcmp.eq.f32.partialorder %v606, 0.0
        %v6265 = vand.u32 %v606, 2147483648
        %v6266 = vsel %vm6264, %v6265, %v6263
        %v6267 = vrsqrt.pop %v607
        %v6268 = vmul.f32 %v6267, %v607
        %v6269 = vmul.f32 %v6268, %v6267
        %v6270 = vmul.f32 0.5, %v6269
        %v6271 = vsub.f32 1.5, %v6270
        %v6272 = vmul.f32 %v6267, %v6271
        %v6273 = vmul.f32 %v607, %v6272
        %vm6274 = vcmp.eq.f32.partialorder %v607, inf
        %v6275 = vsel %vm6274, %v607, %v6273
        %vm6276 = vcmp.eq.f32.partialorder %v607, 0.0
        %v6277 = vand.u32 %v607, 2147483648
        %v6278 = vsel %vm6276, %v6277, %v6275
        %v6279 = vrsqrt.pop %v608
        %v6280 = vmul.f32 %v6279, %v608
        %v6281 = vmul.f32 %v6280, %v6279
        %v6282 = vmul.f32 0.5, %v6281
        %v6283 = vsub.f32 1.5, %v6282
        %v6284 = vmul.f32 %v6279, %v6283
        %v6285 = vmul.f32 %v608, %v6284
        %vm6286 = vcmp.eq.f32.partialorder %v608, inf
        %v6287 = vsel %vm6286, %v608, %v6285
        %vm6288 = vcmp.eq.f32.partialorder %v608, 0.0
        %v6289 = vand.u32 %v608, 2147483648
        %v6290 = vsel %vm6288, %v6289, %v6287
        %v6291 = vrsqrt.pop %v609
        %v6292 = vmul.f32 %v6291, %v609
        %v6293 = vmul.f32 %v6292, %v6291
        %v6294 = vmul.f32 0.5, %v6293
        %v6295 = vsub.f32 1.5, %v6294
        %v6296 = vmul.f32 %v6291, %v6295
        %v6297 = vmul.f32 %v609, %v6296
        %vm6298 = vcmp.eq.f32.partialorder %v609, inf
        %v6299 = vsel %vm6298, %v609, %v6297
        %vm6300 = vcmp.eq.f32.partialorder %v609, 0.0
        %v6301 = vand.u32 %v609, 2147483648
        %v6302 = vsel %vm6300, %v6301, %v6299
        %v6303 = vrsqrt.pop %v610
        %v6304 = vmul.f32 %v6303, %v610
        %v6305 = vmul.f32 %v6304, %v6303
        %v6306 = vmul.f32 0.5, %v6305
        %v6307 = vsub.f32 1.5, %v6306
        %v6308 = vmul.f32 %v6303, %v6307
        %v6309 = vmul.f32 %v610, %v6308
        %vm6310 = vcmp.eq.f32.partialorder %v610, inf
        %v6311 = vsel %vm6310, %v610, %v6309
        %vm6312 = vcmp.eq.f32.partialorder %v610, 0.0
        %v6313 = vand.u32 %v610, 2147483648
        %v6314 = vsel %vm6312, %v6313, %v6311
        %v6315 = vrsqrt.pop %v611
        %v6316 = vmul.f32 %v6315, %v611
        %v6317 = vmul.f32 %v6316, %v6315
        %v6318 = vmul.f32 0.5, %v6317
        %v6319 = vsub.f32 1.5, %v6318
        %v6320 = vmul.f32 %v6315, %v6319
        %v6321 = vmul.f32 %v611, %v6320
        %vm6322 = vcmp.eq.f32.partialorder %v611, inf
        %v6323 = vsel %vm6322, %v611, %v6321
        %vm6324 = vcmp.eq.f32.partialorder %v611, 0.0
        %v6325 = vand.u32 %v611, 2147483648
        %v6326 = vsel %vm6324, %v6325, %v6323
        %v6327 = vrsqrt.pop %v612
        %v6328 = vmul.f32 %v6327, %v612
        %v6329 = vmul.f32 %v6328, %v6327
        %v6330 = vmul.f32 0.5, %v6329
        %v6331 = vsub.f32 1.5, %v6330
        %v6332 = vmul.f32 %v6327, %v6331
        %v6333 = vmul.f32 %v612, %v6332
        %vm6334 = vcmp.eq.f32.partialorder %v612, inf
        %v6335 = vsel %vm6334, %v612, %v6333
        %vm6336 = vcmp.eq.f32.partialorder %v612, 0.0
        %v6337 = vand.u32 %v612, 2147483648
        %v6338 = vsel %vm6336, %v6337, %v6335
        %v6339 = vrsqrt.pop %v613
        %v6340 = vmul.f32 %v6339, %v613
        %v6341 = vmul.f32 %v6340, %v6339
        %v6342 = vmul.f32 0.5, %v6341
        %v6343 = vsub.f32 1.5, %v6342
        %v6344 = vmul.f32 %v6339, %v6343
        %v6345 = vmul.f32 %v613, %v6344
        %vm6346 = vcmp.eq.f32.partialorder %v613, inf
        %v6347 = vsel %vm6346, %v613, %v6345
        %vm6348 = vcmp.eq.f32.partialorder %v613, 0.0
        %v6349 = vand.u32 %v613, 2147483648
        %v6350 = vsel %vm6348, %v6349, %v6347
        %v6351 = vrsqrt.pop %v614
        %v6352 = vmul.f32 %v6351, %v614
        %v6353 = vmul.f32 %v6352, %v6351
        %v6354 = vmul.f32 0.5, %v6353
        %v6355 = vsub.f32 1.5, %v6354
        %v6356 = vmul.f32 %v6351, %v6355
        %v6357 = vmul.f32 %v614, %v6356
        %vm6358 = vcmp.eq.f32.partialorder %v614, inf
        %v6359 = vsel %vm6358, %v614, %v6357
        %vm6360 = vcmp.eq.f32.partialorder %v614, 0.0
        %v6361 = vand.u32 %v614, 2147483648
        %v6362 = vsel %vm6360, %v6361, %v6359
        %v6363 = vrsqrt.pop %v615
        %v6364 = vmul.f32 %v6363, %v615
        %v6365 = vmul.f32 %v6364, %v6363
        %v6366 = vmul.f32 0.5, %v6365
        %v6367 = vsub.f32 1.5, %v6366
        %v6368 = vmul.f32 %v6363, %v6367
        %v6369 = vmul.f32 %v615, %v6368
        %vm6370 = vcmp.eq.f32.partialorder %v615, inf
        %v6371 = vsel %vm6370, %v615, %v6369
        %vm6372 = vcmp.eq.f32.partialorder %v615, 0.0
        %v6373 = vand.u32 %v615, 2147483648
        %v6374 = vsel %vm6372, %v6373, %v6371
        %v6375 = vrsqrt.pop %v616
        %v6376 = vmul.f32 %v6375, %v616
        %v6377 = vmul.f32 %v6376, %v6375
        %v6378 = vmul.f32 0.5, %v6377
        %v6379 = vsub.f32 1.5, %v6378
        %v6380 = vmul.f32 %v6375, %v6379
        %v6381 = vmul.f32 %v616, %v6380
        %vm6382 = vcmp.eq.f32.partialorder %v616, inf
        %v6383 = vsel %vm6382, %v616, %v6381
        %vm6384 = vcmp.eq.f32.partialorder %v616, 0.0
        %v6385 = vand.u32 %v616, 2147483648
        %v6386 = vsel %vm6384, %v6385, %v6383
        %v6387 = vrsqrt.pop %v617
        %v6388 = vmul.f32 %v6387, %v617
        %v6389 = vmul.f32 %v6388, %v6387
        %v6390 = vmul.f32 0.5, %v6389
        %v6391 = vsub.f32 1.5, %v6390
        %v6392 = vmul.f32 %v6387, %v6391
        %v6393 = vmul.f32 %v617, %v6392
        %vm6394 = vcmp.eq.f32.partialorder %v617, inf
        %v6395 = vsel %vm6394, %v617, %v6393
        %vm6396 = vcmp.eq.f32.partialorder %v617, 0.0
        %v6397 = vand.u32 %v617, 2147483648
        %v6398 = vsel %vm6396, %v6397, %v6395
        %v6399 = vrsqrt.pop %v618
        %v6400 = vmul.f32 %v6399, %v618
        %v6401 = vmul.f32 %v6400, %v6399
        %v6402 = vmul.f32 0.5, %v6401
        %v6403 = vsub.f32 1.5, %v6402
        %v6404 = vmul.f32 %v6399, %v6403
        %v6405 = vmul.f32 %v618, %v6404
        %vm6406 = vcmp.eq.f32.partialorder %v618, inf
        %v6407 = vsel %vm6406, %v618, %v6405
        %vm6408 = vcmp.eq.f32.partialorder %v618, 0.0
        %v6409 = vand.u32 %v618, 2147483648
        %v6410 = vsel %vm6408, %v6409, %v6407
        %v6411 = vrsqrt.pop %v619
        %v6412 = vmul.f32 %v6411, %v619
        %v6413 = vmul.f32 %v6412, %v6411
        %v6414 = vmul.f32 0.5, %v6413
        %v6415 = vsub.f32 1.5, %v6414
        %v6416 = vmul.f32 %v6411, %v6415
        %v6417 = vmul.f32 %v619, %v6416
        %vm6418 = vcmp.eq.f32.partialorder %v619, inf
        %v6419 = vsel %vm6418, %v619, %v6417
        %vm6420 = vcmp.eq.f32.partialorder %v619, 0.0
        %v6421 = vand.u32 %v619, 2147483648
        %v6422 = vsel %vm6420, %v6421, %v6419
        %v6423 = vrsqrt.pop %v620
        %v6424 = vmul.f32 %v6423, %v620
        %v6425 = vmul.f32 %v6424, %v6423
        %v6426 = vmul.f32 0.5, %v6425
        %v6427 = vsub.f32 1.5, %v6426
        %v6428 = vmul.f32 %v6423, %v6427
        %v6429 = vmul.f32 %v620, %v6428
        %vm6430 = vcmp.eq.f32.partialorder %v620, inf
        %v6431 = vsel %vm6430, %v620, %v6429
        %vm6432 = vcmp.eq.f32.partialorder %v620, 0.0
        %v6433 = vand.u32 %v620, 2147483648
        %v6434 = vsel %vm6432, %v6433, %v6431
        %v6435 = vrsqrt.pop %v621
        %v6436 = vmul.f32 %v6435, %v621
        %v6437 = vmul.f32 %v6436, %v6435
        %v6438 = vmul.f32 0.5, %v6437
        %v6439 = vsub.f32 1.5, %v6438
        %v6440 = vmul.f32 %v6435, %v6439
        %v6441 = vmul.f32 %v621, %v6440
        %vm6442 = vcmp.eq.f32.partialorder %v621, inf
        %v6443 = vsel %vm6442, %v621, %v6441
        %vm6444 = vcmp.eq.f32.partialorder %v621, 0.0
        %v6445 = vand.u32 %v621, 2147483648
        %v6446 = vsel %vm6444, %v6445, %v6443
        %v6447 = vrsqrt.pop %v622
        %v6448 = vmul.f32 %v6447, %v622
        %v6449 = vmul.f32 %v6448, %v6447
        %v6450 = vmul.f32 0.5, %v6449
        %v6451 = vsub.f32 1.5, %v6450
        %v6452 = vmul.f32 %v6447, %v6451
        %v6453 = vmul.f32 %v622, %v6452
        %vm6454 = vcmp.eq.f32.partialorder %v622, inf
        %v6455 = vsel %vm6454, %v622, %v6453
        %vm6456 = vcmp.eq.f32.partialorder %v622, 0.0
        %v6457 = vand.u32 %v622, 2147483648
        %v6458 = vsel %vm6456, %v6457, %v6455
        %v6459 = vrsqrt.pop %v623
        %v6460 = vmul.f32 %v6459, %v623
        %v6461 = vmul.f32 %v6460, %v6459
        %v6462 = vmul.f32 0.5, %v6461
        %v6463 = vsub.f32 1.5, %v6462
        %v6464 = vmul.f32 %v6459, %v6463
        %v6465 = vmul.f32 %v623, %v6464
        %vm6466 = vcmp.eq.f32.partialorder %v623, inf
        %v6467 = vsel %vm6466, %v623, %v6465
        %vm6468 = vcmp.eq.f32.partialorder %v623, 0.0
        %v6469 = vand.u32 %v623, 2147483648
        %v6470 = vsel %vm6468, %v6469, %v6467
        %v6471 = vrsqrt.pop %v624
        %v6472 = vmul.f32 %v6471, %v624
        %v6473 = vmul.f32 %v6472, %v6471
        %v6474 = vmul.f32 0.5, %v6473
        %v6475 = vsub.f32 1.5, %v6474
        %v6476 = vmul.f32 %v6471, %v6475
        %v6477 = vmul.f32 %v624, %v6476
        %vm6478 = vcmp.eq.f32.partialorder %v624, inf
        %v6479 = vsel %vm6478, %v624, %v6477
        %vm6480 = vcmp.eq.f32.partialorder %v624, 0.0
        %v6481 = vand.u32 %v624, 2147483648
        %v6482 = vsel %vm6480, %v6481, %v6479
        %v6483 = vrsqrt.pop %v625
        %v6484 = vmul.f32 %v6483, %v625
        %v6485 = vmul.f32 %v6484, %v6483
        %v6486 = vmul.f32 0.5, %v6485
        %v6487 = vsub.f32 1.5, %v6486
        %v6488 = vmul.f32 %v6483, %v6487
        %v6489 = vmul.f32 %v625, %v6488
        %vm6490 = vcmp.eq.f32.partialorder %v625, inf
        %v6491 = vsel %vm6490, %v625, %v6489
        %vm6492 = vcmp.eq.f32.partialorder %v625, 0.0
        %v6493 = vand.u32 %v625, 2147483648
        %v6494 = vsel %vm6492, %v6493, %v6491
        %v6495 = vrsqrt.pop %v626
        %v6496 = vmul.f32 %v6495, %v626
        %v6497 = vmul.f32 %v6496, %v6495
        %v6498 = vmul.f32 0.5, %v6497
        %v6499 = vsub.f32 1.5, %v6498
        %v6500 = vmul.f32 %v6495, %v6499
        %v6501 = vmul.f32 %v626, %v6500
        %vm6502 = vcmp.eq.f32.partialorder %v626, inf
        %v6503 = vsel %vm6502, %v626, %v6501
        %vm6504 = vcmp.eq.f32.partialorder %v626, 0.0
        %v6505 = vand.u32 %v626, 2147483648
        %v6506 = vsel %vm6504, %v6505, %v6503
        %v6507 = vrsqrt.pop %v627
        %v6508 = vmul.f32 %v6507, %v627
        %v6509 = vmul.f32 %v6508, %v6507
        %v6510 = vmul.f32 0.5, %v6509
        %v6511 = vsub.f32 1.5, %v6510
        %v6512 = vmul.f32 %v6507, %v6511
        %v6513 = vmul.f32 %v627, %v6512
        %vm6514 = vcmp.eq.f32.partialorder %v627, inf
        %v6515 = vsel %vm6514, %v627, %v6513
        %vm6516 = vcmp.eq.f32.partialorder %v627, 0.0
        %v6517 = vand.u32 %v627, 2147483648
        %v6518 = vsel %vm6516, %v6517, %v6515
        %v6519 = vrsqrt.pop %v628
        %v6520 = vmul.f32 %v6519, %v628
        %v6521 = vmul.f32 %v6520, %v6519
        %v6522 = vmul.f32 0.5, %v6521
        %v6523 = vsub.f32 1.5, %v6522
        %v6524 = vmul.f32 %v6519, %v6523
        %v6525 = vmul.f32 %v628, %v6524
        %vm6526 = vcmp.eq.f32.partialorder %v628, inf
        %v6527 = vsel %vm6526, %v628, %v6525
        %vm6528 = vcmp.eq.f32.partialorder %v628, 0.0
        %v6529 = vand.u32 %v628, 2147483648
        %v6530 = vsel %vm6528, %v6529, %v6527
        %v6531 = vrsqrt.pop %v629
        %v6532 = vmul.f32 %v6531, %v629
        %v6533 = vmul.f32 %v6532, %v6531
        %v6534 = vmul.f32 0.5, %v6533
        %v6535 = vsub.f32 1.5, %v6534
        %v6536 = vmul.f32 %v6531, %v6535
        %v6537 = vmul.f32 %v629, %v6536
        %vm6538 = vcmp.eq.f32.partialorder %v629, inf
        %v6539 = vsel %vm6538, %v629, %v6537
        %vm6540 = vcmp.eq.f32.partialorder %v629, 0.0
        %v6541 = vand.u32 %v629, 2147483648
        %v6542 = vsel %vm6540, %v6541, %v6539
        %v6543 = vrsqrt.pop %v630
        %v6544 = vmul.f32 %v6543, %v630
        %v6545 = vmul.f32 %v6544, %v6543
        %v6546 = vmul.f32 0.5, %v6545
        %v6547 = vsub.f32 1.5, %v6546
        %v6548 = vmul.f32 %v6543, %v6547
        %v6549 = vmul.f32 %v630, %v6548
        %vm6550 = vcmp.eq.f32.partialorder %v630, inf
        %v6551 = vsel %vm6550, %v630, %v6549
        %vm6552 = vcmp.eq.f32.partialorder %v630, 0.0
        %v6553 = vand.u32 %v630, 2147483648
        %v6554 = vsel %vm6552, %v6553, %v6551
        %v6555 = vrsqrt.pop %v631
        %v6556 = vmul.f32 %v6555, %v631
        %v6557 = vmul.f32 %v6556, %v6555
        %v6558 = vmul.f32 0.5, %v6557
        %v6559 = vsub.f32 1.5, %v6558
        %v6560 = vmul.f32 %v6555, %v6559
        %v6561 = vmul.f32 %v631, %v6560
        %vm6562 = vcmp.eq.f32.partialorder %v631, inf
        %v6563 = vsel %vm6562, %v631, %v6561
        %vm6564 = vcmp.eq.f32.partialorder %v631, 0.0
        %v6565 = vand.u32 %v631, 2147483648
        %v6566 = vsel %vm6564, %v6565, %v6563
        %v6567 = vrsqrt.pop %v632
        %v6568 = vmul.f32 %v6567, %v632
        %v6569 = vmul.f32 %v6568, %v6567
        %v6570 = vmul.f32 0.5, %v6569
        %v6571 = vsub.f32 1.5, %v6570
        %v6572 = vmul.f32 %v6567, %v6571
        %v6573 = vmul.f32 %v632, %v6572
        %vm6574 = vcmp.eq.f32.partialorder %v632, inf
        %v6575 = vsel %vm6574, %v632, %v6573
        %vm6576 = vcmp.eq.f32.partialorder %v632, 0.0
        %v6577 = vand.u32 %v632, 2147483648
        %v6578 = vsel %vm6576, %v6577, %v6575
        %v6579 = vrsqrt.pop %v633
        %v6580 = vmul.f32 %v6579, %v633
        %v6581 = vmul.f32 %v6580, %v6579
        %v6582 = vmul.f32 0.5, %v6581
        %v6583 = vsub.f32 1.5, %v6582
        %v6584 = vmul.f32 %v6579, %v6583
        %v6585 = vmul.f32 %v633, %v6584
        %vm6586 = vcmp.eq.f32.partialorder %v633, inf
        %v6587 = vsel %vm6586, %v633, %v6585
        %vm6588 = vcmp.eq.f32.partialorder %v633, 0.0
        %v6589 = vand.u32 %v633, 2147483648
        %v6590 = vsel %vm6588, %v6589, %v6587
        %v6591 = vrsqrt.pop %v634
        %v6592 = vmul.f32 %v6591, %v634
        %v6593 = vmul.f32 %v6592, %v6591
        %v6594 = vmul.f32 0.5, %v6593
        %v6595 = vsub.f32 1.5, %v6594
        %v6596 = vmul.f32 %v6591, %v6595
        %v6597 = vmul.f32 %v634, %v6596
        %vm6598 = vcmp.eq.f32.partialorder %v634, inf
        %v6599 = vsel %vm6598, %v634, %v6597
        %vm6600 = vcmp.eq.f32.partialorder %v634, 0.0
        %v6601 = vand.u32 %v634, 2147483648
        %v6602 = vsel %vm6600, %v6601, %v6599
        %v6603 = vrsqrt.pop %v635
        %v6604 = vmul.f32 %v6603, %v635
        %v6605 = vmul.f32 %v6604, %v6603
        %v6606 = vmul.f32 0.5, %v6605
        %v6607 = vsub.f32 1.5, %v6606
        %v6608 = vmul.f32 %v6603, %v6607
        %v6609 = vmul.f32 %v635, %v6608
        %vm6610 = vcmp.eq.f32.partialorder %v635, inf
        %v6611 = vsel %vm6610, %v635, %v6609
        %vm6612 = vcmp.eq.f32.partialorder %v635, 0.0
        %v6613 = vand.u32 %v635, 2147483648
        %v6614 = vsel %vm6612, %v6613, %v6611
        %v6615 = vrsqrt.pop %v636
        %v6616 = vmul.f32 %v6615, %v636
        %v6617 = vmul.f32 %v6616, %v6615
        %v6618 = vmul.f32 0.5, %v6617
        %v6619 = vsub.f32 1.5, %v6618
        %v6620 = vmul.f32 %v6615, %v6619
        %v6621 = vmul.f32 %v636, %v6620
        %vm6622 = vcmp.eq.f32.partialorder %v636, inf
        %v6623 = vsel %vm6622, %v636, %v6621
        %vm6624 = vcmp.eq.f32.partialorder %v636, 0.0
        %v6625 = vand.u32 %v636, 2147483648
        %v6626 = vsel %vm6624, %v6625, %v6623
        %v6627 = vrsqrt.pop %v637
        %v6628 = vmul.f32 %v6627, %v637
        %v6629 = vmul.f32 %v6628, %v6627
        %v6630 = vmul.f32 0.5, %v6629
        %v6631 = vsub.f32 1.5, %v6630
        %v6632 = vmul.f32 %v6627, %v6631
        %v6633 = vmul.f32 %v637, %v6632
        %vm6634 = vcmp.eq.f32.partialorder %v637, inf
        %v6635 = vsel %vm6634, %v637, %v6633
        %vm6636 = vcmp.eq.f32.partialorder %v637, 0.0
        %v6637 = vand.u32 %v637, 2147483648
        %v6638 = vsel %vm6636, %v6637, %v6635
        %v6639 = vrsqrt.pop %v638
        %v6640 = vmul.f32 %v6639, %v638
        %v6641 = vmul.f32 %v6640, %v6639
        %v6642 = vmul.f32 0.5, %v6641
        %v6643 = vsub.f32 1.5, %v6642
        %v6644 = vmul.f32 %v6639, %v6643
        %v6645 = vmul.f32 %v638, %v6644
        %vm6646 = vcmp.eq.f32.partialorder %v638, inf
        %v6647 = vsel %vm6646, %v638, %v6645
        %vm6648 = vcmp.eq.f32.partialorder %v638, 0.0
        %v6649 = vand.u32 %v638, 2147483648
        %v6650 = vsel %vm6648, %v6649, %v6647
        %v6651 = vrsqrt.pop %v639
        %v6652 = vmul.f32 %v6651, %v639
        %v6653 = vmul.f32 %v6652, %v6651
        %v6654 = vmul.f32 0.5, %v6653
        %v6655 = vsub.f32 1.5, %v6654
        %v6656 = vmul.f32 %v6651, %v6655
        %v6657 = vmul.f32 %v639, %v6656
        %vm6658 = vcmp.eq.f32.partialorder %v639, inf
        %v6659 = vsel %vm6658, %v639, %v6657
        %vm6660 = vcmp.eq.f32.partialorder %v639, 0.0
        %v6661 = vand.u32 %v639, 2147483648
        %v6662 = vsel %vm6660, %v6661, %v6659
        %v6663 = vrsqrt.pop %v640
        %v6664 = vmul.f32 %v6663, %v640
        %v6665 = vmul.f32 %v6664, %v6663
        %v6666 = vmul.f32 0.5, %v6665
        %v6667 = vsub.f32 1.5, %v6666
        %v6668 = vmul.f32 %v6663, %v6667
        %v6669 = vmul.f32 %v640, %v6668
        %vm6670 = vcmp.eq.f32.partialorder %v640, inf
        %v6671 = vsel %vm6670, %v640, %v6669
        %vm6672 = vcmp.eq.f32.partialorder %v640, 0.0
        %v6673 = vand.u32 %v640, 2147483648
        %v6674 = vsel %vm6672, %v6673, %v6671
        %v6675 = vrsqrt.pop %v641
        %v6676 = vmul.f32 %v6675, %v641
        %v6677 = vmul.f32 %v6676, %v6675
        %v6678 = vmul.f32 0.5, %v6677
        %v6679 = vsub.f32 1.5, %v6678
        %v6680 = vmul.f32 %v6675, %v6679
        %v6681 = vmul.f32 %v641, %v6680
        %vm6682 = vcmp.eq.f32.partialorder %v641, inf
        %v6683 = vsel %vm6682, %v641, %v6681
        %vm6684 = vcmp.eq.f32.partialorder %v641, 0.0
        %v6685 = vand.u32 %v641, 2147483648
        %v6686 = vsel %vm6684, %v6685, %v6683
        %v6687 = vrsqrt.pop %v642
        %v6688 = vmul.f32 %v6687, %v642
        %v6689 = vmul.f32 %v6688, %v6687
        %v6690 = vmul.f32 0.5, %v6689
        %v6691 = vsub.f32 1.5, %v6690
        %v6692 = vmul.f32 %v6687, %v6691
        %v6693 = vmul.f32 %v642, %v6692
        %vm6694 = vcmp.eq.f32.partialorder %v642, inf
        %v6695 = vsel %vm6694, %v642, %v6693
        %vm6696 = vcmp.eq.f32.partialorder %v642, 0.0
        %v6697 = vand.u32 %v642, 2147483648
        %v6698 = vsel %vm6696, %v6697, %v6695
        %v6699 = vrsqrt.pop %v643
        %v6700 = vmul.f32 %v6699, %v643
        %v6701 = vmul.f32 %v6700, %v6699
        %v6702 = vmul.f32 0.5, %v6701
        %v6703 = vsub.f32 1.5, %v6702
        %v6704 = vmul.f32 %v6699, %v6703
        %v6705 = vmul.f32 %v643, %v6704
        %vm6706 = vcmp.eq.f32.partialorder %v643, inf
        %v6707 = vsel %vm6706, %v643, %v6705
        %vm6708 = vcmp.eq.f32.partialorder %v643, 0.0
        %v6709 = vand.u32 %v643, 2147483648
        %v6710 = vsel %vm6708, %v6709, %v6707
        %v6711 = vrsqrt.pop %v644
        %v6712 = vmul.f32 %v6711, %v644
        %v6713 = vmul.f32 %v6712, %v6711
        %v6714 = vmul.f32 0.5, %v6713
        %v6715 = vsub.f32 1.5, %v6714
        %v6716 = vmul.f32 %v6711, %v6715
        %v6717 = vmul.f32 %v644, %v6716
        %vm6718 = vcmp.eq.f32.partialorder %v644, inf
        %v6719 = vsel %vm6718, %v644, %v6717
        %vm6720 = vcmp.eq.f32.partialorder %v644, 0.0
        %v6721 = vand.u32 %v644, 2147483648
        %v6722 = vsel %vm6720, %v6721, %v6719
        %v6723 = vrsqrt.pop %v645
        %v6724 = vmul.f32 %v6723, %v645
        %v6725 = vmul.f32 %v6724, %v6723
        %v6726 = vmul.f32 0.5, %v6725
        %v6727 = vsub.f32 1.5, %v6726
        %v6728 = vmul.f32 %v6723, %v6727
        %v6729 = vmul.f32 %v645, %v6728
        %vm6730 = vcmp.eq.f32.partialorder %v645, inf
        %v6731 = vsel %vm6730, %v645, %v6729
        %vm6732 = vcmp.eq.f32.partialorder %v645, 0.0
        %v6733 = vand.u32 %v645, 2147483648
        %v6734 = vsel %vm6732, %v6733, %v6731
        %v6735 = vrsqrt.pop %v646
        %v6736 = vmul.f32 %v6735, %v646
        %v6737 = vmul.f32 %v6736, %v6735
        %v6738 = vmul.f32 0.5, %v6737
        %v6739 = vsub.f32 1.5, %v6738
        %v6740 = vmul.f32 %v6735, %v6739
        %v6741 = vmul.f32 %v646, %v6740
        %vm6742 = vcmp.eq.f32.partialorder %v646, inf
        %v6743 = vsel %vm6742, %v646, %v6741
        %vm6744 = vcmp.eq.f32.partialorder %v646, 0.0
        %v6745 = vand.u32 %v646, 2147483648
        %v6746 = vsel %vm6744, %v6745, %v6743
        %v6747 = vrsqrt.pop %v647
        %v6748 = vmul.f32 %v6747, %v647
        %v6749 = vmul.f32 %v6748, %v6747
        %v6750 = vmul.f32 0.5, %v6749
        %v6751 = vsub.f32 1.5, %v6750
        %v6752 = vmul.f32 %v6747, %v6751
        %v6753 = vmul.f32 %v647, %v6752
        %vm6754 = vcmp.eq.f32.partialorder %v647, inf
        %v6755 = vsel %vm6754, %v647, %v6753
        %vm6756 = vcmp.eq.f32.partialorder %v647, 0.0
        %v6757 = vand.u32 %v647, 2147483648
        %v6758 = vsel %vm6756, %v6757, %v6755
        %v6759 = vrsqrt.pop %v648
        %v6760 = vmul.f32 %v6759, %v648
        %v6761 = vmul.f32 %v6760, %v6759
        %v6762 = vmul.f32 0.5, %v6761
        %v6763 = vsub.f32 1.5, %v6762
        %v6764 = vmul.f32 %v6759, %v6763
        %v6765 = vmul.f32 %v648, %v6764
        %vm6766 = vcmp.eq.f32.partialorder %v648, inf
        %v6767 = vsel %vm6766, %v648, %v6765
        %vm6768 = vcmp.eq.f32.partialorder %v648, 0.0
        %v6769 = vand.u32 %v648, 2147483648
        %v6770 = vsel %vm6768, %v6769, %v6767
        %v6771 = vrsqrt.pop %v649
        %v6772 = vmul.f32 %v6771, %v649
        %v6773 = vmul.f32 %v6772, %v6771
        %v6774 = vmul.f32 0.5, %v6773
        %v6775 = vsub.f32 1.5, %v6774
        %v6776 = vmul.f32 %v6771, %v6775
        %v6777 = vmul.f32 %v649, %v6776
        %vm6778 = vcmp.eq.f32.partialorder %v649, inf
        %v6779 = vsel %vm6778, %v649, %v6777
        %vm6780 = vcmp.eq.f32.partialorder %v649, 0.0
        %v6781 = vand.u32 %v649, 2147483648
        %v6782 = vsel %vm6780, %v6781, %v6779
        %v6783 = vrsqrt.pop %v650
        %v6784 = vmul.f32 %v6783, %v650
        %v6785 = vmul.f32 %v6784, %v6783
        %v6786 = vmul.f32 0.5, %v6785
        %v6787 = vsub.f32 1.5, %v6786
        %v6788 = vmul.f32 %v6783, %v6787
        %v6789 = vmul.f32 %v650, %v6788
        %vm6790 = vcmp.eq.f32.partialorder %v650, inf
        %v6791 = vsel %vm6790, %v650, %v6789
        %vm6792 = vcmp.eq.f32.partialorder %v650, 0.0
        %v6793 = vand.u32 %v650, 2147483648
        %v6794 = vsel %vm6792, %v6793, %v6791
        %6795 = vst [vmem:[%s136] sm:$0xff] %v662
        %6796 = vst [vmem:[%s136 + $0x8] sm:$0xff] %v674
        %6797 = vst [vmem:[%s136 + $0x10] sm:$0xff] %v686
        %6798 = vst [vmem:[%s136 + $0x18] sm:$0xff] %v698
        %6799 = vst [vmem:[%s136 + $0x20] sm:$0xff] %v710
        %6800 = vst [vmem:[%s136 + $0x28] sm:$0xff] %v722
        %6801 = vst [vmem:[%s136 + $0x30] sm:$0xff] %v734
        %6802 = vst [vmem:[%s136 + $0x38] sm:$0xff] %v746
        %6803 = vst [vmem:[%s136 + $0x40] sm:$0xff] %v758
        %6804 = vst [vmem:[%s136 + $0x48] sm:$0xff] %v770
        %6805 = vst [vmem:[%s136 + $0x50] sm:$0xff] %v782
        %6806 = vst [vmem:[%s136 + $0x58] sm:$0xff] %v794
        %6807 = vst [vmem:[%s136 + $0x60] sm:$0xff] %v806
        %6808 = vst [vmem:[%s136 + $0x68] sm:$0xff] %v818
        %6809 = vst [vmem:[%s136 + $0x70] sm:$0xff] %v830
        %6810 = vst [vmem:[%s136 + $0x78] sm:$0xff] %v842
        %6811 = vst [vmem:[%s136 + $0x80] sm:$0xff] %v854
        %6812 = vst [vmem:[%s136 + $0x88] sm:$0xff] %v866
        %6813 = vst [vmem:[%s136 + $0x90] sm:$0xff] %v878
        %6814 = vst [vmem:[%s136 + $0x98] sm:$0xff] %v890
        %6815 = vst [vmem:[%s136 + $0xa0] sm:$0xff] %v902
        %6816 = vst [vmem:[%s136 + $0xa8] sm:$0xff] %v914
        %6817 = vst [vmem:[%s136 + $0xb0] sm:$0xff] %v926
        %6818 = vst [vmem:[%s136 + $0xb8] sm:$0xff] %v938
        %6819 = vst [vmem:[%s136 + $0xc0] sm:$0xff] %v950
        %6820 = vst [vmem:[%s136 + $0xc8] sm:$0xff] %v962
        %6821 = vst [vmem:[%s136 + $0xd0] sm:$0xff] %v974
        %6822 = vst [vmem:[%s136 + $0xd8] sm:$0xff] %v986
        %6823 = vst [vmem:[%s136 + $0xe0] sm:$0xff] %v998
        %6824 = vst [vmem:[%s136 + $0xe8] sm:$0xff] %v1010
        %6825 = vst [vmem:[%s136 + $0xf0] sm:$0xff] %v1022
        %6826 = vst [vmem:[%s136 + $0xf8] sm:$0xff] %v1034
        %6827 = vst [vmem:[%s136 + $0x100] sm:$0xff] %v1046
        %6828 = vst [vmem:[%s136 + $0x108] sm:$0xff] %v1058
        %6829 = vst [vmem:[%s136 + $0x110] sm:$0xff] %v1070
        %6830 = vst [vmem:[%s136 + $0x118] sm:$0xff] %v1082
        %6831 = vst [vmem:[%s136 + $0x120] sm:$0xff] %v1094
        %6832 = vst [vmem:[%s136 + $0x128] sm:$0xff] %v1106
        %6833 = vst [vmem:[%s136 + $0x130] sm:$0xff] %v1118
        %6834 = vst [vmem:[%s136 + $0x138] sm:$0xff] %v1130
        %6835 = vst [vmem:[%s136 + $0x140] sm:$0xff] %v1142
        %6836 = vst [vmem:[%s136 + $0x148] sm:$0xff] %v1154
        %6837 = vst [vmem:[%s136 + $0x150] sm:$0xff] %v1166
        %6838 = vst [vmem:[%s136 + $0x158] sm:$0xff] %v1178
        %6839 = vst [vmem:[%s136 + $0x160] sm:$0xff] %v1190
        %6840 = vst [vmem:[%s136 + $0x168] sm:$0xff] %v1202
        %6841 = vst [vmem:[%s136 + $0x170] sm:$0xff] %v1214
        %6842 = vst [vmem:[%s136 + $0x178] sm:$0xff] %v1226
        %6843 = vst [vmem:[%s136 + $0x180] sm:$0xff] %v1238
        %6844 = vst [vmem:[%s136 + $0x188] sm:$0xff] %v1250
        %6845 = vst [vmem:[%s136 + $0x190] sm:$0xff] %v1262
        %6846 = vst [vmem:[%s136 + $0x198] sm:$0xff] %v1274
        %6847 = vst [vmem:[%s136 + $0x1a0] sm:$0xff] %v1286
        %6848 = vst [vmem:[%s136 + $0x1a8] sm:$0xff] %v1298
        %6849 = vst [vmem:[%s136 + $0x1b0] sm:$0xff] %v1310
        %6850 = vst [vmem:[%s136 + $0x1b8] sm:$0xff] %v1322
        %6851 = vst [vmem:[%s136 + $0x1c0] sm:$0xff] %v1334
        %6852 = vst [vmem:[%s136 + $0x1c8] sm:$0xff] %v1346
        %6853 = vst [vmem:[%s136 + $0x1d0] sm:$0xff] %v1358
        %6854 = vst [vmem:[%s136 + $0x1d8] sm:$0xff] %v1370
        %6855 = vst [vmem:[%s136 + $0x1e0] sm:$0xff] %v1382
        %6856 = vst [vmem:[%s136 + $0x1e8] sm:$0xff] %v1394
        %6857 = vst [vmem:[%s136 + $0x1f0] sm:$0xff] %v1406
        %6858 = vst [vmem:[%s136 + $0x1f8] sm:$0xff] %v1418
        %6859 = vst [vmem:[%s136 + $0x200] sm:$0xff] %v1430
        %6860 = vst [vmem:[%s136 + $0x208] sm:$0xff] %v1442
        %6861 = vst [vmem:[%s136 + $0x210] sm:$0xff] %v1454
        %6862 = vst [vmem:[%s136 + $0x218] sm:$0xff] %v1466
        %6863 = vst [vmem:[%s136 + $0x220] sm:$0xff] %v1478
        %6864 = vst [vmem:[%s136 + $0x228] sm:$0xff] %v1490
        %6865 = vst [vmem:[%s136 + $0x230] sm:$0xff] %v1502
        %6866 = vst [vmem:[%s136 + $0x238] sm:$0xff] %v1514
        %6867 = vst [vmem:[%s136 + $0x240] sm:$0xff] %v1526
        %6868 = vst [vmem:[%s136 + $0x248] sm:$0xff] %v1538
        %6869 = vst [vmem:[%s136 + $0x250] sm:$0xff] %v1550
        %6870 = vst [vmem:[%s136 + $0x258] sm:$0xff] %v1562
        %6871 = vst [vmem:[%s136 + $0x260] sm:$0xff] %v1574
        %6872 = vst [vmem:[%s136 + $0x268] sm:$0xff] %v1586
        %6873 = vst [vmem:[%s136 + $0x270] sm:$0xff] %v1598
        %6874 = vst [vmem:[%s136 + $0x278] sm:$0xff] %v1610
        %6875 = vst [vmem:[%s136 + $0x280] sm:$0xff] %v1622
        %6876 = vst [vmem:[%s136 + $0x288] sm:$0xff] %v1634
        %6877 = vst [vmem:[%s136 + $0x290] sm:$0xff] %v1646
        %6878 = vst [vmem:[%s136 + $0x298] sm:$0xff] %v1658
        %6879 = vst [vmem:[%s136 + $0x2a0] sm:$0xff] %v1670
        %6880 = vst [vmem:[%s136 + $0x2a8] sm:$0xff] %v1682
        %6881 = vst [vmem:[%s136 + $0x2b0] sm:$0xff] %v1694
        %6882 = vst [vmem:[%s136 + $0x2b8] sm:$0xff] %v1706
        %6883 = vst [vmem:[%s136 + $0x2c0] sm:$0xff] %v1718
        %6884 = vst [vmem:[%s136 + $0x2c8] sm:$0xff] %v1730
        %6885 = vst [vmem:[%s136 + $0x2d0] sm:$0xff] %v1742
        %6886 = vst [vmem:[%s136 + $0x2d8] sm:$0xff] %v1754
        %6887 = vst [vmem:[%s136 + $0x2e0] sm:$0xff] %v1766
        %6888 = vst [vmem:[%s136 + $0x2e8] sm:$0xff] %v1778
        %6889 = vst [vmem:[%s136 + $0x2f0] sm:$0xff] %v1790
        %6890 = vst [vmem:[%s136 + $0x2f8] sm:$0xff] %v1802
        %6891 = vst [vmem:[%s136 + $0x300] sm:$0xff] %v1814
        %6892 = vst [vmem:[%s136 + $0x308] sm:$0xff] %v1826
        %6893 = vst [vmem:[%s136 + $0x310] sm:$0xff] %v1838
        %6894 = vst [vmem:[%s136 + $0x318] sm:$0xff] %v1850
        %6895 = vst [vmem:[%s136 + $0x320] sm:$0xff] %v1862
        %6896 = vst [vmem:[%s136 + $0x328] sm:$0xff] %v1874
        %6897 = vst [vmem:[%s136 + $0x330] sm:$0xff] %v1886
        %6898 = vst [vmem:[%s136 + $0x338] sm:$0xff] %v1898
        %6899 = vst [vmem:[%s136 + $0x340] sm:$0xff] %v1910
        %6900 = vst [vmem:[%s136 + $0x348] sm:$0xff] %v1922
        %6901 = vst [vmem:[%s136 + $0x350] sm:$0xff] %v1934
        %6902 = vst [vmem:[%s136 + $0x358] sm:$0xff] %v1946
        %6903 = vst [vmem:[%s136 + $0x360] sm:$0xff] %v1958
        %6904 = vst [vmem:[%s136 + $0x368] sm:$0xff] %v1970
        %6905 = vst [vmem:[%s136 + $0x370] sm:$0xff] %v1982
        %6906 = vst [vmem:[%s136 + $0x378] sm:$0xff] %v1994
        %6907 = vst [vmem:[%s136 + $0x380] sm:$0xff] %v2006
        %6908 = vst [vmem:[%s136 + $0x388] sm:$0xff] %v2018
        %6909 = vst [vmem:[%s136 + $0x390] sm:$0xff] %v2030
        %6910 = vst [vmem:[%s136 + $0x398] sm:$0xff] %v2042
        %6911 = vst [vmem:[%s136 + $0x3a0] sm:$0xff] %v2054
        %6912 = vst [vmem:[%s136 + $0x3a8] sm:$0xff] %v2066
        %6913 = vst [vmem:[%s136 + $0x3b0] sm:$0xff] %v2078
        %6914 = vst [vmem:[%s136 + $0x3b8] sm:$0xff] %v2090
        %6915 = vst [vmem:[%s136 + $0x3c0] sm:$0xff] %v2102
        %6916 = vst [vmem:[%s136 + $0x3c8] sm:$0xff] %v2114
        %6917 = vst [vmem:[%s136 + $0x3d0] sm:$0xff] %v2126
        %6918 = vst [vmem:[%s136 + $0x3d8] sm:$0xff] %v2138
        %6919 = vst [vmem:[%s136 + $0x3e0] sm:$0xff] %v2150
        %6920 = vst [vmem:[%s136 + $0x3e8] sm:$0xff] %v2162
        %6921 = vst [vmem:[%s136 + $0x3f0] sm:$0xff] %v2174
        %6922 = vst [vmem:[%s136 + $0x3f8] sm:$0xff] %v2186
        %6923 = vst [vmem:[%s136 + $0x400] sm:$0xff] %v2198
        %6924 = vst [vmem:[%s136 + $0x408] sm:$0xff] %v2210
        %6925 = vst [vmem:[%s136 + $0x410] sm:$0xff] %v2222
        %6926 = vst [vmem:[%s136 + $0x418] sm:$0xff] %v2234
        %6927 = vst [vmem:[%s136 + $0x420] sm:$0xff] %v2246
        %6928 = vst [vmem:[%s136 + $0x428] sm:$0xff] %v2258
        %6929 = vst [vmem:[%s136 + $0x430] sm:$0xff] %v2270
        %6930 = vst [vmem:[%s136 + $0x438] sm:$0xff] %v2282
        %6931 = vst [vmem:[%s136 + $0x440] sm:$0xff] %v2294
        %6932 = vst [vmem:[%s136 + $0x448] sm:$0xff] %v2306
        %6933 = vst [vmem:[%s136 + $0x450] sm:$0xff] %v2318
        %6934 = vst [vmem:[%s136 + $0x458] sm:$0xff] %v2330
        %6935 = vst [vmem:[%s136 + $0x460] sm:$0xff] %v2342
        %6936 = vst [vmem:[%s136 + $0x468] sm:$0xff] %v2354
        %6937 = vst [vmem:[%s136 + $0x470] sm:$0xff] %v2366
        %6938 = vst [vmem:[%s136 + $0x478] sm:$0xff] %v2378
        %6939 = vst [vmem:[%s136 + $0x480] sm:$0xff] %v2390
        %6940 = vst [vmem:[%s136 + $0x488] sm:$0xff] %v2402
        %6941 = vst [vmem:[%s136 + $0x490] sm:$0xff] %v2414
        %6942 = vst [vmem:[%s136 + $0x498] sm:$0xff] %v2426
        %6943 = vst [vmem:[%s136 + $0x4a0] sm:$0xff] %v2438
        %6944 = vst [vmem:[%s136 + $0x4a8] sm:$0xff] %v2450
        %6945 = vst [vmem:[%s136 + $0x4b0] sm:$0xff] %v2462
        %6946 = vst [vmem:[%s136 + $0x4b8] sm:$0xff] %v2474
        %6947 = vst [vmem:[%s136 + $0x4c0] sm:$0xff] %v2486
        %6948 = vst [vmem:[%s136 + $0x4c8] sm:$0xff] %v2498
        %6949 = vst [vmem:[%s136 + $0x4d0] sm:$0xff] %v2510
        %6950 = vst [vmem:[%s136 + $0x4d8] sm:$0xff] %v2522
        %6951 = vst [vmem:[%s136 + $0x4e0] sm:$0xff] %v2534
        %6952 = vst [vmem:[%s136 + $0x4e8] sm:$0xff] %v2546
        %6953 = vst [vmem:[%s136 + $0x4f0] sm:$0xff] %v2558
        %6954 = vst [vmem:[%s136 + $0x4f8] sm:$0xff] %v2570
        %6955 = vst [vmem:[%s136 + $0x500] sm:$0xff] %v2582
        %6956 = vst [vmem:[%s136 + $0x508] sm:$0xff] %v2594
        %6957 = vst [vmem:[%s136 + $0x510] sm:$0xff] %v2606
        %6958 = vst [vmem:[%s136 + $0x518] sm:$0xff] %v2618
        %6959 = vst [vmem:[%s136 + $0x520] sm:$0xff] %v2630
        %6960 = vst [vmem:[%s136 + $0x528] sm:$0xff] %v2642
        %6961 = vst [vmem:[%s136 + $0x530] sm:$0xff] %v2654
        %6962 = vst [vmem:[%s136 + $0x538] sm:$0xff] %v2666
        %6963 = vst [vmem:[%s136 + $0x540] sm:$0xff] %v2678
        %6964 = vst [vmem:[%s136 + $0x548] sm:$0xff] %v2690
        %6965 = vst [vmem:[%s136 + $0x550] sm:$0xff] %v2702
        %6966 = vst [vmem:[%s136 + $0x558] sm:$0xff] %v2714
        %6967 = vst [vmem:[%s136 + $0x560] sm:$0xff] %v2726
        %6968 = vst [vmem:[%s136 + $0x568] sm:$0xff] %v2738
        %6969 = vst [vmem:[%s136 + $0x570] sm:$0xff] %v2750
        %6970 = vst [vmem:[%s136 + $0x578] sm:$0xff] %v2762
        %6971 = vst [vmem:[%s136 + $0x580] sm:$0xff] %v2774
        %6972 = vst [vmem:[%s136 + $0x588] sm:$0xff] %v2786
        %6973 = vst [vmem:[%s136 + $0x590] sm:$0xff] %v2798
        %6974 = vst [vmem:[%s136 + $0x598] sm:$0xff] %v2810
        %6975 = vst [vmem:[%s136 + $0x5a0] sm:$0xff] %v2822
        %6976 = vst [vmem:[%s136 + $0x5a8] sm:$0xff] %v2834
        %6977 = vst [vmem:[%s136 + $0x5b0] sm:$0xff] %v2846
        %6978 = vst [vmem:[%s136 + $0x5b8] sm:$0xff] %v2858
        %6979 = vst [vmem:[%s136 + $0x5c0] sm:$0xff] %v2870
        %6980 = vst [vmem:[%s136 + $0x5c8] sm:$0xff] %v2882
        %6981 = vst [vmem:[%s136 + $0x5d0] sm:$0xff] %v2894
        %6982 = vst [vmem:[%s136 + $0x5d8] sm:$0xff] %v2906
        %6983 = vst [vmem:[%s136 + $0x5e0] sm:$0xff] %v2918
        %6984 = vst [vmem:[%s136 + $0x5e8] sm:$0xff] %v2930
        %6985 = vst [vmem:[%s136 + $0x5f0] sm:$0xff] %v2942
        %6986 = vst [vmem:[%s136 + $0x5f8] sm:$0xff] %v2954
        %6987 = vst [vmem:[%s136 + $0x600] sm:$0xff] %v2966
        %6988 = vst [vmem:[%s136 + $0x608] sm:$0xff] %v2978
        %6989 = vst [vmem:[%s136 + $0x610] sm:$0xff] %v2990
        %6990 = vst [vmem:[%s136 + $0x618] sm:$0xff] %v3002
        %6991 = vst [vmem:[%s136 + $0x620] sm:$0xff] %v3014
        %6992 = vst [vmem:[%s136 + $0x628] sm:$0xff] %v3026
        %6993 = vst [vmem:[%s136 + $0x630] sm:$0xff] %v3038
        %6994 = vst [vmem:[%s136 + $0x638] sm:$0xff] %v3050
        %6995 = vst [vmem:[%s136 + $0x640] sm:$0xff] %v3062
        %6996 = vst [vmem:[%s136 + $0x648] sm:$0xff] %v3074
        %6997 = vst [vmem:[%s136 + $0x650] sm:$0xff] %v3086
        %6998 = vst [vmem:[%s136 + $0x658] sm:$0xff] %v3098
        %6999 = vst [vmem:[%s136 + $0x660] sm:$0xff] %v3110
        %7000 = vst [vmem:[%s136 + $0x668] sm:$0xff] %v3122
        %7001 = vst [vmem:[%s136 + $0x670] sm:$0xff] %v3134
        %7002 = vst [vmem:[%s136 + $0x678] sm:$0xff] %v3146
        %7003 = vst [vmem:[%s136 + $0x680] sm:$0xff] %v3158
        %7004 = vst [vmem:[%s136 + $0x688] sm:$0xff] %v3170
        %7005 = vst [vmem:[%s136 + $0x690] sm:$0xff] %v3182
        %7006 = vst [vmem:[%s136 + $0x698] sm:$0xff] %v3194
        %7007 = vst [vmem:[%s136 + $0x6a0] sm:$0xff] %v3206
        %7008 = vst [vmem:[%s136 + $0x6a8] sm:$0xff] %v3218
        %7009 = vst [vmem:[%s136 + $0x6b0] sm:$0xff] %v3230
        %7010 = vst [vmem:[%s136 + $0x6b8] sm:$0xff] %v3242
        %7011 = vst [vmem:[%s136 + $0x6c0] sm:$0xff] %v3254
        %7012 = vst [vmem:[%s136 + $0x6c8] sm:$0xff] %v3266
        %7013 = vst [vmem:[%s136 + $0x6d0] sm:$0xff] %v3278
        %7014 = vst [vmem:[%s136 + $0x6d8] sm:$0xff] %v3290
        %7015 = vst [vmem:[%s136 + $0x6e0] sm:$0xff] %v3302
        %7016 = vst [vmem:[%s136 + $0x6e8] sm:$0xff] %v3314
        %7017 = vst [vmem:[%s136 + $0x6f0] sm:$0xff] %v3326
        %7018 = vst [vmem:[%s136 + $0x6f8] sm:$0xff] %v3338
        %7019 = vst [vmem:[%s136 + $0x700] sm:$0xff] %v3350
        %7020 = vst [vmem:[%s136 + $0x708] sm:$0xff] %v3362
        %7021 = vst [vmem:[%s136 + $0x710] sm:$0xff] %v3374
        %7022 = vst [vmem:[%s136 + $0x718] sm:$0xff] %v3386
        %7023 = vst [vmem:[%s136 + $0x720] sm:$0xff] %v3398
        %7024 = vst [vmem:[%s136 + $0x728] sm:$0xff] %v3410
        %7025 = vst [vmem:[%s136 + $0x730] sm:$0xff] %v3422
        %7026 = vst [vmem:[%s136 + $0x738] sm:$0xff] %v3434
        %7027 = vst [vmem:[%s136 + $0x740] sm:$0xff] %v3446
        %7028 = vst [vmem:[%s136 + $0x748] sm:$0xff] %v3458
        %7029 = vst [vmem:[%s136 + $0x750] sm:$0xff] %v3470
        %7030 = vst [vmem:[%s136 + $0x758] sm:$0xff] %v3482
        %7031 = vst [vmem:[%s136 + $0x760] sm:$0xff] %v3494
        %7032 = vst [vmem:[%s136 + $0x768] sm:$0xff] %v3506
        %7033 = vst [vmem:[%s136 + $0x770] sm:$0xff] %v3518
        %7034 = vst [vmem:[%s136 + $0x778] sm:$0xff] %v3530
        %7035 = vst [vmem:[%s136 + $0x780] sm:$0xff] %v3542
        %7036 = vst [vmem:[%s136 + $0x788] sm:$0xff] %v3554
        %7037 = vst [vmem:[%s136 + $0x790] sm:$0xff] %v3566
        %7038 = vst [vmem:[%s136 + $0x798] sm:$0xff] %v3578
        %7039 = vst [vmem:[%s136 + $0x7a0] sm:$0xff] %v3590
        %7040 = vst [vmem:[%s136 + $0x7a8] sm:$0xff] %v3602
        %7041 = vst [vmem:[%s136 + $0x7b0] sm:$0xff] %v3614
        %7042 = vst [vmem:[%s136 + $0x7b8] sm:$0xff] %v3626
        %7043 = vst [vmem:[%s136 + $0x7c0] sm:$0xff] %v3638
        %7044 = vst [vmem:[%s136 + $0x7c8] sm:$0xff] %v3650
        %7045 = vst [vmem:[%s136 + $0x7d0] sm:$0xff] %v3662
        %7046 = vst [vmem:[%s136 + $0x7d8] sm:$0xff] %v3674
        %7047 = vst [vmem:[%s136 + $0x7e0] sm:$0xff] %v3686
        %7048 = vst [vmem:[%s136 + $0x7e8] sm:$0xff] %v3698
        %7049 = vst [vmem:[%s136 + $0x7f0] sm:$0xff] %v3710
        %7050 = vst [vmem:[%s136 + $0x7f8] sm:$0xff] %v3722
        %7051 = vst [vmem:[%s136 + $0x800] sm:$0xff] %v3734
        %7052 = vst [vmem:[%s136 + $0x808] sm:$0xff] %v3746
        %7053 = vst [vmem:[%s136 + $0x810] sm:$0xff] %v3758
        %7054 = vst [vmem:[%s136 + $0x818] sm:$0xff] %v3770
        %7055 = vst [vmem:[%s136 + $0x820] sm:$0xff] %v3782
        %7056 = vst [vmem:[%s136 + $0x828] sm:$0xff] %v3794
        %7057 = vst [vmem:[%s136 + $0x830] sm:$0xff] %v3806
        %7058 = vst [vmem:[%s136 + $0x838] sm:$0xff] %v3818
        %7059 = vst [vmem:[%s136 + $0x840] sm:$0xff] %v3830
        %7060 = vst [vmem:[%s136 + $0x848] sm:$0xff] %v3842
        %7061 = vst [vmem:[%s136 + $0x850] sm:$0xff] %v3854
        %7062 = vst [vmem:[%s136 + $0x858] sm:$0xff] %v3866
        %7063 = vst [vmem:[%s136 + $0x860] sm:$0xff] %v3878
        %7064 = vst [vmem:[%s136 + $0x868] sm:$0xff] %v3890
        %7065 = vst [vmem:[%s136 + $0x870] sm:$0xff] %v3902
        %7066 = vst [vmem:[%s136 + $0x878] sm:$0xff] %v3914
        %7067 = vst [vmem:[%s136 + $0x880] sm:$0xff] %v3926
        %7068 = vst [vmem:[%s136 + $0x888] sm:$0xff] %v3938
        %7069 = vst [vmem:[%s136 + $0x890] sm:$0xff] %v3950
        %7070 = vst [vmem:[%s136 + $0x898] sm:$0xff] %v3962
        %7071 = vst [vmem:[%s136 + $0x8a0] sm:$0xff] %v3974
        %7072 = vst [vmem:[%s136 + $0x8a8] sm:$0xff] %v3986
        %7073 = vst [vmem:[%s136 + $0x8b0] sm:$0xff] %v3998
        %7074 = vst [vmem:[%s136 + $0x8b8] sm:$0xff] %v4010
        %7075 = vst [vmem:[%s136 + $0x8c0] sm:$0xff] %v4022
        %7076 = vst [vmem:[%s136 + $0x8c8] sm:$0xff] %v4034
        %7077 = vst [vmem:[%s136 + $0x8d0] sm:$0xff] %v4046
        %7078 = vst [vmem:[%s136 + $0x8d8] sm:$0xff] %v4058
        %7079 = vst [vmem:[%s136 + $0x8e0] sm:$0xff] %v4070
        %7080 = vst [vmem:[%s136 + $0x8e8] sm:$0xff] %v4082
        %7081 = vst [vmem:[%s136 + $0x8f0] sm:$0xff] %v4094
        %7082 = vst [vmem:[%s136 + $0x8f8] sm:$0xff] %v4106
        %7083 = vst [vmem:[%s136 + $0x900] sm:$0xff] %v4118
        %7084 = vst [vmem:[%s136 + $0x908] sm:$0xff] %v4130
        %7085 = vst [vmem:[%s136 + $0x910] sm:$0xff] %v4142
        %7086 = vst [vmem:[%s136 + $0x918] sm:$0xff] %v4154
        %7087 = vst [vmem:[%s136 + $0x920] sm:$0xff] %v4166
        %7088 = vst [vmem:[%s136 + $0x928] sm:$0xff] %v4178
        %7089 = vst [vmem:[%s136 + $0x930] sm:$0xff] %v4190
        %7090 = vst [vmem:[%s136 + $0x938] sm:$0xff] %v4202
        %7091 = vst [vmem:[%s136 + $0x940] sm:$0xff] %v4214
        %7092 = vst [vmem:[%s136 + $0x948] sm:$0xff] %v4226
        %7093 = vst [vmem:[%s136 + $0x950] sm:$0xff] %v4238
        %7094 = vst [vmem:[%s136 + $0x958] sm:$0xff] %v4250
        %7095 = vst [vmem:[%s136 + $0x960] sm:$0xff] %v4262
        %7096 = vst [vmem:[%s136 + $0x968] sm:$0xff] %v4274
        %7097 = vst [vmem:[%s136 + $0x970] sm:$0xff] %v4286
        %7098 = vst [vmem:[%s136 + $0x978] sm:$0xff] %v4298
        %7099 = vst [vmem:[%s136 + $0x980] sm:$0xff] %v4310
        %7100 = vst [vmem:[%s136 + $0x988] sm:$0xff] %v4322
        %7101 = vst [vmem:[%s136 + $0x990] sm:$0xff] %v4334
        %7102 = vst [vmem:[%s136 + $0x998] sm:$0xff] %v4346
        %7103 = vst [vmem:[%s136 + $0x9a0] sm:$0xff] %v4358
        %7104 = vst [vmem:[%s136 + $0x9a8] sm:$0xff] %v4370
        %7105 = vst [vmem:[%s136 + $0x9b0] sm:$0xff] %v4382
        %7106 = vst [vmem:[%s136 + $0x9b8] sm:$0xff] %v4394
        %7107 = vst [vmem:[%s136 + $0x9c0] sm:$0xff] %v4406
        %7108 = vst [vmem:[%s136 + $0x9c8] sm:$0xff] %v4418
        %7109 = vst [vmem:[%s136 + $0x9d0] sm:$0xff] %v4430
        %7110 = vst [vmem:[%s136 + $0x9d8] sm:$0xff] %v4442
        %7111 = vst [vmem:[%s136 + $0x9e0] sm:$0xff] %v4454
        %7112 = vst [vmem:[%s136 + $0x9e8] sm:$0xff] %v4466
        %7113 = vst [vmem:[%s136 + $0x9f0] sm:$0xff] %v4478
        %7114 = vst [vmem:[%s136 + $0x9f8] sm:$0xff] %v4490
        %7115 = vst [vmem:[%s136 + $0xa00] sm:$0xff] %v4502
        %7116 = vst [vmem:[%s136 + $0xa08] sm:$0xff] %v4514
        %7117 = vst [vmem:[%s136 + $0xa10] sm:$0xff] %v4526
        %7118 = vst [vmem:[%s136 + $0xa18] sm:$0xff] %v4538
        %7119 = vst [vmem:[%s136 + $0xa20] sm:$0xff] %v4550
        %7120 = vst [vmem:[%s136 + $0xa28] sm:$0xff] %v4562
        %7121 = vst [vmem:[%s136 + $0xa30] sm:$0xff] %v4574
        %7122 = vst [vmem:[%s136 + $0xa38] sm:$0xff] %v4586
        %7123 = vst [vmem:[%s136 + $0xa40] sm:$0xff] %v4598
        %7124 = vst [vmem:[%s136 + $0xa48] sm:$0xff] %v4610
        %7125 = vst [vmem:[%s136 + $0xa50] sm:$0xff] %v4622
        %7126 = vst [vmem:[%s136 + $0xa58] sm:$0xff] %v4634
        %7127 = vst [vmem:[%s136 + $0xa60] sm:$0xff] %v4646
        %7128 = vst [vmem:[%s136 + $0xa68] sm:$0xff] %v4658
        %7129 = vst [vmem:[%s136 + $0xa70] sm:$0xff] %v4670
        %7130 = vst [vmem:[%s136 + $0xa78] sm:$0xff] %v4682
        %7131 = vst [vmem:[%s136 + $0xa80] sm:$0xff] %v4694
        %7132 = vst [vmem:[%s136 + $0xa88] sm:$0xff] %v4706
        %7133 = vst [vmem:[%s136 + $0xa90] sm:$0xff] %v4718
        %7134 = vst [vmem:[%s136 + $0xa98] sm:$0xff] %v4730
        %7135 = vst [vmem:[%s136 + $0xaa0] sm:$0xff] %v4742
        %7136 = vst [vmem:[%s136 + $0xaa8] sm:$0xff] %v4754
        %7137 = vst [vmem:[%s136 + $0xab0] sm:$0xff] %v4766
        %7138 = vst [vmem:[%s136 + $0xab8] sm:$0xff] %v4778
        %7139 = vst [vmem:[%s136 + $0xac0] sm:$0xff] %v4790
        %7140 = vst [vmem:[%s136 + $0xac8] sm:$0xff] %v4802
        %7141 = vst [vmem:[%s136 + $0xad0] sm:$0xff] %v4814
        %7142 = vst [vmem:[%s136 + $0xad8] sm:$0xff] %v4826
        %7143 = vst [vmem:[%s136 + $0xae0] sm:$0xff] %v4838
        %7144 = vst [vmem:[%s136 + $0xae8] sm:$0xff] %v4850
        %7145 = vst [vmem:[%s136 + $0xaf0] sm:$0xff] %v4862
        %7146 = vst [vmem:[%s136 + $0xaf8] sm:$0xff] %v4874
        %7147 = vst [vmem:[%s136 + $0xb00] sm:$0xff] %v4886
        %7148 = vst [vmem:[%s136 + $0xb08] sm:$0xff] %v4898
        %7149 = vst [vmem:[%s136 + $0xb10] sm:$0xff] %v4910
        %7150 = vst [vmem:[%s136 + $0xb18] sm:$0xff] %v4922
        %7151 = vst [vmem:[%s136 + $0xb20] sm:$0xff] %v4934
        %7152 = vst [vmem:[%s136 + $0xb28] sm:$0xff] %v4946
        %7153 = vst [vmem:[%s136 + $0xb30] sm:$0xff] %v4958
        %7154 = vst [vmem:[%s136 + $0xb38] sm:$0xff] %v4970
        %7155 = vst [vmem:[%s136 + $0xb40] sm:$0xff] %v4982
        %7156 = vst [vmem:[%s136 + $0xb48] sm:$0xff] %v4994
        %7157 = vst [vmem:[%s136 + $0xb50] sm:$0xff] %v5006
        %7158 = vst [vmem:[%s136 + $0xb58] sm:$0xff] %v5018
        %7159 = vst [vmem:[%s136 + $0xb60] sm:$0xff] %v5030
        %7160 = vst [vmem:[%s136 + $0xb68] sm:$0xff] %v5042
        %7161 = vst [vmem:[%s136 + $0xb70] sm:$0xff] %v5054
        %7162 = vst [vmem:[%s136 + $0xb78] sm:$0xff] %v5066
        %7163 = vst [vmem:[%s136 + $0xb80] sm:$0xff] %v5078
        %7164 = vst [vmem:[%s136 + $0xb88] sm:$0xff] %v5090
        %7165 = vst [vmem:[%s136 + $0xb90] sm:$0xff] %v5102
        %7166 = vst [vmem:[%s136 + $0xb98] sm:$0xff] %v5114
        %7167 = vst [vmem:[%s136 + $0xba0] sm:$0xff] %v5126
        %7168 = vst [vmem:[%s136 + $0xba8] sm:$0xff] %v5138
        %7169 = vst [vmem:[%s136 + $0xbb0] sm:$0xff] %v5150
        %7170 = vst [vmem:[%s136 + $0xbb8] sm:$0xff] %v5162
        %7171 = vst [vmem:[%s136 + $0xbc0] sm:$0xff] %v5174
        %7172 = vst [vmem:[%s136 + $0xbc8] sm:$0xff] %v5186
        %7173 = vst [vmem:[%s136 + $0xbd0] sm:$0xff] %v5198
        %7174 = vst [vmem:[%s136 + $0xbd8] sm:$0xff] %v5210
        %7175 = vst [vmem:[%s136 + $0xbe0] sm:$0xff] %v5222
        %7176 = vst [vmem:[%s136 + $0xbe8] sm:$0xff] %v5234
        %7177 = vst [vmem:[%s136 + $0xbf0] sm:$0xff] %v5246
        %7178 = vst [vmem:[%s136 + $0xbf8] sm:$0xff] %v5258
        %7179 = vst [vmem:[%s136 + $0xc00] sm:$0xff] %v5270
        %7180 = vst [vmem:[%s136 + $0xc08] sm:$0xff] %v5282
        %7181 = vst [vmem:[%s136 + $0xc10] sm:$0xff] %v5294
        %7182 = vst [vmem:[%s136 + $0xc18] sm:$0xff] %v5306
        %7183 = vst [vmem:[%s136 + $0xc20] sm:$0xff] %v5318
        %7184 = vst [vmem:[%s136 + $0xc28] sm:$0xff] %v5330
        %7185 = vst [vmem:[%s136 + $0xc30] sm:$0xff] %v5342
        %7186 = vst [vmem:[%s136 + $0xc38] sm:$0xff] %v5354
        %7187 = vst [vmem:[%s136 + $0xc40] sm:$0xff] %v5366
        %7188 = vst [vmem:[%s136 + $0xc48] sm:$0xff] %v5378
        %7189 = vst [vmem:[%s136 + $0xc50] sm:$0xff] %v5390
        %7190 = vst [vmem:[%s136 + $0xc58] sm:$0xff] %v5402
        %7191 = vst [vmem:[%s136 + $0xc60] sm:$0xff] %v5414
        %7192 = vst [vmem:[%s136 + $0xc68] sm:$0xff] %v5426
        %7193 = vst [vmem:[%s136 + $0xc70] sm:$0xff] %v5438
        %7194 = vst [vmem:[%s136 + $0xc78] sm:$0xff] %v5450
        %7195 = vst [vmem:[%s136 + $0xc80] sm:$0xff] %v5462
        %7196 = vst [vmem:[%s136 + $0xc88] sm:$0xff] %v5474
        %7197 = vst [vmem:[%s136 + $0xc90] sm:$0xff] %v5486
        %7198 = vst [vmem:[%s136 + $0xc98] sm:$0xff] %v5498
        %7199 = vst [vmem:[%s136 + $0xca0] sm:$0xff] %v5510
        %7200 = vst [vmem:[%s136 + $0xca8] sm:$0xff] %v5522
        %7201 = vst [vmem:[%s136 + $0xcb0] sm:$0xff] %v5534
        %7202 = vst [vmem:[%s136 + $0xcb8] sm:$0xff] %v5546
        %7203 = vst [vmem:[%s136 + $0xcc0] sm:$0xff] %v5558
        %7204 = vst [vmem:[%s136 + $0xcc8] sm:$0xff] %v5570
        %7205 = vst [vmem:[%s136 + $0xcd0] sm:$0xff] %v5582
        %7206 = vst [vmem:[%s136 + $0xcd8] sm:$0xff] %v5594
        %7207 = vst [vmem:[%s136 + $0xce0] sm:$0xff] %v5606
        %7208 = vst [vmem:[%s136 + $0xce8] sm:$0xff] %v5618
        %7209 = vst [vmem:[%s136 + $0xcf0] sm:$0xff] %v5630
        %7210 = vst [vmem:[%s136 + $0xcf8] sm:$0xff] %v5642
        %7211 = vst [vmem:[%s136 + $0xd00] sm:$0xff] %v5654
        %7212 = vst [vmem:[%s136 + $0xd08] sm:$0xff] %v5666
        %7213 = vst [vmem:[%s136 + $0xd10] sm:$0xff] %v5678
        %7214 = vst [vmem:[%s136 + $0xd18] sm:$0xff] %v5690
        %7215 = vst [vmem:[%s136 + $0xd20] sm:$0xff] %v5702
        %7216 = vst [vmem:[%s136 + $0xd28] sm:$0xff] %v5714
        %7217 = vst [vmem:[%s136 + $0xd30] sm:$0xff] %v5726
        %7218 = vst [vmem:[%s136 + $0xd38] sm:$0xff] %v5738
        %7219 = vst [vmem:[%s136 + $0xd40] sm:$0xff] %v5750
        %7220 = vst [vmem:[%s136 + $0xd48] sm:$0xff] %v5762
        %7221 = vst [vmem:[%s136 + $0xd50] sm:$0xff] %v5774
        %7222 = vst [vmem:[%s136 + $0xd58] sm:$0xff] %v5786
        %7223 = vst [vmem:[%s136 + $0xd60] sm:$0xff] %v5798
        %7224 = vst [vmem:[%s136 + $0xd68] sm:$0xff] %v5810
        %7225 = vst [vmem:[%s136 + $0xd70] sm:$0xff] %v5822
        %7226 = vst [vmem:[%s136 + $0xd78] sm:$0xff] %v5834
        %7227 = vst [vmem:[%s136 + $0xd80] sm:$0xff] %v5846
        %7228 = vst [vmem:[%s136 + $0xd88] sm:$0xff] %v5858
        %7229 = vst [vmem:[%s136 + $0xd90] sm:$0xff] %v5870
        %7230 = vst [vmem:[%s136 + $0xd98] sm:$0xff] %v5882
        %7231 = vst [vmem:[%s136 + $0xda0] sm:$0xff] %v5894
        %7232 = vst [vmem:[%s136 + $0xda8] sm:$0xff] %v5906
        %7233 = vst [vmem:[%s136 + $0xdb0] sm:$0xff] %v5918
        %7234 = vst [vmem:[%s136 + $0xdb8] sm:$0xff] %v5930
        %7235 = vst [vmem:[%s136 + $0xdc0] sm:$0xff] %v5942
        %7236 = vst [vmem:[%s136 + $0xdc8] sm:$0xff] %v5954
        %7237 = vst [vmem:[%s136 + $0xdd0] sm:$0xff] %v5966
        %7238 = vst [vmem:[%s136 + $0xdd8] sm:$0xff] %v5978
        %7239 = vst [vmem:[%s136 + $0xde0] sm:$0xff] %v5990
        %7240 = vst [vmem:[%s136 + $0xde8] sm:$0xff] %v6002
        %7241 = vst [vmem:[%s136 + $0xdf0] sm:$0xff] %v6014
        %7242 = vst [vmem:[%s136 + $0xdf8] sm:$0xff] %v6026
        %7243 = vst [vmem:[%s136 + $0xe00] sm:$0xff] %v6038
        %7244 = vst [vmem:[%s136 + $0xe08] sm:$0xff] %v6050
        %7245 = vst [vmem:[%s136 + $0xe10] sm:$0xff] %v6062
        %7246 = vst [vmem:[%s136 + $0xe18] sm:$0xff] %v6074
        %7247 = vst [vmem:[%s136 + $0xe20] sm:$0xff] %v6086
        %7248 = vst [vmem:[%s136 + $0xe28] sm:$0xff] %v6098
        %7249 = vst [vmem:[%s136 + $0xe30] sm:$0xff] %v6110
        %7250 = vst [vmem:[%s136 + $0xe38] sm:$0xff] %v6122
        %7251 = vst [vmem:[%s136 + $0xe40] sm:$0xff] %v6134
        %7252 = vst [vmem:[%s136 + $0xe48] sm:$0xff] %v6146
        %7253 = vst [vmem:[%s136 + $0xe50] sm:$0xff] %v6158
        %7254 = vst [vmem:[%s136 + $0xe58] sm:$0xff] %v6170
        %7255 = vst [vmem:[%s136 + $0xe60] sm:$0xff] %v6182
        %7256 = vst [vmem:[%s136 + $0xe68] sm:$0xff] %v6194
        %7257 = vst [vmem:[%s136 + $0xe70] sm:$0xff] %v6206
        %7258 = vst [vmem:[%s136 + $0xe78] sm:$0xff] %v6218
        %7259 = vst [vmem:[%s136 + $0xe80] sm:$0xff] %v6230
        %7260 = vst [vmem:[%s136 + $0xe88] sm:$0xff] %v6242
        %7261 = vst [vmem:[%s136 + $0xe90] sm:$0xff] %v6254
        %7262 = vst [vmem:[%s136 + $0xe98] sm:$0xff] %v6266
        %7263 = vst [vmem:[%s136 + $0xea0] sm:$0xff] %v6278
        %7264 = vst [vmem:[%s136 + $0xea8] sm:$0xff] %v6290
        %7265 = vst [vmem:[%s136 + $0xeb0] sm:$0xff] %v6302
        %7266 = vst [vmem:[%s136 + $0xeb8] sm:$0xff] %v6314
        %7267 = vst [vmem:[%s136 + $0xec0] sm:$0xff] %v6326
        %7268 = vst [vmem:[%s136 + $0xec8] sm:$0xff] %v6338
        %7269 = vst [vmem:[%s136 + $0xed0] sm:$0xff] %v6350
        %7270 = vst [vmem:[%s136 + $0xed8] sm:$0xff] %v6362
        %7271 = vst [vmem:[%s136 + $0xee0] sm:$0xff] %v6374
        %7272 = vst [vmem:[%s136 + $0xee8] sm:$0xff] %v6386
        %7273 = vst [vmem:[%s136 + $0xef0] sm:$0xff] %v6398
        %7274 = vst [vmem:[%s136 + $0xef8] sm:$0xff] %v6410
        %7275 = vst [vmem:[%s136 + $0xf00] sm:$0xff] %v6422
        %7276 = vst [vmem:[%s136 + $0xf08] sm:$0xff] %v6434
        %7277 = vst [vmem:[%s136 + $0xf10] sm:$0xff] %v6446
        %7278 = vst [vmem:[%s136 + $0xf18] sm:$0xff] %v6458
        %7279 = vst [vmem:[%s136 + $0xf20] sm:$0xff] %v6470
        %7280 = vst [vmem:[%s136 + $0xf28] sm:$0xff] %v6482
        %7281 = vst [vmem:[%s136 + $0xf30] sm:$0xff] %v6494
        %7282 = vst [vmem:[%s136 + $0xf38] sm:$0xff] %v6506
        %7283 = vst [vmem:[%s136 + $0xf40] sm:$0xff] %v6518
        %7284 = vst [vmem:[%s136 + $0xf48] sm:$0xff] %v6530
        %7285 = vst [vmem:[%s136 + $0xf50] sm:$0xff] %v6542
        %7286 = vst [vmem:[%s136 + $0xf58] sm:$0xff] %v6554
        %7287 = vst [vmem:[%s136 + $0xf60] sm:$0xff] %v6566
        %7288 = vst [vmem:[%s136 + $0xf68] sm:$0xff] %v6578
        %7289 = vst [vmem:[%s136 + $0xf70] sm:$0xff] %v6590
        %7290 = vst [vmem:[%s136 + $0xf78] sm:$0xff] %v6602
        %7291 = vst [vmem:[%s136 + $0xf80] sm:$0xff] %v6614
        %7292 = vst [vmem:[%s136 + $0xf88] sm:$0xff] %v6626
        %7293 = vst [vmem:[%s136 + $0xf90] sm:$0xff] %v6638
        %7294 = vst [vmem:[%s136 + $0xf98] sm:$0xff] %v6650
        %7295 = vst [vmem:[%s136 + $0xfa0] sm:$0xff] %v6662
        %7296 = vst [vmem:[%s136 + $0xfa8] sm:$0xff] %v6674
        %7297 = vst [vmem:[%s136 + $0xfb0] sm:$0xff] %v6686
        %7298 = vst [vmem:[%s136 + $0xfb8] sm:$0xff] %v6698
        %7299 = vst [vmem:[%s136 + $0xfc0] sm:$0xff] %v6710
        %7300 = vst [vmem:[%s136 + $0xfc8] sm:$0xff] %v6722
        %7301 = vst [vmem:[%s136 + $0xfd0] sm:$0xff] %v6734
        %7302 = vst [vmem:[%s136 + $0xfd8] sm:$0xff] %v6746
        %7303 = vst [vmem:[%s136 + $0xfe0] sm:$0xff] %v6758
        %7304 = vst [vmem:[%s136 + $0xfe8] sm:$0xff] %v6770
        %7305 = vst [vmem:[%s136 + $0xff0] sm:$0xff] %v6782
        %7306 = vst [vmem:[%s136 + $0xff8] sm:$0xff] %v6794
        %s7307 = sand.u32 %s52, 1
        %s7308 = scalar_lea.sflag [#allocation4], %s7307
        %s7309 = sand.u32 %s52, 1
        %s7310 = smul.addr %s7309, 4096
        %s7311 = scalar_lea.vmem [#allocation5], %s7310
        // Predicated region
        $region29: #{tpu_custom_call.1} parent=23 // pred_check
          %p7312 = pneg %p62
        $region30: #{tpu_custom_call.1} parent=23 // pred_check_branch
          %7314 = sbr.rel (%p7312) target = $region32
        $region31: #{tpu_custom_call.1} parent=23 // pred_region
          %s7315 = smul.u32 512, %s18
          %7317 = vsyncadd %s7308, 0
          %s7318 = smul.addr %s7315, 8
          %s7319 = scalar_lea.hbm %s1, %s7318
          %s7320 = sshll.u32 %s7311, 4
          %s7321 = int_to_ptr.vmem [resolvable:$true] %s7320
          %s7322 = sshll.u32 %s7319, 4
          %s7323 = int_to_ptr.hbm [resolvable:$true] %s7322
          %7328 = dma.vmem_to_hbm [thread:$0]  %s7321, 65536, %s7323, %s7308, 128, 128, 8
        $region32: #{tpu_custom_call.1} parent=23 // pred_fallthru
          _
      $region24: #{tpu_custom_call.1} parent=5 // pred_fallthru
        _
      %p7329 = scmp.le.s32.totalorder 2, %s13
      // Predicated region
      $region33: #{tpu_custom_call.1} parent=5 // pred_check
        %p7330 = pneg %p7329
      $region34: #{tpu_custom_call.1} parent=5 // pred_check_branch
        %7332 = sbr.rel (%p7330) target = $region36
      $region35: #{tpu_custom_call.1} parent=5 // pred_region
        %s7333 = ssub.s32 %s13, 2
        // Predicated region
        $region37: #{tpu_custom_call.1} parent=35 // pred_check
          %p7334 = pneg %p68
        $region38: #{tpu_custom_call.1} parent=35 // pred_check_branch
          %7336 = sbr.rel (%p7334) target = $region40
        $region39: #{tpu_custom_call.1} parent=35 // pred_region
          %s7337 = sand.u32 %s53, 1
          %s7338 = scalar_lea.sflag [#allocation4], %s7337
          %s7339 = sand.u32 %s53, 1
          %s7340 = smul.addr %s7339, 4096
          %s7341 = scalar_lea.vmem [#allocation5], %s7340
          %7343 = dma.done %s7338, 65536
        $region40: #{tpu_custom_call.1} parent=35 // pred_fallthru
          _
      $region36: #{tpu_custom_call.1} parent=5 // pred_fallthru
        _
    $region6: #{tpu_custom_call.1} parent=1 // loop_footer
      %s17 = sadd.s32 1, %s13
    $region7: #{tpu_custom_call.1} parent=1 // loop_footer_branch
      %12 = sbr.rel target = $region3
    $region8: #{tpu_custom_call.1} parent=1 // loop_exit
      _
    %7344 = vsyncpa [#allocation3], 1
    %s7345 = scalar_lea.sflag [#allocation3], 1
    %7346 = vsyncpa %s7345, 1
    %7347 = vsyncpa [#allocation4], 1
    %s7348 = scalar_lea.sflag [#allocation4], 1
    %7349 = vsyncpa %s7348, 1

</llo_original>
